<compile_context>
chip_gen: v7x
topology: tpu7x:2x2x1
jax: 0.10.0
libtpu: 0.0.40
codegen_flags: <defaults>
</compile_context>

<pallas_src>
import functools

import jax
import jax.numpy as jnp
from jax.experimental import pallas as pl
from jax.experimental.pallas import tpu as pltpu


# ----------------------------------------------------------------------------
# Kernel 1: fused stacked-LSTM decoder (all layers, all timesteps, one call).
#   grid = (1,)  -- everything resident in VMEM, lax.fori_loop over time.
#   PyTorch LSTM gate order: i, f, g, o ; gates = x@W_ih^T + h@W_hh^T + (b_ih+b_hh).
# ----------------------------------------------------------------------------
def _stacked_lstm_kernel(emb_ref, w_ihT_ref, w_hhT_ref, b_ref, out_ref,
                         x_scr, gx_scr, h_scr, c_scr, *, seq_len, batch):
    num_layers = w_ihT_ref.shape[0]
    H = out_ref.shape[-1]

    # Layer-0 input: embeddings, already laid out as (T*B, D) time-major rows.
    x_scr[...] = emb_ref[...]

    for l in range(num_layers):          # static (unrolled) loop over layers
        # -- hoisted input projection: one big GEMM covering every timestep --
        gx_scr[...] = (
            jnp.dot(x_scr[...].astype(jnp.bfloat16), w_ihT_ref[l],
                    preferred_element_type=jnp.float32)
            + b_ref[l]
        )

        # dec.init_state(batch_size, encoder_final=None) -> zero initial state.
        h_scr[...] = jnp.zeros_like(h_scr)
        c_scr[...] = jnp.zeros_like(c_scr)
        is_last = (l == num_layers - 1)

        def step(t, carry, l=l, is_last=is_last):
            row = t * batch                       # batch is a multiple of 8 -> aligned
            h = h_scr[...]
            c = c_scr[...]
            # Recurrent path only: gates = gx[t] + h @ W_hh^T  (bf16 MXU, f32 accum).
            gates = gx_scr[pl.ds(row, batch), :] + jnp.dot(
                h.astype(jnp.bfloat16), w_hhT_ref[l],
                preferred_element_type=jnp.float32)
            i_g = jax.nn.sigmoid(gates[:, 0 * H:1 * H])
            f_g = jax.nn.sigmoid(gates[:, 1 * H:2 * H])
            g_g = jnp.tanh(gates[:, 2 * H:3 * H])
            o_g = jax.nn.sigmoid(gates[:, 3 * H:4 * H])
            c_new = f_g * c + i_g * g_g
            h_new = o_g * jnp.tanh(c_new)
            c_scr[...] = c_new
            h_scr[...] = h_new
            if is_last:
                out_ref[pl.ds(row, batch), :] = h_new
            else:
                # Becomes the next layer's input (inter-layer dropout skipped: eval).
                x_scr[pl.ds(row, batch), :] = h_new
            return carry

        jax.lax.fori_loop(0, seq_len, step, 0, unroll=(seq_len <= 32))


def stacked_lstm(emb2d, w_ihT, w_hhT, b, *, seq_len, batch):
    """emb2d: (T*B, D) f32 -> (T*B, H) f32 (final layer hidden states)."""
    TB, D = emb2d.shape
    L, _, H4 = w_ihT.shape
    H = w_hhT.shape[1]
    assert TB == seq_len * batch
    kernel = functools.partial(_stacked_lstm_kernel, seq_len=seq_len, batch=batch)
    return pl.pallas_call(
        kernel,
        out_shape=jax.ShapeDtypeStruct((TB, H), jnp.float32),
        grid=(1,),
        in_specs=[
            pl.BlockSpec((TB, D), lambda i: (0, 0)),
            pl.BlockSpec((L, D, H4), lambda i: (0, 0, 0)),
            pl.BlockSpec((L, H, H4), lambda i: (0, 0, 0)),
            pl.BlockSpec((L, 1, H4), lambda i: (0, 0, 0)),
        ],
        out_specs=pl.BlockSpec((TB, H), lambda i: (0, 0)),
        scratch_shapes=[
            pltpu.VMEM((TB, D), jnp.float32),       # current layer input (x)
            pltpu.VMEM((TB, H4), jnp.float32),      # precomputed input gates
            pltpu.VMEM((batch, H), jnp.float32),    # h
            pltpu.VMEM((batch, H), jnp.float32),    # c
        ],
        compiler_params=pltpu.CompilerParams(
            dimension_semantics=("arbitrary",),      # recurrence: sequential
            vmem_limit_bytes=32 * 1024 * 1024,
        ),
    )(emb2d, w_ihT, w_hhT, b)


# ----------------------------------------------------------------------------
# Kernel 2: tied output projection  logits = h @ wemb^T + bias
#   grid over (row tiles, vocab tiles); lane-dense output blocks; both axes
#   parallel so v7x's two TensorCores can split the work.
# ----------------------------------------------------------------------------
def _proj_kernel(h_ref, wT_ref, b_ref, out_ref):
    out_ref[...] = (
        jnp.dot(h_ref[...].astype(jnp.bfloat16), wT_ref[...],
                preferred_element_type=jnp.float32)
        + b_ref[...]
    )


def tied_projection(h2d, wembT_bf16, bias2d, *, tm=256, tn=512):
    """h2d: (M, D) f32, wembT_bf16: (D, V) bf16, bias2d: (1, V) f32 -> (M, V) f32."""
    M, D = h2d.shape
    V = wembT_bf16.shape[1]
    tm = min(tm, M)
    while M % tm:
        tm //= 2
    tn = min(tn, V)
    while V % tn:
        tn //= 2
    return pl.pallas_call(
        _proj_kernel,
        out_shape=jax.ShapeDtypeStruct((M, V), jnp.float32),
        grid=(M // tm, V // tn),
        in_specs=[
            pl.BlockSpec((tm, D), lambda i, j: (i, 0)),
            pl.BlockSpec((D, tn), lambda i, j: (0, j)),
            pl.BlockSpec((1, tn), lambda i, j: (0, j)),
        ],
        out_specs=pl.BlockSpec((tm, tn), lambda i, j: (i, j)),
        compiler_params=pltpu.CompilerParams(
            dimension_semantics=("parallel", "parallel"),
            vmem_limit_bytes=32 * 1024 * 1024,
        ),
    )(h2d, wembT_bf16, bias2d)


# ----------------------------------------------------------------------------
# Parameter construction (deterministic, mirrors __init__ / init_weights).
# Weights are pre-transposed + stacked once here (not per timestep in-kernel).
# ----------------------------------------------------------------------------
def init_params(key, vocab_size, dim, num_layers):
    keys = jax.random.split(key, 1 + 4 * num_layers)
    # wemb: uniform(-0.1, 0.1), row 0 (padding_idx) zeroed.
    wemb = jax.random.uniform(keys[0], (vocab_size, dim), jnp.float32, -0.1, 0.1)
    wemb = wemb.at[0, :].set(0.0)
    # linear.weight tied to wemb; linear.bias zeroed.
    lin_bias = jnp.zeros((vocab_size,), jnp.float32)

    bound = 1.0 / jnp.sqrt(dim)
    w_ihT, w_hhT, bias = [], [], []
    for l in range(num_layers):
        k = keys[1 + 4 * l:1 + 4 * (l + 1)]
        w_ih = jax.random.uniform(k[0], (4 * dim, dim), jnp.float32, -bound, bound)
        w_hh = jax.random.uniform(k[1], (4 * dim, dim), jnp.float32, -bound, bound)
        b_ih = jax.random.uniform(k[2], (4 * dim,), jnp.float32, -bound, bound)
        b_hh = jax.random.uniform(k[3], (4 * dim,), jnp.float32, -bound, bound)
        w_ihT.append(w_ih.T)                       # (D, 4H)
        w_hhT.append(w_hh.T)                       # (H, 4H)
        bias.append((b_ih + b_hh).reshape(1, -1))  # (1, 4H)
    return dict(
        wemb=wemb,
        lin_bias=lin_bias,
        w_ihT=jnp.stack(w_ihT).astype(jnp.bfloat16),   # (L, D, 4H) bf16 for MXU
        w_hhT=jnp.stack(w_hhT).astype(jnp.bfloat16),   # (L, H, 4H) bf16 for MXU
        b=jnp.stack(bias),                             # (L, 1, 4H) f32
    )


# ----------------------------------------------------------------------------
# Forward pass equivalent of Seq2Seq.forward (is_conditional=False, start=True).
# ----------------------------------------------------------------------------
@jax.jit
def seq2seq_forward(params, subblock):
    # subblock: (T, B) int32 token ids ; batch_size = subblock.shape[1]
    wemb = params["wemb"]                              # (V, D) f32, tied weights
    T, B = subblock.shape
    D = wemb.shape[1]
    emb = wemb[subblock]                               # (T, B, D) gather (glue)
    emb2d = emb.reshape(T * B, D)                      # time-major rows: row = t*B + b
    out2d = stacked_lstm(emb2d, params["w_ihT"], params["w_hhT"], params["b"],
                         seq_len=T, batch=B)           # == output.view(-1, dim)
    wembT = wemb.astype(jnp.bfloat16).T                # tied projection weight (D, V)
    decoded = tied_projection(out2d, wembT, params["lin_bias"].reshape(1, -1))
    attns = {}                                         # use_attention=False
    return decoded, attns


if __name__ == "__main__":
    vocab_size = 256
    dim = 128
    num_layers = 2
    T, B = 8, 8

    key = jax.random.PRNGKey(0)
    pkey, dkey = jax.random.split(key)
    params = init_params(pkey, vocab_size, dim, num_layers)

    subblock = jax.random.randint(dkey, (T, B), 0, vocab_size, dtype=jnp.int32)
    subblock = subblock.at[0, 0].set(0)  # include a padding token

    decoded, attns = seq2seq_forward(params, subblock)
    decoded = jax.block_until_ready(decoded)

    assert decoded.shape == (T * B, vocab_size), decoded.shape
    assert decoded.dtype == jnp.float32
    assert bool(jnp.all(jnp.isfinite(decoded)))

    print("KERNEL_OK")
</pallas_src>

<mosaic_0001>
module attributes {stable_mosaic.version = 11 : i64} {
  func.func @_proj_kernel(%arg0: i32, %arg1: i32, %arg2: memref<64x128xf32, #tpu.memory_space<vmem>>, %arg3: memref<128x256xbf16, #tpu.memory_space<vmem>>, %arg4: memref<1x256xf32, #tpu.memory_space<vmem>>, %arg5: memref<64x256xf32, #tpu.memory_space<vmem>>) attributes {dimension_semantics = [#tpu.dimension_semantics<parallel>, #tpu.dimension_semantics<parallel>], iteration_bounds = array<i64: 1, 1>, scalar_prefetch = 0 : i64, scratch_operands = 0 : i64, tpu.core_type = #tpu.core_type<tc>, window_params = [{transform_indices = @transform_0, window_bounds = array<i64: 64, 128>}, {transform_indices = @transform_1, window_bounds = array<i64: 128, 256>}, {transform_indices = @transform_2, window_bounds = array<i64: 1, 256>}, {transform_indices = @transform_3, window_bounds = array<i64: 64, 256>}]} {
    %c0 = arith.constant 0 : index
    %c0_0 = arith.constant 0 : index
    %0 = vector.load %arg2[%c0, %c0_0] : memref<64x128xf32, #tpu.memory_space<vmem>>, vector<64x128xf32>
    %1 = arith.truncf %0 : vector<64x128xf32> to vector<64x128xbf16>
    %c0_1 = arith.constant 0 : index
    %c0_2 = arith.constant 0 : index
    %2 = vector.load %arg3[%c0_1, %c0_2] : memref<128x256xbf16, #tpu.memory_space<vmem>>, vector<128x256xbf16>
    %cst = arith.constant dense<0.000000e+00> : vector<64x256xf32>
    %3 = tpu.matmul %1, %2, %cst {dimension_numbers = #tpu.dot_dimension_numbers<[1], [0], [0], [1], [0, 0, 1, 1], [], []>} : vector<64x128xbf16>, vector<128x256xbf16>, vector<64x256xf32> -> vector<64x256xf32>
    %c0_3 = arith.constant 0 : index
    %c0_4 = arith.constant 0 : index
    %4 = vector.load %arg4[%c0_3, %c0_4] : memref<1x256xf32, #tpu.memory_space<vmem>>, vector<1x256xf32>
    %5 = vector.broadcast %4 : vector<1x256xf32> to vector<64x256xf32>
    %6 = arith.addf %3, %5 : vector<64x256xf32>
    %c0_5 = arith.constant 0 : index
    %c0_6 = arith.constant 0 : index
    %7 = vector.load %arg5[%c0_5, %c0_6] : memref<64x256xf32, #tpu.memory_space<vmem>>, vector<64x256xf32>
    tpu.vector_store %arg5[%c0_5, %c0_6], %6 {strides = array<i32>} : memref<64x256xf32, #tpu.memory_space<vmem>>, vector<64x256xf32>,
    return
  }
  func.func @transform_0(%arg0: i32, %arg1: i32) -> (i32, i32) {
    %c0_i32 = arith.constant 0 : i32
    %c0_i32_0 = arith.constant 0 : i32
    return %arg0, %c0_i32 : i32, i32
  }
  func.func @transform_1(%arg0: i32, %arg1: i32) -> (i32, i32) {
    %c0_i32 = arith.constant 0 : i32
    %c0_i32_0 = arith.constant 0 : i32
    return %c0_i32, %arg1 : i32, i32
  }
  func.func @transform_2(%arg0: i32, %arg1: i32) -> (i32, i32) {
    %c0_i32 = arith.constant 0 : i32
    %c0_i32_0 = arith.constant 0 : i32
    return %c0_i32, %arg1 : i32, i32
  }
  func.func @transform_3(%arg0: i32, %arg1: i32) -> (i32, i32) {
    %c0_i32 = arith.constant 0 : i32
    return %arg0, %arg1 : i32, i32
  }
}

module attributes {stable_mosaic.version = 11 : i64} {
  func.func @_stacked_lstm_kernel(%arg0: i32, %arg1: memref<64x128xf32, #tpu.memory_space<vmem>>, %arg2: memref<2x128x512xbf16, #tpu.memory_space<vmem>>, %arg3: memref<2x128x512xbf16, #tpu.memory_space<vmem>>, %arg4: memref<2x1x512xf32, #tpu.memory_space<vmem>>, %arg5: memref<64x128xf32, #tpu.memory_space<vmem>>, %arg6: memref<64x128xf32, #tpu.memory_space<vmem>>, %arg7: memref<64x512xf32, #tpu.memory_space<vmem>>, %arg8: memref<8x128xf32, #tpu.memory_space<vmem>>, %arg9: memref<8x128xf32, #tpu.memory_space<vmem>>) attributes {dimension_semantics = [#tpu.dimension_semantics<arbitrary>], iteration_bounds = array<i64: 1>, scalar_prefetch = 0 : i64, scratch_operands = 4 : i64, tpu.core_type = #tpu.core_type<tc>, window_params = [{pipeline_mode = #tpu.pipeline_mode<synchronous>, transform_indices = @transform_0, window_bounds = array<i64: 64, 128>}, {pipeline_mode = #tpu.pipeline_mode<synchronous>, transform_indices = @transform_1, window_bounds = array<i64: 2, 128, 512>}, {pipeline_mode = #tpu.pipeline_mode<synchronous>, transform_indices = @transform_2, window_bounds = array<i64: 2, 128, 512>}, {pipeline_mode = #tpu.pipeline_mode<synchronous>, transform_indices = @transform_3, window_bounds = array<i64: 2, 1, 512>}, {pipeline_mode = #tpu.pipeline_mode<synchronous>, transform_indices = @transform_4, window_bounds = array<i64: 64, 128>}]} {
    %c0 = arith.constant 0 : index
    %c0_0 = arith.constant 0 : index
    %0 = vector.load %arg1[%c0, %c0_0] : memref<64x128xf32, #tpu.memory_space<vmem>>, vector<64x128xf32>
    %c0_1 = arith.constant 0 : index
    %c0_2 = arith.constant 0 : index
    %1 = vector.load %arg6[%c0_1, %c0_2] : memref<64x128xf32, #tpu.memory_space<vmem>>, vector<64x128xf32>
    tpu.vector_store %arg6[%c0_1, %c0_2], %0 {strides = array<i32>} : memref<64x128xf32, #tpu.memory_space<vmem>>, vector<64x128xf32>,
    %c0_3 = arith.constant 0 : index
    %c0_4 = arith.constant 0 : index
    %2 = vector.load %arg6[%c0_3, %c0_4] : memref<64x128xf32, #tpu.memory_space<vmem>>, vector<64x128xf32>
    %3 = arith.truncf %2 : vector<64x128xf32> to vector<64x128xbf16>
    %c0_5 = arith.constant 0 : index
    %c0_6 = arith.constant 0 : index
    %c0_7 = arith.constant 0 : index
    %4 = vector.load %arg2[%c0_5, %c0_6, %c0_7] : memref<2x128x512xbf16, #tpu.memory_space<vmem>>, vector<1x128x512xbf16>
    %5 = vector.shape_cast %4 : vector<1x128x512xbf16> to vector<128x512xbf16>
    %cst = arith.constant dense<0.000000e+00> : vector<64x512xf32>
    %6 = tpu.matmul %3, %5, %cst {dimension_numbers = #tpu.dot_dimension_numbers<[1], [0], [0], [1], [0, 0, 1, 1], [], []>} : vector<64x128xbf16>, vector<128x512xbf16>, vector<64x512xf32> -> vector<64x512xf32>
    %c0_8 = arith.constant 0 : index
    %c0_9 = arith.constant 0 : index
    %c0_10 = arith.constant 0 : index
    %7 = vector.load %arg4[%c0_8, %c0_9, %c0_10] : memref<2x1x512xf32, #tpu.memory_space<vmem>>, vector<1x1x512xf32>
    %8 = vector.shape_cast %7 : vector<1x1x512xf32> to vector<1x512xf32>
    %9 = vector.broadcast %8 : vector<1x512xf32> to vector<64x512xf32>
    %10 = arith.addf %6, %9 : vector<64x512xf32>
    %c0_11 = arith.constant 0 : index
    %c0_12 = arith.constant 0 : index
    %11 = vector.load %arg7[%c0_11, %c0_12] : memref<64x512xf32, #tpu.memory_space<vmem>>, vector<64x512xf32>
    tpu.vector_store %arg7[%c0_11, %c0_12], %10 {strides = array<i32>} : memref<64x512xf32, #tpu.memory_space<vmem>>, vector<64x512xf32>,
    %cst_13 = arith.constant 0.000000e+00 : f32
    %12 = vector.broadcast %cst_13 : f32 to vector<8x128xf32>
    %c0_14 = arith.constant 0 : index
    %c0_15 = arith.constant 0 : index
    %13 = vector.load %arg8[%c0_14, %c0_15] : memref<8x128xf32, #tpu.memory_space<vmem>>, vector<8x128xf32>
    tpu.vector_store %arg8[%c0_14, %c0_15], %12 {strides = array<i32>} : memref<8x128xf32, #tpu.memory_space<vmem>>, vector<8x128xf32>,
    %cst_16 = arith.constant 0.000000e+00 : f32
    %14 = vector.broadcast %cst_16 : f32 to vector<8x128xf32>
    %c0_17 = arith.constant 0 : index
    %c0_18 = arith.constant 0 : index
    %15 = vector.load %arg9[%c0_17, %c0_18] : memref<8x128xf32, #tpu.memory_space<vmem>>, vector<8x128xf32>
    tpu.vector_store %arg9[%c0_17, %c0_18], %14 {strides = array<i32>} : memref<8x128xf32, #tpu.memory_space<vmem>>, vector<8x128xf32>,
    %c0_i32 = arith.constant 0 : i32
    %c8_i32 = arith.constant 8 : i32
    %16 = arith.muli %c0_i32, %c8_i32 : i32
    %c0_19 = arith.constant 0 : index
    %c0_20 = arith.constant 0 : index
    %17 = vector.load %arg8[%c0_19, %c0_20] : memref<8x128xf32, #tpu.memory_space<vmem>>, vector<8x128xf32>
    %c0_21 = arith.constant 0 : index
    %c0_22 = arith.constant 0 : index
    %18 = vector.load %arg9[%c0_21, %c0_22] : memref<8x128xf32, #tpu.memory_space<vmem>>, vector<8x128xf32>
    %19 = arith.index_cast %16 : i32 to index
    %c0_23 = arith.constant 0 : index
    %20 = vector.load %arg7[%19, %c0_23] : memref<64x512xf32, #tpu.memory_space<vmem>>, vector<8x512xf32>
    %21 = arith.truncf %17 : vector<8x128xf32> to vector<8x128xbf16>
    %c0_24 = arith.constant 0 : index
    %c0_25 = arith.constant 0 : index
    %c0_26 = arith.constant 0 : index
    %22 = vector.load %arg3[%c0_24, %c0_25, %c0_26] : memref<2x128x512xbf16, #tpu.memory_space<vmem>>, vector<1x128x512xbf16>
    %23 = vector.shape_cast %22 : vector<1x128x512xbf16> to vector<128x512xbf16>
    %cst_27 = arith.constant dense<0.000000e+00> : vector<8x512xf32>
    %24 = tpu.matmul %21, %23, %cst_27 {dimension_numbers = #tpu.dot_dimension_numbers<[1], [0], [0], [1], [0, 0, 1, 1], [], []>} : vector<8x128xbf16>, vector<128x512xbf16>, vector<8x512xf32> -> vector<8x512xf32>
    %25 = arith.addf %20, %24 : vector<8x512xf32>
    %26 = vector.extract_strided_slice %25 {offsets = [0, 0], sizes = [8, 128], strides = [1, 1]} : vector<8x512xf32> to vector<8x128xf32>
    %27 = arith.negf %26 : vector<8x128xf32>
    %28 = math.exp %27 : vector<8x128xf32>
    %cst_28 = arith.constant 1.000000e+00 : f32
    %29 = vector.broadcast %cst_28 : f32 to vector<8x128xf32>
    %30 = arith.addf %29, %28 : vector<8x128xf32>
    %31 = arith.divf %29, %30 : vector<8x128xf32>
    %32 = vector.extract_strided_slice %25 {offsets = [0, 128], sizes = [8, 128], strides = [1, 1]} : vector<8x512xf32> to vector<8x128xf32>
    %33 = arith.negf %32 : vector<8x128xf32>
    %34 = math.exp %33 : vector<8x128xf32>
    %cst_29 = arith.constant 1.000000e+00 : f32
    %35 = vector.broadcast %cst_29 : f32 to vector<8x128xf32>
    %36 = arith.addf %35, %34 : vector<8x128xf32>
    %37 = arith.divf %35, %36 : vector<8x128xf32>
    %38 = vector.extract_strided_slice %25 {offsets = [0, 256], sizes = [8, 128], strides = [1, 1]} : vector<8x512xf32> to vector<8x128xf32>
    %39 = math.tanh %38 : vector<8x128xf32>
    %40 = vector.extract_strided_slice %25 {offsets = [0, 384], sizes = [8, 128], strides = [1, 1]} : vector<8x512xf32> to vector<8x128xf32>
    %41 = arith.negf %40 : vector<8x128xf32>
    %42 = math.exp %41 : vector<8x128xf32>
    %cst_30 = arith.constant 1.000000e+00 : f32
    %43 = vector.broadcast %cst_30 : f32 to vector<8x128xf32>
    %44 = arith.addf %43, %42 : vector<8x128xf32>
    %45 = arith.divf %43, %44 : vector<8x128xf32>
    %46 = arith.mulf %37, %18 : vector<8x128xf32>
    %47 = arith.mulf %31, %39 : vector<8x128xf32>
    %48 = arith.addf %46, %47 : vector<8x128xf32>
    %49 = math.tanh %48 : vector<8x128xf32>
    %50 = arith.mulf %45, %49 : vector<8x128xf32>
    %c0_31 = arith.constant 0 : index
    %c0_32 = arith.constant 0 : index
    %51 = vector.load %arg9[%c0_31, %c0_32] : memref<8x128xf32, #tpu.memory_space<vmem>>, vector<8x128xf32>
    tpu.vector_store %arg9[%c0_31, %c0_32], %48 {strides = array<i32>} : memref<8x128xf32, #tpu.memory_space<vmem>>, vector<8x128xf32>,
    %c0_33 = arith.constant 0 : index
    %c0_34 = arith.constant 0 : index
    %52 = vector.load %arg8[%c0_33, %c0_34] : memref<8x128xf32, #tpu.memory_space<vmem>>, vector<8x128xf32>
    tpu.vector_store %arg8[%c0_33, %c0_34], %50 {strides = array<i32>} : memref<8x128xf32, #tpu.memory_space<vmem>>, vector<8x128xf32>,
    %53 = arith.index_cast %16 : i32 to index
    %c0_35 = arith.constant 0 : index
    %54 = vector.load %arg6[%53, %c0_35] : memref<64x128xf32, #tpu.memory_space<vmem>>, vector<8x128xf32>
    tpu.vector_store %arg6[%53, %c0_35], %50 {strides = array<i32>} : memref<64x128xf32, #tpu.memory_space<vmem>>, vector<8x128xf32>,
    %c1_i32 = arith.constant 1 : i32
    %c8_i32_36 = arith.constant 8 : i32
    %55 = arith.muli %c1_i32, %c8_i32_36 : i32
    %c0_37 = arith.constant 0 : index
    %c0_38 = arith.constant 0 : index
    %56 = vector.load %arg8[%c0_37, %c0_38] : memref<8x128xf32, #tpu.memory_space<vmem>>, vector<8x128xf32>
    %c0_39 = arith.constant 0 : index
    %c0_40 = arith.constant 0 : index
    %57 = vector.load %arg9[%c0_39, %c0_40] : memref<8x128xf32, #tpu.memory_space<vmem>>, vector<8x128xf32>
    %58 = arith.index_cast %55 : i32 to index
    %c0_41 = arith.constant 0 : index
    %59 = vector.load %arg7[%58, %c0_41] : memref<64x512xf32, #tpu.memory_space<vmem>>, vector<8x512xf32>
    %60 = arith.truncf %56 : vector<8x128xf32> to vector<8x128xbf16>
    %c0_42 = arith.constant 0 : index
    %c0_43 = arith.constant 0 : index
    %c0_44 = arith.constant 0 : index
    %61 = vector.load %arg3[%c0_42, %c0_43, %c0_44] : memref<2x128x512xbf16, #tpu.memory_space<vmem>>, vector<1x128x512xbf16>
    %62 = vector.shape_cast %61 : vector<1x128x512xbf16> to vector<128x512xbf16>
    %cst_45 = arith.constant dense<0.000000e+00> : vector<8x512xf32>
    %63 = tpu.matmul %60, %62, %cst_45 {dimension_numbers = #tpu.dot_dimension_numbers<[1], [0], [0], [1], [0, 0, 1, 1], [], []>} : vector<8x128xbf16>, vector<128x512xbf16>, vector<8x512xf32> -> vector<8x512xf32>
    %64 = arith.addf %59, %63 : vector<8x512xf32>
    %65 = vector.extract_strided_slice %64 {offsets = [0, 0], sizes = [8, 128], strides = [1, 1]} : vector<8x512xf32> to vector<8x128xf32>
    %66 = arith.negf %65 : vector<8x128xf32>
    %67 = math.exp %66 : vector<8x128xf32>
    %cst_46 = arith.constant 1.000000e+00 : f32
    %68 = vector.broadcast %cst_46 : f32 to vector<8x128xf32>
    %69 = arith.addf %68, %67 : vector<8x128xf32>
    %70 = arith.divf %68, %69 : vector<8x128xf32>
    %71 = vector.extract_strided_slice %64 {offsets = [0, 128], sizes = [8, 128], strides = [1, 1]} : vector<8x512xf32> to vector<8x128xf32>
    %72 = arith.negf %71 : vector<8x128xf32>
    %73 = math.exp %72 : vector<8x128xf32>
    %cst_47 = arith.constant 1.000000e+00 : f32
    %74 = vector.broadcast %cst_47 : f32 to vector<8x128xf32>
    %75 = arith.addf %74, %73 : vector<8x128xf32>
    %76 = arith.divf %74, %75 : vector<8x128xf32>
    %77 = vector.extract_strided_slice %64 {offsets = [0, 256], sizes = [8, 128], strides = [1, 1]} : vector<8x512xf32> to vector<8x128xf32>
    %78 = math.tanh %77 : vector<8x128xf32>
    %79 = vector.extract_strided_slice %64 {offsets = [0, 384], sizes = [8, 128], strides = [1, 1]} : vector<8x512xf32> to vector<8x128xf32>
    %80 = arith.negf %79 : vector<8x128xf32>
    %81 = math.exp %80 : vector<8x128xf32>
    %cst_48 = arith.constant 1.000000e+00 : f32
    %82 = vector.broadcast %cst_48 : f32 to vector<8x128xf32>
    %83 = arith.addf %82, %81 : vector<8x128xf32>
    %84 = arith.divf %82, %83 : vector<8x128xf32>
    %85 = arith.mulf %76, %57 : vector<8x128xf32>
    %86 = arith.mulf %70, %78 : vector<8x128xf32>
    %87 = arith.addf %85, %86 : vector<8x128xf32>
    %88 = math.tanh %87 : vector<8x128xf32>
    %89 = arith.mulf %84, %88 : vector<8x128xf32>
    %c0_49 = arith.constant 0 : index
    %c0_50 = arith.constant 0 : index
    %90 = vector.load %arg9[%c0_49, %c0_50] : memref<8x128xf32, #tpu.memory_space<vmem>>, vector<8x128xf32>
    tpu.vector_store %arg9[%c0_49, %c0_50], %87 {strides = array<i32>} : memref<8x128xf32, #tpu.memory_space<vmem>>, vector<8x128xf32>,
    %c0_51 = arith.constant 0 : index
    %c0_52 = arith.constant 0 : index
    %91 = vector.load %arg8[%c0_51, %c0_52] : memref<8x128xf32, #tpu.memory_space<vmem>>, vector<8x128xf32>
    tpu.vector_store %arg8[%c0_51, %c0_52], %89 {strides = array<i32>} : memref<8x128xf32, #tpu.memory_space<vmem>>, vector<8x128xf32>,
    %92 = arith.index_cast %55 : i32 to index
    %c0_53 = arith.constant 0 : index
    %93 = vector.load %arg6[%92, %c0_53] : memref<64x128xf32, #tpu.memory_space<vmem>>, vector<8x128xf32>
    tpu.vector_store %arg6[%92, %c0_53], %89 {strides = array<i32>} : memref<64x128xf32, #tpu.memory_space<vmem>>, vector<8x128xf32>,
    %c2_i32 = arith.constant 2 : i32
    %c8_i32_54 = arith.constant 8 : i32
    %94 = arith.muli %c2_i32, %c8_i32_54 : i32
    %c0_55 = arith.constant 0 : index
    %c0_56 = arith.constant 0 : index
    %95 = vector.load %arg8[%c0_55, %c0_56] : memref<8x128xf32, #tpu.memory_space<vmem>>, vector<8x128xf32>
    %c0_57 = arith.constant 0 : index
    %c0_58 = arith.constant 0 : index
    %96 = vector.load %arg9[%c0_57, %c0_58] : memref<8x128xf32, #tpu.memory_space<vmem>>, vector<8x128xf32>
    %97 = arith.index_cast %94 : i32 to index
    %c0_59 = arith.constant 0 : index
    %98 = vector.load %arg7[%97, %c0_59] : memref<64x512xf32, #tpu.memory_space<vmem>>, vector<8x512xf32>
    %99 = arith.truncf %95 : vector<8x128xf32> to vector<8x128xbf16>
    %c0_60 = arith.constant 0 : index
    %c0_61 = arith.constant 0 : index
    %c0_62 = arith.constant 0 : index
    %100 = vector.load %arg3[%c0_60, %c0_61, %c0_62] : memref<2x128x512xbf16, #tpu.memory_space<vmem>>, vector<1x128x512xbf16>
    %101 = vector.shape_cast %100 : vector<1x128x512xbf16> to vector<128x512xbf16>
    %cst_63 = arith.constant dense<0.000000e+00> : vector<8x512xf32>
    %102 = tpu.matmul %99, %101, %cst_63 {dimension_numbers = #tpu.dot_dimension_numbers<[1], [0], [0], [1], [0, 0, 1, 1], [], []>} : vector<8x128xbf16>, vector<128x512xbf16>, vector<8x512xf32> -> vector<8x512xf32>
    %103 = arith.addf %98, %102 : vector<8x512xf32>
    %104 = vector.extract_strided_slice %103 {offsets = [0, 0], sizes = [8, 128], strides = [1, 1]} : vector<8x512xf32> to vector<8x128xf32>
    %105 = arith.negf %104 : vector<8x128xf32>
    %106 = math.exp %105 : vector<8x128xf32>
    %cst_64 = arith.constant 1.000000e+00 : f32
    %107 = vector.broadcast %cst_64 : f32 to vector<8x128xf32>
    %108 = arith.addf %107, %106 : vector<8x128xf32>
    %109 = arith.divf %107, %108 : vector<8x128xf32>
    %110 = vector.extract_strided_slice %103 {offsets = [0, 128], sizes = [8, 128], strides = [1, 1]} : vector<8x512xf32> to vector<8x128xf32>
    %111 = arith.negf %110 : vector<8x128xf32>
    %112 = math.exp %111 : vector<8x128xf32>
    %cst_65 = arith.constant 1.000000e+00 : f32
    %113 = vector.broadcast %cst_65 : f32 to vector<8x128xf32>
    %114 = arith.addf %113, %112 : vector<8x128xf32>
    %115 = arith.divf %113, %114 : vector<8x128xf32>
    %116 = vector.extract_strided_slice %103 {offsets = [0, 256], sizes = [8, 128], strides = [1, 1]} : vector<8x512xf32> to vector<8x128xf32>
    %117 = math.tanh %116 : vector<8x128xf32>
    %118 = vector.extract_strided_slice %103 {offsets = [0, 384], sizes = [8, 128], strides = [1, 1]} : vector<8x512xf32> to vector<8x128xf32>
    %119 = arith.negf %118 : vector<8x128xf32>
    %120 = math.exp %119 : vector<8x128xf32>
    %cst_66 = arith.constant 1.000000e+00 : f32
    %121 = vector.broadcast %cst_66 : f32 to vector<8x128xf32>
    %122 = arith.addf %121, %120 : vector<8x128xf32>
    %123 = arith.divf %121, %122 : vector<8x128xf32>
    %124 = arith.mulf %115, %96 : vector<8x128xf32>
    %125 = arith.mulf %109, %117 : vector<8x128xf32>
    %126 = arith.addf %124, %125 : vector<8x128xf32>
    %127 = math.tanh %126 : vector<8x128xf32>
    %128 = arith.mulf %123, %127 : vector<8x128xf32>
    %c0_67 = arith.constant 0 : index
    %c0_68 = arith.constant 0 : index
    %129 = vector.load %arg9[%c0_67, %c0_68] : memref<8x128xf32, #tpu.memory_space<vmem>>, vector<8x128xf32>
    tpu.vector_store %arg9[%c0_67, %c0_68], %126 {strides = array<i32>} : memref<8x128xf32, #tpu.memory_space<vmem>>, vector<8x128xf32>,
    %c0_69 = arith.constant 0 : index
    %c0_70 = arith.constant 0 : index
    %130 = vector.load %arg8[%c0_69, %c0_70] : memref<8x128xf32, #tpu.memory_space<vmem>>, vector<8x128xf32>
    tpu.vector_store %arg8[%c0_69, %c0_70], %128 {strides = array<i32>} : memref<8x128xf32, #tpu.memory_space<vmem>>, vector<8x128xf32>,
    %131 = arith.index_cast %94 : i32 to index
    %c0_71 = arith.constant 0 : index
    %132 = vector.load %arg6[%131, %c0_71] : memref<64x128xf32, #tpu.memory_space<vmem>>, vector<8x128xf32>
    tpu.vector_store %arg6[%131, %c0_71], %128 {strides = array<i32>} : memref<64x128xf32, #tpu.memory_space<vmem>>, vector<8x128xf32>,
    %c3_i32 = arith.constant 3 : i32
    %c8_i32_72 = arith.constant 8 : i32
    %133 = arith.muli %c3_i32, %c8_i32_72 : i32
    %c0_73 = arith.constant 0 : index
    %c0_74 = arith.constant 0 : index
    %134 = vector.load %arg8[%c0_73, %c0_74] : memref<8x128xf32, #tpu.memory_space<vmem>>, vector<8x128xf32>
    %c0_75 = arith.constant 0 : index
    %c0_76 = arith.constant 0 : index
    %135 = vector.load %arg9[%c0_75, %c0_76] : memref<8x128xf32, #tpu.memory_space<vmem>>, vector<8x128xf32>
    %136 = arith.index_cast %133 : i32 to index
    %c0_77 = arith.constant 0 : index
    %137 = vector.load %arg7[%136, %c0_77] : memref<64x512xf32, #tpu.memory_space<vmem>>, vector<8x512xf32>
    %138 = arith.truncf %134 : vector<8x128xf32> to vector<8x128xbf16>
    %c0_78 = arith.constant 0 : index
    %c0_79 = arith.constant 0 : index
    %c0_80 = arith.constant 0 : index
    %139 = vector.load %arg3[%c0_78, %c0_79, %c0_80] : memref<2x128x512xbf16, #tpu.memory_space<vmem>>, vector<1x128x512xbf16>
    %140 = vector.shape_cast %139 : vector<1x128x512xbf16> to vector<128x512xbf16>
    %cst_81 = arith.constant dense<0.000000e+00> : vector<8x512xf32>
    %141 = tpu.matmul %138, %140, %cst_81 {dimension_numbers = #tpu.dot_dimension_numbers<[1], [0], [0], [1], [0, 0, 1, 1], [], []>} : vector<8x128xbf16>, vector<128x512xbf16>, vector<8x512xf32> -> vector<8x512xf32>
    %142 = arith.addf %137, %141 : vector<8x512xf32>
    %143 = vector.extract_strided_slice %142 {offsets = [0, 0], sizes = [8, 128], strides = [1, 1]} : vector<8x512xf32> to vector<8x128xf32>
    %144 = arith.negf %143 : vector<8x128xf32>
    %145 = math.exp %144 : vector<8x128xf32>
    %cst_82 = arith.constant 1.000000e+00 : f32
    %146 = vector.broadcast %cst_82 : f32 to vector<8x128xf32>
    %147 = arith.addf %146, %145 : vector<8x128xf32>
    %148 = arith.divf %146, %147 : vector<8x128xf32>
    %149 = vector.extract_strided_slice %142 {offsets = [0, 128], sizes = [8, 128], strides = [1, 1]} : vector<8x512xf32> to vector<8x128xf32>
    %150 = arith.negf %149 : vector<8x128xf32>
    %151 = math.exp %150 : vector<8x128xf32>
    %cst_83 = arith.constant 1.000000e+00 : f32
    %152 = vector.broadcast %cst_83 : f32 to vector<8x128xf32>
    %153 = arith.addf %152, %151 : vector<8x128xf32>
    %154 = arith.divf %152, %153 : vector<8x128xf32>
    %155 = vector.extract_strided_slice %142 {offsets = [0, 256], sizes = [8, 128], strides = [1, 1]} : vector<8x512xf32> to vector<8x128xf32>
    %156 = math.tanh %155 : vector<8x128xf32>
    %157 = vector.extract_strided_slice %142 {offsets = [0, 384], sizes = [8, 128], strides = [1, 1]} : vector<8x512xf32> to vector<8x128xf32>
    %158 = arith.negf %157 : vector<8x128xf32>
    %159 = math.exp %158 : vector<8x128xf32>
    %cst_84 = arith.constant 1.000000e+00 : f32
    %160 = vector.broadcast %cst_84 : f32 to vector<8x128xf32>
    %161 = arith.addf %160, %159 : vector<8x128xf32>
    %162 = arith.divf %160, %161 : vector<8x128xf32>
    %163 = arith.mulf %154, %135 : vector<8x128xf32>
    %164 = arith.mulf %148, %156 : vector<8x128xf32>
    %165 = arith.addf %163, %164 : vector<8x128xf32>
    %166 = math.tanh %165 : vector<8x128xf32>
    %167 = arith.mulf %162, %166 : vector<8x128xf32>
    %c0_85 = arith.constant 0 : index
    %c0_86 = arith.constant 0 : index
    %168 = vector.load %arg9[%c0_85, %c0_86] : memref<8x128xf32, #tpu.memory_space<vmem>>, vector<8x128xf32>
    tpu.vector_store %arg9[%c0_85, %c0_86], %165 {strides = array<i32>} : memref<8x128xf32, #tpu.memory_space<vmem>>, vector<8x128xf32>,
    %c0_87 = arith.constant 0 : index
    %c0_88 = arith.constant 0 : index
    %169 = vector.load %arg8[%c0_87, %c0_88] : memref<8x128xf32, #tpu.memory_space<vmem>>, vector<8x128xf32>
    tpu.vector_store %arg8[%c0_87, %c0_88], %167 {strides = array<i32>} : memref<8x128xf32, #tpu.memory_space<vmem>>, vector<8x128xf32>,
    %170 = arith.index_cast %133 : i32 to index
    %c0_89 = arith.constant 0 : index
    %171 = vector.load %arg6[%170, %c0_89] : memref<64x128xf32, #tpu.memory_space<vmem>>, vector<8x128xf32>
    tpu.vector_store %arg6[%170, %c0_89], %167 {strides = array<i32>} : memref<64x128xf32, #tpu.memory_space<vmem>>, vector<8x128xf32>,
    %c4_i32 = arith.constant 4 : i32
    %c8_i32_90 = arith.constant 8 : i32
    %172 = arith.muli %c4_i32, %c8_i32_90 : i32
    %c0_91 = arith.constant 0 : index
    %c0_92 = arith.constant 0 : index
    %173 = vector.load %arg8[%c0_91, %c0_92] : memref<8x128xf32, #tpu.memory_space<vmem>>, vector<8x128xf32>
    %c0_93 = arith.constant 0 : index
    %c0_94 = arith.constant 0 : index
    %174 = vector.load %arg9[%c0_93, %c0_94] : memref<8x128xf32, #tpu.memory_space<vmem>>, vector<8x128xf32>
    %175 = arith.index_cast %172 : i32 to index
    %c0_95 = arith.constant 0 : index
    %176 = vector.load %arg7[%175, %c0_95] : memref<64x512xf32, #tpu.memory_space<vmem>>, vector<8x512xf32>
    %177 = arith.truncf %173 : vector<8x128xf32> to vector<8x128xbf16>
    %c0_96 = arith.constant 0 : index
    %c0_97 = arith.constant 0 : index
    %c0_98 = arith.constant 0 : index
    %178 = vector.load %arg3[%c0_96, %c0_97, %c0_98] : memref<2x128x512xbf16, #tpu.memory_space<vmem>>, vector<1x128x512xbf16>
    %179 = vector.shape_cast %178 : vector<1x128x512xbf16> to vector<128x512xbf16>
    %cst_99 = arith.constant dense<0.000000e+00> : vector<8x512xf32>
    %180 = tpu.matmul %177, %179, %cst_99 {dimension_numbers = #tpu.dot_dimension_numbers<[1], [0], [0], [1], [0, 0, 1, 1], [], []>} : vector<8x128xbf16>, vector<128x512xbf16>, vector<8x512xf32> -> vector<8x512xf32>
    %181 = arith.addf %176, %180 : vector<8x512xf32>
    %182 = vector.extract_strided_slice %181 {offsets = [0, 0], sizes = [8, 128], strides = [1, 1]} : vector<8x512xf32> to vector<8x128xf32>
    %183 = arith.negf %182 : vector<8x128xf32>
    %184 = math.exp %183 : vector<8x128xf32>
    %cst_100 = arith.constant 1.000000e+00 : f32
    %185 = vector.broadcast %cst_100 : f32 to vector<8x128xf32>
    %186 = arith.addf %185, %184 : vector<8x128xf32>
    %187 = arith.divf %185, %186 : vector<8x128xf32>
    %188 = vector.extract_strided_slice %181 {offsets = [0, 128], sizes = [8, 128], strides = [1, 1]} : vector<8x512xf32> to vector<8x128xf32>
    %189 = arith.negf %188 : vector<8x128xf32>
    %190 = math.exp %189 : vector<8x128xf32>
    %cst_101 = arith.constant 1.000000e+00 : f32
    %191 = vector.broadcast %cst_101 : f32 to vector<8x128xf32>
    %192 = arith.addf %191, %190 : vector<8x128xf32>
    %193 = arith.divf %191, %192 : vector<8x128xf32>
    %194 = vector.extract_strided_slice %181 {offsets = [0, 256], sizes = [8, 128], strides = [1, 1]} : vector<8x512xf32> to vector<8x128xf32>
    %195 = math.tanh %194 : vector<8x128xf32>
    %196 = vector.extract_strided_slice %181 {offsets = [0, 384], sizes = [8, 128], strides = [1, 1]} : vector<8x512xf32> to vector<8x128xf32>
    %197 = arith.negf %196 : vector<8x128xf32>
    %198 = math.exp %197 : vector<8x128xf32>
    %cst_102 = arith.constant 1.000000e+00 : f32
    %199 = vector.broadcast %cst_102 : f32 to vector<8x128xf32>
    %200 = arith.addf %199, %198 : vector<8x128xf32>
    %201 = arith.divf %199, %200 : vector<8x128xf32>
    %202 = arith.mulf %193, %174 : vector<8x128xf32>
    %203 = arith.mulf %187, %195 : vector<8x128xf32>
    %204 = arith.addf %202, %203 : vector<8x128xf32>
    %205 = math.tanh %204 : vector<8x128xf32>
    %206 = arith.mulf %201, %205 : vector<8x128xf32>
    %c0_103 = arith.constant 0 : index
    %c0_104 = arith.constant 0 : index
    %207 = vector.load %arg9[%c0_103, %c0_104] : memref<8x128xf32, #tpu.memory_space<vmem>>, vector<8x128xf32>
    tpu.vector_store %arg9[%c0_103, %c0_104], %204 {strides = array<i32>} : memref<8x128xf32, #tpu.memory_space<vmem>>, vector<8x128xf32>,
    %c0_105 = arith.constant 0 : index
    %c0_106 = arith.constant 0 : index
    %208 = vector.load %arg8[%c0_105, %c0_106] : memref<8x128xf32, #tpu.memory_space<vmem>>, vector<8x128xf32>
    tpu.vector_store %arg8[%c0_105, %c0_106], %206 {strides = array<i32>} : memref<8x128xf32, #tpu.memory_space<vmem>>, vector<8x128xf32>,
    %209 = arith.index_cast %172 : i32 to index
    %c0_107 = arith.constant 0 : index
    %210 = vector.load %arg6[%209, %c0_107] : memref<64x128xf32, #tpu.memory_space<vmem>>, vector<8x128xf32>
    tpu.vector_store %arg6[%209, %c0_107], %206 {strides = array<i32>} : memref<64x128xf32, #tpu.memory_space<vmem>>, vector<8x128xf32>,
    %c5_i32 = arith.constant 5 : i32
    %c8_i32_108 = arith.constant 8 : i32
    %211 = arith.muli %c5_i32, %c8_i32_108 : i32
    %c0_109 = arith.constant 0 : index
    %c0_110 = arith.constant 0 : index
    %212 = vector.load %arg8[%c0_109, %c0_110] : memref<8x128xf32, #tpu.memory_space<vmem>>, vector<8x128xf32>
    %c0_111 = arith.constant 0 : index
    %c0_112 = arith.constant 0 : index
    %213 = vector.load %arg9[%c0_111, %c0_112] : memref<8x128xf32, #tpu.memory_space<vmem>>, vector<8x128xf32>
    %214 = arith.index_cast %211 : i32 to index
    %c0_113 = arith.constant 0 : index
    %215 = vector.load %arg7[%214, %c0_113] : memref<64x512xf32, #tpu.memory_space<vmem>>, vector<8x512xf32>
    %216 = arith.truncf %212 : vector<8x128xf32> to vector<8x128xbf16>
    %c0_114 = arith.constant 0 : index
    %c0_115 = arith.constant 0 : index
    %c0_116 = arith.constant 0 : index
    %217 = vector.load %arg3[%c0_114, %c0_115, %c0_116] : memref<2x128x512xbf16, #tpu.memory_space<vmem>>, vector<1x128x512xbf16>
    %218 = vector.shape_cast %217 : vector<1x128x512xbf16> to vector<128x512xbf16>
    %cst_117 = arith.constant dense<0.000000e+00> : vector<8x512xf32>
    %219 = tpu.matmul %216, %218, %cst_117 {dimension_numbers = #tpu.dot_dimension_numbers<[1], [0], [0], [1], [0, 0, 1, 1], [], []>} : vector<8x128xbf16>, vector<128x512xbf16>, vector<8x512xf32> -> vector<8x512xf32>
    %220 = arith.addf %215, %219 : vector<8x512xf32>
    %221 = vector.extract_strided_slice %220 {offsets = [0, 0], sizes = [8, 128], strides = [1, 1]} : vector<8x512xf32> to vector<8x128xf32>
    %222 = arith.negf %221 : vector<8x128xf32>
    %223 = math.exp %222 : vector<8x128xf32>
    %cst_118 = arith.constant 1.000000e+00 : f32
    %224 = vector.broadcast %cst_118 : f32 to vector<8x128xf32>
    %225 = arith.addf %224, %223 : vector<8x128xf32>
    %226 = arith.divf %224, %225 : vector<8x128xf32>
    %227 = vector.extract_strided_slice %220 {offsets = [0, 128], sizes = [8, 128], strides = [1, 1]} : vector<8x512xf32> to vector<8x128xf32>
    %228 = arith.negf %227 : vector<8x128xf32>
    %229 = math.exp %228 : vector<8x128xf32>
    %cst_119 = arith.constant 1.000000e+00 : f32
    %230 = vector.broadcast %cst_119 : f32 to vector<8x128xf32>
    %231 = arith.addf %230, %229 : vector<8x128xf32>
    %232 = arith.divf %230, %231 : vector<8x128xf32>
    %233 = vector.extract_strided_slice %220 {offsets = [0, 256], sizes = [8, 128], strides = [1, 1]} : vector<8x512xf32> to vector<8x128xf32>
    %234 = math.tanh %233 : vector<8x128xf32>
    %235 = vector.extract_strided_slice %220 {offsets = [0, 384], sizes = [8, 128], strides = [1, 1]} : vector<8x512xf32> to vector<8x128xf32>
    %236 = arith.negf %235 : vector<8x128xf32>
    %237 = math.exp %236 : vector<8x128xf32>
    %cst_120 = arith.constant 1.000000e+00 : f32
    %238 = vector.broadcast %cst_120 : f32 to vector<8x128xf32>
    %239 = arith.addf %238, %237 : vector<8x128xf32>
    %240 = arith.divf %238, %239 : vector<8x128xf32>
    %241 = arith.mulf %232, %213 : vector<8x128xf32>
    %242 = arith.mulf %226, %234 : vector<8x128xf32>
    %243 = arith.addf %241, %242 : vector<8x128xf32>
    %244 = math.tanh %243 : vector<8x128xf32>
    %245 = arith.mulf %240, %244 : vector<8x128xf32>
    %c0_121 = arith.constant 0 : index
    %c0_122 = arith.constant 0 : index
    %246 = vector.load %arg9[%c0_121, %c0_122] : memref<8x128xf32, #tpu.memory_space<vmem>>, vector<8x128xf32>
    tpu.vector_store %arg9[%c0_121, %c0_122], %243 {strides = array<i32>} : memref<8x128xf32, #tpu.memory_space<vmem>>, vector<8x128xf32>,
    %c0_123 = arith.constant 0 : index
    %c0_124 = arith.constant 0 : index
    %247 = vector.load %arg8[%c0_123, %c0_124] : memref<8x128xf32, #tpu.memory_space<vmem>>, vector<8x128xf32>
    tpu.vector_store %arg8[%c0_123, %c0_124], %245 {strides = array<i32>} : memref<8x128xf32, #tpu.memory_space<vmem>>, vector<8x128xf32>,
    %248 = arith.index_cast %211 : i32 to index
    %c0_125 = arith.constant 0 : index
    %249 = vector.load %arg6[%248, %c0_125] : memref<64x128xf32, #tpu.memory_space<vmem>>, vector<8x128xf32>
    tpu.vector_store %arg6[%248, %c0_125], %245 {strides = array<i32>} : memref<64x128xf32, #tpu.memory_space<vmem>>, vector<8x128xf32>,
    %c6_i32 = arith.constant 6 : i32
    %c8_i32_126 = arith.constant 8 : i32
    %250 = arith.muli %c6_i32, %c8_i32_126 : i32
    %c0_127 = arith.constant 0 : index
    %c0_128 = arith.constant 0 : index
    %251 = vector.load %arg8[%c0_127, %c0_128] : memref<8x128xf32, #tpu.memory_space<vmem>>, vector<8x128xf32>
    %c0_129 = arith.constant 0 : index
    %c0_130 = arith.constant 0 : index
    %252 = vector.load %arg9[%c0_129, %c0_130] : memref<8x128xf32, #tpu.memory_space<vmem>>, vector<8x128xf32>
    %253 = arith.index_cast %250 : i32 to index
    %c0_131 = arith.constant 0 : index
    %254 = vector.load %arg7[%253, %c0_131] : memref<64x512xf32, #tpu.memory_space<vmem>>, vector<8x512xf32>
    %255 = arith.truncf %251 : vector<8x128xf32> to vector<8x128xbf16>
    %c0_132 = arith.constant 0 : index
    %c0_133 = arith.constant 0 : index
    %c0_134 = arith.constant 0 : index
    %256 = vector.load %arg3[%c0_132, %c0_133, %c0_134] : memref<2x128x512xbf16, #tpu.memory_space<vmem>>, vector<1x128x512xbf16>
    %257 = vector.shape_cast %256 : vector<1x128x512xbf16> to vector<128x512xbf16>
    %cst_135 = arith.constant dense<0.000000e+00> : vector<8x512xf32>
    %258 = tpu.matmul %255, %257, %cst_135 {dimension_numbers = #tpu.dot_dimension_numbers<[1], [0], [0], [1], [0, 0, 1, 1], [], []>} : vector<8x128xbf16>, vector<128x512xbf16>, vector<8x512xf32> -> vector<8x512xf32>
    %259 = arith.addf %254, %258 : vector<8x512xf32>
    %260 = vector.extract_strided_slice %259 {offsets = [0, 0], sizes = [8, 128], strides = [1, 1]} : vector<8x512xf32> to vector<8x128xf32>
    %261 = arith.negf %260 : vector<8x128xf32>
    %262 = math.exp %261 : vector<8x128xf32>
    %cst_136 = arith.constant 1.000000e+00 : f32
    %263 = vector.broadcast %cst_136 : f32 to vector<8x128xf32>
    %264 = arith.addf %263, %262 : vector<8x128xf32>
    %265 = arith.divf %263, %264 : vector<8x128xf32>
    %266 = vector.extract_strided_slice %259 {offsets = [0, 128], sizes = [8, 128], strides = [1, 1]} : vector<8x512xf32> to vector<8x128xf32>
    %267 = arith.negf %266 : vector<8x128xf32>
    %268 = math.exp %267 : vector<8x128xf32>
    %cst_137 = arith.constant 1.000000e+00 : f32
    %269 = vector.broadcast %cst_137 : f32 to vector<8x128xf32>
    %270 = arith.addf %269, %268 : vector<8x128xf32>
    %271 = arith.divf %269, %270 : vector<8x128xf32>
    %272 = vector.extract_strided_slice %259 {offsets = [0, 256], sizes = [8, 128], strides = [1, 1]} : vector<8x512xf32> to vector<8x128xf32>
    %273 = math.tanh %272 : vector<8x128xf32>
    %274 = vector.extract_strided_slice %259 {offsets = [0, 384], sizes = [8, 128], strides = [1, 1]} : vector<8x512xf32> to vector<8x128xf32>
    %275 = arith.negf %274 : vector<8x128xf32>
    %276 = math.exp %275 : vector<8x128xf32>
    %cst_138 = arith.constant 1.000000e+00 : f32
    %277 = vector.broadcast %cst_138 : f32 to vector<8x128xf32>
    %278 = arith.addf %277, %276 : vector<8x128xf32>
    %279 = arith.divf %277, %278 : vector<8x128xf32>
    %280 = arith.mulf %271, %252 : vector<8x128xf32>
    %281 = arith.mulf %265, %273 : vector<8x128xf32>
    %282 = arith.addf %280, %281 : vector<8x128xf32>
    %283 = math.tanh %282 : vector<8x128xf32>
    %284 = arith.mulf %279, %283 : vector<8x128xf32>
    %c0_139 = arith.constant 0 : index
    %c0_140 = arith.constant 0 : index
    %285 = vector.load %arg9[%c0_139, %c0_140] : memref<8x128xf32, #tpu.memory_space<vmem>>, vector<8x128xf32>
    tpu.vector_store %arg9[%c0_139, %c0_140], %282 {strides = array<i32>} : memref<8x128xf32, #tpu.memory_space<vmem>>, vector<8x128xf32>,
    %c0_141 = arith.constant 0 : index
    %c0_142 = arith.constant 0 : index
    %286 = vector.load %arg8[%c0_141, %c0_142] : memref<8x128xf32, #tpu.memory_space<vmem>>, vector<8x128xf32>
    tpu.vector_store %arg8[%c0_141, %c0_142], %284 {strides = array<i32>} : memref<8x128xf32, #tpu.memory_space<vmem>>, vector<8x128xf32>,
    %287 = arith.index_cast %250 : i32 to index
    %c0_143 = arith.constant 0 : index
    %288 = vector.load %arg6[%287, %c0_143] : memref<64x128xf32, #tpu.memory_space<vmem>>, vector<8x128xf32>
    tpu.vector_store %arg6[%287, %c0_143], %284 {strides = array<i32>} : memref<64x128xf32, #tpu.memory_space<vmem>>, vector<8x128xf32>,
    %c7_i32 = arith.constant 7 : i32
    %c8_i32_144 = arith.constant 8 : i32
    %289 = arith.muli %c7_i32, %c8_i32_144 : i32
    %c0_145 = arith.constant 0 : index
    %c0_146 = arith.constant 0 : index
    %290 = vector.load %arg8[%c0_145, %c0_146] : memref<8x128xf32, #tpu.memory_space<vmem>>, vector<8x128xf32>
    %c0_147 = arith.constant 0 : index
    %c0_148 = arith.constant 0 : index
    %291 = vector.load %arg9[%c0_147, %c0_148] : memref<8x128xf32, #tpu.memory_space<vmem>>, vector<8x128xf32>
    %292 = arith.index_cast %289 : i32 to index
    %c0_149 = arith.constant 0 : index
    %293 = vector.load %arg7[%292, %c0_149] : memref<64x512xf32, #tpu.memory_space<vmem>>, vector<8x512xf32>
    %294 = arith.truncf %290 : vector<8x128xf32> to vector<8x128xbf16>
    %c0_150 = arith.constant 0 : index
    %c0_151 = arith.constant 0 : index
    %c0_152 = arith.constant 0 : index
    %295 = vector.load %arg3[%c0_150, %c0_151, %c0_152] : memref<2x128x512xbf16, #tpu.memory_space<vmem>>, vector<1x128x512xbf16>
    %296 = vector.shape_cast %295 : vector<1x128x512xbf16> to vector<128x512xbf16>
    %cst_153 = arith.constant dense<0.000000e+00> : vector<8x512xf32>
    %297 = tpu.matmul %294, %296, %cst_153 {dimension_numbers = #tpu.dot_dimension_numbers<[1], [0], [0], [1], [0, 0, 1, 1], [], []>} : vector<8x128xbf16>, vector<128x512xbf16>, vector<8x512xf32> -> vector<8x512xf32>
    %298 = arith.addf %293, %297 : vector<8x512xf32>
    %299 = vector.extract_strided_slice %298 {offsets = [0, 0], sizes = [8, 128], strides = [1, 1]} : vector<8x512xf32> to vector<8x128xf32>
    %300 = arith.negf %299 : vector<8x128xf32>
    %301 = math.exp %300 : vector<8x128xf32>
    %cst_154 = arith.constant 1.000000e+00 : f32
    %302 = vector.broadcast %cst_154 : f32 to vector<8x128xf32>
    %303 = arith.addf %302, %301 : vector<8x128xf32>
    %304 = arith.divf %302, %303 : vector<8x128xf32>
    %305 = vector.extract_strided_slice %298 {offsets = [0, 128], sizes = [8, 128], strides = [1, 1]} : vector<8x512xf32> to vector<8x128xf32>
    %306 = arith.negf %305 : vector<8x128xf32>
    %307 = math.exp %306 : vector<8x128xf32>
    %cst_155 = arith.constant 1.000000e+00 : f32
    %308 = vector.broadcast %cst_155 : f32 to vector<8x128xf32>
    %309 = arith.addf %308, %307 : vector<8x128xf32>
    %310 = arith.divf %308, %309 : vector<8x128xf32>
    %311 = vector.extract_strided_slice %298 {offsets = [0, 256], sizes = [8, 128], strides = [1, 1]} : vector<8x512xf32> to vector<8x128xf32>
    %312 = math.tanh %311 : vector<8x128xf32>
    %313 = vector.extract_strided_slice %298 {offsets = [0, 384], sizes = [8, 128], strides = [1, 1]} : vector<8x512xf32> to vector<8x128xf32>
    %314 = arith.negf %313 : vector<8x128xf32>
    %315 = math.exp %314 : vector<8x128xf32>
    %cst_156 = arith.constant 1.000000e+00 : f32
    %316 = vector.broadcast %cst_156 : f32 to vector<8x128xf32>
    %317 = arith.addf %316, %315 : vector<8x128xf32>
    %318 = arith.divf %316, %317 : vector<8x128xf32>
    %319 = arith.mulf %310, %291 : vector<8x128xf32>
    %320 = arith.mulf %304, %312 : vector<8x128xf32>
    %321 = arith.addf %319, %320 : vector<8x128xf32>
    %322 = math.tanh %321 : vector<8x128xf32>
    %323 = arith.mulf %318, %322 : vector<8x128xf32>
    %c0_157 = arith.constant 0 : index
    %c0_158 = arith.constant 0 : index
    %324 = vector.load %arg9[%c0_157, %c0_158] : memref<8x128xf32, #tpu.memory_space<vmem>>, vector<8x128xf32>
    tpu.vector_store %arg9[%c0_157, %c0_158], %321 {strides = array<i32>} : memref<8x128xf32, #tpu.memory_space<vmem>>, vector<8x128xf32>,
    %c0_159 = arith.constant 0 : index
    %c0_160 = arith.constant 0 : index
    %325 = vector.load %arg8[%c0_159, %c0_160] : memref<8x128xf32, #tpu.memory_space<vmem>>, vector<8x128xf32>
    tpu.vector_store %arg8[%c0_159, %c0_160], %323 {strides = array<i32>} : memref<8x128xf32, #tpu.memory_space<vmem>>, vector<8x128xf32>,
    %326 = arith.index_cast %289 : i32 to index
    %c0_161 = arith.constant 0 : index
    %327 = vector.load %arg6[%326, %c0_161] : memref<64x128xf32, #tpu.memory_space<vmem>>, vector<8x128xf32>
    tpu.vector_store %arg6[%326, %c0_161], %323 {strides = array<i32>} : memref<64x128xf32, #tpu.memory_space<vmem>>, vector<8x128xf32>,
    %c8_i32_162 = arith.constant 8 : i32
    %c0_163 = arith.constant 0 : index
    %c0_164 = arith.constant 0 : index
    %328 = vector.load %arg6[%c0_163, %c0_164] : memref<64x128xf32, #tpu.memory_space<vmem>>, vector<64x128xf32>
    %329 = arith.truncf %328 : vector<64x128xf32> to vector<64x128xbf16>
    %c1 = arith.constant 1 : index
    %c0_165 = arith.constant 0 : index
    %c0_166 = arith.constant 0 : index
    %330 = vector.load %arg2[%c1, %c0_165, %c0_166] : memref<2x128x512xbf16, #tpu.memory_space<vmem>>, vector<1x128x512xbf16>
    %331 = vector.shape_cast %330 : vector<1x128x512xbf16> to vector<128x512xbf16>
    %cst_167 = arith.constant dense<0.000000e+00> : vector<64x512xf32>
    %332 = tpu.matmul %329, %331, %cst_167 {dimension_numbers = #tpu.dot_dimension_numbers<[1], [0], [0], [1], [0, 0, 1, 1], [], []>} : vector<64x128xbf16>, vector<128x512xbf16>, vector<64x512xf32> -> vector<64x512xf32>
    %c1_168 = arith.constant 1 : index
    %c0_169 = arith.constant 0 : index
    %c0_170 = arith.constant 0 : index
    %333 = vector.load %arg4[%c1_168, %c0_169, %c0_170] : memref<2x1x512xf32, #tpu.memory_space<vmem>>, vector<1x1x512xf32>
    %334 = vector.shape_cast %333 : vector<1x1x512xf32> to vector<1x512xf32>
    %335 = vector.broadcast %334 : vector<1x512xf32> to vector<64x512xf32>
    %336 = arith.addf %332, %335 : vector<64x512xf32>
    %c0_171 = arith.constant 0 : index
    %c0_172 = arith.constant 0 : index
    %337 = vector.load %arg7[%c0_171, %c0_172] : memref<64x512xf32, #tpu.memory_space<vmem>>, vector<64x512xf32>
    tpu.vector_store %arg7[%c0_171, %c0_172], %336 {strides = array<i32>} : memref<64x512xf32, #tpu.memory_space<vmem>>, vector<64x512xf32>,
    %cst_173 = arith.constant 0.000000e+00 : f32
    %338 = vector.broadcast %cst_173 : f32 to vector<8x128xf32>
    %c0_174 = arith.constant 0 : index
    %c0_175 = arith.constant 0 : index
    %339 = vector.load %arg8[%c0_174, %c0_175] : memref<8x128xf32, #tpu.memory_space<vmem>>, vector<8x128xf32>
    tpu.vector_store %arg8[%c0_174, %c0_175], %338 {strides = array<i32>} : memref<8x128xf32, #tpu.memory_space<vmem>>, vector<8x128xf32>,
    %cst_176 = arith.constant 0.000000e+00 : f32
    %340 = vector.broadcast %cst_176 : f32 to vector<8x128xf32>
    %c0_177 = arith.constant 0 : index
    %c0_178 = arith.constant 0 : index
    %341 = vector.load %arg9[%c0_177, %c0_178] : memref<8x128xf32, #tpu.memory_space<vmem>>, vector<8x128xf32>
    tpu.vector_store %arg9[%c0_177, %c0_178], %340 {strides = array<i32>} : memref<8x128xf32, #tpu.memory_space<vmem>>, vector<8x128xf32>,
    %c0_i32_179 = arith.constant 0 : i32
    %c8_i32_180 = arith.constant 8 : i32
    %342 = arith.muli %c0_i32_179, %c8_i32_180 : i32
    %c0_181 = arith.constant 0 : index
    %c0_182 = arith.constant 0 : index
    %343 = vector.load %arg8[%c0_181, %c0_182] : memref<8x128xf32, #tpu.memory_space<vmem>>, vector<8x128xf32>
    %c0_183 = arith.constant 0 : index
    %c0_184 = arith.constant 0 : index
    %344 = vector.load %arg9[%c0_183, %c0_184] : memref<8x128xf32, #tpu.memory_space<vmem>>, vector<8x128xf32>
    %345 = arith.index_cast %342 : i32 to index
    %c0_185 = arith.constant 0 : index
    %346 = vector.load %arg7[%345, %c0_185] : memref<64x512xf32, #tpu.memory_space<vmem>>, vector<8x512xf32>
    %347 = arith.truncf %343 : vector<8x128xf32> to vector<8x128xbf16>
    %c1_186 = arith.constant 1 : index
    %c0_187 = arith.constant 0 : index
    %c0_188 = arith.constant 0 : index
    %348 = vector.load %arg3[%c1_186, %c0_187, %c0_188] : memref<2x128x512xbf16, #tpu.memory_space<vmem>>, vector<1x128x512xbf16>
    %349 = vector.shape_cast %348 : vector<1x128x512xbf16> to vector<128x512xbf16>
    %cst_189 = arith.constant dense<0.000000e+00> : vector<8x512xf32>
    %350 = tpu.matmul %347, %349, %cst_189 {dimension_numbers = #tpu.dot_dimension_numbers<[1], [0], [0], [1], [0, 0, 1, 1], [], []>} : vector<8x128xbf16>, vector<128x512xbf16>, vector<8x512xf32> -> vector<8x512xf32>
    %351 = arith.addf %346, %350 : vector<8x512xf32>
    %352 = vector.extract_strided_slice %351 {offsets = [0, 0], sizes = [8, 128], strides = [1, 1]} : vector<8x512xf32> to vector<8x128xf32>
    %353 = arith.negf %352 : vector<8x128xf32>
    %354 = math.exp %353 : vector<8x128xf32>
    %cst_190 = arith.constant 1.000000e+00 : f32
    %355 = vector.broadcast %cst_190 : f32 to vector<8x128xf32>
    %356 = arith.addf %355, %354 : vector<8x128xf32>
    %357 = arith.divf %355, %356 : vector<8x128xf32>
    %358 = vector.extract_strided_slice %351 {offsets = [0, 128], sizes = [8, 128], strides = [1, 1]} : vector<8x512xf32> to vector<8x128xf32>
    %359 = arith.negf %358 : vector<8x128xf32>
    %360 = math.exp %359 : vector<8x128xf32>
    %cst_191 = arith.constant 1.000000e+00 : f32
    %361 = vector.broadcast %cst_191 : f32 to vector<8x128xf32>
    %362 = arith.addf %361, %360 : vector<8x128xf32>
    %363 = arith.divf %361, %362 : vector<8x128xf32>
    %364 = vector.extract_strided_slice %351 {offsets = [0, 256], sizes = [8, 128], strides = [1, 1]} : vector<8x512xf32> to vector<8x128xf32>
    %365 = math.tanh %364 : vector<8x128xf32>
    %366 = vector.extract_strided_slice %351 {offsets = [0, 384], sizes = [8, 128], strides = [1, 1]} : vector<8x512xf32> to vector<8x128xf32>
    %367 = arith.negf %366 : vector<8x128xf32>
    %368 = math.exp %367 : vector<8x128xf32>
    %cst_192 = arith.constant 1.000000e+00 : f32
    %369 = vector.broadcast %cst_192 : f32 to vector<8x128xf32>
    %370 = arith.addf %369, %368 : vector<8x128xf32>
    %371 = arith.divf %369, %370 : vector<8x128xf32>
    %372 = arith.mulf %363, %344 : vector<8x128xf32>
    %373 = arith.mulf %357, %365 : vector<8x128xf32>
    %374 = arith.addf %372, %373 : vector<8x128xf32>
    %375 = math.tanh %374 : vector<8x128xf32>
    %376 = arith.mulf %371, %375 : vector<8x128xf32>
    %c0_193 = arith.constant 0 : index
    %c0_194 = arith.constant 0 : index
    %377 = vector.load %arg9[%c0_193, %c0_194] : memref<8x128xf32, #tpu.memory_space<vmem>>, vector<8x128xf32>
    tpu.vector_store %arg9[%c0_193, %c0_194], %374 {strides = array<i32>} : memref<8x128xf32, #tpu.memory_space<vmem>>, vector<8x128xf32>,
    %c0_195 = arith.constant 0 : index
    %c0_196 = arith.constant 0 : index
    %378 = vector.load %arg8[%c0_195, %c0_196] : memref<8x128xf32, #tpu.memory_space<vmem>>, vector<8x128xf32>
    tpu.vector_store %arg8[%c0_195, %c0_196], %376 {strides = array<i32>} : memref<8x128xf32, #tpu.memory_space<vmem>>, vector<8x128xf32>,
    %379 = arith.index_cast %342 : i32 to index
    %c0_197 = arith.constant 0 : index
    %380 = vector.load %arg5[%379, %c0_197] : memref<64x128xf32, #tpu.memory_space<vmem>>, vector<8x128xf32>
    tpu.vector_store %arg5[%379, %c0_197], %376 {strides = array<i32>} : memref<64x128xf32, #tpu.memory_space<vmem>>, vector<8x128xf32>,
    %c1_i32_198 = arith.constant 1 : i32
    %c8_i32_199 = arith.constant 8 : i32
    %381 = arith.muli %c1_i32_198, %c8_i32_199 : i32
    %c0_200 = arith.constant 0 : index
    %c0_201 = arith.constant 0 : index
    %382 = vector.load %arg8[%c0_200, %c0_201] : memref<8x128xf32, #tpu.memory_space<vmem>>, vector<8x128xf32>
    %c0_202 = arith.constant 0 : index
    %c0_203 = arith.constant 0 : index
    %383 = vector.load %arg9[%c0_202, %c0_203] : memref<8x128xf32, #tpu.memory_space<vmem>>, vector<8x128xf32>
    %384 = arith.index_cast %381 : i32 to index
    %c0_204 = arith.constant 0 : index
    %385 = vector.load %arg7[%384, %c0_204] : memref<64x512xf32, #tpu.memory_space<vmem>>, vector<8x512xf32>
    %386 = arith.truncf %382 : vector<8x128xf32> to vector<8x128xbf16>
    %c1_205 = arith.constant 1 : index
    %c0_206 = arith.constant 0 : index
    %c0_207 = arith.constant 0 : index
    %387 = vector.load %arg3[%c1_205, %c0_206, %c0_207] : memref<2x128x512xbf16, #tpu.memory_space<vmem>>, vector<1x128x512xbf16>
    %388 = vector.shape_cast %387 : vector<1x128x512xbf16> to vector<128x512xbf16>
    %cst_208 = arith.constant dense<0.000000e+00> : vector<8x512xf32>
    %389 = tpu.matmul %386, %388, %cst_208 {dimension_numbers = #tpu.dot_dimension_numbers<[1], [0], [0], [1], [0, 0, 1, 1], [], []>} : vector<8x128xbf16>, vector<128x512xbf16>, vector<8x512xf32> -> vector<8x512xf32>
    %390 = arith.addf %385, %389 : vector<8x512xf32>
    %391 = vector.extract_strided_slice %390 {offsets = [0, 0], sizes = [8, 128], strides = [1, 1]} : vector<8x512xf32> to vector<8x128xf32>
    %392 = arith.negf %391 : vector<8x128xf32>
    %393 = math.exp %392 : vector<8x128xf32>
    %cst_209 = arith.constant 1.000000e+00 : f32
    %394 = vector.broadcast %cst_209 : f32 to vector<8x128xf32>
    %395 = arith.addf %394, %393 : vector<8x128xf32>
    %396 = arith.divf %394, %395 : vector<8x128xf32>
    %397 = vector.extract_strided_slice %390 {offsets = [0, 128], sizes = [8, 128], strides = [1, 1]} : vector<8x512xf32> to vector<8x128xf32>
    %398 = arith.negf %397 : vector<8x128xf32>
    %399 = math.exp %398 : vector<8x128xf32>
    %cst_210 = arith.constant 1.000000e+00 : f32
    %400 = vector.broadcast %cst_210 : f32 to vector<8x128xf32>
    %401 = arith.addf %400, %399 : vector<8x128xf32>
    %402 = arith.divf %400, %401 : vector<8x128xf32>
    %403 = vector.extract_strided_slice %390 {offsets = [0, 256], sizes = [8, 128], strides = [1, 1]} : vector<8x512xf32> to vector<8x128xf32>
    %404 = math.tanh %403 : vector<8x128xf32>
    %405 = vector.extract_strided_slice %390 {offsets = [0, 384], sizes = [8, 128], strides = [1, 1]} : vector<8x512xf32> to vector<8x128xf32>
    %406 = arith.negf %405 : vector<8x128xf32>
    %407 = math.exp %406 : vector<8x128xf32>
    %cst_211 = arith.constant 1.000000e+00 : f32
    %408 = vector.broadcast %cst_211 : f32 to vector<8x128xf32>
    %409 = arith.addf %408, %407 : vector<8x128xf32>
    %410 = arith.divf %408, %409 : vector<8x128xf32>
    %411 = arith.mulf %402, %383 : vector<8x128xf32>
    %412 = arith.mulf %396, %404 : vector<8x128xf32>
    %413 = arith.addf %411, %412 : vector<8x128xf32>
    %414 = math.tanh %413 : vector<8x128xf32>
    %415 = arith.mulf %410, %414 : vector<8x128xf32>
    %c0_212 = arith.constant 0 : index
    %c0_213 = arith.constant 0 : index
    %416 = vector.load %arg9[%c0_212, %c0_213] : memref<8x128xf32, #tpu.memory_space<vmem>>, vector<8x128xf32>
    tpu.vector_store %arg9[%c0_212, %c0_213], %413 {strides = array<i32>} : memref<8x128xf32, #tpu.memory_space<vmem>>, vector<8x128xf32>,
    %c0_214 = arith.constant 0 : index
    %c0_215 = arith.constant 0 : index
    %417 = vector.load %arg8[%c0_214, %c0_215] : memref<8x128xf32, #tpu.memory_space<vmem>>, vector<8x128xf32>
    tpu.vector_store %arg8[%c0_214, %c0_215], %415 {strides = array<i32>} : memref<8x128xf32, #tpu.memory_space<vmem>>, vector<8x128xf32>,
    %418 = arith.index_cast %381 : i32 to index
    %c0_216 = arith.constant 0 : index
    %419 = vector.load %arg5[%418, %c0_216] : memref<64x128xf32, #tpu.memory_space<vmem>>, vector<8x128xf32>
    tpu.vector_store %arg5[%418, %c0_216], %415 {strides = array<i32>} : memref<64x128xf32, #tpu.memory_space<vmem>>, vector<8x128xf32>,
    %c2_i32_217 = arith.constant 2 : i32
    %c8_i32_218 = arith.constant 8 : i32
    %420 = arith.muli %c2_i32_217, %c8_i32_218 : i32
    %c0_219 = arith.constant 0 : index
    %c0_220 = arith.constant 0 : index
    %421 = vector.load %arg8[%c0_219, %c0_220] : memref<8x128xf32, #tpu.memory_space<vmem>>, vector<8x128xf32>
    %c0_221 = arith.constant 0 : index
    %c0_222 = arith.constant 0 : index
    %422 = vector.load %arg9[%c0_221, %c0_222] : memref<8x128xf32, #tpu.memory_space<vmem>>, vector<8x128xf32>
    %423 = arith.index_cast %420 : i32 to index
    %c0_223 = arith.constant 0 : index
    %424 = vector.load %arg7[%423, %c0_223] : memref<64x512xf32, #tpu.memory_space<vmem>>, vector<8x512xf32>
    %425 = arith.truncf %421 : vector<8x128xf32> to vector<8x128xbf16>
    %c1_224 = arith.constant 1 : index
    %c0_225 = arith.constant 0 : index
    %c0_226 = arith.constant 0 : index
    %426 = vector.load %arg3[%c1_224, %c0_225, %c0_226] : memref<2x128x512xbf16, #tpu.memory_space<vmem>>, vector<1x128x512xbf16>
    %427 = vector.shape_cast %426 : vector<1x128x512xbf16> to vector<128x512xbf16>
    %cst_227 = arith.constant dense<0.000000e+00> : vector<8x512xf32>
    %428 = tpu.matmul %425, %427, %cst_227 {dimension_numbers = #tpu.dot_dimension_numbers<[1], [0], [0], [1], [0, 0, 1, 1], [], []>} : vector<8x128xbf16>, vector<128x512xbf16>, vector<8x512xf32> -> vector<8x512xf32>
    %429 = arith.addf %424, %428 : vector<8x512xf32>
    %430 = vector.extract_strided_slice %429 {offsets = [0, 0], sizes = [8, 128], strides = [1, 1]} : vector<8x512xf32> to vector<8x128xf32>
    %431 = arith.negf %430 : vector<8x128xf32>
    %432 = math.exp %431 : vector<8x128xf32>
    %cst_228 = arith.constant 1.000000e+00 : f32
    %433 = vector.broadcast %cst_228 : f32 to vector<8x128xf32>
    %434 = arith.addf %433, %432 : vector<8x128xf32>
    %435 = arith.divf %433, %434 : vector<8x128xf32>
    %436 = vector.extract_strided_slice %429 {offsets = [0, 128], sizes = [8, 128], strides = [1, 1]} : vector<8x512xf32> to vector<8x128xf32>
    %437 = arith.negf %436 : vector<8x128xf32>
    %438 = math.exp %437 : vector<8x128xf32>
    %cst_229 = arith.constant 1.000000e+00 : f32
    %439 = vector.broadcast %cst_229 : f32 to vector<8x128xf32>
    %440 = arith.addf %439, %438 : vector<8x128xf32>
    %441 = arith.divf %439, %440 : vector<8x128xf32>
    %442 = vector.extract_strided_slice %429 {offsets = [0, 256], sizes = [8, 128], strides = [1, 1]} : vector<8x512xf32> to vector<8x128xf32>
    %443 = math.tanh %442 : vector<8x128xf32>
    %444 = vector.extract_strided_slice %429 {offsets = [0, 384], sizes = [8, 128], strides = [1, 1]} : vector<8x512xf32> to vector<8x128xf32>
    %445 = arith.negf %444 : vector<8x128xf32>
    %446 = math.exp %445 : vector<8x128xf32>
    %cst_230 = arith.constant 1.000000e+00 : f32
    %447 = vector.broadcast %cst_230 : f32 to vector<8x128xf32>
    %448 = arith.addf %447, %446 : vector<8x128xf32>
    %449 = arith.divf %447, %448 : vector<8x128xf32>
    %450 = arith.mulf %441, %422 : vector<8x128xf32>
    %451 = arith.mulf %435, %443 : vector<8x128xf32>
    %452 = arith.addf %450, %451 : vector<8x128xf32>
    %453 = math.tanh %452 : vector<8x128xf32>
    %454 = arith.mulf %449, %453 : vector<8x128xf32>
    %c0_231 = arith.constant 0 : index
    %c0_232 = arith.constant 0 : index
    %455 = vector.load %arg9[%c0_231, %c0_232] : memref<8x128xf32, #tpu.memory_space<vmem>>, vector<8x128xf32>
    tpu.vector_store %arg9[%c0_231, %c0_232], %452 {strides = array<i32>} : memref<8x128xf32, #tpu.memory_space<vmem>>, vector<8x128xf32>,
    %c0_233 = arith.constant 0 : index
    %c0_234 = arith.constant 0 : index
    %456 = vector.load %arg8[%c0_233, %c0_234] : memref<8x128xf32, #tpu.memory_space<vmem>>, vector<8x128xf32>
    tpu.vector_store %arg8[%c0_233, %c0_234], %454 {strides = array<i32>} : memref<8x128xf32, #tpu.memory_space<vmem>>, vector<8x128xf32>,
    %457 = arith.index_cast %420 : i32 to index
    %c0_235 = arith.constant 0 : index
    %458 = vector.load %arg5[%457, %c0_235] : memref<64x128xf32, #tpu.memory_space<vmem>>, vector<8x128xf32>
    tpu.vector_store %arg5[%457, %c0_235], %454 {strides = array<i32>} : memref<64x128xf32, #tpu.memory_space<vmem>>, vector<8x128xf32>,
    %c3_i32_236 = arith.constant 3 : i32
    %c8_i32_237 = arith.constant 8 : i32
    %459 = arith.muli %c3_i32_236, %c8_i32_237 : i32
    %c0_238 = arith.constant 0 : index
    %c0_239 = arith.constant 0 : index
    %460 = vector.load %arg8[%c0_238, %c0_239] : memref<8x128xf32, #tpu.memory_space<vmem>>, vector<8x128xf32>
    %c0_240 = arith.constant 0 : index
    %c0_241 = arith.constant 0 : index
    %461 = vector.load %arg9[%c0_240, %c0_241] : memref<8x128xf32, #tpu.memory_space<vmem>>, vector<8x128xf32>
    %462 = arith.index_cast %459 : i32 to index
    %c0_242 = arith.constant 0 : index
    %463 = vector.load %arg7[%462, %c0_242] : memref<64x512xf32, #tpu.memory_space<vmem>>, vector<8x512xf32>
    %464 = arith.truncf %460 : vector<8x128xf32> to vector<8x128xbf16>
    %c1_243 = arith.constant 1 : index
    %c0_244 = arith.constant 0 : index
    %c0_245 = arith.constant 0 : index
    %465 = vector.load %arg3[%c1_243, %c0_244, %c0_245] : memref<2x128x512xbf16, #tpu.memory_space<vmem>>, vector<1x128x512xbf16>
    %466 = vector.shape_cast %465 : vector<1x128x512xbf16> to vector<128x512xbf16>
    %cst_246 = arith.constant dense<0.000000e+00> : vector<8x512xf32>
    %467 = tpu.matmul %464, %466, %cst_246 {dimension_numbers = #tpu.dot_dimension_numbers<[1], [0], [0], [1], [0, 0, 1, 1], [], []>} : vector<8x128xbf16>, vector<128x512xbf16>, vector<8x512xf32> -> vector<8x512xf32>
    %468 = arith.addf %463, %467 : vector<8x512xf32>
    %469 = vector.extract_strided_slice %468 {offsets = [0, 0], sizes = [8, 128], strides = [1, 1]} : vector<8x512xf32> to vector<8x128xf32>
    %470 = arith.negf %469 : vector<8x128xf32>
    %471 = math.exp %470 : vector<8x128xf32>
    %cst_247 = arith.constant 1.000000e+00 : f32
    %472 = vector.broadcast %cst_247 : f32 to vector<8x128xf32>
    %473 = arith.addf %472, %471 : vector<8x128xf32>
    %474 = arith.divf %472, %473 : vector<8x128xf32>
    %475 = vector.extract_strided_slice %468 {offsets = [0, 128], sizes = [8, 128], strides = [1, 1]} : vector<8x512xf32> to vector<8x128xf32>
    %476 = arith.negf %475 : vector<8x128xf32>
    %477 = math.exp %476 : vector<8x128xf32>
    %cst_248 = arith.constant 1.000000e+00 : f32
    %478 = vector.broadcast %cst_248 : f32 to vector<8x128xf32>
    %479 = arith.addf %478, %477 : vector<8x128xf32>
    %480 = arith.divf %478, %479 : vector<8x128xf32>
    %481 = vector.extract_strided_slice %468 {offsets = [0, 256], sizes = [8, 128], strides = [1, 1]} : vector<8x512xf32> to vector<8x128xf32>
    %482 = math.tanh %481 : vector<8x128xf32>
    %483 = vector.extract_strided_slice %468 {offsets = [0, 384], sizes = [8, 128], strides = [1, 1]} : vector<8x512xf32> to vector<8x128xf32>
    %484 = arith.negf %483 : vector<8x128xf32>
    %485 = math.exp %484 : vector<8x128xf32>
    %cst_249 = arith.constant 1.000000e+00 : f32
    %486 = vector.broadcast %cst_249 : f32 to vector<8x128xf32>
    %487 = arith.addf %486, %485 : vector<8x128xf32>
    %488 = arith.divf %486, %487 : vector<8x128xf32>
    %489 = arith.mulf %480, %461 : vector<8x128xf32>
    %490 = arith.mulf %474, %482 : vector<8x128xf32>
    %491 = arith.addf %489, %490 : vector<8x128xf32>
    %492 = math.tanh %491 : vector<8x128xf32>
    %493 = arith.mulf %488, %492 : vector<8x128xf32>
    %c0_250 = arith.constant 0 : index
    %c0_251 = arith.constant 0 : index
    %494 = vector.load %arg9[%c0_250, %c0_251] : memref<8x128xf32, #tpu.memory_space<vmem>>, vector<8x128xf32>
    tpu.vector_store %arg9[%c0_250, %c0_251], %491 {strides = array<i32>} : memref<8x128xf32, #tpu.memory_space<vmem>>, vector<8x128xf32>,
    %c0_252 = arith.constant 0 : index
    %c0_253 = arith.constant 0 : index
    %495 = vector.load %arg8[%c0_252, %c0_253] : memref<8x128xf32, #tpu.memory_space<vmem>>, vector<8x128xf32>
    tpu.vector_store %arg8[%c0_252, %c0_253], %493 {strides = array<i32>} : memref<8x128xf32, #tpu.memory_space<vmem>>, vector<8x128xf32>,
    %496 = arith.index_cast %459 : i32 to index
    %c0_254 = arith.constant 0 : index
    %497 = vector.load %arg5[%496, %c0_254] : memref<64x128xf32, #tpu.memory_space<vmem>>, vector<8x128xf32>
    tpu.vector_store %arg5[%496, %c0_254], %493 {strides = array<i32>} : memref<64x128xf32, #tpu.memory_space<vmem>>, vector<8x128xf32>,
    %c4_i32_255 = arith.constant 4 : i32
    %c8_i32_256 = arith.constant 8 : i32
    %498 = arith.muli %c4_i32_255, %c8_i32_256 : i32
    %c0_257 = arith.constant 0 : index
    %c0_258 = arith.constant 0 : index
    %499 = vector.load %arg8[%c0_257, %c0_258] : memref<8x128xf32, #tpu.memory_space<vmem>>, vector<8x128xf32>
    %c0_259 = arith.constant 0 : index
    %c0_260 = arith.constant 0 : index
    %500 = vector.load %arg9[%c0_259, %c0_260] : memref<8x128xf32, #tpu.memory_space<vmem>>, vector<8x128xf32>
    %501 = arith.index_cast %498 : i32 to index
    %c0_261 = arith.constant 0 : index
    %502 = vector.load %arg7[%501, %c0_261] : memref<64x512xf32, #tpu.memory_space<vmem>>, vector<8x512xf32>
    %503 = arith.truncf %499 : vector<8x128xf32> to vector<8x128xbf16>
    %c1_262 = arith.constant 1 : index
    %c0_263 = arith.constant 0 : index
    %c0_264 = arith.constant 0 : index
    %504 = vector.load %arg3[%c1_262, %c0_263, %c0_264] : memref<2x128x512xbf16, #tpu.memory_space<vmem>>, vector<1x128x512xbf16>
    %505 = vector.shape_cast %504 : vector<1x128x512xbf16> to vector<128x512xbf16>
    %cst_265 = arith.constant dense<0.000000e+00> : vector<8x512xf32>
    %506 = tpu.matmul %503, %505, %cst_265 {dimension_numbers = #tpu.dot_dimension_numbers<[1], [0], [0], [1], [0, 0, 1, 1], [], []>} : vector<8x128xbf16>, vector<128x512xbf16>, vector<8x512xf32> -> vector<8x512xf32>
    %507 = arith.addf %502, %506 : vector<8x512xf32>
    %508 = vector.extract_strided_slice %507 {offsets = [0, 0], sizes = [8, 128], strides = [1, 1]} : vector<8x512xf32> to vector<8x128xf32>
    %509 = arith.negf %508 : vector<8x128xf32>
    %510 = math.exp %509 : vector<8x128xf32>
    %cst_266 = arith.constant 1.000000e+00 : f32
    %511 = vector.broadcast %cst_266 : f32 to vector<8x128xf32>
    %512 = arith.addf %511, %510 : vector<8x128xf32>
    %513 = arith.divf %511, %512 : vector<8x128xf32>
    %514 = vector.extract_strided_slice %507 {offsets = [0, 128], sizes = [8, 128], strides = [1, 1]} : vector<8x512xf32> to vector<8x128xf32>
    %515 = arith.negf %514 : vector<8x128xf32>
    %516 = math.exp %515 : vector<8x128xf32>
    %cst_267 = arith.constant 1.000000e+00 : f32
    %517 = vector.broadcast %cst_267 : f32 to vector<8x128xf32>
    %518 = arith.addf %517, %516 : vector<8x128xf32>
    %519 = arith.divf %517, %518 : vector<8x128xf32>
    %520 = vector.extract_strided_slice %507 {offsets = [0, 256], sizes = [8, 128], strides = [1, 1]} : vector<8x512xf32> to vector<8x128xf32>
    %521 = math.tanh %520 : vector<8x128xf32>
    %522 = vector.extract_strided_slice %507 {offsets = [0, 384], sizes = [8, 128], strides = [1, 1]} : vector<8x512xf32> to vector<8x128xf32>
    %523 = arith.negf %522 : vector<8x128xf32>
    %524 = math.exp %523 : vector<8x128xf32>
    %cst_268 = arith.constant 1.000000e+00 : f32
    %525 = vector.broadcast %cst_268 : f32 to vector<8x128xf32>
    %526 = arith.addf %525, %524 : vector<8x128xf32>
    %527 = arith.divf %525, %526 : vector<8x128xf32>
    %528 = arith.mulf %519, %500 : vector<8x128xf32>
    %529 = arith.mulf %513, %521 : vector<8x128xf32>
    %530 = arith.addf %528, %529 : vector<8x128xf32>
    %531 = math.tanh %530 : vector<8x128xf32>
    %532 = arith.mulf %527, %531 : vector<8x128xf32>
    %c0_269 = arith.constant 0 : index
    %c0_270 = arith.constant 0 : index
    %533 = vector.load %arg9[%c0_269, %c0_270] : memref<8x128xf32, #tpu.memory_space<vmem>>, vector<8x128xf32>
    tpu.vector_store %arg9[%c0_269, %c0_270], %530 {strides = array<i32>} : memref<8x128xf32, #tpu.memory_space<vmem>>, vector<8x128xf32>,
    %c0_271 = arith.constant 0 : index
    %c0_272 = arith.constant 0 : index
    %534 = vector.load %arg8[%c0_271, %c0_272] : memref<8x128xf32, #tpu.memory_space<vmem>>, vector<8x128xf32>
    tpu.vector_store %arg8[%c0_271, %c0_272], %532 {strides = array<i32>} : memref<8x128xf32, #tpu.memory_space<vmem>>, vector<8x128xf32>,
    %535 = arith.index_cast %498 : i32 to index
    %c0_273 = arith.constant 0 : index
    %536 = vector.load %arg5[%535, %c0_273] : memref<64x128xf32, #tpu.memory_space<vmem>>, vector<8x128xf32>
    tpu.vector_store %arg5[%535, %c0_273], %532 {strides = array<i32>} : memref<64x128xf32, #tpu.memory_space<vmem>>, vector<8x128xf32>,
    %c5_i32_274 = arith.constant 5 : i32
    %c8_i32_275 = arith.constant 8 : i32
    %537 = arith.muli %c5_i32_274, %c8_i32_275 : i32
    %c0_276 = arith.constant 0 : index
    %c0_277 = arith.constant 0 : index
    %538 = vector.load %arg8[%c0_276, %c0_277] : memref<8x128xf32, #tpu.memory_space<vmem>>, vector<8x128xf32>
    %c0_278 = arith.constant 0 : index
    %c0_279 = arith.constant 0 : index
    %539 = vector.load %arg9[%c0_278, %c0_279] : memref<8x128xf32, #tpu.memory_space<vmem>>, vector<8x128xf32>
    %540 = arith.index_cast %537 : i32 to index
    %c0_280 = arith.constant 0 : index
    %541 = vector.load %arg7[%540, %c0_280] : memref<64x512xf32, #tpu.memory_space<vmem>>, vector<8x512xf32>
    %542 = arith.truncf %538 : vector<8x128xf32> to vector<8x128xbf16>
    %c1_281 = arith.constant 1 : index
    %c0_282 = arith.constant 0 : index
    %c0_283 = arith.constant 0 : index
    %543 = vector.load %arg3[%c1_281, %c0_282, %c0_283] : memref<2x128x512xbf16, #tpu.memory_space<vmem>>, vector<1x128x512xbf16>
    %544 = vector.shape_cast %543 : vector<1x128x512xbf16> to vector<128x512xbf16>
    %cst_284 = arith.constant dense<0.000000e+00> : vector<8x512xf32>
    %545 = tpu.matmul %542, %544, %cst_284 {dimension_numbers = #tpu.dot_dimension_numbers<[1], [0], [0], [1], [0, 0, 1, 1], [], []>} : vector<8x128xbf16>, vector<128x512xbf16>, vector<8x512xf32> -> vector<8x512xf32>
    %546 = arith.addf %541, %545 : vector<8x512xf32>
    %547 = vector.extract_strided_slice %546 {offsets = [0, 0], sizes = [8, 128], strides = [1, 1]} : vector<8x512xf32> to vector<8x128xf32>
    %548 = arith.negf %547 : vector<8x128xf32>
    %549 = math.exp %548 : vector<8x128xf32>
    %cst_285 = arith.constant 1.000000e+00 : f32
    %550 = vector.broadcast %cst_285 : f32 to vector<8x128xf32>
    %551 = arith.addf %550, %549 : vector<8x128xf32>
    %552 = arith.divf %550, %551 : vector<8x128xf32>
    %553 = vector.extract_strided_slice %546 {offsets = [0, 128], sizes = [8, 128], strides = [1, 1]} : vector<8x512xf32> to vector<8x128xf32>
    %554 = arith.negf %553 : vector<8x128xf32>
    %555 = math.exp %554 : vector<8x128xf32>
    %cst_286 = arith.constant 1.000000e+00 : f32
    %556 = vector.broadcast %cst_286 : f32 to vector<8x128xf32>
    %557 = arith.addf %556, %555 : vector<8x128xf32>
    %558 = arith.divf %556, %557 : vector<8x128xf32>
    %559 = vector.extract_strided_slice %546 {offsets = [0, 256], sizes = [8, 128], strides = [1, 1]} : vector<8x512xf32> to vector<8x128xf32>
    %560 = math.tanh %559 : vector<8x128xf32>
    %561 = vector.extract_strided_slice %546 {offsets = [0, 384], sizes = [8, 128], strides = [1, 1]} : vector<8x512xf32> to vector<8x128xf32>
    %562 = arith.negf %561 : vector<8x128xf32>
    %563 = math.exp %562 : vector<8x128xf32>
    %cst_287 = arith.constant 1.000000e+00 : f32
    %564 = vector.broadcast %cst_287 : f32 to vector<8x128xf32>
    %565 = arith.addf %564, %563 : vector<8x128xf32>
    %566 = arith.divf %564, %565 : vector<8x128xf32>
    %567 = arith.mulf %558, %539 : vector<8x128xf32>
    %568 = arith.mulf %552, %560 : vector<8x128xf32>
    %569 = arith.addf %567, %568 : vector<8x128xf32>
    %570 = math.tanh %569 : vector<8x128xf32>
    %571 = arith.mulf %566, %570 : vector<8x128xf32>
    %c0_288 = arith.constant 0 : index
    %c0_289 = arith.constant 0 : index
    %572 = vector.load %arg9[%c0_288, %c0_289] : memref<8x128xf32, #tpu.memory_space<vmem>>, vector<8x128xf32>
    tpu.vector_store %arg9[%c0_288, %c0_289], %569 {strides = array<i32>} : memref<8x128xf32, #tpu.memory_space<vmem>>, vector<8x128xf32>,
    %c0_290 = arith.constant 0 : index
    %c0_291 = arith.constant 0 : index
    %573 = vector.load %arg8[%c0_290, %c0_291] : memref<8x128xf32, #tpu.memory_space<vmem>>, vector<8x128xf32>
    tpu.vector_store %arg8[%c0_290, %c0_291], %571 {strides = array<i32>} : memref<8x128xf32, #tpu.memory_space<vmem>>, vector<8x128xf32>,
    %574 = arith.index_cast %537 : i32 to index
    %c0_292 = arith.constant 0 : index
    %575 = vector.load %arg5[%574, %c0_292] : memref<64x128xf32, #tpu.memory_space<vmem>>, vector<8x128xf32>
    tpu.vector_store %arg5[%574, %c0_292], %571 {strides = array<i32>} : memref<64x128xf32, #tpu.memory_space<vmem>>, vector<8x128xf32>,
    %c6_i32_293 = arith.constant 6 : i32
    %c8_i32_294 = arith.constant 8 : i32
    %576 = arith.muli %c6_i32_293, %c8_i32_294 : i32
    %c0_295 = arith.constant 0 : index
    %c0_296 = arith.constant 0 : index
    %577 = vector.load %arg8[%c0_295, %c0_296] : memref<8x128xf32, #tpu.memory_space<vmem>>, vector<8x128xf32>
    %c0_297 = arith.constant 0 : index
    %c0_298 = arith.constant 0 : index
    %578 = vector.load %arg9[%c0_297, %c0_298] : memref<8x128xf32, #tpu.memory_space<vmem>>, vector<8x128xf32>
    %579 = arith.index_cast %576 : i32 to index
    %c0_299 = arith.constant 0 : index
    %580 = vector.load %arg7[%579, %c0_299] : memref<64x512xf32, #tpu.memory_space<vmem>>, vector<8x512xf32>
    %581 = arith.truncf %577 : vector<8x128xf32> to vector<8x128xbf16>
    %c1_300 = arith.constant 1 : index
    %c0_301 = arith.constant 0 : index
    %c0_302 = arith.constant 0 : index
    %582 = vector.load %arg3[%c1_300, %c0_301, %c0_302] : memref<2x128x512xbf16, #tpu.memory_space<vmem>>, vector<1x128x512xbf16>
    %583 = vector.shape_cast %582 : vector<1x128x512xbf16> to vector<128x512xbf16>
    %cst_303 = arith.constant dense<0.000000e+00> : vector<8x512xf32>
    %584 = tpu.matmul %581, %583, %cst_303 {dimension_numbers = #tpu.dot_dimension_numbers<[1], [0], [0], [1], [0, 0, 1, 1], [], []>} : vector<8x128xbf16>, vector<128x512xbf16>, vector<8x512xf32> -> vector<8x512xf32>
    %585 = arith.addf %580, %584 : vector<8x512xf32>
    %586 = vector.extract_strided_slice %585 {offsets = [0, 0], sizes = [8, 128], strides = [1, 1]} : vector<8x512xf32> to vector<8x128xf32>
    %587 = arith.negf %586 : vector<8x128xf32>
    %588 = math.exp %587 : vector<8x128xf32>
    %cst_304 = arith.constant 1.000000e+00 : f32
    %589 = vector.broadcast %cst_304 : f32 to vector<8x128xf32>
    %590 = arith.addf %589, %588 : vector<8x128xf32>
    %591 = arith.divf %589, %590 : vector<8x128xf32>
    %592 = vector.extract_strided_slice %585 {offsets = [0, 128], sizes = [8, 128], strides = [1, 1]} : vector<8x512xf32> to vector<8x128xf32>
    %593 = arith.negf %592 : vector<8x128xf32>
    %594 = math.exp %593 : vector<8x128xf32>
    %cst_305 = arith.constant 1.000000e+00 : f32
    %595 = vector.broadcast %cst_305 : f32 to vector<8x128xf32>
    %596 = arith.addf %595, %594 : vector<8x128xf32>
    %597 = arith.divf %595, %596 : vector<8x128xf32>
    %598 = vector.extract_strided_slice %585 {offsets = [0, 256], sizes = [8, 128], strides = [1, 1]} : vector<8x512xf32> to vector<8x128xf32>
    %599 = math.tanh %598 : vector<8x128xf32>
    %600 = vector.extract_strided_slice %585 {offsets = [0, 384], sizes = [8, 128], strides = [1, 1]} : vector<8x512xf32> to vector<8x128xf32>
    %601 = arith.negf %600 : vector<8x128xf32>
    %602 = math.exp %601 : vector<8x128xf32>
    %cst_306 = arith.constant 1.000000e+00 : f32
    %603 = vector.broadcast %cst_306 : f32 to vector<8x128xf32>
    %604 = arith.addf %603, %602 : vector<8x128xf32>
    %605 = arith.divf %603, %604 : vector<8x128xf32>
    %606 = arith.mulf %597, %578 : vector<8x128xf32>
    %607 = arith.mulf %591, %599 : vector<8x128xf32>
    %608 = arith.addf %606, %607 : vector<8x128xf32>
    %609 = math.tanh %608 : vector<8x128xf32>
    %610 = arith.mulf %605, %609 : vector<8x128xf32>
    %c0_307 = arith.constant 0 : index
    %c0_308 = arith.constant 0 : index
    %611 = vector.load %arg9[%c0_307, %c0_308] : memref<8x128xf32, #tpu.memory_space<vmem>>, vector<8x128xf32>
    tpu.vector_store %arg9[%c0_307, %c0_308], %608 {strides = array<i32>} : memref<8x128xf32, #tpu.memory_space<vmem>>, vector<8x128xf32>,
    %c0_309 = arith.constant 0 : index
    %c0_310 = arith.constant 0 : index
    %612 = vector.load %arg8[%c0_309, %c0_310] : memref<8x128xf32, #tpu.memory_space<vmem>>, vector<8x128xf32>
    tpu.vector_store %arg8[%c0_309, %c0_310], %610 {strides = array<i32>} : memref<8x128xf32, #tpu.memory_space<vmem>>, vector<8x128xf32>,
    %613 = arith.index_cast %576 : i32 to index
    %c0_311 = arith.constant 0 : index
    %614 = vector.load %arg5[%613, %c0_311] : memref<64x128xf32, #tpu.memory_space<vmem>>, vector<8x128xf32>
    tpu.vector_store %arg5[%613, %c0_311], %610 {strides = array<i32>} : memref<64x128xf32, #tpu.memory_space<vmem>>, vector<8x128xf32>,
    %c7_i32_312 = arith.constant 7 : i32
    %c8_i32_313 = arith.constant 8 : i32
    %615 = arith.muli %c7_i32_312, %c8_i32_313 : i32
    %c0_314 = arith.constant 0 : index
    %c0_315 = arith.constant 0 : index
    %616 = vector.load %arg8[%c0_314, %c0_315] : memref<8x128xf32, #tpu.memory_space<vmem>>, vector<8x128xf32>
    %c0_316 = arith.constant 0 : index
    %c0_317 = arith.constant 0 : index
    %617 = vector.load %arg9[%c0_316, %c0_317] : memref<8x128xf32, #tpu.memory_space<vmem>>, vector<8x128xf32>
    %618 = arith.index_cast %615 : i32 to index
    %c0_318 = arith.constant 0 : index
    %619 = vector.load %arg7[%618, %c0_318] : memref<64x512xf32, #tpu.memory_space<vmem>>, vector<8x512xf32>
    %620 = arith.truncf %616 : vector<8x128xf32> to vector<8x128xbf16>
    %c1_319 = arith.constant 1 : index
    %c0_320 = arith.constant 0 : index
    %c0_321 = arith.constant 0 : index
    %621 = vector.load %arg3[%c1_319, %c0_320, %c0_321] : memref<2x128x512xbf16, #tpu.memory_space<vmem>>, vector<1x128x512xbf16>
    %622 = vector.shape_cast %621 : vector<1x128x512xbf16> to vector<128x512xbf16>
    %cst_322 = arith.constant dense<0.000000e+00> : vector<8x512xf32>
    %623 = tpu.matmul %620, %622, %cst_322 {dimension_numbers = #tpu.dot_dimension_numbers<[1], [0], [0], [1], [0, 0, 1, 1], [], []>} : vector<8x128xbf16>, vector<128x512xbf16>, vector<8x512xf32> -> vector<8x512xf32>
    %624 = arith.addf %619, %623 : vector<8x512xf32>
    %625 = vector.extract_strided_slice %624 {offsets = [0, 0], sizes = [8, 128], strides = [1, 1]} : vector<8x512xf32> to vector<8x128xf32>
    %626 = arith.negf %625 : vector<8x128xf32>
    %627 = math.exp %626 : vector<8x128xf32>
    %cst_323 = arith.constant 1.000000e+00 : f32
    %628 = vector.broadcast %cst_323 : f32 to vector<8x128xf32>
    %629 = arith.addf %628, %627 : vector<8x128xf32>
    %630 = arith.divf %628, %629 : vector<8x128xf32>
    %631 = vector.extract_strided_slice %624 {offsets = [0, 128], sizes = [8, 128], strides = [1, 1]} : vector<8x512xf32> to vector<8x128xf32>
    %632 = arith.negf %631 : vector<8x128xf32>
    %633 = math.exp %632 : vector<8x128xf32>
    %cst_324 = arith.constant 1.000000e+00 : f32
    %634 = vector.broadcast %cst_324 : f32 to vector<8x128xf32>
    %635 = arith.addf %634, %633 : vector<8x128xf32>
    %636 = arith.divf %634, %635 : vector<8x128xf32>
    %637 = vector.extract_strided_slice %624 {offsets = [0, 256], sizes = [8, 128], strides = [1, 1]} : vector<8x512xf32> to vector<8x128xf32>
    %638 = math.tanh %637 : vector<8x128xf32>
    %639 = vector.extract_strided_slice %624 {offsets = [0, 384], sizes = [8, 128], strides = [1, 1]} : vector<8x512xf32> to vector<8x128xf32>
    %640 = arith.negf %639 : vector<8x128xf32>
    %641 = math.exp %640 : vector<8x128xf32>
    %cst_325 = arith.constant 1.000000e+00 : f32
    %642 = vector.broadcast %cst_325 : f32 to vector<8x128xf32>
    %643 = arith.addf %642, %641 : vector<8x128xf32>
    %644 = arith.divf %642, %643 : vector<8x128xf32>
    %645 = arith.mulf %636, %617 : vector<8x128xf32>
    %646 = arith.mulf %630, %638 : vector<8x128xf32>
    %647 = arith.addf %645, %646 : vector<8x128xf32>
    %648 = math.tanh %647 : vector<8x128xf32>
    %649 = arith.mulf %644, %648 : vector<8x128xf32>
    %c0_326 = arith.constant 0 : index
    %c0_327 = arith.constant 0 : index
    %650 = vector.load %arg9[%c0_326, %c0_327] : memref<8x128xf32, #tpu.memory_space<vmem>>, vector<8x128xf32>
    tpu.vector_store %arg9[%c0_326, %c0_327], %647 {strides = array<i32>} : memref<8x128xf32, #tpu.memory_space<vmem>>, vector<8x128xf32>,
    %c0_328 = arith.constant 0 : index
    %c0_329 = arith.constant 0 : index
    %651 = vector.load %arg8[%c0_328, %c0_329] : memref<8x128xf32, #tpu.memory_space<vmem>>, vector<8x128xf32>
    tpu.vector_store %arg8[%c0_328, %c0_329], %649 {strides = array<i32>} : memref<8x128xf32, #tpu.memory_space<vmem>>, vector<8x128xf32>,
    %652 = arith.index_cast %615 : i32 to index
    %c0_330 = arith.constant 0 : index
    %653 = vector.load %arg5[%652, %c0_330] : memref<64x128xf32, #tpu.memory_space<vmem>>, vector<8x128xf32>
    tpu.vector_store %arg5[%652, %c0_330], %649 {strides = array<i32>} : memref<64x128xf32, #tpu.memory_space<vmem>>, vector<8x128xf32>,
    %c8_i32_331 = arith.constant 8 : i32
    return
  }
  func.func @transform_0(%arg0: i32) -> (i32, i32) {
    %c0_i32 = arith.constant 0 : i32
    %c0_i32_0 = arith.constant 0 : i32
    %c0_i32_1 = arith.constant 0 : i32
    return %c0_i32, %c0_i32_0 : i32, i32
  }
  func.func @transform_1(%arg0: i32) -> (i32, i32, i32) {
    %c0_i32 = arith.constant 0 : i32
    %c0_i32_0 = arith.constant 0 : i32
    %c0_i32_1 = arith.constant 0 : i32
    %c0_i32_2 = arith.constant 0 : i32
    return %c0_i32, %c0_i32_0, %c0_i32_1 : i32, i32, i32
  }
  func.func @transform_2(%arg0: i32) -> (i32, i32, i32) {
    %c0_i32 = arith.constant 0 : i32
    %c0_i32_0 = arith.constant 0 : i32
    %c0_i32_1 = arith.constant 0 : i32
    %c0_i32_2 = arith.constant 0 : i32
    return %c0_i32, %c0_i32_0, %c0_i32_1 : i32, i32, i32
  }
  func.func @transform_3(%arg0: i32) -> (i32, i32, i32) {
    %c0_i32 = arith.constant 0 : i32
    %c0_i32_0 = arith.constant 0 : i32
    %c0_i32_1 = arith.constant 0 : i32
    %c0_i32_2 = arith.constant 0 : i32
    return %c0_i32, %c0_i32_0, %c0_i32_1 : i32, i32, i32
  }
  func.func @transform_4(%arg0: i32) -> (i32, i32) {
    %c0_i32 = arith.constant 0 : i32
    %c0_i32_0 = arith.constant 0 : i32
    %c0_i32_1 = arith.constant 0 : i32
    return %c0_i32, %c0_i32_0 : i32, i32
  }
}

</mosaic_0001>

<llo_original>
// kernel: seq2seq_forward.3
$region0: #{seq2seq_forward.3}
  #allocation0 [shape = 'u32[]', space=smem, size = 0x4, offset = 0x4, fixed_abs, tag = 'smem constant byte address 0x4 - core index']
  #allocation1 [shape = 'u32[144,128]{1,0:T(1,128)}', space=vmem, size = 0x12000, scoped, tag = 'internal scratch']
  %s0 = inlined_call_operand.vmem [shape: f32[64,128], index: 0, kind: input, shape index: {}]
  %s1 = inlined_call_operand.vmem [shape: bf16[128,256], index: 1, kind: input, shape index: {}]
  %s2 = inlined_call_operand.vmem [shape: f32[1,256], index: 2, kind: input, shape index: {}]
  %s3 = inlined_call_operand.hbm [shape: f32[64,256], index: 3, kind: output, shape index: {}]
  %s4 = sld [smem:[#allocation0]]
  $region22: #{seq2seq_forward.3} parent=0
    _
  %s6 = ssub.s32 1, %s4
  %s7 = scalar_select 0, %s6, %s4
  $region1: #{seq2seq_forward.3} parent=0
    #allocation2 [shape = 'u8[65536]{0}', space=vmem, size = 0x10000, scoped, tag = 'output window, operand 0, single buffered']
    #allocation3 [shape = 's32[1]{0}', space=sflag, size = 0x4, scoped, tag = 'scoped memory for seq2seq_forward.3']
    %8 = vsyncpa [#allocation3], 0
    // Predicated region
    $region2: #{seq2seq_forward.3} parent=1 // pred_check
      _
    $region3: #{seq2seq_forward.3} parent=1 // pred_check_branch
      %10 = sbr.rel (0) target = $region5
    $region4: #{seq2seq_forward.3} parent=1 // pred_region
      _
    $region5: #{seq2seq_forward.3} parent=1 // pred_fallthru
      _
    // Predicated region
    $region6: #{seq2seq_forward.3} parent=1 // pred_check
      _
    $region7: #{seq2seq_forward.3} parent=1 // pred_check_branch
      %12 = sbr.rel (0) target = $region9
    $region8: #{seq2seq_forward.3} parent=1 // pred_region
      _
    $region9: #{seq2seq_forward.3} parent=1 // pred_fallthru
      _
    // Predicated region
    $region10: #{seq2seq_forward.3} parent=1 // pred_check
      _
    $region11: #{seq2seq_forward.3} parent=1 // pred_check_branch
      %14 = sbr.rel (0) target = $region13
    $region12: #{seq2seq_forward.3} parent=1 // pred_region
      _
    $region13: #{seq2seq_forward.3} parent=1 // pred_fallthru
      _
    %v16 = vld [vmem:[%s0] sm:$0xff]
    %v17 = vld [vmem:[%s0 + $0x8] sm:$0xff]
    %v18 = vld [vmem:[%s0 + $0x10] sm:$0xff]
    %v19 = vld [vmem:[%s0 + $0x18] sm:$0xff]
    %v20 = vld [vmem:[%s0 + $0x20] sm:$0xff]
    %v21 = vld [vmem:[%s0 + $0x28] sm:$0xff]
    %v22 = vld [vmem:[%s0 + $0x30] sm:$0xff]
    %v23 = vld [vmem:[%s0 + $0x38] sm:$0xff]
    %v24 = vpack.c.bf16 %v17, %v16
    %v25 = vpack.c.bf16 %v19, %v18
    %v26 = vpack.c.bf16 %v21, %v20
    %v27 = vpack.c.bf16 %v23, %v22
    %v28 = vld [vmem:[%s1] sm:$0xff]
    %v29 = vld [vmem:[%s1 + $0x8] sm:$0xff]
    %v30 = vld [vmem:[%s1 + $0x10] sm:$0xff]
    %v31 = vld [vmem:[%s1 + $0x18] sm:$0xff]
    %v32 = vld [vmem:[%s1 + $0x20] sm:$0xff]
    %v33 = vld [vmem:[%s1 + $0x28] sm:$0xff]
    %v34 = vld [vmem:[%s1 + $0x30] sm:$0xff]
    %v35 = vld [vmem:[%s1 + $0x38] sm:$0xff]
    %v36 = vld [vmem:[%s1 + $0x40] sm:$0xff]
    %v37 = vld [vmem:[%s1 + $0x48] sm:$0xff]
    %v38 = vld [vmem:[%s1 + $0x50] sm:$0xff]
    %v39 = vld [vmem:[%s1 + $0x58] sm:$0xff]
    %v40 = vld [vmem:[%s1 + $0x60] sm:$0xff]
    %v41 = vld [vmem:[%s1 + $0x68] sm:$0xff]
    %v42 = vld [vmem:[%s1 + $0x70] sm:$0xff]
    %v43 = vld [vmem:[%s1 + $0x78] sm:$0xff]
    %v44 = vld [vmem:[%s2] sm:$0x3]
    %v46 = vlaneseq
    %v47 = vshrl.u32 %v46, 7
    %v48 = vsub.s32 0, %v47
    %v49 = vrot.slane %v44, %v48
    %v50 = vlaneseq
    %v51 = vshrl.u32 %v50, 7
    %v52 = vsub.s32 1, %v51
    %v53 = vrot.slane %v44, %v52
    %v72 = vunpack.c.l.b16 %v28
    %v73 = vunpack.c.h.b16 %v28
    %v74 = vunpack.c.l.b16 %v29
    %v75 = vunpack.c.h.b16 %v29
    %v76 = vunpack.c.l.b16 %v30
    %v77 = vunpack.c.h.b16 %v30
    %v78 = vunpack.c.l.b16 %v31
    %v79 = vunpack.c.h.b16 %v31
    %v80 = vunpack.c.l.b16 %v32
    %v81 = vunpack.c.h.b16 %v32
    %v82 = vunpack.c.l.b16 %v33
    %v83 = vunpack.c.h.b16 %v33
    %v84 = vunpack.c.l.b16 %v34
    %v85 = vunpack.c.h.b16 %v34
    %v86 = vunpack.c.l.b16 %v35
    %v87 = vunpack.c.h.b16 %v35
    %v88 = vunpack.c.l.b16 %v36
    %v89 = vunpack.c.h.b16 %v36
    %v90 = vunpack.c.l.b16 %v37
    %v91 = vunpack.c.h.b16 %v37
    %v92 = vunpack.c.l.b16 %v38
    %v93 = vunpack.c.h.b16 %v38
    %v94 = vunpack.c.l.b16 %v39
    %v95 = vunpack.c.h.b16 %v39
    %v96 = vunpack.c.l.b16 %v40
    %v97 = vunpack.c.h.b16 %v40
    %v98 = vunpack.c.l.b16 %v41
    %v99 = vunpack.c.h.b16 %v41
    %v100 = vunpack.c.l.b16 %v42
    %v101 = vunpack.c.h.b16 %v42
    %v102 = vunpack.c.l.b16 %v43
    %v103 = vunpack.c.h.b16 %v43
    %v104 = vpack.c.b16 %v74, %v72
    %v105 = vpack.c.b16 %v75, %v73
    %v106 = vpack.c.b16 %v78, %v76
    %v107 = vpack.c.b16 %v79, %v77
    %v108 = vpack.c.b16 %v82, %v80
    %v109 = vpack.c.b16 %v83, %v81
    %v110 = vpack.c.b16 %v86, %v84
    %v111 = vpack.c.b16 %v87, %v85
    %v112 = vpack.c.b16 %v90, %v88
    %v113 = vpack.c.b16 %v91, %v89
    %v114 = vpack.c.b16 %v94, %v92
    %v115 = vpack.c.b16 %v95, %v93
    %v116 = vpack.c.b16 %v98, %v96
    %v117 = vpack.c.b16 %v99, %v97
    %v118 = vpack.c.b16 %v102, %v100
    %v119 = vpack.c.b16 %v103, %v101
    %136 = vmatprep.subr.bf16.mxu0 %v105
    %137 = vmatpush1.bf16.msra.mxu0 %v104
    %138 = vmatprep.subr.bf16.mxu0 %v107
    %139 = vmatpush1.bf16.msra.mxu0 %v106
    %140 = vmatprep.subr.bf16.mxu0 %v109
    %141 = vmatpush1.bf16.msra.mxu0 %v108
    %142 = vmatprep.subr.bf16.mxu0 %v111
    %143 = vmatpush1.bf16.msra.mxu0 %v110
    %144 = vmatprep.subr.bf16.mxu0 %v113
    %145 = vmatpush1.bf16.msra.mxu0 %v112
    %146 = vmatprep.subr.bf16.mxu0 %v115
    %147 = vmatpush1.bf16.msra.mxu0 %v114
    %148 = vmatprep.subr.bf16.mxu0 %v117
    %149 = vmatpush1.bf16.msra.mxu0 %v116
    %150 = vmatprep.subr.bf16.mxu0 %v119
    %151 = vmatpush1.bf16.msra.mxu0 %v118
    %152 = vmatprep.subr.bf16.mxu0 0
    %153 = vmatpush1.bf16.msra.mxu0 0
    %154 = vmatprep.subr.bf16.mxu0 0
    %155 = vmatpush1.bf16.msra.mxu0 0
    %156 = vmatprep.subr.bf16.mxu0 0
    %157 = vmatpush1.bf16.msra.mxu0 0
    %158 = vmatprep.subr.bf16.mxu0 0
    %159 = vmatpush1.bf16.msra.mxu0 0
    %160 = vmatprep.subr.bf16.mxu0 0
    %161 = vmatpush1.bf16.msra.mxu0 0
    %162 = vmatprep.subr.bf16.mxu0 0
    %163 = vmatpush1.bf16.msra.mxu0 0
    %164 = vmatprep.subr.bf16.mxu0 0
    %165 = vmatpush1.bf16.msra.mxu0 0
    %166 = vmatprep.subr.bf16.mxu0 0
    %167 = vmatpush1.bf16.msra.mxu0 0
    %168 = vmatprep.mubr.bf16.mxu0 0
    %169 = vmatmul.mubr.bf16.gmra.mrb[0].mxu0 %v24
    %v170 = vpop.f32.mrb[0].mxu0
    %v171 = vadd.f32 %v49, %v170
    %v172 = vpop.f32.mrb[0].mxu0
    %v173 = vadd.f32 %v53, %v172
    %v174 = vpop.f32.mrb[0].mxu0
    %v175 = vadd.f32 %v49, %v174
    %v176 = vpop.f32.mrb[0].mxu0
    %v177 = vadd.f32 %v53, %v176
    %178 = vmatprep.mubr.bf16.mxu0 0
    %179 = vmatmul.mubr.bf16.gmra.mrb[0].mxu0 %v25
    %v180 = vpop.f32.mrb[0].mxu0
    %v181 = vadd.f32 %v49, %v180
    %v182 = vpop.f32.mrb[0].mxu0
    %v183 = vadd.f32 %v53, %v182
    %v184 = vpop.f32.mrb[0].mxu0
    %v185 = vadd.f32 %v49, %v184
    %v186 = vpop.f32.mrb[0].mxu0
    %v187 = vadd.f32 %v53, %v186
    %188 = vmatprep.mubr.bf16.mxu0 0
    %189 = vmatmul.mubr.bf16.gmra.mrb[0].mxu0 %v26
    %v190 = vpop.f32.mrb[0].mxu0
    %v191 = vadd.f32 %v49, %v190
    %v192 = vpop.f32.mrb[0].mxu0
    %v193 = vadd.f32 %v53, %v192
    %v194 = vpop.f32.mrb[0].mxu0
    %v195 = vadd.f32 %v49, %v194
    %v196 = vpop.f32.mrb[0].mxu0
    %v197 = vadd.f32 %v53, %v196
    %198 = vmatprep.mubr.bf16.mxu0 0
    %199 = vmatmul.mubr.bf16.gmra.mrb[0].mxu0 %v27
    %v200 = vpop.f32.mrb[0].mxu0
    %v201 = vadd.f32 %v49, %v200
    %v202 = vpop.f32.mrb[0].mxu0
    %v203 = vadd.f32 %v53, %v202
    %v204 = vpop.f32.mrb[0].mxu0
    %v205 = vadd.f32 %v49, %v204
    %v206 = vpop.f32.mrb[0].mxu0
    %v207 = vadd.f32 %v53, %v206
    %208 = vdwg.mxu0
    %209 = vst [vmem:[#allocation2] sm:$0xff] %v171
    %210 = vst [vmem:[#allocation2 + $0x8] sm:$0xff] %v173
    %211 = vst [vmem:[#allocation2 + $0x10] sm:$0xff] %v175
    %212 = vst [vmem:[#allocation2 + $0x18] sm:$0xff] %v177
    %213 = vst [vmem:[#allocation2 + $0x20] sm:$0xff] %v181
    %214 = vst [vmem:[#allocation2 + $0x28] sm:$0xff] %v183
    %215 = vst [vmem:[#allocation2 + $0x30] sm:$0xff] %v185
    %216 = vst [vmem:[#allocation2 + $0x38] sm:$0xff] %v187
    %217 = vst [vmem:[#allocation2 + $0x40] sm:$0xff] %v191
    %218 = vst [vmem:[#allocation2 + $0x48] sm:$0xff] %v193
    %219 = vst [vmem:[#allocation2 + $0x50] sm:$0xff] %v195
    %220 = vst [vmem:[#allocation2 + $0x58] sm:$0xff] %v197
    %221 = vst [vmem:[#allocation2 + $0x60] sm:$0xff] %v201
    %222 = vst [vmem:[#allocation2 + $0x68] sm:$0xff] %v203
    %223 = vst [vmem:[#allocation2 + $0x70] sm:$0xff] %v205
    %224 = vst [vmem:[#allocation2 + $0x78] sm:$0xff] %v207
    // Predicated region
    $region14: #{seq2seq_forward.3} parent=1 // pred_check
      _
    $region15: #{seq2seq_forward.3} parent=1 // pred_check_branch
      %226 = sbr.rel (0) target = $region17
    $region16: #{seq2seq_forward.3} parent=1 // pred_region
      %s228 = ssub.s32 2048, 2048
      %229 = vsyncadd [#allocation3], %s228
      %s230 = sshll.u32 [#allocation2], 4
      %s231 = int_to_ptr.vmem [resolvable:$true] %s230
      %236 = dma.vmem_to_hbm [thread:$0]  %s231, 2048, %s3, [#allocation3], 256, 256, 16
    $region17: #{seq2seq_forward.3} parent=1 // pred_fallthru
      _
    // Predicated region
    $region18: #{seq2seq_forward.3} parent=1 // pred_check
      _
    $region19: #{seq2seq_forward.3} parent=1 // pred_check_branch
      %238 = sbr.rel (0) target = $region21
    $region20: #{seq2seq_forward.3} parent=1 // pred_region
      %239 = dma.done [#allocation3], 2048
    $region21: #{seq2seq_forward.3} parent=1 // pred_fallthru
      _
    %240 = vsyncpa [#allocation3], 1

// kernel: seq2seq_forward.2
$region0: #{seq2seq_forward.2}
  #allocation0 [shape = 'u32[]', space=smem, size = 0x4, offset = 0x4, fixed_abs, tag = 'smem constant byte address 0x4 - core index']
  #allocation1 [shape = 'u32[144,128]{1,0:T(1,128)}', space=vmem, size = 0x12000, scoped, tag = 'internal scratch']
  #allocation2 [shape = 'f32[64,128]{1,0:T(8,128)}', space=vmem, size = 0x8000, scoped, tag = 'scratch operand']
  #allocation3 [shape = 'f32[64,512]{1,0:T(8,128)}', space=vmem, size = 0x20000, scoped, tag = 'scratch operand']
  #allocation4 [shape = 'f32[8,128]{1,0:T(8,128)}', space=vmem, size = 0x1000, scoped, tag = 'scratch operand']
  #allocation5 [shape = 'f32[8,128]{1,0:T(8,128)}', space=vmem, size = 0x1000, scoped, tag = 'scratch operand']
  %s0 = inlined_call_operand.vmem [shape: f32[64,128], index: 0, kind: input, shape index: {}]
  %s1 = inlined_call_operand.vmem [shape: bf16[2,128,512], index: 1, kind: input, shape index: {}]
  %s2 = inlined_call_operand.hbm [shape: bf16[2,128,512], index: 2, kind: input, shape index: {}]
  %s3 = inlined_call_operand.vmem [shape: f32[2,1,512], index: 3, kind: input, shape index: {}]
  %s4 = inlined_call_operand.vmem [shape: f32[64,128], index: 4, kind: output, shape index: {}]
  %s5 = sld [smem:[#allocation0]]
  $region30: #{seq2seq_forward.2} parent=0
    _
  %s7 = ssub.s32 1, %s5
  %s8 = scalar_select 0, %s7, %s5
  $region1: #{seq2seq_forward.2} parent=0
    #allocation6 [shape = 'u8[262144]{0}', space=vmem, size = 0x40000, scoped, tag = 'input window, operand 2, single buffered']
    #allocation7 [shape = 's32[1]{0}', space=sflag, size = 0x4, scoped, tag = 'scoped memory for seq2seq_forward.2']
    %9 = vsyncpa [#allocation7], 0
    // Predicated region
    $region2: #{seq2seq_forward.2} parent=1 // pred_check
      _
    $region3: #{seq2seq_forward.2} parent=1 // pred_check_branch
      %11 = sbr.rel (0) target = $region5
    $region4: #{seq2seq_forward.2} parent=1 // pred_region
      _
    $region5: #{seq2seq_forward.2} parent=1 // pred_fallthru
      _
    // Predicated region
    $region6: #{seq2seq_forward.2} parent=1 // pred_check
      _
    $region7: #{seq2seq_forward.2} parent=1 // pred_check_branch
      %13 = sbr.rel (0) target = $region9
    $region8: #{seq2seq_forward.2} parent=1 // pred_region
      _
    $region9: #{seq2seq_forward.2} parent=1 // pred_fallthru
      _
    // Predicated region
    $region10: #{seq2seq_forward.2} parent=1 // pred_check
      _
    $region11: #{seq2seq_forward.2} parent=1 // pred_check_branch
      %15 = sbr.rel (0) target = $region13
    $region12: #{seq2seq_forward.2} parent=1 // pred_region
      %s17 = ssub.s32 8192, 8192
      %18 = vsyncadd [#allocation7], %s17
      %s19 = sshll.u32 [#allocation6], 4
      %s20 = int_to_ptr.vmem [resolvable:$true] %s19
      %25 = dma.hbm_to_vmem [thread:$0]  %s2, 8192, %s20, [#allocation7], 256, 256, 16
    $region13: #{seq2seq_forward.2} parent=1 // pred_fallthru
      _
    // Predicated region
    $region14: #{seq2seq_forward.2} parent=1 // pred_check
      _
    $region15: #{seq2seq_forward.2} parent=1 // pred_check_branch
      %27 = sbr.rel (0) target = $region17
    $region16: #{seq2seq_forward.2} parent=1 // pred_region
      _
    $region17: #{seq2seq_forward.2} parent=1 // pred_fallthru
      _
    // Predicated region
    $region18: #{seq2seq_forward.2} parent=1 // pred_check
      _
    $region19: #{seq2seq_forward.2} parent=1 // pred_check_branch
      %29 = sbr.rel (0) target = $region21
    $region20: #{seq2seq_forward.2} parent=1 // pred_region
      %30 = dma.done [#allocation7], 8192
    $region21: #{seq2seq_forward.2} parent=1 // pred_fallthru
      _
    %v32 = vld [vmem:[%s0] sm:$0xff]
    %v33 = vld [vmem:[%s0 + $0x8] sm:$0xff]
    %v34 = vld [vmem:[%s0 + $0x10] sm:$0xff]
    %v35 = vld [vmem:[%s0 + $0x18] sm:$0xff]
    %v36 = vld [vmem:[%s0 + $0x20] sm:$0xff]
    %v37 = vld [vmem:[%s0 + $0x28] sm:$0xff]
    %v38 = vld [vmem:[%s0 + $0x30] sm:$0xff]
    %v39 = vld [vmem:[%s0 + $0x38] sm:$0xff]
    %40 = vst [vmem:[#allocation2] sm:$0xff] %v32
    %41 = vst [vmem:[#allocation2 + $0x8] sm:$0xff] %v33
    %42 = vst [vmem:[#allocation2 + $0x10] sm:$0xff] %v34
    %43 = vst [vmem:[#allocation2 + $0x18] sm:$0xff] %v35
    %44 = vst [vmem:[#allocation2 + $0x20] sm:$0xff] %v36
    %45 = vst [vmem:[#allocation2 + $0x28] sm:$0xff] %v37
    %46 = vst [vmem:[#allocation2 + $0x30] sm:$0xff] %v38
    %47 = vst [vmem:[#allocation2 + $0x38] sm:$0xff] %v39
    %v48 = vld [vmem:[#allocation2] sm:$0xff]
    %v49 = vld [vmem:[#allocation2 + $0x8] sm:$0xff]
    %v50 = vld [vmem:[#allocation2 + $0x10] sm:$0xff]
    %v51 = vld [vmem:[#allocation2 + $0x18] sm:$0xff]
    %v52 = vld [vmem:[#allocation2 + $0x20] sm:$0xff]
    %v53 = vld [vmem:[#allocation2 + $0x28] sm:$0xff]
    %v54 = vld [vmem:[#allocation2 + $0x30] sm:$0xff]
    %v55 = vld [vmem:[#allocation2 + $0x38] sm:$0xff]
    %v56 = vpack.c.bf16 %v49, %v48
    %v57 = vpack.c.bf16 %v51, %v50
    %v58 = vpack.c.bf16 %v53, %v52
    %v59 = vpack.c.bf16 %v55, %v54
    %v60 = vld [vmem:[%s1] sm:$0xff]
    %v61 = vld [vmem:[%s1 + $0x8] sm:$0xff]
    %v62 = vld [vmem:[%s1 + $0x10] sm:$0xff]
    %v63 = vld [vmem:[%s1 + $0x18] sm:$0xff]
    %v64 = vld [vmem:[%s1 + $0x20] sm:$0xff]
    %v65 = vld [vmem:[%s1 + $0x28] sm:$0xff]
    %v66 = vld [vmem:[%s1 + $0x30] sm:$0xff]
    %v67 = vld [vmem:[%s1 + $0x38] sm:$0xff]
    %v68 = vld [vmem:[%s1 + $0x40] sm:$0xff]
    %v69 = vld [vmem:[%s1 + $0x48] sm:$0xff]
    %v70 = vld [vmem:[%s1 + $0x50] sm:$0xff]
    %v71 = vld [vmem:[%s1 + $0x58] sm:$0xff]
    %v72 = vld [vmem:[%s1 + $0x60] sm:$0xff]
    %v73 = vld [vmem:[%s1 + $0x68] sm:$0xff]
    %v74 = vld [vmem:[%s1 + $0x70] sm:$0xff]
    %v75 = vld [vmem:[%s1 + $0x78] sm:$0xff]
    %v76 = vld [vmem:[%s1 + $0x80] sm:$0xff]
    %v77 = vld [vmem:[%s1 + $0x88] sm:$0xff]
    %v78 = vld [vmem:[%s1 + $0x90] sm:$0xff]
    %v79 = vld [vmem:[%s1 + $0x98] sm:$0xff]
    %v80 = vld [vmem:[%s1 + $0xa0] sm:$0xff]
    %v81 = vld [vmem:[%s1 + $0xa8] sm:$0xff]
    %v82 = vld [vmem:[%s1 + $0xb0] sm:$0xff]
    %v83 = vld [vmem:[%s1 + $0xb8] sm:$0xff]
    %v84 = vld [vmem:[%s1 + $0xc0] sm:$0xff]
    %v85 = vld [vmem:[%s1 + $0xc8] sm:$0xff]
    %v86 = vld [vmem:[%s1 + $0xd0] sm:$0xff]
    %v87 = vld [vmem:[%s1 + $0xd8] sm:$0xff]
    %v88 = vld [vmem:[%s1 + $0xe0] sm:$0xff]
    %v89 = vld [vmem:[%s1 + $0xe8] sm:$0xff]
    %v90 = vld [vmem:[%s1 + $0xf0] sm:$0xff]
    %v91 = vld [vmem:[%s1 + $0xf8] sm:$0xff]
    %v92 = vld [vmem:[%s3] sm:$0xf]
    %v94 = vlaneseq
    %v95 = vshrl.u32 %v94, 7
    %v96 = vsub.s32 0, %v95
    %v97 = vrot.slane %v92, %v96
    %v98 = vlaneseq
    %v99 = vshrl.u32 %v98, 7
    %v100 = vsub.s32 1, %v99
    %v101 = vrot.slane %v92, %v100
    %v102 = vlaneseq
    %v103 = vshrl.u32 %v102, 7
    %v104 = vsub.s32 2, %v103
    %v105 = vrot.slane %v92, %v104
    %v106 = vlaneseq
    %v107 = vshrl.u32 %v106, 7
    %v108 = vsub.s32 3, %v107
    %v109 = vrot.slane %v92, %v108
    %v146 = vunpack.c.l.b16 %v60
    %v147 = vunpack.c.h.b16 %v60
    %v148 = vunpack.c.l.b16 %v61
    %v149 = vunpack.c.h.b16 %v61
    %v150 = vunpack.c.l.b16 %v62
    %v151 = vunpack.c.h.b16 %v62
    %v152 = vunpack.c.l.b16 %v63
    %v153 = vunpack.c.h.b16 %v63
    %v154 = vunpack.c.l.b16 %v64
    %v155 = vunpack.c.h.b16 %v64
    %v156 = vunpack.c.l.b16 %v65
    %v157 = vunpack.c.h.b16 %v65
    %v158 = vunpack.c.l.b16 %v66
    %v159 = vunpack.c.h.b16 %v66
    %v160 = vunpack.c.l.b16 %v67
    %v161 = vunpack.c.h.b16 %v67
    %v162 = vunpack.c.l.b16 %v68
    %v163 = vunpack.c.h.b16 %v68
    %v164 = vunpack.c.l.b16 %v69
    %v165 = vunpack.c.h.b16 %v69
    %v166 = vunpack.c.l.b16 %v70
    %v167 = vunpack.c.h.b16 %v70
    %v168 = vunpack.c.l.b16 %v71
    %v169 = vunpack.c.h.b16 %v71
    %v170 = vunpack.c.l.b16 %v72
    %v171 = vunpack.c.h.b16 %v72
    %v172 = vunpack.c.l.b16 %v73
    %v173 = vunpack.c.h.b16 %v73
    %v174 = vunpack.c.l.b16 %v74
    %v175 = vunpack.c.h.b16 %v74
    %v176 = vunpack.c.l.b16 %v75
    %v177 = vunpack.c.h.b16 %v75
    %v178 = vunpack.c.l.b16 %v76
    %v179 = vunpack.c.h.b16 %v76
    %v180 = vunpack.c.l.b16 %v77
    %v181 = vunpack.c.h.b16 %v77
    %v182 = vunpack.c.l.b16 %v78
    %v183 = vunpack.c.h.b16 %v78
    %v184 = vunpack.c.l.b16 %v79
    %v185 = vunpack.c.h.b16 %v79
    %v186 = vunpack.c.l.b16 %v80
    %v187 = vunpack.c.h.b16 %v80
    %v188 = vunpack.c.l.b16 %v81
    %v189 = vunpack.c.h.b16 %v81
    %v190 = vunpack.c.l.b16 %v82
    %v191 = vunpack.c.h.b16 %v82
    %v192 = vunpack.c.l.b16 %v83
    %v193 = vunpack.c.h.b16 %v83
    %v194 = vunpack.c.l.b16 %v84
    %v195 = vunpack.c.h.b16 %v84
    %v196 = vunpack.c.l.b16 %v85
    %v197 = vunpack.c.h.b16 %v85
    %v198 = vunpack.c.l.b16 %v86
    %v199 = vunpack.c.h.b16 %v86
    %v200 = vunpack.c.l.b16 %v87
    %v201 = vunpack.c.h.b16 %v87
    %v202 = vunpack.c.l.b16 %v88
    %v203 = vunpack.c.h.b16 %v88
    %v204 = vunpack.c.l.b16 %v89
    %v205 = vunpack.c.h.b16 %v89
    %v206 = vunpack.c.l.b16 %v90
    %v207 = vunpack.c.h.b16 %v90
    %v208 = vunpack.c.l.b16 %v91
    %v209 = vunpack.c.h.b16 %v91
    %v210 = vpack.c.b16 %v150, %v146
    %v211 = vpack.c.b16 %v151, %v147
    %v212 = vpack.c.b16 %v152, %v148
    %v213 = vpack.c.b16 %v153, %v149
    %v214 = vpack.c.b16 %v158, %v154
    %v215 = vpack.c.b16 %v159, %v155
    %v216 = vpack.c.b16 %v160, %v156
    %v217 = vpack.c.b16 %v161, %v157
    %v218 = vpack.c.b16 %v166, %v162
    %v219 = vpack.c.b16 %v167, %v163
    %v220 = vpack.c.b16 %v168, %v164
    %v221 = vpack.c.b16 %v169, %v165
    %v222 = vpack.c.b16 %v174, %v170
    %v223 = vpack.c.b16 %v175, %v171
    %v224 = vpack.c.b16 %v176, %v172
    %v225 = vpack.c.b16 %v177, %v173
    %v226 = vpack.c.b16 %v182, %v178
    %v227 = vpack.c.b16 %v183, %v179
    %v228 = vpack.c.b16 %v184, %v180
    %v229 = vpack.c.b16 %v185, %v181
    %v230 = vpack.c.b16 %v190, %v186
    %v231 = vpack.c.b16 %v191, %v187
    %v232 = vpack.c.b16 %v192, %v188
    %v233 = vpack.c.b16 %v193, %v189
    %v234 = vpack.c.b16 %v198, %v194
    %v235 = vpack.c.b16 %v199, %v195
    %v236 = vpack.c.b16 %v200, %v196
    %v237 = vpack.c.b16 %v201, %v197
    %v238 = vpack.c.b16 %v206, %v202
    %v239 = vpack.c.b16 %v207, %v203
    %v240 = vpack.c.b16 %v208, %v204
    %v241 = vpack.c.b16 %v209, %v205
    %274 = vmatprep.subr.bf16.mxu0 %v211
    %275 = vmatpush1.bf16.msra.mxu0 %v210
    %276 = vmatprep.subr.bf16.mxu0 %v215
    %277 = vmatpush1.bf16.msra.mxu0 %v214
    %278 = vmatprep.subr.bf16.mxu0 %v219
    %279 = vmatpush1.bf16.msra.mxu0 %v218
    %280 = vmatprep.subr.bf16.mxu0 %v223
    %281 = vmatpush1.bf16.msra.mxu0 %v222
    %282 = vmatprep.subr.bf16.mxu0 %v227
    %283 = vmatpush1.bf16.msra.mxu0 %v226
    %284 = vmatprep.subr.bf16.mxu0 %v231
    %285 = vmatpush1.bf16.msra.mxu0 %v230
    %286 = vmatprep.subr.bf16.mxu0 %v235
    %287 = vmatpush1.bf16.msra.mxu0 %v234
    %288 = vmatprep.subr.bf16.mxu0 %v239
    %289 = vmatpush1.bf16.msra.mxu0 %v238
    %290 = vmatprep.subr.bf16.mxu0 0
    %291 = vmatpush1.bf16.msra.mxu0 0
    %292 = vmatprep.subr.bf16.mxu0 0
    %293 = vmatpush1.bf16.msra.mxu0 0
    %294 = vmatprep.subr.bf16.mxu0 0
    %295 = vmatpush1.bf16.msra.mxu0 0
    %296 = vmatprep.subr.bf16.mxu0 0
    %297 = vmatpush1.bf16.msra.mxu0 0
    %298 = vmatprep.subr.bf16.mxu0 0
    %299 = vmatpush1.bf16.msra.mxu0 0
    %300 = vmatprep.subr.bf16.mxu0 0
    %301 = vmatpush1.bf16.msra.mxu0 0
    %302 = vmatprep.subr.bf16.mxu0 0
    %303 = vmatpush1.bf16.msra.mxu0 0
    %304 = vmatprep.subr.bf16.mxu0 0
    %305 = vmatpush1.bf16.msra.mxu0 0
    %306 = vmatprep.mubr.bf16.mxu0 0
    %307 = vmatmul.mubr.bf16.gmra.mrb[0].mxu0 %v56
    %v308 = vpop.f32.mrb[0].mxu0
    %v309 = vadd.f32 %v97, %v308
    %v310 = vpop.f32.mrb[0].mxu0
    %v311 = vadd.f32 %v101, %v310
    %v312 = vpop.f32.mrb[0].mxu0
    %v313 = vadd.f32 %v97, %v312
    %v314 = vpop.f32.mrb[0].mxu0
    %v315 = vadd.f32 %v101, %v314
    %316 = vmatprep.mubr.bf16.mxu0 0
    %317 = vmatmul.mubr.bf16.gmra.mrb[0].mxu0 %v57
    %v318 = vpop.f32.mrb[0].mxu0
    %v319 = vadd.f32 %v97, %v318
    %v320 = vpop.f32.mrb[0].mxu0
    %v321 = vadd.f32 %v101, %v320
    %v322 = vpop.f32.mrb[0].mxu0
    %v323 = vadd.f32 %v97, %v322
    %v324 = vpop.f32.mrb[0].mxu0
    %v325 = vadd.f32 %v101, %v324
    %326 = vmatprep.mubr.bf16.mxu0 0
    %327 = vmatmul.mubr.bf16.gmra.mrb[0].mxu0 %v58
    %v328 = vpop.f32.mrb[0].mxu0
    %v329 = vadd.f32 %v97, %v328
    %v330 = vpop.f32.mrb[0].mxu0
    %v331 = vadd.f32 %v101, %v330
    %v332 = vpop.f32.mrb[0].mxu0
    %v333 = vadd.f32 %v97, %v332
    %v334 = vpop.f32.mrb[0].mxu0
    %v335 = vadd.f32 %v101, %v334
    %336 = vmatprep.mubr.bf16.mxu0 0
    %337 = vmatmul.mubr.bf16.gmra.mrb[0].mxu0 %v59
    %v338 = vpop.f32.mrb[0].mxu0
    %v339 = vadd.f32 %v97, %v338
    %v340 = vpop.f32.mrb[0].mxu0
    %v341 = vadd.f32 %v101, %v340
    %v342 = vpop.f32.mrb[0].mxu0
    %v343 = vadd.f32 %v97, %v342
    %v344 = vpop.f32.mrb[0].mxu0
    %v345 = vadd.f32 %v101, %v344
    %346 = vdwg.mxu0
    %347 = vmatprep.subr.bf16.mxu0 %v213
    %348 = vmatpush1.bf16.msra.mxu0 %v212
    %349 = vmatprep.subr.bf16.mxu0 %v217
    %350 = vmatpush1.bf16.msra.mxu0 %v216
    %351 = vmatprep.subr.bf16.mxu0 %v221
    %352 = vmatpush1.bf16.msra.mxu0 %v220
    %353 = vmatprep.subr.bf16.mxu0 %v225
    %354 = vmatpush1.bf16.msra.mxu0 %v224
    %355 = vmatprep.subr.bf16.mxu0 %v229
    %356 = vmatpush1.bf16.msra.mxu0 %v228
    %357 = vmatprep.subr.bf16.mxu0 %v233
    %358 = vmatpush1.bf16.msra.mxu0 %v232
    %359 = vmatprep.subr.bf16.mxu0 %v237
    %360 = vmatpush1.bf16.msra.mxu0 %v236
    %361 = vmatprep.subr.bf16.mxu0 %v241
    %362 = vmatpush1.bf16.msra.mxu0 %v240
    %363 = vmatprep.subr.bf16.mxu0 0
    %364 = vmatpush1.bf16.msra.mxu0 0
    %365 = vmatprep.subr.bf16.mxu0 0
    %366 = vmatpush1.bf16.msra.mxu0 0
    %367 = vmatprep.subr.bf16.mxu0 0
    %368 = vmatpush1.bf16.msra.mxu0 0
    %369 = vmatprep.subr.bf16.mxu0 0
    %370 = vmatpush1.bf16.msra.mxu0 0
    %371 = vmatprep.subr.bf16.mxu0 0
    %372 = vmatpush1.bf16.msra.mxu0 0
    %373 = vmatprep.subr.bf16.mxu0 0
    %374 = vmatpush1.bf16.msra.mxu0 0
    %375 = vmatprep.subr.bf16.mxu0 0
    %376 = vmatpush1.bf16.msra.mxu0 0
    %377 = vmatprep.subr.bf16.mxu0 0
    %378 = vmatpush1.bf16.msra.mxu0 0
    %379 = vmatprep.mubr.bf16.mxu0 0
    %380 = vmatmul.mubr.bf16.gmra.mrb[0].mxu0 %v56
    %v381 = vpop.f32.mrb[0].mxu0
    %v382 = vadd.f32 %v105, %v381
    %v383 = vpop.f32.mrb[0].mxu0
    %v384 = vadd.f32 %v109, %v383
    %v385 = vpop.f32.mrb[0].mxu0
    %v386 = vadd.f32 %v105, %v385
    %v387 = vpop.f32.mrb[0].mxu0
    %v388 = vadd.f32 %v109, %v387
    %389 = vmatprep.mubr.bf16.mxu0 0
    %390 = vmatmul.mubr.bf16.gmra.mrb[0].mxu0 %v57
    %v391 = vpop.f32.mrb[0].mxu0
    %v392 = vadd.f32 %v105, %v391
    %v393 = vpop.f32.mrb[0].mxu0
    %v394 = vadd.f32 %v109, %v393
    %v395 = vpop.f32.mrb[0].mxu0
    %v396 = vadd.f32 %v105, %v395
    %v397 = vpop.f32.mrb[0].mxu0
    %v398 = vadd.f32 %v109, %v397
    %399 = vmatprep.mubr.bf16.mxu0 0
    %400 = vmatmul.mubr.bf16.gmra.mrb[0].mxu0 %v58
    %v401 = vpop.f32.mrb[0].mxu0
    %v402 = vadd.f32 %v105, %v401
    %v403 = vpop.f32.mrb[0].mxu0
    %v404 = vadd.f32 %v109, %v403
    %v405 = vpop.f32.mrb[0].mxu0
    %v406 = vadd.f32 %v105, %v405
    %v407 = vpop.f32.mrb[0].mxu0
    %v408 = vadd.f32 %v109, %v407
    %409 = vmatprep.mubr.bf16.mxu0 0
    %410 = vmatmul.mubr.bf16.gmra.mrb[0].mxu0 %v59
    %v411 = vpop.f32.mrb[0].mxu0
    %v412 = vadd.f32 %v105, %v411
    %v413 = vpop.f32.mrb[0].mxu0
    %v414 = vadd.f32 %v109, %v413
    %v415 = vpop.f32.mrb[0].mxu0
    %v416 = vadd.f32 %v105, %v415
    %v417 = vpop.f32.mrb[0].mxu0
    %v418 = vadd.f32 %v109, %v417
    %419 = vdwg.mxu0
    %420 = vst [vmem:[#allocation3] sm:$0xff] %v309
    %421 = vst [vmem:[#allocation3 + $0x8] sm:$0xff] %v311
    %422 = vst [vmem:[#allocation3 + $0x10] sm:$0xff] %v382
    %423 = vst [vmem:[#allocation3 + $0x18] sm:$0xff] %v384
    %424 = vst [vmem:[#allocation3 + $0x20] sm:$0xff] %v313
    %425 = vst [vmem:[#allocation3 + $0x28] sm:$0xff] %v315
    %426 = vst [vmem:[#allocation3 + $0x30] sm:$0xff] %v386
    %427 = vst [vmem:[#allocation3 + $0x38] sm:$0xff] %v388
    %428 = vst [vmem:[#allocation3 + $0x40] sm:$0xff] %v319
    %429 = vst [vmem:[#allocation3 + $0x48] sm:$0xff] %v321
    %430 = vst [vmem:[#allocation3 + $0x50] sm:$0xff] %v392
    %431 = vst [vmem:[#allocation3 + $0x58] sm:$0xff] %v394
    %432 = vst [vmem:[#allocation3 + $0x60] sm:$0xff] %v323
    %433 = vst [vmem:[#allocation3 + $0x68] sm:$0xff] %v325
    %434 = vst [vmem:[#allocation3 + $0x70] sm:$0xff] %v396
    %435 = vst [vmem:[#allocation3 + $0x78] sm:$0xff] %v398
    %436 = vst [vmem:[#allocation3 + $0x80] sm:$0xff] %v329
    %437 = vst [vmem:[#allocation3 + $0x88] sm:$0xff] %v331
    %438 = vst [vmem:[#allocation3 + $0x90] sm:$0xff] %v402
    %439 = vst [vmem:[#allocation3 + $0x98] sm:$0xff] %v404
    %440 = vst [vmem:[#allocation3 + $0xa0] sm:$0xff] %v333
    %441 = vst [vmem:[#allocation3 + $0xa8] sm:$0xff] %v335
    %442 = vst [vmem:[#allocation3 + $0xb0] sm:$0xff] %v406
    %443 = vst [vmem:[#allocation3 + $0xb8] sm:$0xff] %v408
    %444 = vst [vmem:[#allocation3 + $0xc0] sm:$0xff] %v339
    %445 = vst [vmem:[#allocation3 + $0xc8] sm:$0xff] %v341
    %446 = vst [vmem:[#allocation3 + $0xd0] sm:$0xff] %v412
    %447 = vst [vmem:[#allocation3 + $0xd8] sm:$0xff] %v414
    %448 = vst [vmem:[#allocation3 + $0xe0] sm:$0xff] %v343
    %449 = vst [vmem:[#allocation3 + $0xe8] sm:$0xff] %v345
    %450 = vst [vmem:[#allocation3 + $0xf0] sm:$0xff] %v416
    %451 = vst [vmem:[#allocation3 + $0xf8] sm:$0xff] %v418
    %452 = vst [vmem:[#allocation4] sm:$0xff] 0.0
    %453 = vst [vmem:[#allocation5] sm:$0xff] 0.0
    %v454 = vld [vmem:[#allocation4] sm:$0xff]
    %v455 = vld [vmem:[#allocation5] sm:$0xff]
    %v456 = vld [vmem:[#allocation3] sm:$0xff]
    %v457 = vld [vmem:[#allocation3 + $0x8] sm:$0xff]
    %v458 = vld [vmem:[#allocation3 + $0x10] sm:$0xff]
    %v459 = vld [vmem:[#allocation3 + $0x18] sm:$0xff]
    %v460 = vpack.c.bf16 %v454, %v454
    %v461 = vld [vmem:[#allocation6] sm:$0xff]
    %v462 = vld [vmem:[#allocation6 + $0x8] sm:$0xff]
    %v463 = vld [vmem:[#allocation6 + $0x10] sm:$0xff]
    %v464 = vld [vmem:[#allocation6 + $0x18] sm:$0xff]
    %v465 = vld [vmem:[#allocation6 + $0x20] sm:$0xff]
    %v466 = vld [vmem:[#allocation6 + $0x28] sm:$0xff]
    %v467 = vld [vmem:[#allocation6 + $0x30] sm:$0xff]
    %v468 = vld [vmem:[#allocation6 + $0x38] sm:$0xff]
    %v469 = vld [vmem:[#allocation6 + $0x40] sm:$0xff]
    %v470 = vld [vmem:[#allocation6 + $0x48] sm:$0xff]
    %v471 = vld [vmem:[#allocation6 + $0x50] sm:$0xff]
    %v472 = vld [vmem:[#allocation6 + $0x58] sm:$0xff]
    %v473 = vld [vmem:[#allocation6 + $0x60] sm:$0xff]
    %v474 = vld [vmem:[#allocation6 + $0x68] sm:$0xff]
    %v475 = vld [vmem:[#allocation6 + $0x70] sm:$0xff]
    %v476 = vld [vmem:[#allocation6 + $0x78] sm:$0xff]
    %v477 = vld [vmem:[#allocation6 + $0x80] sm:$0xff]
    %v478 = vld [vmem:[#allocation6 + $0x88] sm:$0xff]
    %v479 = vld [vmem:[#allocation6 + $0x90] sm:$0xff]
    %v480 = vld [vmem:[#allocation6 + $0x98] sm:$0xff]
    %v481 = vld [vmem:[#allocation6 + $0xa0] sm:$0xff]
    %v482 = vld [vmem:[#allocation6 + $0xa8] sm:$0xff]
    %v483 = vld [vmem:[#allocation6 + $0xb0] sm:$0xff]
    %v484 = vld [vmem:[#allocation6 + $0xb8] sm:$0xff]
    %v485 = vld [vmem:[#allocation6 + $0xc0] sm:$0xff]
    %v486 = vld [vmem:[#allocation6 + $0xc8] sm:$0xff]
    %v487 = vld [vmem:[#allocation6 + $0xd0] sm:$0xff]
    %v488 = vld [vmem:[#allocation6 + $0xd8] sm:$0xff]
    %v489 = vld [vmem:[#allocation6 + $0xe0] sm:$0xff]
    %v490 = vld [vmem:[#allocation6 + $0xe8] sm:$0xff]
    %v491 = vld [vmem:[#allocation6 + $0xf0] sm:$0xff]
    %v492 = vld [vmem:[#allocation6 + $0xf8] sm:$0xff]
    %v525 = vunpack.c.l.b16 %v461
    %v526 = vunpack.c.h.b16 %v461
    %v527 = vunpack.c.l.b16 %v462
    %v528 = vunpack.c.h.b16 %v462
    %v529 = vunpack.c.l.b16 %v463
    %v530 = vunpack.c.h.b16 %v463
    %v531 = vunpack.c.l.b16 %v464
    %v532 = vunpack.c.h.b16 %v464
    %v533 = vunpack.c.l.b16 %v465
    %v534 = vunpack.c.h.b16 %v465
    %v535 = vunpack.c.l.b16 %v466
    %v536 = vunpack.c.h.b16 %v466
    %v537 = vunpack.c.l.b16 %v467
    %v538 = vunpack.c.h.b16 %v467
    %v539 = vunpack.c.l.b16 %v468
    %v540 = vunpack.c.h.b16 %v468
    %v541 = vunpack.c.l.b16 %v469
    %v542 = vunpack.c.h.b16 %v469
    %v543 = vunpack.c.l.b16 %v470
    %v544 = vunpack.c.h.b16 %v470
    %v545 = vunpack.c.l.b16 %v471
    %v546 = vunpack.c.h.b16 %v471
    %v547 = vunpack.c.l.b16 %v472
    %v548 = vunpack.c.h.b16 %v472
    %v549 = vunpack.c.l.b16 %v473
    %v550 = vunpack.c.h.b16 %v473
    %v551 = vunpack.c.l.b16 %v474
    %v552 = vunpack.c.h.b16 %v474
    %v553 = vunpack.c.l.b16 %v475
    %v554 = vunpack.c.h.b16 %v475
    %v555 = vunpack.c.l.b16 %v476
    %v556 = vunpack.c.h.b16 %v476
    %v557 = vunpack.c.l.b16 %v477
    %v558 = vunpack.c.h.b16 %v477
    %v559 = vunpack.c.l.b16 %v478
    %v560 = vunpack.c.h.b16 %v478
    %v561 = vunpack.c.l.b16 %v479
    %v562 = vunpack.c.h.b16 %v479
    %v563 = vunpack.c.l.b16 %v480
    %v564 = vunpack.c.h.b16 %v480
    %v565 = vunpack.c.l.b16 %v481
    %v566 = vunpack.c.h.b16 %v481
    %v567 = vunpack.c.l.b16 %v482
    %v568 = vunpack.c.h.b16 %v482
    %v569 = vunpack.c.l.b16 %v483
    %v570 = vunpack.c.h.b16 %v483
    %v571 = vunpack.c.l.b16 %v484
    %v572 = vunpack.c.h.b16 %v484
    %v573 = vunpack.c.l.b16 %v485
    %v574 = vunpack.c.h.b16 %v485
    %v575 = vunpack.c.l.b16 %v486
    %v576 = vunpack.c.h.b16 %v486
    %v577 = vunpack.c.l.b16 %v487
    %v578 = vunpack.c.h.b16 %v487
    %v579 = vunpack.c.l.b16 %v488
    %v580 = vunpack.c.h.b16 %v488
    %v581 = vunpack.c.l.b16 %v489
    %v582 = vunpack.c.h.b16 %v489
    %v583 = vunpack.c.l.b16 %v490
    %v584 = vunpack.c.h.b16 %v490
    %v585 = vunpack.c.l.b16 %v491
    %v586 = vunpack.c.h.b16 %v491
    %v587 = vunpack.c.l.b16 %v492
    %v588 = vunpack.c.h.b16 %v492
    %v589 = vpack.c.b16 %v529, %v525
    %v590 = vpack.c.b16 %v530, %v526
    %v591 = vpack.c.b16 %v531, %v527
    %v592 = vpack.c.b16 %v532, %v528
    %v593 = vpack.c.b16 %v537, %v533
    %v594 = vpack.c.b16 %v538, %v534
    %v595 = vpack.c.b16 %v539, %v535
    %v596 = vpack.c.b16 %v540, %v536
    %v597 = vpack.c.b16 %v545, %v541
    %v598 = vpack.c.b16 %v546, %v542
    %v599 = vpack.c.b16 %v547, %v543
    %v600 = vpack.c.b16 %v548, %v544
    %v601 = vpack.c.b16 %v553, %v549
    %v602 = vpack.c.b16 %v554, %v550
    %v603 = vpack.c.b16 %v555, %v551
    %v604 = vpack.c.b16 %v556, %v552
    %v605 = vpack.c.b16 %v561, %v557
    %v606 = vpack.c.b16 %v562, %v558
    %v607 = vpack.c.b16 %v563, %v559
    %v608 = vpack.c.b16 %v564, %v560
    %v609 = vpack.c.b16 %v569, %v565
    %v610 = vpack.c.b16 %v570, %v566
    %v611 = vpack.c.b16 %v571, %v567
    %v612 = vpack.c.b16 %v572, %v568
    %v613 = vpack.c.b16 %v577, %v573
    %v614 = vpack.c.b16 %v578, %v574
    %v615 = vpack.c.b16 %v579, %v575
    %v616 = vpack.c.b16 %v580, %v576
    %v617 = vpack.c.b16 %v585, %v581
    %v618 = vpack.c.b16 %v586, %v582
    %v619 = vpack.c.b16 %v587, %v583
    %v620 = vpack.c.b16 %v588, %v584
    %653 = vmatprep.subr.bf16.mxu0 %v590
    %654 = vmatpush1.bf16.msra.mxu0 %v589
    %655 = vmatprep.subr.bf16.mxu0 %v594
    %656 = vmatpush1.bf16.msra.mxu0 %v593
    %657 = vmatprep.subr.bf16.mxu0 %v598
    %658 = vmatpush1.bf16.msra.mxu0 %v597
    %659 = vmatprep.subr.bf16.mxu0 %v602
    %660 = vmatpush1.bf16.msra.mxu0 %v601
    %661 = vmatprep.subr.bf16.mxu0 %v606
    %662 = vmatpush1.bf16.msra.mxu0 %v605
    %663 = vmatprep.subr.bf16.mxu0 %v610
    %664 = vmatpush1.bf16.msra.mxu0 %v609
    %665 = vmatprep.subr.bf16.mxu0 %v614
    %666 = vmatpush1.bf16.msra.mxu0 %v613
    %667 = vmatprep.subr.bf16.mxu0 %v618
    %668 = vmatpush1.bf16.msra.mxu0 %v617
    %669 = vmatprep.subr.bf16.mxu0 0
    %670 = vmatpush1.bf16.msra.mxu0 0
    %671 = vmatprep.subr.bf16.mxu0 0
    %672 = vmatpush1.bf16.msra.mxu0 0
    %673 = vmatprep.subr.bf16.mxu0 0
    %674 = vmatpush1.bf16.msra.mxu0 0
    %675 = vmatprep.subr.bf16.mxu0 0
    %676 = vmatpush1.bf16.msra.mxu0 0
    %677 = vmatprep.subr.bf16.mxu0 0
    %678 = vmatpush1.bf16.msra.mxu0 0
    %679 = vmatprep.subr.bf16.mxu0 0
    %680 = vmatpush1.bf16.msra.mxu0 0
    %681 = vmatprep.subr.bf16.mxu0 0
    %682 = vmatpush1.bf16.msra.mxu0 0
    %683 = vmatprep.subr.bf16.mxu0 0
    %684 = vmatpush1.bf16.msra.mxu0 0
    %685 = vmatprep.mubr.bf16.mxu0 0
    %686 = vmatmul.mubr.bf16.gmra.mrb[0].mxu0 %v460
    %v687 = vpop.f32.mrb[0].mxu0
    %v688 = vadd.f32 0.0, %v687
    %v689 = vpop.f32.mrb[0].mxu0
    %v690 = vadd.f32 0.0, %v689
    %v691 = vpop.f32.mrb[0].mxu0
    %v692 = vpop.f32.mrb[0].mxu0
    %693 = vdwg.mxu0
    %694 = vmatprep.subr.bf16.mxu0 %v592
    %695 = vmatpush1.bf16.msra.mxu0 %v591
    %696 = vmatprep.subr.bf16.mxu0 %v596
    %697 = vmatpush1.bf16.msra.mxu0 %v595
    %698 = vmatprep.subr.bf16.mxu0 %v600
    %699 = vmatpush1.bf16.msra.mxu0 %v599
    %700 = vmatprep.subr.bf16.mxu0 %v604
    %701 = vmatpush1.bf16.msra.mxu0 %v603
    %702 = vmatprep.subr.bf16.mxu0 %v608
    %703 = vmatpush1.bf16.msra.mxu0 %v607
    %704 = vmatprep.subr.bf16.mxu0 %v612
    %705 = vmatpush1.bf16.msra.mxu0 %v611
    %706 = vmatprep.subr.bf16.mxu0 %v616
    %707 = vmatpush1.bf16.msra.mxu0 %v615
    %708 = vmatprep.subr.bf16.mxu0 %v620
    %709 = vmatpush1.bf16.msra.mxu0 %v619
    %710 = vmatprep.subr.bf16.mxu0 0
    %711 = vmatpush1.bf16.msra.mxu0 0
    %712 = vmatprep.subr.bf16.mxu0 0
    %713 = vmatpush1.bf16.msra.mxu0 0
    %714 = vmatprep.subr.bf16.mxu0 0
    %715 = vmatpush1.bf16.msra.mxu0 0
    %716 = vmatprep.subr.bf16.mxu0 0
    %717 = vmatpush1.bf16.msra.mxu0 0
    %718 = vmatprep.subr.bf16.mxu0 0
    %719 = vmatpush1.bf16.msra.mxu0 0
    %720 = vmatprep.subr.bf16.mxu0 0
    %721 = vmatpush1.bf16.msra.mxu0 0
    %722 = vmatprep.subr.bf16.mxu0 0
    %723 = vmatpush1.bf16.msra.mxu0 0
    %724 = vmatprep.subr.bf16.mxu0 0
    %725 = vmatpush1.bf16.msra.mxu0 0
    %726 = vmatprep.mubr.bf16.mxu0 0
    %727 = vmatmul.mubr.bf16.gmra.mrb[0].mxu0 %v460
    %v728 = vpop.f32.mrb[0].mxu0
    %v729 = vadd.f32 0.0, %v728
    %v730 = vpop.f32.mrb[0].mxu0
    %v731 = vadd.f32 0.0, %v730
    %v732 = vpop.f32.mrb[0].mxu0
    %v733 = vpop.f32.mrb[0].mxu0
    %734 = vdwg.mxu0
    %v735 = vadd.f32 %v456, %v688
    %v736 = vadd.f32 %v457, %v690
    %v737 = vadd.f32 %v458, %v729
    %v738 = vadd.f32 %v459, %v731
    %v739 = vxor.u32 %v735, 2147483648
    %v740 = vmul.f32 %v739, 1.442695
    %v741 = vpow.pop %v740
    %v742 = vadd.f32 %v741, 1.0
    %v743 = vrcp.pop %v742
    %v744 = vmul.f32 1.0, %v743
    %v745 = vxor.u32 %v736, 2147483648
    %v746 = vmul.f32 %v745, 1.442695
    %v747 = vpow.pop %v746
    %v748 = vadd.f32 %v747, 1.0
    %v749 = vrcp.pop %v748
    %v750 = vmul.f32 1.0, %v749
    %v751 = vtanh.pop %v737
    %v752 = vxor.u32 %v738, 2147483648
    %v753 = vmul.f32 %v752, 1.442695
    %v754 = vpow.pop %v753
    %v755 = vadd.f32 %v754, 1.0
    %v756 = vrcp.pop %v755
    %v757 = vmul.f32 1.0, %v756
    %v758 = vmul.f32 %v750, %v455
    %v759 = vmul.f32 %v744, %v751
    %v760 = vadd.f32 %v758, %v759
    %v761 = vtanh.pop %v760
    %v762 = vmul.f32 %v757, %v761
    %763 = vst [vmem:[#allocation5] sm:$0xff] %v760
    %764 = vst [vmem:[#allocation4] sm:$0xff] %v762
    %765 = vst [vmem:[#allocation2] sm:$0xff] %v762
    %v766 = vld [vmem:[#allocation4] sm:$0xff]
    %v767 = vld [vmem:[#allocation5] sm:$0xff]
    %v768 = vld [vmem:[#allocation3 + $0x20] sm:$0xff]
    %v769 = vld [vmem:[#allocation3 + $0x28] sm:$0xff]
    %v770 = vld [vmem:[#allocation3 + $0x30] sm:$0xff]
    %v771 = vld [vmem:[#allocation3 + $0x38] sm:$0xff]
    %v772 = vpack.c.bf16 %v766, %v766
    %v773 = vld [vmem:[#allocation6] sm:$0xff]
    %v774 = vld [vmem:[#allocation6 + $0x8] sm:$0xff]
    %v775 = vld [vmem:[#allocation6 + $0x10] sm:$0xff]
    %v776 = vld [vmem:[#allocation6 + $0x18] sm:$0xff]
    %v777 = vld [vmem:[#allocation6 + $0x20] sm:$0xff]
    %v778 = vld [vmem:[#allocation6 + $0x28] sm:$0xff]
    %v779 = vld [vmem:[#allocation6 + $0x30] sm:$0xff]
    %v780 = vld [vmem:[#allocation6 + $0x38] sm:$0xff]
    %v781 = vld [vmem:[#allocation6 + $0x40] sm:$0xff]
    %v782 = vld [vmem:[#allocation6 + $0x48] sm:$0xff]
    %v783 = vld [vmem:[#allocation6 + $0x50] sm:$0xff]
    %v784 = vld [vmem:[#allocation6 + $0x58] sm:$0xff]
    %v785 = vld [vmem:[#allocation6 + $0x60] sm:$0xff]
    %v786 = vld [vmem:[#allocation6 + $0x68] sm:$0xff]
    %v787 = vld [vmem:[#allocation6 + $0x70] sm:$0xff]
    %v788 = vld [vmem:[#allocation6 + $0x78] sm:$0xff]
    %v789 = vld [vmem:[#allocation6 + $0x80] sm:$0xff]
    %v790 = vld [vmem:[#allocation6 + $0x88] sm:$0xff]
    %v791 = vld [vmem:[#allocation6 + $0x90] sm:$0xff]
    %v792 = vld [vmem:[#allocation6 + $0x98] sm:$0xff]
    %v793 = vld [vmem:[#allocation6 + $0xa0] sm:$0xff]
    %v794 = vld [vmem:[#allocation6 + $0xa8] sm:$0xff]
    %v795 = vld [vmem:[#allocation6 + $0xb0] sm:$0xff]
    %v796 = vld [vmem:[#allocation6 + $0xb8] sm:$0xff]
    %v797 = vld [vmem:[#allocation6 + $0xc0] sm:$0xff]
    %v798 = vld [vmem:[#allocation6 + $0xc8] sm:$0xff]
    %v799 = vld [vmem:[#allocation6 + $0xd0] sm:$0xff]
    %v800 = vld [vmem:[#allocation6 + $0xd8] sm:$0xff]
    %v801 = vld [vmem:[#allocation6 + $0xe0] sm:$0xff]
    %v802 = vld [vmem:[#allocation6 + $0xe8] sm:$0xff]
    %v803 = vld [vmem:[#allocation6 + $0xf0] sm:$0xff]
    %v804 = vld [vmem:[#allocation6 + $0xf8] sm:$0xff]
    %v837 = vunpack.c.l.b16 %v773
    %v838 = vunpack.c.h.b16 %v773
    %v839 = vunpack.c.l.b16 %v774
    %v840 = vunpack.c.h.b16 %v774
    %v841 = vunpack.c.l.b16 %v775
    %v842 = vunpack.c.h.b16 %v775
    %v843 = vunpack.c.l.b16 %v776
    %v844 = vunpack.c.h.b16 %v776
    %v845 = vunpack.c.l.b16 %v777
    %v846 = vunpack.c.h.b16 %v777
    %v847 = vunpack.c.l.b16 %v778
    %v848 = vunpack.c.h.b16 %v778
    %v849 = vunpack.c.l.b16 %v779
    %v850 = vunpack.c.h.b16 %v779
    %v851 = vunpack.c.l.b16 %v780
    %v852 = vunpack.c.h.b16 %v780
    %v853 = vunpack.c.l.b16 %v781
    %v854 = vunpack.c.h.b16 %v781
    %v855 = vunpack.c.l.b16 %v782
    %v856 = vunpack.c.h.b16 %v782
    %v857 = vunpack.c.l.b16 %v783
    %v858 = vunpack.c.h.b16 %v783
    %v859 = vunpack.c.l.b16 %v784
    %v860 = vunpack.c.h.b16 %v784
    %v861 = vunpack.c.l.b16 %v785
    %v862 = vunpack.c.h.b16 %v785
    %v863 = vunpack.c.l.b16 %v786
    %v864 = vunpack.c.h.b16 %v786
    %v865 = vunpack.c.l.b16 %v787
    %v866 = vunpack.c.h.b16 %v787
    %v867 = vunpack.c.l.b16 %v788
    %v868 = vunpack.c.h.b16 %v788
    %v869 = vunpack.c.l.b16 %v789
    %v870 = vunpack.c.h.b16 %v789
    %v871 = vunpack.c.l.b16 %v790
    %v872 = vunpack.c.h.b16 %v790
    %v873 = vunpack.c.l.b16 %v791
    %v874 = vunpack.c.h.b16 %v791
    %v875 = vunpack.c.l.b16 %v792
    %v876 = vunpack.c.h.b16 %v792
    %v877 = vunpack.c.l.b16 %v793
    %v878 = vunpack.c.h.b16 %v793
    %v879 = vunpack.c.l.b16 %v794
    %v880 = vunpack.c.h.b16 %v794
    %v881 = vunpack.c.l.b16 %v795
    %v882 = vunpack.c.h.b16 %v795
    %v883 = vunpack.c.l.b16 %v796
    %v884 = vunpack.c.h.b16 %v796
    %v885 = vunpack.c.l.b16 %v797
    %v886 = vunpack.c.h.b16 %v797
    %v887 = vunpack.c.l.b16 %v798
    %v888 = vunpack.c.h.b16 %v798
    %v889 = vunpack.c.l.b16 %v799
    %v890 = vunpack.c.h.b16 %v799
    %v891 = vunpack.c.l.b16 %v800
    %v892 = vunpack.c.h.b16 %v800
    %v893 = vunpack.c.l.b16 %v801
    %v894 = vunpack.c.h.b16 %v801
    %v895 = vunpack.c.l.b16 %v802
    %v896 = vunpack.c.h.b16 %v802
    %v897 = vunpack.c.l.b16 %v803
    %v898 = vunpack.c.h.b16 %v803
    %v899 = vunpack.c.l.b16 %v804
    %v900 = vunpack.c.h.b16 %v804
    %v901 = vpack.c.b16 %v841, %v837
    %v902 = vpack.c.b16 %v842, %v838
    %v903 = vpack.c.b16 %v843, %v839
    %v904 = vpack.c.b16 %v844, %v840
    %v905 = vpack.c.b16 %v849, %v845
    %v906 = vpack.c.b16 %v850, %v846
    %v907 = vpack.c.b16 %v851, %v847
    %v908 = vpack.c.b16 %v852, %v848
    %v909 = vpack.c.b16 %v857, %v853
    %v910 = vpack.c.b16 %v858, %v854
    %v911 = vpack.c.b16 %v859, %v855
    %v912 = vpack.c.b16 %v860, %v856
    %v913 = vpack.c.b16 %v865, %v861
    %v914 = vpack.c.b16 %v866, %v862
    %v915 = vpack.c.b16 %v867, %v863
    %v916 = vpack.c.b16 %v868, %v864
    %v917 = vpack.c.b16 %v873, %v869
    %v918 = vpack.c.b16 %v874, %v870
    %v919 = vpack.c.b16 %v875, %v871
    %v920 = vpack.c.b16 %v876, %v872
    %v921 = vpack.c.b16 %v881, %v877
    %v922 = vpack.c.b16 %v882, %v878
    %v923 = vpack.c.b16 %v883, %v879
    %v924 = vpack.c.b16 %v884, %v880
    %v925 = vpack.c.b16 %v889, %v885
    %v926 = vpack.c.b16 %v890, %v886
    %v927 = vpack.c.b16 %v891, %v887
    %v928 = vpack.c.b16 %v892, %v888
    %v929 = vpack.c.b16 %v897, %v893
    %v930 = vpack.c.b16 %v898, %v894
    %v931 = vpack.c.b16 %v899, %v895
    %v932 = vpack.c.b16 %v900, %v896
    %965 = vmatprep.subr.bf16.mxu0 %v902
    %966 = vmatpush1.bf16.msra.mxu0 %v901
    %967 = vmatprep.subr.bf16.mxu0 %v906
    %968 = vmatpush1.bf16.msra.mxu0 %v905
    %969 = vmatprep.subr.bf16.mxu0 %v910
    %970 = vmatpush1.bf16.msra.mxu0 %v909
    %971 = vmatprep.subr.bf16.mxu0 %v914
    %972 = vmatpush1.bf16.msra.mxu0 %v913
    %973 = vmatprep.subr.bf16.mxu0 %v918
    %974 = vmatpush1.bf16.msra.mxu0 %v917
    %975 = vmatprep.subr.bf16.mxu0 %v922
    %976 = vmatpush1.bf16.msra.mxu0 %v921
    %977 = vmatprep.subr.bf16.mxu0 %v926
    %978 = vmatpush1.bf16.msra.mxu0 %v925
    %979 = vmatprep.subr.bf16.mxu0 %v930
    %980 = vmatpush1.bf16.msra.mxu0 %v929
    %981 = vmatprep.subr.bf16.mxu0 0
    %982 = vmatpush1.bf16.msra.mxu0 0
    %983 = vmatprep.subr.bf16.mxu0 0
    %984 = vmatpush1.bf16.msra.mxu0 0
    %985 = vmatprep.subr.bf16.mxu0 0
    %986 = vmatpush1.bf16.msra.mxu0 0
    %987 = vmatprep.subr.bf16.mxu0 0
    %988 = vmatpush1.bf16.msra.mxu0 0
    %989 = vmatprep.subr.bf16.mxu0 0
    %990 = vmatpush1.bf16.msra.mxu0 0
    %991 = vmatprep.subr.bf16.mxu0 0
    %992 = vmatpush1.bf16.msra.mxu0 0
    %993 = vmatprep.subr.bf16.mxu0 0
    %994 = vmatpush1.bf16.msra.mxu0 0
    %995 = vmatprep.subr.bf16.mxu0 0
    %996 = vmatpush1.bf16.msra.mxu0 0
    %997 = vmatprep.mubr.bf16.mxu0 0
    %998 = vmatmul.mubr.bf16.gmra.mrb[0].mxu0 %v772
    %v999 = vpop.f32.mrb[0].mxu0
    %v1000 = vadd.f32 0.0, %v999
    %v1001 = vpop.f32.mrb[0].mxu0
    %v1002 = vadd.f32 0.0, %v1001
    %v1003 = vpop.f32.mrb[0].mxu0
    %v1004 = vpop.f32.mrb[0].mxu0
    %1005 = vdwg.mxu0
    %1006 = vmatprep.subr.bf16.mxu0 %v904
    %1007 = vmatpush1.bf16.msra.mxu0 %v903
    %1008 = vmatprep.subr.bf16.mxu0 %v908
    %1009 = vmatpush1.bf16.msra.mxu0 %v907
    %1010 = vmatprep.subr.bf16.mxu0 %v912
    %1011 = vmatpush1.bf16.msra.mxu0 %v911
    %1012 = vmatprep.subr.bf16.mxu0 %v916
    %1013 = vmatpush1.bf16.msra.mxu0 %v915
    %1014 = vmatprep.subr.bf16.mxu0 %v920
    %1015 = vmatpush1.bf16.msra.mxu0 %v919
    %1016 = vmatprep.subr.bf16.mxu0 %v924
    %1017 = vmatpush1.bf16.msra.mxu0 %v923
    %1018 = vmatprep.subr.bf16.mxu0 %v928
    %1019 = vmatpush1.bf16.msra.mxu0 %v927
    %1020 = vmatprep.subr.bf16.mxu0 %v932
    %1021 = vmatpush1.bf16.msra.mxu0 %v931
    %1022 = vmatprep.subr.bf16.mxu0 0
    %1023 = vmatpush1.bf16.msra.mxu0 0
    %1024 = vmatprep.subr.bf16.mxu0 0
    %1025 = vmatpush1.bf16.msra.mxu0 0
    %1026 = vmatprep.subr.bf16.mxu0 0
    %1027 = vmatpush1.bf16.msra.mxu0 0
    %1028 = vmatprep.subr.bf16.mxu0 0
    %1029 = vmatpush1.bf16.msra.mxu0 0
    %1030 = vmatprep.subr.bf16.mxu0 0
    %1031 = vmatpush1.bf16.msra.mxu0 0
    %1032 = vmatprep.subr.bf16.mxu0 0
    %1033 = vmatpush1.bf16.msra.mxu0 0
    %1034 = vmatprep.subr.bf16.mxu0 0
    %1035 = vmatpush1.bf16.msra.mxu0 0
    %1036 = vmatprep.subr.bf16.mxu0 0
    %1037 = vmatpush1.bf16.msra.mxu0 0
    %1038 = vmatprep.mubr.bf16.mxu0 0
    %1039 = vmatmul.mubr.bf16.gmra.mrb[0].mxu0 %v772
    %v1040 = vpop.f32.mrb[0].mxu0
    %v1041 = vadd.f32 0.0, %v1040
    %v1042 = vpop.f32.mrb[0].mxu0
    %v1043 = vadd.f32 0.0, %v1042
    %v1044 = vpop.f32.mrb[0].mxu0
    %v1045 = vpop.f32.mrb[0].mxu0
    %1046 = vdwg.mxu0
    %v1047 = vadd.f32 %v768, %v1000
    %v1048 = vadd.f32 %v769, %v1002
    %v1049 = vadd.f32 %v770, %v1041
    %v1050 = vadd.f32 %v771, %v1043
    %v1051 = vxor.u32 %v1047, 2147483648
    %v1052 = vmul.f32 %v1051, 1.442695
    %v1053 = vpow.pop %v1052
    %v1054 = vadd.f32 %v1053, 1.0
    %v1055 = vrcp.pop %v1054
    %v1056 = vmul.f32 1.0, %v1055
    %v1057 = vxor.u32 %v1048, 2147483648
    %v1058 = vmul.f32 %v1057, 1.442695
    %v1059 = vpow.pop %v1058
    %v1060 = vadd.f32 %v1059, 1.0
    %v1061 = vrcp.pop %v1060
    %v1062 = vmul.f32 1.0, %v1061
    %v1063 = vtanh.pop %v1049
    %v1064 = vxor.u32 %v1050, 2147483648
    %v1065 = vmul.f32 %v1064, 1.442695
    %v1066 = vpow.pop %v1065
    %v1067 = vadd.f32 %v1066, 1.0
    %v1068 = vrcp.pop %v1067
    %v1069 = vmul.f32 1.0, %v1068
    %v1070 = vmul.f32 %v1062, %v767
    %v1071 = vmul.f32 %v1056, %v1063
    %v1072 = vadd.f32 %v1070, %v1071
    %v1073 = vtanh.pop %v1072
    %v1074 = vmul.f32 %v1069, %v1073
    %1075 = vst [vmem:[#allocation5] sm:$0xff] %v1072
    %1076 = vst [vmem:[#allocation4] sm:$0xff] %v1074
    %1077 = vst [vmem:[#allocation2 + $0x8] sm:$0xff] %v1074
    %v1078 = vld [vmem:[#allocation4] sm:$0xff]
    %v1079 = vld [vmem:[#allocation5] sm:$0xff]
    %v1080 = vld [vmem:[#allocation3 + $0x40] sm:$0xff]
    %v1081 = vld [vmem:[#allocation3 + $0x48] sm:$0xff]
    %v1082 = vld [vmem:[#allocation3 + $0x50] sm:$0xff]
    %v1083 = vld [vmem:[#allocation3 + $0x58] sm:$0xff]
    %v1084 = vpack.c.bf16 %v1078, %v1078
    %v1085 = vld [vmem:[#allocation6] sm:$0xff]
    %v1086 = vld [vmem:[#allocation6 + $0x8] sm:$0xff]
    %v1087 = vld [vmem:[#allocation6 + $0x10] sm:$0xff]
    %v1088 = vld [vmem:[#allocation6 + $0x18] sm:$0xff]
    %v1089 = vld [vmem:[#allocation6 + $0x20] sm:$0xff]
    %v1090 = vld [vmem:[#allocation6 + $0x28] sm:$0xff]
    %v1091 = vld [vmem:[#allocation6 + $0x30] sm:$0xff]
    %v1092 = vld [vmem:[#allocation6 + $0x38] sm:$0xff]
    %v1093 = vld [vmem:[#allocation6 + $0x40] sm:$0xff]
    %v1094 = vld [vmem:[#allocation6 + $0x48] sm:$0xff]
    %v1095 = vld [vmem:[#allocation6 + $0x50] sm:$0xff]
    %v1096 = vld [vmem:[#allocation6 + $0x58] sm:$0xff]
    %v1097 = vld [vmem:[#allocation6 + $0x60] sm:$0xff]
    %v1098 = vld [vmem:[#allocation6 + $0x68] sm:$0xff]
    %v1099 = vld [vmem:[#allocation6 + $0x70] sm:$0xff]
    %v1100 = vld [vmem:[#allocation6 + $0x78] sm:$0xff]
    %v1101 = vld [vmem:[#allocation6 + $0x80] sm:$0xff]
    %v1102 = vld [vmem:[#allocation6 + $0x88] sm:$0xff]
    %v1103 = vld [vmem:[#allocation6 + $0x90] sm:$0xff]
    %v1104 = vld [vmem:[#allocation6 + $0x98] sm:$0xff]
    %v1105 = vld [vmem:[#allocation6 + $0xa0] sm:$0xff]
    %v1106 = vld [vmem:[#allocation6 + $0xa8] sm:$0xff]
    %v1107 = vld [vmem:[#allocation6 + $0xb0] sm:$0xff]
    %v1108 = vld [vmem:[#allocation6 + $0xb8] sm:$0xff]
    %v1109 = vld [vmem:[#allocation6 + $0xc0] sm:$0xff]
    %v1110 = vld [vmem:[#allocation6 + $0xc8] sm:$0xff]
    %v1111 = vld [vmem:[#allocation6 + $0xd0] sm:$0xff]
    %v1112 = vld [vmem:[#allocation6 + $0xd8] sm:$0xff]
    %v1113 = vld [vmem:[#allocation6 + $0xe0] sm:$0xff]
    %v1114 = vld [vmem:[#allocation6 + $0xe8] sm:$0xff]
    %v1115 = vld [vmem:[#allocation6 + $0xf0] sm:$0xff]
    %v1116 = vld [vmem:[#allocation6 + $0xf8] sm:$0xff]
    %v1149 = vunpack.c.l.b16 %v1085
    %v1150 = vunpack.c.h.b16 %v1085
    %v1151 = vunpack.c.l.b16 %v1086
    %v1152 = vunpack.c.h.b16 %v1086
    %v1153 = vunpack.c.l.b16 %v1087
    %v1154 = vunpack.c.h.b16 %v1087
    %v1155 = vunpack.c.l.b16 %v1088
    %v1156 = vunpack.c.h.b16 %v1088
    %v1157 = vunpack.c.l.b16 %v1089
    %v1158 = vunpack.c.h.b16 %v1089
    %v1159 = vunpack.c.l.b16 %v1090
    %v1160 = vunpack.c.h.b16 %v1090
    %v1161 = vunpack.c.l.b16 %v1091
    %v1162 = vunpack.c.h.b16 %v1091
    %v1163 = vunpack.c.l.b16 %v1092
    %v1164 = vunpack.c.h.b16 %v1092
    %v1165 = vunpack.c.l.b16 %v1093
    %v1166 = vunpack.c.h.b16 %v1093
    %v1167 = vunpack.c.l.b16 %v1094
    %v1168 = vunpack.c.h.b16 %v1094
    %v1169 = vunpack.c.l.b16 %v1095
    %v1170 = vunpack.c.h.b16 %v1095
    %v1171 = vunpack.c.l.b16 %v1096
    %v1172 = vunpack.c.h.b16 %v1096
    %v1173 = vunpack.c.l.b16 %v1097
    %v1174 = vunpack.c.h.b16 %v1097
    %v1175 = vunpack.c.l.b16 %v1098
    %v1176 = vunpack.c.h.b16 %v1098
    %v1177 = vunpack.c.l.b16 %v1099
    %v1178 = vunpack.c.h.b16 %v1099
    %v1179 = vunpack.c.l.b16 %v1100
    %v1180 = vunpack.c.h.b16 %v1100
    %v1181 = vunpack.c.l.b16 %v1101
    %v1182 = vunpack.c.h.b16 %v1101
    %v1183 = vunpack.c.l.b16 %v1102
    %v1184 = vunpack.c.h.b16 %v1102
    %v1185 = vunpack.c.l.b16 %v1103
    %v1186 = vunpack.c.h.b16 %v1103
    %v1187 = vunpack.c.l.b16 %v1104
    %v1188 = vunpack.c.h.b16 %v1104
    %v1189 = vunpack.c.l.b16 %v1105
    %v1190 = vunpack.c.h.b16 %v1105
    %v1191 = vunpack.c.l.b16 %v1106
    %v1192 = vunpack.c.h.b16 %v1106
    %v1193 = vunpack.c.l.b16 %v1107
    %v1194 = vunpack.c.h.b16 %v1107
    %v1195 = vunpack.c.l.b16 %v1108
    %v1196 = vunpack.c.h.b16 %v1108
    %v1197 = vunpack.c.l.b16 %v1109
    %v1198 = vunpack.c.h.b16 %v1109
    %v1199 = vunpack.c.l.b16 %v1110
    %v1200 = vunpack.c.h.b16 %v1110
    %v1201 = vunpack.c.l.b16 %v1111
    %v1202 = vunpack.c.h.b16 %v1111
    %v1203 = vunpack.c.l.b16 %v1112
    %v1204 = vunpack.c.h.b16 %v1112
    %v1205 = vunpack.c.l.b16 %v1113
    %v1206 = vunpack.c.h.b16 %v1113
    %v1207 = vunpack.c.l.b16 %v1114
    %v1208 = vunpack.c.h.b16 %v1114
    %v1209 = vunpack.c.l.b16 %v1115
    %v1210 = vunpack.c.h.b16 %v1115
    %v1211 = vunpack.c.l.b16 %v1116
    %v1212 = vunpack.c.h.b16 %v1116
    %v1213 = vpack.c.b16 %v1153, %v1149
    %v1214 = vpack.c.b16 %v1154, %v1150
    %v1215 = vpack.c.b16 %v1155, %v1151
    %v1216 = vpack.c.b16 %v1156, %v1152
    %v1217 = vpack.c.b16 %v1161, %v1157
    %v1218 = vpack.c.b16 %v1162, %v1158
    %v1219 = vpack.c.b16 %v1163, %v1159
    %v1220 = vpack.c.b16 %v1164, %v1160
    %v1221 = vpack.c.b16 %v1169, %v1165
    %v1222 = vpack.c.b16 %v1170, %v1166
    %v1223 = vpack.c.b16 %v1171, %v1167
    %v1224 = vpack.c.b16 %v1172, %v1168
    %v1225 = vpack.c.b16 %v1177, %v1173
    %v1226 = vpack.c.b16 %v1178, %v1174
    %v1227 = vpack.c.b16 %v1179, %v1175
    %v1228 = vpack.c.b16 %v1180, %v1176
    %v1229 = vpack.c.b16 %v1185, %v1181
    %v1230 = vpack.c.b16 %v1186, %v1182
    %v1231 = vpack.c.b16 %v1187, %v1183
    %v1232 = vpack.c.b16 %v1188, %v1184
    %v1233 = vpack.c.b16 %v1193, %v1189
    %v1234 = vpack.c.b16 %v1194, %v1190
    %v1235 = vpack.c.b16 %v1195, %v1191
    %v1236 = vpack.c.b16 %v1196, %v1192
    %v1237 = vpack.c.b16 %v1201, %v1197
    %v1238 = vpack.c.b16 %v1202, %v1198
    %v1239 = vpack.c.b16 %v1203, %v1199
    %v1240 = vpack.c.b16 %v1204, %v1200
    %v1241 = vpack.c.b16 %v1209, %v1205
    %v1242 = vpack.c.b16 %v1210, %v1206
    %v1243 = vpack.c.b16 %v1211, %v1207
    %v1244 = vpack.c.b16 %v1212, %v1208
    %1277 = vmatprep.subr.bf16.mxu0 %v1214
    %1278 = vmatpush1.bf16.msra.mxu0 %v1213
    %1279 = vmatprep.subr.bf16.mxu0 %v1218
    %1280 = vmatpush1.bf16.msra.mxu0 %v1217
    %1281 = vmatprep.subr.bf16.mxu0 %v1222
    %1282 = vmatpush1.bf16.msra.mxu0 %v1221
    %1283 = vmatprep.subr.bf16.mxu0 %v1226
    %1284 = vmatpush1.bf16.msra.mxu0 %v1225
    %1285 = vmatprep.subr.bf16.mxu0 %v1230
    %1286 = vmatpush1.bf16.msra.mxu0 %v1229
    %1287 = vmatprep.subr.bf16.mxu0 %v1234
    %1288 = vmatpush1.bf16.msra.mxu0 %v1233
    %1289 = vmatprep.subr.bf16.mxu0 %v1238
    %1290 = vmatpush1.bf16.msra.mxu0 %v1237
    %1291 = vmatprep.subr.bf16.mxu0 %v1242
    %1292 = vmatpush1.bf16.msra.mxu0 %v1241
    %1293 = vmatprep.subr.bf16.mxu0 0
    %1294 = vmatpush1.bf16.msra.mxu0 0
    %1295 = vmatprep.subr.bf16.mxu0 0
    %1296 = vmatpush1.bf16.msra.mxu0 0
    %1297 = vmatprep.subr.bf16.mxu0 0
    %1298 = vmatpush1.bf16.msra.mxu0 0
    %1299 = vmatprep.subr.bf16.mxu0 0
    %1300 = vmatpush1.bf16.msra.mxu0 0
    %1301 = vmatprep.subr.bf16.mxu0 0
    %1302 = vmatpush1.bf16.msra.mxu0 0
    %1303 = vmatprep.subr.bf16.mxu0 0
    %1304 = vmatpush1.bf16.msra.mxu0 0
    %1305 = vmatprep.subr.bf16.mxu0 0
    %1306 = vmatpush1.bf16.msra.mxu0 0
    %1307 = vmatprep.subr.bf16.mxu0 0
    %1308 = vmatpush1.bf16.msra.mxu0 0
    %1309 = vmatprep.mubr.bf16.mxu0 0
    %1310 = vmatmul.mubr.bf16.gmra.mrb[0].mxu0 %v1084
    %v1311 = vpop.f32.mrb[0].mxu0
    %v1312 = vadd.f32 0.0, %v1311
    %v1313 = vpop.f32.mrb[0].mxu0
    %v1314 = vadd.f32 0.0, %v1313
    %v1315 = vpop.f32.mrb[0].mxu0
    %v1316 = vpop.f32.mrb[0].mxu0
    %1317 = vdwg.mxu0
    %1318 = vmatprep.subr.bf16.mxu0 %v1216
    %1319 = vmatpush1.bf16.msra.mxu0 %v1215
    %1320 = vmatprep.subr.bf16.mxu0 %v1220
    %1321 = vmatpush1.bf16.msra.mxu0 %v1219
    %1322 = vmatprep.subr.bf16.mxu0 %v1224
    %1323 = vmatpush1.bf16.msra.mxu0 %v1223
    %1324 = vmatprep.subr.bf16.mxu0 %v1228
    %1325 = vmatpush1.bf16.msra.mxu0 %v1227
    %1326 = vmatprep.subr.bf16.mxu0 %v1232
    %1327 = vmatpush1.bf16.msra.mxu0 %v1231
    %1328 = vmatprep.subr.bf16.mxu0 %v1236
    %1329 = vmatpush1.bf16.msra.mxu0 %v1235
    %1330 = vmatprep.subr.bf16.mxu0 %v1240
    %1331 = vmatpush1.bf16.msra.mxu0 %v1239
    %1332 = vmatprep.subr.bf16.mxu0 %v1244
    %1333 = vmatpush1.bf16.msra.mxu0 %v1243
    %1334 = vmatprep.subr.bf16.mxu0 0
    %1335 = vmatpush1.bf16.msra.mxu0 0
    %1336 = vmatprep.subr.bf16.mxu0 0
    %1337 = vmatpush1.bf16.msra.mxu0 0
    %1338 = vmatprep.subr.bf16.mxu0 0
    %1339 = vmatpush1.bf16.msra.mxu0 0
    %1340 = vmatprep.subr.bf16.mxu0 0
    %1341 = vmatpush1.bf16.msra.mxu0 0
    %1342 = vmatprep.subr.bf16.mxu0 0
    %1343 = vmatpush1.bf16.msra.mxu0 0
    %1344 = vmatprep.subr.bf16.mxu0 0
    %1345 = vmatpush1.bf16.msra.mxu0 0
    %1346 = vmatprep.subr.bf16.mxu0 0
    %1347 = vmatpush1.bf16.msra.mxu0 0
    %1348 = vmatprep.subr.bf16.mxu0 0
    %1349 = vmatpush1.bf16.msra.mxu0 0
    %1350 = vmatprep.mubr.bf16.mxu0 0
    %1351 = vmatmul.mubr.bf16.gmra.mrb[0].mxu0 %v1084
    %v1352 = vpop.f32.mrb[0].mxu0
    %v1353 = vadd.f32 0.0, %v1352
    %v1354 = vpop.f32.mrb[0].mxu0
    %v1355 = vadd.f32 0.0, %v1354
    %v1356 = vpop.f32.mrb[0].mxu0
    %v1357 = vpop.f32.mrb[0].mxu0
    %1358 = vdwg.mxu0
    %v1359 = vadd.f32 %v1080, %v1312
    %v1360 = vadd.f32 %v1081, %v1314
    %v1361 = vadd.f32 %v1082, %v1353
    %v1362 = vadd.f32 %v1083, %v1355
    %v1363 = vxor.u32 %v1359, 2147483648
    %v1364 = vmul.f32 %v1363, 1.442695
    %v1365 = vpow.pop %v1364
    %v1366 = vadd.f32 %v1365, 1.0
    %v1367 = vrcp.pop %v1366
    %v1368 = vmul.f32 1.0, %v1367
    %v1369 = vxor.u32 %v1360, 2147483648
    %v1370 = vmul.f32 %v1369, 1.442695
    %v1371 = vpow.pop %v1370
    %v1372 = vadd.f32 %v1371, 1.0
    %v1373 = vrcp.pop %v1372
    %v1374 = vmul.f32 1.0, %v1373
    %v1375 = vtanh.pop %v1361
    %v1376 = vxor.u32 %v1362, 2147483648
    %v1377 = vmul.f32 %v1376, 1.442695
    %v1378 = vpow.pop %v1377
    %v1379 = vadd.f32 %v1378, 1.0
    %v1380 = vrcp.pop %v1379
    %v1381 = vmul.f32 1.0, %v1380
    %v1382 = vmul.f32 %v1374, %v1079
    %v1383 = vmul.f32 %v1368, %v1375
    %v1384 = vadd.f32 %v1382, %v1383
    %v1385 = vtanh.pop %v1384
    %v1386 = vmul.f32 %v1381, %v1385
    %1387 = vst [vmem:[#allocation5] sm:$0xff] %v1384
    %1388 = vst [vmem:[#allocation4] sm:$0xff] %v1386
    %1389 = vst [vmem:[#allocation2 + $0x10] sm:$0xff] %v1386
    %v1390 = vld [vmem:[#allocation4] sm:$0xff]
    %v1391 = vld [vmem:[#allocation5] sm:$0xff]
    %v1392 = vld [vmem:[#allocation3 + $0x60] sm:$0xff]
    %v1393 = vld [vmem:[#allocation3 + $0x68] sm:$0xff]
    %v1394 = vld [vmem:[#allocation3 + $0x70] sm:$0xff]
    %v1395 = vld [vmem:[#allocation3 + $0x78] sm:$0xff]
    %v1396 = vpack.c.bf16 %v1390, %v1390
    %v1397 = vld [vmem:[#allocation6] sm:$0xff]
    %v1398 = vld [vmem:[#allocation6 + $0x8] sm:$0xff]
    %v1399 = vld [vmem:[#allocation6 + $0x10] sm:$0xff]
    %v1400 = vld [vmem:[#allocation6 + $0x18] sm:$0xff]
    %v1401 = vld [vmem:[#allocation6 + $0x20] sm:$0xff]
    %v1402 = vld [vmem:[#allocation6 + $0x28] sm:$0xff]
    %v1403 = vld [vmem:[#allocation6 + $0x30] sm:$0xff]
    %v1404 = vld [vmem:[#allocation6 + $0x38] sm:$0xff]
    %v1405 = vld [vmem:[#allocation6 + $0x40] sm:$0xff]
    %v1406 = vld [vmem:[#allocation6 + $0x48] sm:$0xff]
    %v1407 = vld [vmem:[#allocation6 + $0x50] sm:$0xff]
    %v1408 = vld [vmem:[#allocation6 + $0x58] sm:$0xff]
    %v1409 = vld [vmem:[#allocation6 + $0x60] sm:$0xff]
    %v1410 = vld [vmem:[#allocation6 + $0x68] sm:$0xff]
    %v1411 = vld [vmem:[#allocation6 + $0x70] sm:$0xff]
    %v1412 = vld [vmem:[#allocation6 + $0x78] sm:$0xff]
    %v1413 = vld [vmem:[#allocation6 + $0x80] sm:$0xff]
    %v1414 = vld [vmem:[#allocation6 + $0x88] sm:$0xff]
    %v1415 = vld [vmem:[#allocation6 + $0x90] sm:$0xff]
    %v1416 = vld [vmem:[#allocation6 + $0x98] sm:$0xff]
    %v1417 = vld [vmem:[#allocation6 + $0xa0] sm:$0xff]
    %v1418 = vld [vmem:[#allocation6 + $0xa8] sm:$0xff]
    %v1419 = vld [vmem:[#allocation6 + $0xb0] sm:$0xff]
    %v1420 = vld [vmem:[#allocation6 + $0xb8] sm:$0xff]
    %v1421 = vld [vmem:[#allocation6 + $0xc0] sm:$0xff]
    %v1422 = vld [vmem:[#allocation6 + $0xc8] sm:$0xff]
    %v1423 = vld [vmem:[#allocation6 + $0xd0] sm:$0xff]
    %v1424 = vld [vmem:[#allocation6 + $0xd8] sm:$0xff]
    %v1425 = vld [vmem:[#allocation6 + $0xe0] sm:$0xff]
    %v1426 = vld [vmem:[#allocation6 + $0xe8] sm:$0xff]
    %v1427 = vld [vmem:[#allocation6 + $0xf0] sm:$0xff]
    %v1428 = vld [vmem:[#allocation6 + $0xf8] sm:$0xff]
    %v1461 = vunpack.c.l.b16 %v1397
    %v1462 = vunpack.c.h.b16 %v1397
    %v1463 = vunpack.c.l.b16 %v1398
    %v1464 = vunpack.c.h.b16 %v1398
    %v1465 = vunpack.c.l.b16 %v1399
    %v1466 = vunpack.c.h.b16 %v1399
    %v1467 = vunpack.c.l.b16 %v1400
    %v1468 = vunpack.c.h.b16 %v1400
    %v1469 = vunpack.c.l.b16 %v1401
    %v1470 = vunpack.c.h.b16 %v1401
    %v1471 = vunpack.c.l.b16 %v1402
    %v1472 = vunpack.c.h.b16 %v1402
    %v1473 = vunpack.c.l.b16 %v1403
    %v1474 = vunpack.c.h.b16 %v1403
    %v1475 = vunpack.c.l.b16 %v1404
    %v1476 = vunpack.c.h.b16 %v1404
    %v1477 = vunpack.c.l.b16 %v1405
    %v1478 = vunpack.c.h.b16 %v1405
    %v1479 = vunpack.c.l.b16 %v1406
    %v1480 = vunpack.c.h.b16 %v1406
    %v1481 = vunpack.c.l.b16 %v1407
    %v1482 = vunpack.c.h.b16 %v1407
    %v1483 = vunpack.c.l.b16 %v1408
    %v1484 = vunpack.c.h.b16 %v1408
    %v1485 = vunpack.c.l.b16 %v1409
    %v1486 = vunpack.c.h.b16 %v1409
    %v1487 = vunpack.c.l.b16 %v1410
    %v1488 = vunpack.c.h.b16 %v1410
    %v1489 = vunpack.c.l.b16 %v1411
    %v1490 = vunpack.c.h.b16 %v1411
    %v1491 = vunpack.c.l.b16 %v1412
    %v1492 = vunpack.c.h.b16 %v1412
    %v1493 = vunpack.c.l.b16 %v1413
    %v1494 = vunpack.c.h.b16 %v1413
    %v1495 = vunpack.c.l.b16 %v1414
    %v1496 = vunpack.c.h.b16 %v1414
    %v1497 = vunpack.c.l.b16 %v1415
    %v1498 = vunpack.c.h.b16 %v1415
    %v1499 = vunpack.c.l.b16 %v1416
    %v1500 = vunpack.c.h.b16 %v1416
    %v1501 = vunpack.c.l.b16 %v1417
    %v1502 = vunpack.c.h.b16 %v1417
    %v1503 = vunpack.c.l.b16 %v1418
    %v1504 = vunpack.c.h.b16 %v1418
    %v1505 = vunpack.c.l.b16 %v1419
    %v1506 = vunpack.c.h.b16 %v1419
    %v1507 = vunpack.c.l.b16 %v1420
    %v1508 = vunpack.c.h.b16 %v1420
    %v1509 = vunpack.c.l.b16 %v1421
    %v1510 = vunpack.c.h.b16 %v1421
    %v1511 = vunpack.c.l.b16 %v1422
    %v1512 = vunpack.c.h.b16 %v1422
    %v1513 = vunpack.c.l.b16 %v1423
    %v1514 = vunpack.c.h.b16 %v1423
    %v1515 = vunpack.c.l.b16 %v1424
    %v1516 = vunpack.c.h.b16 %v1424
    %v1517 = vunpack.c.l.b16 %v1425
    %v1518 = vunpack.c.h.b16 %v1425
    %v1519 = vunpack.c.l.b16 %v1426
    %v1520 = vunpack.c.h.b16 %v1426
    %v1521 = vunpack.c.l.b16 %v1427
    %v1522 = vunpack.c.h.b16 %v1427
    %v1523 = vunpack.c.l.b16 %v1428
    %v1524 = vunpack.c.h.b16 %v1428
    %v1525 = vpack.c.b16 %v1465, %v1461
    %v1526 = vpack.c.b16 %v1466, %v1462
    %v1527 = vpack.c.b16 %v1467, %v1463
    %v1528 = vpack.c.b16 %v1468, %v1464
    %v1529 = vpack.c.b16 %v1473, %v1469
    %v1530 = vpack.c.b16 %v1474, %v1470
    %v1531 = vpack.c.b16 %v1475, %v1471
    %v1532 = vpack.c.b16 %v1476, %v1472
    %v1533 = vpack.c.b16 %v1481, %v1477
    %v1534 = vpack.c.b16 %v1482, %v1478
    %v1535 = vpack.c.b16 %v1483, %v1479
    %v1536 = vpack.c.b16 %v1484, %v1480
    %v1537 = vpack.c.b16 %v1489, %v1485
    %v1538 = vpack.c.b16 %v1490, %v1486
    %v1539 = vpack.c.b16 %v1491, %v1487
    %v1540 = vpack.c.b16 %v1492, %v1488
    %v1541 = vpack.c.b16 %v1497, %v1493
    %v1542 = vpack.c.b16 %v1498, %v1494
    %v1543 = vpack.c.b16 %v1499, %v1495
    %v1544 = vpack.c.b16 %v1500, %v1496
    %v1545 = vpack.c.b16 %v1505, %v1501
    %v1546 = vpack.c.b16 %v1506, %v1502
    %v1547 = vpack.c.b16 %v1507, %v1503
    %v1548 = vpack.c.b16 %v1508, %v1504
    %v1549 = vpack.c.b16 %v1513, %v1509
    %v1550 = vpack.c.b16 %v1514, %v1510
    %v1551 = vpack.c.b16 %v1515, %v1511
    %v1552 = vpack.c.b16 %v1516, %v1512
    %v1553 = vpack.c.b16 %v1521, %v1517
    %v1554 = vpack.c.b16 %v1522, %v1518
    %v1555 = vpack.c.b16 %v1523, %v1519
    %v1556 = vpack.c.b16 %v1524, %v1520
    %1589 = vmatprep.subr.bf16.mxu0 %v1526
    %1590 = vmatpush1.bf16.msra.mxu0 %v1525
    %1591 = vmatprep.subr.bf16.mxu0 %v1530
    %1592 = vmatpush1.bf16.msra.mxu0 %v1529
    %1593 = vmatprep.subr.bf16.mxu0 %v1534
    %1594 = vmatpush1.bf16.msra.mxu0 %v1533
    %1595 = vmatprep.subr.bf16.mxu0 %v1538
    %1596 = vmatpush1.bf16.msra.mxu0 %v1537
    %1597 = vmatprep.subr.bf16.mxu0 %v1542
    %1598 = vmatpush1.bf16.msra.mxu0 %v1541
    %1599 = vmatprep.subr.bf16.mxu0 %v1546
    %1600 = vmatpush1.bf16.msra.mxu0 %v1545
    %1601 = vmatprep.subr.bf16.mxu0 %v1550
    %1602 = vmatpush1.bf16.msra.mxu0 %v1549
    %1603 = vmatprep.subr.bf16.mxu0 %v1554
    %1604 = vmatpush1.bf16.msra.mxu0 %v1553
    %1605 = vmatprep.subr.bf16.mxu0 0
    %1606 = vmatpush1.bf16.msra.mxu0 0
    %1607 = vmatprep.subr.bf16.mxu0 0
    %1608 = vmatpush1.bf16.msra.mxu0 0
    %1609 = vmatprep.subr.bf16.mxu0 0
    %1610 = vmatpush1.bf16.msra.mxu0 0
    %1611 = vmatprep.subr.bf16.mxu0 0
    %1612 = vmatpush1.bf16.msra.mxu0 0
    %1613 = vmatprep.subr.bf16.mxu0 0
    %1614 = vmatpush1.bf16.msra.mxu0 0
    %1615 = vmatprep.subr.bf16.mxu0 0
    %1616 = vmatpush1.bf16.msra.mxu0 0
    %1617 = vmatprep.subr.bf16.mxu0 0
    %1618 = vmatpush1.bf16.msra.mxu0 0
    %1619 = vmatprep.subr.bf16.mxu0 0
    %1620 = vmatpush1.bf16.msra.mxu0 0
    %1621 = vmatprep.mubr.bf16.mxu0 0
    %1622 = vmatmul.mubr.bf16.gmra.mrb[0].mxu0 %v1396
    %v1623 = vpop.f32.mrb[0].mxu0
    %v1624 = vadd.f32 0.0, %v1623
    %v1625 = vpop.f32.mrb[0].mxu0
    %v1626 = vadd.f32 0.0, %v1625
    %v1627 = vpop.f32.mrb[0].mxu0
    %v1628 = vpop.f32.mrb[0].mxu0
    %1629 = vdwg.mxu0
    %1630 = vmatprep.subr.bf16.mxu0 %v1528
    %1631 = vmatpush1.bf16.msra.mxu0 %v1527
    %1632 = vmatprep.subr.bf16.mxu0 %v1532
    %1633 = vmatpush1.bf16.msra.mxu0 %v1531
    %1634 = vmatprep.subr.bf16.mxu0 %v1536
    %1635 = vmatpush1.bf16.msra.mxu0 %v1535
    %1636 = vmatprep.subr.bf16.mxu0 %v1540
    %1637 = vmatpush1.bf16.msra.mxu0 %v1539
    %1638 = vmatprep.subr.bf16.mxu0 %v1544
    %1639 = vmatpush1.bf16.msra.mxu0 %v1543
    %1640 = vmatprep.subr.bf16.mxu0 %v1548
    %1641 = vmatpush1.bf16.msra.mxu0 %v1547
    %1642 = vmatprep.subr.bf16.mxu0 %v1552
    %1643 = vmatpush1.bf16.msra.mxu0 %v1551
    %1644 = vmatprep.subr.bf16.mxu0 %v1556
    %1645 = vmatpush1.bf16.msra.mxu0 %v1555
    %1646 = vmatprep.subr.bf16.mxu0 0
    %1647 = vmatpush1.bf16.msra.mxu0 0
    %1648 = vmatprep.subr.bf16.mxu0 0
    %1649 = vmatpush1.bf16.msra.mxu0 0
    %1650 = vmatprep.subr.bf16.mxu0 0
    %1651 = vmatpush1.bf16.msra.mxu0 0
    %1652 = vmatprep.subr.bf16.mxu0 0
    %1653 = vmatpush1.bf16.msra.mxu0 0
    %1654 = vmatprep.subr.bf16.mxu0 0
    %1655 = vmatpush1.bf16.msra.mxu0 0
    %1656 = vmatprep.subr.bf16.mxu0 0
    %1657 = vmatpush1.bf16.msra.mxu0 0
    %1658 = vmatprep.subr.bf16.mxu0 0
    %1659 = vmatpush1.bf16.msra.mxu0 0
    %1660 = vmatprep.subr.bf16.mxu0 0
    %1661 = vmatpush1.bf16.msra.mxu0 0
    %1662 = vmatprep.mubr.bf16.mxu0 0
    %1663 = vmatmul.mubr.bf16.gmra.mrb[0].mxu0 %v1396
    %v1664 = vpop.f32.mrb[0].mxu0
    %v1665 = vadd.f32 0.0, %v1664
    %v1666 = vpop.f32.mrb[0].mxu0
    %v1667 = vadd.f32 0.0, %v1666
    %v1668 = vpop.f32.mrb[0].mxu0
    %v1669 = vpop.f32.mrb[0].mxu0
    %1670 = vdwg.mxu0
    %v1671 = vadd.f32 %v1392, %v1624
    %v1672 = vadd.f32 %v1393, %v1626
    %v1673 = vadd.f32 %v1394, %v1665
    %v1674 = vadd.f32 %v1395, %v1667
    %v1675 = vxor.u32 %v1671, 2147483648
    %v1676 = vmul.f32 %v1675, 1.442695
    %v1677 = vpow.pop %v1676
    %v1678 = vadd.f32 %v1677, 1.0
    %v1679 = vrcp.pop %v1678
    %v1680 = vmul.f32 1.0, %v1679
    %v1681 = vxor.u32 %v1672, 2147483648
    %v1682 = vmul.f32 %v1681, 1.442695
    %v1683 = vpow.pop %v1682
    %v1684 = vadd.f32 %v1683, 1.0
    %v1685 = vrcp.pop %v1684
    %v1686 = vmul.f32 1.0, %v1685
    %v1687 = vtanh.pop %v1673
    %v1688 = vxor.u32 %v1674, 2147483648
    %v1689 = vmul.f32 %v1688, 1.442695
    %v1690 = vpow.pop %v1689
    %v1691 = vadd.f32 %v1690, 1.0
    %v1692 = vrcp.pop %v1691
    %v1693 = vmul.f32 1.0, %v1692
    %v1694 = vmul.f32 %v1686, %v1391
    %v1695 = vmul.f32 %v1680, %v1687
    %v1696 = vadd.f32 %v1694, %v1695
    %v1697 = vtanh.pop %v1696
    %v1698 = vmul.f32 %v1693, %v1697
    %1699 = vst [vmem:[#allocation5] sm:$0xff] %v1696
    %1700 = vst [vmem:[#allocation4] sm:$0xff] %v1698
    %1701 = vst [vmem:[#allocation2 + $0x18] sm:$0xff] %v1698
    %v1702 = vld [vmem:[#allocation4] sm:$0xff]
    %v1703 = vld [vmem:[#allocation5] sm:$0xff]
    %v1704 = vld [vmem:[#allocation3 + $0x80] sm:$0xff]
    %v1705 = vld [vmem:[#allocation3 + $0x88] sm:$0xff]
    %v1706 = vld [vmem:[#allocation3 + $0x90] sm:$0xff]
    %v1707 = vld [vmem:[#allocation3 + $0x98] sm:$0xff]
    %v1708 = vpack.c.bf16 %v1702, %v1702
    %v1709 = vld [vmem:[#allocation6] sm:$0xff]
    %v1710 = vld [vmem:[#allocation6 + $0x8] sm:$0xff]
    %v1711 = vld [vmem:[#allocation6 + $0x10] sm:$0xff]
    %v1712 = vld [vmem:[#allocation6 + $0x18] sm:$0xff]
    %v1713 = vld [vmem:[#allocation6 + $0x20] sm:$0xff]
    %v1714 = vld [vmem:[#allocation6 + $0x28] sm:$0xff]
    %v1715 = vld [vmem:[#allocation6 + $0x30] sm:$0xff]
    %v1716 = vld [vmem:[#allocation6 + $0x38] sm:$0xff]
    %v1717 = vld [vmem:[#allocation6 + $0x40] sm:$0xff]
    %v1718 = vld [vmem:[#allocation6 + $0x48] sm:$0xff]
    %v1719 = vld [vmem:[#allocation6 + $0x50] sm:$0xff]
    %v1720 = vld [vmem:[#allocation6 + $0x58] sm:$0xff]
    %v1721 = vld [vmem:[#allocation6 + $0x60] sm:$0xff]
    %v1722 = vld [vmem:[#allocation6 + $0x68] sm:$0xff]
    %v1723 = vld [vmem:[#allocation6 + $0x70] sm:$0xff]
    %v1724 = vld [vmem:[#allocation6 + $0x78] sm:$0xff]
    %v1725 = vld [vmem:[#allocation6 + $0x80] sm:$0xff]
    %v1726 = vld [vmem:[#allocation6 + $0x88] sm:$0xff]
    %v1727 = vld [vmem:[#allocation6 + $0x90] sm:$0xff]
    %v1728 = vld [vmem:[#allocation6 + $0x98] sm:$0xff]
    %v1729 = vld [vmem:[#allocation6 + $0xa0] sm:$0xff]
    %v1730 = vld [vmem:[#allocation6 + $0xa8] sm:$0xff]
    %v1731 = vld [vmem:[#allocation6 + $0xb0] sm:$0xff]
    %v1732 = vld [vmem:[#allocation6 + $0xb8] sm:$0xff]
    %v1733 = vld [vmem:[#allocation6 + $0xc0] sm:$0xff]
    %v1734 = vld [vmem:[#allocation6 + $0xc8] sm:$0xff]
    %v1735 = vld [vmem:[#allocation6 + $0xd0] sm:$0xff]
    %v1736 = vld [vmem:[#allocation6 + $0xd8] sm:$0xff]
    %v1737 = vld [vmem:[#allocation6 + $0xe0] sm:$0xff]
    %v1738 = vld [vmem:[#allocation6 + $0xe8] sm:$0xff]
    %v1739 = vld [vmem:[#allocation6 + $0xf0] sm:$0xff]
    %v1740 = vld [vmem:[#allocation6 + $0xf8] sm:$0xff]
    %v1773 = vunpack.c.l.b16 %v1709
    %v1774 = vunpack.c.h.b16 %v1709
    %v1775 = vunpack.c.l.b16 %v1710
    %v1776 = vunpack.c.h.b16 %v1710
    %v1777 = vunpack.c.l.b16 %v1711
    %v1778 = vunpack.c.h.b16 %v1711
    %v1779 = vunpack.c.l.b16 %v1712
    %v1780 = vunpack.c.h.b16 %v1712
    %v1781 = vunpack.c.l.b16 %v1713
    %v1782 = vunpack.c.h.b16 %v1713
    %v1783 = vunpack.c.l.b16 %v1714
    %v1784 = vunpack.c.h.b16 %v1714
    %v1785 = vunpack.c.l.b16 %v1715
    %v1786 = vunpack.c.h.b16 %v1715
    %v1787 = vunpack.c.l.b16 %v1716
    %v1788 = vunpack.c.h.b16 %v1716
    %v1789 = vunpack.c.l.b16 %v1717
    %v1790 = vunpack.c.h.b16 %v1717
    %v1791 = vunpack.c.l.b16 %v1718
    %v1792 = vunpack.c.h.b16 %v1718
    %v1793 = vunpack.c.l.b16 %v1719
    %v1794 = vunpack.c.h.b16 %v1719
    %v1795 = vunpack.c.l.b16 %v1720
    %v1796 = vunpack.c.h.b16 %v1720
    %v1797 = vunpack.c.l.b16 %v1721
    %v1798 = vunpack.c.h.b16 %v1721
    %v1799 = vunpack.c.l.b16 %v1722
    %v1800 = vunpack.c.h.b16 %v1722
    %v1801 = vunpack.c.l.b16 %v1723
    %v1802 = vunpack.c.h.b16 %v1723
    %v1803 = vunpack.c.l.b16 %v1724
    %v1804 = vunpack.c.h.b16 %v1724
    %v1805 = vunpack.c.l.b16 %v1725
    %v1806 = vunpack.c.h.b16 %v1725
    %v1807 = vunpack.c.l.b16 %v1726
    %v1808 = vunpack.c.h.b16 %v1726
    %v1809 = vunpack.c.l.b16 %v1727
    %v1810 = vunpack.c.h.b16 %v1727
    %v1811 = vunpack.c.l.b16 %v1728
    %v1812 = vunpack.c.h.b16 %v1728
    %v1813 = vunpack.c.l.b16 %v1729
    %v1814 = vunpack.c.h.b16 %v1729
    %v1815 = vunpack.c.l.b16 %v1730
    %v1816 = vunpack.c.h.b16 %v1730
    %v1817 = vunpack.c.l.b16 %v1731
    %v1818 = vunpack.c.h.b16 %v1731
    %v1819 = vunpack.c.l.b16 %v1732
    %v1820 = vunpack.c.h.b16 %v1732
    %v1821 = vunpack.c.l.b16 %v1733
    %v1822 = vunpack.c.h.b16 %v1733
    %v1823 = vunpack.c.l.b16 %v1734
    %v1824 = vunpack.c.h.b16 %v1734
    %v1825 = vunpack.c.l.b16 %v1735
    %v1826 = vunpack.c.h.b16 %v1735
    %v1827 = vunpack.c.l.b16 %v1736
    %v1828 = vunpack.c.h.b16 %v1736
    %v1829 = vunpack.c.l.b16 %v1737
    %v1830 = vunpack.c.h.b16 %v1737
    %v1831 = vunpack.c.l.b16 %v1738
    %v1832 = vunpack.c.h.b16 %v1738
    %v1833 = vunpack.c.l.b16 %v1739
    %v1834 = vunpack.c.h.b16 %v1739
    %v1835 = vunpack.c.l.b16 %v1740
    %v1836 = vunpack.c.h.b16 %v1740
    %v1837 = vpack.c.b16 %v1777, %v1773
    %v1838 = vpack.c.b16 %v1778, %v1774
    %v1839 = vpack.c.b16 %v1779, %v1775
    %v1840 = vpack.c.b16 %v1780, %v1776
    %v1841 = vpack.c.b16 %v1785, %v1781
    %v1842 = vpack.c.b16 %v1786, %v1782
    %v1843 = vpack.c.b16 %v1787, %v1783
    %v1844 = vpack.c.b16 %v1788, %v1784
    %v1845 = vpack.c.b16 %v1793, %v1789
    %v1846 = vpack.c.b16 %v1794, %v1790
    %v1847 = vpack.c.b16 %v1795, %v1791
    %v1848 = vpack.c.b16 %v1796, %v1792
    %v1849 = vpack.c.b16 %v1801, %v1797
    %v1850 = vpack.c.b16 %v1802, %v1798
    %v1851 = vpack.c.b16 %v1803, %v1799
    %v1852 = vpack.c.b16 %v1804, %v1800
    %v1853 = vpack.c.b16 %v1809, %v1805
    %v1854 = vpack.c.b16 %v1810, %v1806
    %v1855 = vpack.c.b16 %v1811, %v1807
    %v1856 = vpack.c.b16 %v1812, %v1808
    %v1857 = vpack.c.b16 %v1817, %v1813
    %v1858 = vpack.c.b16 %v1818, %v1814
    %v1859 = vpack.c.b16 %v1819, %v1815
    %v1860 = vpack.c.b16 %v1820, %v1816
    %v1861 = vpack.c.b16 %v1825, %v1821
    %v1862 = vpack.c.b16 %v1826, %v1822
    %v1863 = vpack.c.b16 %v1827, %v1823
    %v1864 = vpack.c.b16 %v1828, %v1824
    %v1865 = vpack.c.b16 %v1833, %v1829
    %v1866 = vpack.c.b16 %v1834, %v1830
    %v1867 = vpack.c.b16 %v1835, %v1831
    %v1868 = vpack.c.b16 %v1836, %v1832
    %1901 = vmatprep.subr.bf16.mxu0 %v1838
    %1902 = vmatpush1.bf16.msra.mxu0 %v1837
    %1903 = vmatprep.subr.bf16.mxu0 %v1842
    %1904 = vmatpush1.bf16.msra.mxu0 %v1841
    %1905 = vmatprep.subr.bf16.mxu0 %v1846
    %1906 = vmatpush1.bf16.msra.mxu0 %v1845
    %1907 = vmatprep.subr.bf16.mxu0 %v1850
    %1908 = vmatpush1.bf16.msra.mxu0 %v1849
    %1909 = vmatprep.subr.bf16.mxu0 %v1854
    %1910 = vmatpush1.bf16.msra.mxu0 %v1853
    %1911 = vmatprep.subr.bf16.mxu0 %v1858
    %1912 = vmatpush1.bf16.msra.mxu0 %v1857
    %1913 = vmatprep.subr.bf16.mxu0 %v1862
    %1914 = vmatpush1.bf16.msra.mxu0 %v1861
    %1915 = vmatprep.subr.bf16.mxu0 %v1866
    %1916 = vmatpush1.bf16.msra.mxu0 %v1865
    %1917 = vmatprep.subr.bf16.mxu0 0
    %1918 = vmatpush1.bf16.msra.mxu0 0
    %1919 = vmatprep.subr.bf16.mxu0 0
    %1920 = vmatpush1.bf16.msra.mxu0 0
    %1921 = vmatprep.subr.bf16.mxu0 0
    %1922 = vmatpush1.bf16.msra.mxu0 0
    %1923 = vmatprep.subr.bf16.mxu0 0
    %1924 = vmatpush1.bf16.msra.mxu0 0
    %1925 = vmatprep.subr.bf16.mxu0 0
    %1926 = vmatpush1.bf16.msra.mxu0 0
    %1927 = vmatprep.subr.bf16.mxu0 0
    %1928 = vmatpush1.bf16.msra.mxu0 0
    %1929 = vmatprep.subr.bf16.mxu0 0
    %1930 = vmatpush1.bf16.msra.mxu0 0
    %1931 = vmatprep.subr.bf16.mxu0 0
    %1932 = vmatpush1.bf16.msra.mxu0 0
    %1933 = vmatprep.mubr.bf16.mxu0 0
    %1934 = vmatmul.mubr.bf16.gmra.mrb[0].mxu0 %v1708
    %v1935 = vpop.f32.mrb[0].mxu0
    %v1936 = vadd.f32 0.0, %v1935
    %v1937 = vpop.f32.mrb[0].mxu0
    %v1938 = vadd.f32 0.0, %v1937
    %v1939 = vpop.f32.mrb[0].mxu0
    %v1940 = vpop.f32.mrb[0].mxu0
    %1941 = vdwg.mxu0
    %1942 = vmatprep.subr.bf16.mxu0 %v1840
    %1943 = vmatpush1.bf16.msra.mxu0 %v1839
    %1944 = vmatprep.subr.bf16.mxu0 %v1844
    %1945 = vmatpush1.bf16.msra.mxu0 %v1843
    %1946 = vmatprep.subr.bf16.mxu0 %v1848
    %1947 = vmatpush1.bf16.msra.mxu0 %v1847
    %1948 = vmatprep.subr.bf16.mxu0 %v1852
    %1949 = vmatpush1.bf16.msra.mxu0 %v1851
    %1950 = vmatprep.subr.bf16.mxu0 %v1856
    %1951 = vmatpush1.bf16.msra.mxu0 %v1855
    %1952 = vmatprep.subr.bf16.mxu0 %v1860
    %1953 = vmatpush1.bf16.msra.mxu0 %v1859
    %1954 = vmatprep.subr.bf16.mxu0 %v1864
    %1955 = vmatpush1.bf16.msra.mxu0 %v1863
    %1956 = vmatprep.subr.bf16.mxu0 %v1868
    %1957 = vmatpush1.bf16.msra.mxu0 %v1867
    %1958 = vmatprep.subr.bf16.mxu0 0
    %1959 = vmatpush1.bf16.msra.mxu0 0
    %1960 = vmatprep.subr.bf16.mxu0 0
    %1961 = vmatpush1.bf16.msra.mxu0 0
    %1962 = vmatprep.subr.bf16.mxu0 0
    %1963 = vmatpush1.bf16.msra.mxu0 0
    %1964 = vmatprep.subr.bf16.mxu0 0
    %1965 = vmatpush1.bf16.msra.mxu0 0
    %1966 = vmatprep.subr.bf16.mxu0 0
    %1967 = vmatpush1.bf16.msra.mxu0 0
    %1968 = vmatprep.subr.bf16.mxu0 0
    %1969 = vmatpush1.bf16.msra.mxu0 0
    %1970 = vmatprep.subr.bf16.mxu0 0
    %1971 = vmatpush1.bf16.msra.mxu0 0
    %1972 = vmatprep.subr.bf16.mxu0 0
    %1973 = vmatpush1.bf16.msra.mxu0 0
    %1974 = vmatprep.mubr.bf16.mxu0 0
    %1975 = vmatmul.mubr.bf16.gmra.mrb[0].mxu0 %v1708
    %v1976 = vpop.f32.mrb[0].mxu0
    %v1977 = vadd.f32 0.0, %v1976
    %v1978 = vpop.f32.mrb[0].mxu0
    %v1979 = vadd.f32 0.0, %v1978
    %v1980 = vpop.f32.mrb[0].mxu0
    %v1981 = vpop.f32.mrb[0].mxu0
    %1982 = vdwg.mxu0
    %v1983 = vadd.f32 %v1704, %v1936
    %v1984 = vadd.f32 %v1705, %v1938
    %v1985 = vadd.f32 %v1706, %v1977
    %v1986 = vadd.f32 %v1707, %v1979
    %v1987 = vxor.u32 %v1983, 2147483648
    %v1988 = vmul.f32 %v1987, 1.442695
    %v1989 = vpow.pop %v1988
    %v1990 = vadd.f32 %v1989, 1.0
    %v1991 = vrcp.pop %v1990
    %v1992 = vmul.f32 1.0, %v1991
    %v1993 = vxor.u32 %v1984, 2147483648
    %v1994 = vmul.f32 %v1993, 1.442695
    %v1995 = vpow.pop %v1994
    %v1996 = vadd.f32 %v1995, 1.0
    %v1997 = vrcp.pop %v1996
    %v1998 = vmul.f32 1.0, %v1997
    %v1999 = vtanh.pop %v1985
    %v2000 = vxor.u32 %v1986, 2147483648
    %v2001 = vmul.f32 %v2000, 1.442695
    %v2002 = vpow.pop %v2001
    %v2003 = vadd.f32 %v2002, 1.0
    %v2004 = vrcp.pop %v2003
    %v2005 = vmul.f32 1.0, %v2004
    %v2006 = vmul.f32 %v1998, %v1703
    %v2007 = vmul.f32 %v1992, %v1999
    %v2008 = vadd.f32 %v2006, %v2007
    %v2009 = vtanh.pop %v2008
    %v2010 = vmul.f32 %v2005, %v2009
    %2011 = vst [vmem:[#allocation5] sm:$0xff] %v2008
    %2012 = vst [vmem:[#allocation4] sm:$0xff] %v2010
    %2013 = vst [vmem:[#allocation2 + $0x20] sm:$0xff] %v2010
    %v2014 = vld [vmem:[#allocation4] sm:$0xff]
    %v2015 = vld [vmem:[#allocation5] sm:$0xff]
    %v2016 = vld [vmem:[#allocation3 + $0xa0] sm:$0xff]
    %v2017 = vld [vmem:[#allocation3 + $0xa8] sm:$0xff]
    %v2018 = vld [vmem:[#allocation3 + $0xb0] sm:$0xff]
    %v2019 = vld [vmem:[#allocation3 + $0xb8] sm:$0xff]
    %v2020 = vpack.c.bf16 %v2014, %v2014
    %v2021 = vld [vmem:[#allocation6] sm:$0xff]
    %v2022 = vld [vmem:[#allocation6 + $0x8] sm:$0xff]
    %v2023 = vld [vmem:[#allocation6 + $0x10] sm:$0xff]
    %v2024 = vld [vmem:[#allocation6 + $0x18] sm:$0xff]
    %v2025 = vld [vmem:[#allocation6 + $0x20] sm:$0xff]
    %v2026 = vld [vmem:[#allocation6 + $0x28] sm:$0xff]
    %v2027 = vld [vmem:[#allocation6 + $0x30] sm:$0xff]
    %v2028 = vld [vmem:[#allocation6 + $0x38] sm:$0xff]
    %v2029 = vld [vmem:[#allocation6 + $0x40] sm:$0xff]
    %v2030 = vld [vmem:[#allocation6 + $0x48] sm:$0xff]
    %v2031 = vld [vmem:[#allocation6 + $0x50] sm:$0xff]
    %v2032 = vld [vmem:[#allocation6 + $0x58] sm:$0xff]
    %v2033 = vld [vmem:[#allocation6 + $0x60] sm:$0xff]
    %v2034 = vld [vmem:[#allocation6 + $0x68] sm:$0xff]
    %v2035 = vld [vmem:[#allocation6 + $0x70] sm:$0xff]
    %v2036 = vld [vmem:[#allocation6 + $0x78] sm:$0xff]
    %v2037 = vld [vmem:[#allocation6 + $0x80] sm:$0xff]
    %v2038 = vld [vmem:[#allocation6 + $0x88] sm:$0xff]
    %v2039 = vld [vmem:[#allocation6 + $0x90] sm:$0xff]
    %v2040 = vld [vmem:[#allocation6 + $0x98] sm:$0xff]
    %v2041 = vld [vmem:[#allocation6 + $0xa0] sm:$0xff]
    %v2042 = vld [vmem:[#allocation6 + $0xa8] sm:$0xff]
    %v2043 = vld [vmem:[#allocation6 + $0xb0] sm:$0xff]
    %v2044 = vld [vmem:[#allocation6 + $0xb8] sm:$0xff]
    %v2045 = vld [vmem:[#allocation6 + $0xc0] sm:$0xff]
    %v2046 = vld [vmem:[#allocation6 + $0xc8] sm:$0xff]
    %v2047 = vld [vmem:[#allocation6 + $0xd0] sm:$0xff]
    %v2048 = vld [vmem:[#allocation6 + $0xd8] sm:$0xff]
    %v2049 = vld [vmem:[#allocation6 + $0xe0] sm:$0xff]
    %v2050 = vld [vmem:[#allocation6 + $0xe8] sm:$0xff]
    %v2051 = vld [vmem:[#allocation6 + $0xf0] sm:$0xff]
    %v2052 = vld [vmem:[#allocation6 + $0xf8] sm:$0xff]
    %v2085 = vunpack.c.l.b16 %v2021
    %v2086 = vunpack.c.h.b16 %v2021
    %v2087 = vunpack.c.l.b16 %v2022
    %v2088 = vunpack.c.h.b16 %v2022
    %v2089 = vunpack.c.l.b16 %v2023
    %v2090 = vunpack.c.h.b16 %v2023
    %v2091 = vunpack.c.l.b16 %v2024
    %v2092 = vunpack.c.h.b16 %v2024
    %v2093 = vunpack.c.l.b16 %v2025
    %v2094 = vunpack.c.h.b16 %v2025
    %v2095 = vunpack.c.l.b16 %v2026
    %v2096 = vunpack.c.h.b16 %v2026
    %v2097 = vunpack.c.l.b16 %v2027
    %v2098 = vunpack.c.h.b16 %v2027
    %v2099 = vunpack.c.l.b16 %v2028
    %v2100 = vunpack.c.h.b16 %v2028
    %v2101 = vunpack.c.l.b16 %v2029
    %v2102 = vunpack.c.h.b16 %v2029
    %v2103 = vunpack.c.l.b16 %v2030
    %v2104 = vunpack.c.h.b16 %v2030
    %v2105 = vunpack.c.l.b16 %v2031
    %v2106 = vunpack.c.h.b16 %v2031
    %v2107 = vunpack.c.l.b16 %v2032
    %v2108 = vunpack.c.h.b16 %v2032
    %v2109 = vunpack.c.l.b16 %v2033
    %v2110 = vunpack.c.h.b16 %v2033
    %v2111 = vunpack.c.l.b16 %v2034
    %v2112 = vunpack.c.h.b16 %v2034
    %v2113 = vunpack.c.l.b16 %v2035
    %v2114 = vunpack.c.h.b16 %v2035
    %v2115 = vunpack.c.l.b16 %v2036
    %v2116 = vunpack.c.h.b16 %v2036
    %v2117 = vunpack.c.l.b16 %v2037
    %v2118 = vunpack.c.h.b16 %v2037
    %v2119 = vunpack.c.l.b16 %v2038
    %v2120 = vunpack.c.h.b16 %v2038
    %v2121 = vunpack.c.l.b16 %v2039
    %v2122 = vunpack.c.h.b16 %v2039
    %v2123 = vunpack.c.l.b16 %v2040
    %v2124 = vunpack.c.h.b16 %v2040
    %v2125 = vunpack.c.l.b16 %v2041
    %v2126 = vunpack.c.h.b16 %v2041
    %v2127 = vunpack.c.l.b16 %v2042
    %v2128 = vunpack.c.h.b16 %v2042
    %v2129 = vunpack.c.l.b16 %v2043
    %v2130 = vunpack.c.h.b16 %v2043
    %v2131 = vunpack.c.l.b16 %v2044
    %v2132 = vunpack.c.h.b16 %v2044
    %v2133 = vunpack.c.l.b16 %v2045
    %v2134 = vunpack.c.h.b16 %v2045
    %v2135 = vunpack.c.l.b16 %v2046
    %v2136 = vunpack.c.h.b16 %v2046
    %v2137 = vunpack.c.l.b16 %v2047
    %v2138 = vunpack.c.h.b16 %v2047
    %v2139 = vunpack.c.l.b16 %v2048
    %v2140 = vunpack.c.h.b16 %v2048
    %v2141 = vunpack.c.l.b16 %v2049
    %v2142 = vunpack.c.h.b16 %v2049
    %v2143 = vunpack.c.l.b16 %v2050
    %v2144 = vunpack.c.h.b16 %v2050
    %v2145 = vunpack.c.l.b16 %v2051
    %v2146 = vunpack.c.h.b16 %v2051
    %v2147 = vunpack.c.l.b16 %v2052
    %v2148 = vunpack.c.h.b16 %v2052
    %v2149 = vpack.c.b16 %v2089, %v2085
    %v2150 = vpack.c.b16 %v2090, %v2086
    %v2151 = vpack.c.b16 %v2091, %v2087
    %v2152 = vpack.c.b16 %v2092, %v2088
    %v2153 = vpack.c.b16 %v2097, %v2093
    %v2154 = vpack.c.b16 %v2098, %v2094
    %v2155 = vpack.c.b16 %v2099, %v2095
    %v2156 = vpack.c.b16 %v2100, %v2096
    %v2157 = vpack.c.b16 %v2105, %v2101
    %v2158 = vpack.c.b16 %v2106, %v2102
    %v2159 = vpack.c.b16 %v2107, %v2103
    %v2160 = vpack.c.b16 %v2108, %v2104
    %v2161 = vpack.c.b16 %v2113, %v2109
    %v2162 = vpack.c.b16 %v2114, %v2110
    %v2163 = vpack.c.b16 %v2115, %v2111
    %v2164 = vpack.c.b16 %v2116, %v2112
    %v2165 = vpack.c.b16 %v2121, %v2117
    %v2166 = vpack.c.b16 %v2122, %v2118
    %v2167 = vpack.c.b16 %v2123, %v2119
    %v2168 = vpack.c.b16 %v2124, %v2120
    %v2169 = vpack.c.b16 %v2129, %v2125
    %v2170 = vpack.c.b16 %v2130, %v2126
    %v2171 = vpack.c.b16 %v2131, %v2127
    %v2172 = vpack.c.b16 %v2132, %v2128
    %v2173 = vpack.c.b16 %v2137, %v2133
    %v2174 = vpack.c.b16 %v2138, %v2134
    %v2175 = vpack.c.b16 %v2139, %v2135
    %v2176 = vpack.c.b16 %v2140, %v2136
    %v2177 = vpack.c.b16 %v2145, %v2141
    %v2178 = vpack.c.b16 %v2146, %v2142
    %v2179 = vpack.c.b16 %v2147, %v2143
    %v2180 = vpack.c.b16 %v2148, %v2144
    %2213 = vmatprep.subr.bf16.mxu0 %v2150
    %2214 = vmatpush1.bf16.msra.mxu0 %v2149
    %2215 = vmatprep.subr.bf16.mxu0 %v2154
    %2216 = vmatpush1.bf16.msra.mxu0 %v2153
    %2217 = vmatprep.subr.bf16.mxu0 %v2158
    %2218 = vmatpush1.bf16.msra.mxu0 %v2157
    %2219 = vmatprep.subr.bf16.mxu0 %v2162
    %2220 = vmatpush1.bf16.msra.mxu0 %v2161
    %2221 = vmatprep.subr.bf16.mxu0 %v2166
    %2222 = vmatpush1.bf16.msra.mxu0 %v2165
    %2223 = vmatprep.subr.bf16.mxu0 %v2170
    %2224 = vmatpush1.bf16.msra.mxu0 %v2169
    %2225 = vmatprep.subr.bf16.mxu0 %v2174
    %2226 = vmatpush1.bf16.msra.mxu0 %v2173
    %2227 = vmatprep.subr.bf16.mxu0 %v2178
    %2228 = vmatpush1.bf16.msra.mxu0 %v2177
    %2229 = vmatprep.subr.bf16.mxu0 0
    %2230 = vmatpush1.bf16.msra.mxu0 0
    %2231 = vmatprep.subr.bf16.mxu0 0
    %2232 = vmatpush1.bf16.msra.mxu0 0
    %2233 = vmatprep.subr.bf16.mxu0 0
    %2234 = vmatpush1.bf16.msra.mxu0 0
    %2235 = vmatprep.subr.bf16.mxu0 0
    %2236 = vmatpush1.bf16.msra.mxu0 0
    %2237 = vmatprep.subr.bf16.mxu0 0
    %2238 = vmatpush1.bf16.msra.mxu0 0
    %2239 = vmatprep.subr.bf16.mxu0 0
    %2240 = vmatpush1.bf16.msra.mxu0 0
    %2241 = vmatprep.subr.bf16.mxu0 0
    %2242 = vmatpush1.bf16.msra.mxu0 0
    %2243 = vmatprep.subr.bf16.mxu0 0
    %2244 = vmatpush1.bf16.msra.mxu0 0
    %2245 = vmatprep.mubr.bf16.mxu0 0
    %2246 = vmatmul.mubr.bf16.gmra.mrb[0].mxu0 %v2020
    %v2247 = vpop.f32.mrb[0].mxu0
    %v2248 = vadd.f32 0.0, %v2247
    %v2249 = vpop.f32.mrb[0].mxu0
    %v2250 = vadd.f32 0.0, %v2249
    %v2251 = vpop.f32.mrb[0].mxu0
    %v2252 = vpop.f32.mrb[0].mxu0
    %2253 = vdwg.mxu0
    %2254 = vmatprep.subr.bf16.mxu0 %v2152
    %2255 = vmatpush1.bf16.msra.mxu0 %v2151
    %2256 = vmatprep.subr.bf16.mxu0 %v2156
    %2257 = vmatpush1.bf16.msra.mxu0 %v2155
    %2258 = vmatprep.subr.bf16.mxu0 %v2160
    %2259 = vmatpush1.bf16.msra.mxu0 %v2159
    %2260 = vmatprep.subr.bf16.mxu0 %v2164
    %2261 = vmatpush1.bf16.msra.mxu0 %v2163
    %2262 = vmatprep.subr.bf16.mxu0 %v2168
    %2263 = vmatpush1.bf16.msra.mxu0 %v2167
    %2264 = vmatprep.subr.bf16.mxu0 %v2172
    %2265 = vmatpush1.bf16.msra.mxu0 %v2171
    %2266 = vmatprep.subr.bf16.mxu0 %v2176
    %2267 = vmatpush1.bf16.msra.mxu0 %v2175
    %2268 = vmatprep.subr.bf16.mxu0 %v2180
    %2269 = vmatpush1.bf16.msra.mxu0 %v2179
    %2270 = vmatprep.subr.bf16.mxu0 0
    %2271 = vmatpush1.bf16.msra.mxu0 0
    %2272 = vmatprep.subr.bf16.mxu0 0
    %2273 = vmatpush1.bf16.msra.mxu0 0
    %2274 = vmatprep.subr.bf16.mxu0 0
    %2275 = vmatpush1.bf16.msra.mxu0 0
    %2276 = vmatprep.subr.bf16.mxu0 0
    %2277 = vmatpush1.bf16.msra.mxu0 0
    %2278 = vmatprep.subr.bf16.mxu0 0
    %2279 = vmatpush1.bf16.msra.mxu0 0
    %2280 = vmatprep.subr.bf16.mxu0 0
    %2281 = vmatpush1.bf16.msra.mxu0 0
    %2282 = vmatprep.subr.bf16.mxu0 0
    %2283 = vmatpush1.bf16.msra.mxu0 0
    %2284 = vmatprep.subr.bf16.mxu0 0
    %2285 = vmatpush1.bf16.msra.mxu0 0
    %2286 = vmatprep.mubr.bf16.mxu0 0
    %2287 = vmatmul.mubr.bf16.gmra.mrb[0].mxu0 %v2020
    %v2288 = vpop.f32.mrb[0].mxu0
    %v2289 = vadd.f32 0.0, %v2288
    %v2290 = vpop.f32.mrb[0].mxu0
    %v2291 = vadd.f32 0.0, %v2290
    %v2292 = vpop.f32.mrb[0].mxu0
    %v2293 = vpop.f32.mrb[0].mxu0
    %2294 = vdwg.mxu0
    %v2295 = vadd.f32 %v2016, %v2248
    %v2296 = vadd.f32 %v2017, %v2250
    %v2297 = vadd.f32 %v2018, %v2289
    %v2298 = vadd.f32 %v2019, %v2291
    %v2299 = vxor.u32 %v2295, 2147483648
    %v2300 = vmul.f32 %v2299, 1.442695
    %v2301 = vpow.pop %v2300
    %v2302 = vadd.f32 %v2301, 1.0
    %v2303 = vrcp.pop %v2302
    %v2304 = vmul.f32 1.0, %v2303
    %v2305 = vxor.u32 %v2296, 2147483648
    %v2306 = vmul.f32 %v2305, 1.442695
    %v2307 = vpow.pop %v2306
    %v2308 = vadd.f32 %v2307, 1.0
    %v2309 = vrcp.pop %v2308
    %v2310 = vmul.f32 1.0, %v2309
    %v2311 = vtanh.pop %v2297
    %v2312 = vxor.u32 %v2298, 2147483648
    %v2313 = vmul.f32 %v2312, 1.442695
    %v2314 = vpow.pop %v2313
    %v2315 = vadd.f32 %v2314, 1.0
    %v2316 = vrcp.pop %v2315
    %v2317 = vmul.f32 1.0, %v2316
    %v2318 = vmul.f32 %v2310, %v2015
    %v2319 = vmul.f32 %v2304, %v2311
    %v2320 = vadd.f32 %v2318, %v2319
    %v2321 = vtanh.pop %v2320
    %v2322 = vmul.f32 %v2317, %v2321
    %2323 = vst [vmem:[#allocation5] sm:$0xff] %v2320
    %2324 = vst [vmem:[#allocation4] sm:$0xff] %v2322
    %2325 = vst [vmem:[#allocation2 + $0x28] sm:$0xff] %v2322
    %v2326 = vld [vmem:[#allocation4] sm:$0xff]
    %v2327 = vld [vmem:[#allocation5] sm:$0xff]
    %v2328 = vld [vmem:[#allocation3 + $0xc0] sm:$0xff]
    %v2329 = vld [vmem:[#allocation3 + $0xc8] sm:$0xff]
    %v2330 = vld [vmem:[#allocation3 + $0xd0] sm:$0xff]
    %v2331 = vld [vmem:[#allocation3 + $0xd8] sm:$0xff]
    %v2332 = vpack.c.bf16 %v2326, %v2326
    %v2333 = vld [vmem:[#allocation6] sm:$0xff]
    %v2334 = vld [vmem:[#allocation6 + $0x8] sm:$0xff]
    %v2335 = vld [vmem:[#allocation6 + $0x10] sm:$0xff]
    %v2336 = vld [vmem:[#allocation6 + $0x18] sm:$0xff]
    %v2337 = vld [vmem:[#allocation6 + $0x20] sm:$0xff]
    %v2338 = vld [vmem:[#allocation6 + $0x28] sm:$0xff]
    %v2339 = vld [vmem:[#allocation6 + $0x30] sm:$0xff]
    %v2340 = vld [vmem:[#allocation6 + $0x38] sm:$0xff]
    %v2341 = vld [vmem:[#allocation6 + $0x40] sm:$0xff]
    %v2342 = vld [vmem:[#allocation6 + $0x48] sm:$0xff]
    %v2343 = vld [vmem:[#allocation6 + $0x50] sm:$0xff]
    %v2344 = vld [vmem:[#allocation6 + $0x58] sm:$0xff]
    %v2345 = vld [vmem:[#allocation6 + $0x60] sm:$0xff]
    %v2346 = vld [vmem:[#allocation6 + $0x68] sm:$0xff]
    %v2347 = vld [vmem:[#allocation6 + $0x70] sm:$0xff]
    %v2348 = vld [vmem:[#allocation6 + $0x78] sm:$0xff]
    %v2349 = vld [vmem:[#allocation6 + $0x80] sm:$0xff]
    %v2350 = vld [vmem:[#allocation6 + $0x88] sm:$0xff]
    %v2351 = vld [vmem:[#allocation6 + $0x90] sm:$0xff]
    %v2352 = vld [vmem:[#allocation6 + $0x98] sm:$0xff]
    %v2353 = vld [vmem:[#allocation6 + $0xa0] sm:$0xff]
    %v2354 = vld [vmem:[#allocation6 + $0xa8] sm:$0xff]
    %v2355 = vld [vmem:[#allocation6 + $0xb0] sm:$0xff]
    %v2356 = vld [vmem:[#allocation6 + $0xb8] sm:$0xff]
    %v2357 = vld [vmem:[#allocation6 + $0xc0] sm:$0xff]
    %v2358 = vld [vmem:[#allocation6 + $0xc8] sm:$0xff]
    %v2359 = vld [vmem:[#allocation6 + $0xd0] sm:$0xff]
    %v2360 = vld [vmem:[#allocation6 + $0xd8] sm:$0xff]
    %v2361 = vld [vmem:[#allocation6 + $0xe0] sm:$0xff]
    %v2362 = vld [vmem:[#allocation6 + $0xe8] sm:$0xff]
    %v2363 = vld [vmem:[#allocation6 + $0xf0] sm:$0xff]
    %v2364 = vld [vmem:[#allocation6 + $0xf8] sm:$0xff]
    %v2397 = vunpack.c.l.b16 %v2333
    %v2398 = vunpack.c.h.b16 %v2333
    %v2399 = vunpack.c.l.b16 %v2334
    %v2400 = vunpack.c.h.b16 %v2334
    %v2401 = vunpack.c.l.b16 %v2335
    %v2402 = vunpack.c.h.b16 %v2335
    %v2403 = vunpack.c.l.b16 %v2336
    %v2404 = vunpack.c.h.b16 %v2336
    %v2405 = vunpack.c.l.b16 %v2337
    %v2406 = vunpack.c.h.b16 %v2337
    %v2407 = vunpack.c.l.b16 %v2338
    %v2408 = vunpack.c.h.b16 %v2338
    %v2409 = vunpack.c.l.b16 %v2339
    %v2410 = vunpack.c.h.b16 %v2339
    %v2411 = vunpack.c.l.b16 %v2340
    %v2412 = vunpack.c.h.b16 %v2340
    %v2413 = vunpack.c.l.b16 %v2341
    %v2414 = vunpack.c.h.b16 %v2341
    %v2415 = vunpack.c.l.b16 %v2342
    %v2416 = vunpack.c.h.b16 %v2342
    %v2417 = vunpack.c.l.b16 %v2343
    %v2418 = vunpack.c.h.b16 %v2343
    %v2419 = vunpack.c.l.b16 %v2344
    %v2420 = vunpack.c.h.b16 %v2344
    %v2421 = vunpack.c.l.b16 %v2345
    %v2422 = vunpack.c.h.b16 %v2345
    %v2423 = vunpack.c.l.b16 %v2346
    %v2424 = vunpack.c.h.b16 %v2346
    %v2425 = vunpack.c.l.b16 %v2347
    %v2426 = vunpack.c.h.b16 %v2347
    %v2427 = vunpack.c.l.b16 %v2348
    %v2428 = vunpack.c.h.b16 %v2348
    %v2429 = vunpack.c.l.b16 %v2349
    %v2430 = vunpack.c.h.b16 %v2349
    %v2431 = vunpack.c.l.b16 %v2350
    %v2432 = vunpack.c.h.b16 %v2350
    %v2433 = vunpack.c.l.b16 %v2351
    %v2434 = vunpack.c.h.b16 %v2351
    %v2435 = vunpack.c.l.b16 %v2352
    %v2436 = vunpack.c.h.b16 %v2352
    %v2437 = vunpack.c.l.b16 %v2353
    %v2438 = vunpack.c.h.b16 %v2353
    %v2439 = vunpack.c.l.b16 %v2354
    %v2440 = vunpack.c.h.b16 %v2354
    %v2441 = vunpack.c.l.b16 %v2355
    %v2442 = vunpack.c.h.b16 %v2355
    %v2443 = vunpack.c.l.b16 %v2356
    %v2444 = vunpack.c.h.b16 %v2356
    %v2445 = vunpack.c.l.b16 %v2357
    %v2446 = vunpack.c.h.b16 %v2357
    %v2447 = vunpack.c.l.b16 %v2358
    %v2448 = vunpack.c.h.b16 %v2358
    %v2449 = vunpack.c.l.b16 %v2359
    %v2450 = vunpack.c.h.b16 %v2359
    %v2451 = vunpack.c.l.b16 %v2360
    %v2452 = vunpack.c.h.b16 %v2360
    %v2453 = vunpack.c.l.b16 %v2361
    %v2454 = vunpack.c.h.b16 %v2361
    %v2455 = vunpack.c.l.b16 %v2362
    %v2456 = vunpack.c.h.b16 %v2362
    %v2457 = vunpack.c.l.b16 %v2363
    %v2458 = vunpack.c.h.b16 %v2363
    %v2459 = vunpack.c.l.b16 %v2364
    %v2460 = vunpack.c.h.b16 %v2364
    %v2461 = vpack.c.b16 %v2401, %v2397
    %v2462 = vpack.c.b16 %v2402, %v2398
    %v2463 = vpack.c.b16 %v2403, %v2399
    %v2464 = vpack.c.b16 %v2404, %v2400
    %v2465 = vpack.c.b16 %v2409, %v2405
    %v2466 = vpack.c.b16 %v2410, %v2406
    %v2467 = vpack.c.b16 %v2411, %v2407
    %v2468 = vpack.c.b16 %v2412, %v2408
    %v2469 = vpack.c.b16 %v2417, %v2413
    %v2470 = vpack.c.b16 %v2418, %v2414
    %v2471 = vpack.c.b16 %v2419, %v2415
    %v2472 = vpack.c.b16 %v2420, %v2416
    %v2473 = vpack.c.b16 %v2425, %v2421
    %v2474 = vpack.c.b16 %v2426, %v2422
    %v2475 = vpack.c.b16 %v2427, %v2423
    %v2476 = vpack.c.b16 %v2428, %v2424
    %v2477 = vpack.c.b16 %v2433, %v2429
    %v2478 = vpack.c.b16 %v2434, %v2430
    %v2479 = vpack.c.b16 %v2435, %v2431
    %v2480 = vpack.c.b16 %v2436, %v2432
    %v2481 = vpack.c.b16 %v2441, %v2437
    %v2482 = vpack.c.b16 %v2442, %v2438
    %v2483 = vpack.c.b16 %v2443, %v2439
    %v2484 = vpack.c.b16 %v2444, %v2440
    %v2485 = vpack.c.b16 %v2449, %v2445
    %v2486 = vpack.c.b16 %v2450, %v2446
    %v2487 = vpack.c.b16 %v2451, %v2447
    %v2488 = vpack.c.b16 %v2452, %v2448
    %v2489 = vpack.c.b16 %v2457, %v2453
    %v2490 = vpack.c.b16 %v2458, %v2454
    %v2491 = vpack.c.b16 %v2459, %v2455
    %v2492 = vpack.c.b16 %v2460, %v2456
    %2525 = vmatprep.subr.bf16.mxu0 %v2462
    %2526 = vmatpush1.bf16.msra.mxu0 %v2461
    %2527 = vmatprep.subr.bf16.mxu0 %v2466
    %2528 = vmatpush1.bf16.msra.mxu0 %v2465
    %2529 = vmatprep.subr.bf16.mxu0 %v2470
    %2530 = vmatpush1.bf16.msra.mxu0 %v2469
    %2531 = vmatprep.subr.bf16.mxu0 %v2474
    %2532 = vmatpush1.bf16.msra.mxu0 %v2473
    %2533 = vmatprep.subr.bf16.mxu0 %v2478
    %2534 = vmatpush1.bf16.msra.mxu0 %v2477
    %2535 = vmatprep.subr.bf16.mxu0 %v2482
    %2536 = vmatpush1.bf16.msra.mxu0 %v2481
    %2537 = vmatprep.subr.bf16.mxu0 %v2486
    %2538 = vmatpush1.bf16.msra.mxu0 %v2485
    %2539 = vmatprep.subr.bf16.mxu0 %v2490
    %2540 = vmatpush1.bf16.msra.mxu0 %v2489
    %2541 = vmatprep.subr.bf16.mxu0 0
    %2542 = vmatpush1.bf16.msra.mxu0 0
    %2543 = vmatprep.subr.bf16.mxu0 0
    %2544 = vmatpush1.bf16.msra.mxu0 0
    %2545 = vmatprep.subr.bf16.mxu0 0
    %2546 = vmatpush1.bf16.msra.mxu0 0
    %2547 = vmatprep.subr.bf16.mxu0 0
    %2548 = vmatpush1.bf16.msra.mxu0 0
    %2549 = vmatprep.subr.bf16.mxu0 0
    %2550 = vmatpush1.bf16.msra.mxu0 0
    %2551 = vmatprep.subr.bf16.mxu0 0
    %2552 = vmatpush1.bf16.msra.mxu0 0
    %2553 = vmatprep.subr.bf16.mxu0 0
    %2554 = vmatpush1.bf16.msra.mxu0 0
    %2555 = vmatprep.subr.bf16.mxu0 0
    %2556 = vmatpush1.bf16.msra.mxu0 0
    %2557 = vmatprep.mubr.bf16.mxu0 0
    %2558 = vmatmul.mubr.bf16.gmra.mrb[0].mxu0 %v2332
    %v2559 = vpop.f32.mrb[0].mxu0
    %v2560 = vadd.f32 0.0, %v2559
    %v2561 = vpop.f32.mrb[0].mxu0
    %v2562 = vadd.f32 0.0, %v2561
    %v2563 = vpop.f32.mrb[0].mxu0
    %v2564 = vpop.f32.mrb[0].mxu0
    %2565 = vdwg.mxu0
    %2566 = vmatprep.subr.bf16.mxu0 %v2464
    %2567 = vmatpush1.bf16.msra.mxu0 %v2463
    %2568 = vmatprep.subr.bf16.mxu0 %v2468
    %2569 = vmatpush1.bf16.msra.mxu0 %v2467
    %2570 = vmatprep.subr.bf16.mxu0 %v2472
    %2571 = vmatpush1.bf16.msra.mxu0 %v2471
    %2572 = vmatprep.subr.bf16.mxu0 %v2476
    %2573 = vmatpush1.bf16.msra.mxu0 %v2475
    %2574 = vmatprep.subr.bf16.mxu0 %v2480
    %2575 = vmatpush1.bf16.msra.mxu0 %v2479
    %2576 = vmatprep.subr.bf16.mxu0 %v2484
    %2577 = vmatpush1.bf16.msra.mxu0 %v2483
    %2578 = vmatprep.subr.bf16.mxu0 %v2488
    %2579 = vmatpush1.bf16.msra.mxu0 %v2487
    %2580 = vmatprep.subr.bf16.mxu0 %v2492
    %2581 = vmatpush1.bf16.msra.mxu0 %v2491
    %2582 = vmatprep.subr.bf16.mxu0 0
    %2583 = vmatpush1.bf16.msra.mxu0 0
    %2584 = vmatprep.subr.bf16.mxu0 0
    %2585 = vmatpush1.bf16.msra.mxu0 0
    %2586 = vmatprep.subr.bf16.mxu0 0
    %2587 = vmatpush1.bf16.msra.mxu0 0
    %2588 = vmatprep.subr.bf16.mxu0 0
    %2589 = vmatpush1.bf16.msra.mxu0 0
    %2590 = vmatprep.subr.bf16.mxu0 0
    %2591 = vmatpush1.bf16.msra.mxu0 0
    %2592 = vmatprep.subr.bf16.mxu0 0
    %2593 = vmatpush1.bf16.msra.mxu0 0
    %2594 = vmatprep.subr.bf16.mxu0 0
    %2595 = vmatpush1.bf16.msra.mxu0 0
    %2596 = vmatprep.subr.bf16.mxu0 0
    %2597 = vmatpush1.bf16.msra.mxu0 0
    %2598 = vmatprep.mubr.bf16.mxu0 0
    %2599 = vmatmul.mubr.bf16.gmra.mrb[0].mxu0 %v2332
    %v2600 = vpop.f32.mrb[0].mxu0
    %v2601 = vadd.f32 0.0, %v2600
    %v2602 = vpop.f32.mrb[0].mxu0
    %v2603 = vadd.f32 0.0, %v2602
    %v2604 = vpop.f32.mrb[0].mxu0
    %v2605 = vpop.f32.mrb[0].mxu0
    %2606 = vdwg.mxu0
    %v2607 = vadd.f32 %v2328, %v2560
    %v2608 = vadd.f32 %v2329, %v2562
    %v2609 = vadd.f32 %v2330, %v2601
    %v2610 = vadd.f32 %v2331, %v2603
    %v2611 = vxor.u32 %v2607, 2147483648
    %v2612 = vmul.f32 %v2611, 1.442695
    %v2613 = vpow.pop %v2612
    %v2614 = vadd.f32 %v2613, 1.0
    %v2615 = vrcp.pop %v2614
    %v2616 = vmul.f32 1.0, %v2615
    %v2617 = vxor.u32 %v2608, 2147483648
    %v2618 = vmul.f32 %v2617, 1.442695
    %v2619 = vpow.pop %v2618
    %v2620 = vadd.f32 %v2619, 1.0
    %v2621 = vrcp.pop %v2620
    %v2622 = vmul.f32 1.0, %v2621
    %v2623 = vtanh.pop %v2609
    %v2624 = vxor.u32 %v2610, 2147483648
    %v2625 = vmul.f32 %v2624, 1.442695
    %v2626 = vpow.pop %v2625
    %v2627 = vadd.f32 %v2626, 1.0
    %v2628 = vrcp.pop %v2627
    %v2629 = vmul.f32 1.0, %v2628
    %v2630 = vmul.f32 %v2622, %v2327
    %v2631 = vmul.f32 %v2616, %v2623
    %v2632 = vadd.f32 %v2630, %v2631
    %v2633 = vtanh.pop %v2632
    %v2634 = vmul.f32 %v2629, %v2633
    %2635 = vst [vmem:[#allocation5] sm:$0xff] %v2632
    %2636 = vst [vmem:[#allocation4] sm:$0xff] %v2634
    %2637 = vst [vmem:[#allocation2 + $0x30] sm:$0xff] %v2634
    %v2638 = vld [vmem:[#allocation4] sm:$0xff]
    %v2639 = vld [vmem:[#allocation5] sm:$0xff]
    %v2640 = vld [vmem:[#allocation3 + $0xe0] sm:$0xff]
    %v2641 = vld [vmem:[#allocation3 + $0xe8] sm:$0xff]
    %v2642 = vld [vmem:[#allocation3 + $0xf0] sm:$0xff]
    %v2643 = vld [vmem:[#allocation3 + $0xf8] sm:$0xff]
    %v2644 = vpack.c.bf16 %v2638, %v2638
    %v2645 = vld [vmem:[#allocation6] sm:$0xff]
    %v2646 = vld [vmem:[#allocation6 + $0x8] sm:$0xff]
    %v2647 = vld [vmem:[#allocation6 + $0x10] sm:$0xff]
    %v2648 = vld [vmem:[#allocation6 + $0x18] sm:$0xff]
    %v2649 = vld [vmem:[#allocation6 + $0x20] sm:$0xff]
    %v2650 = vld [vmem:[#allocation6 + $0x28] sm:$0xff]
    %v2651 = vld [vmem:[#allocation6 + $0x30] sm:$0xff]
    %v2652 = vld [vmem:[#allocation6 + $0x38] sm:$0xff]
    %v2653 = vld [vmem:[#allocation6 + $0x40] sm:$0xff]
    %v2654 = vld [vmem:[#allocation6 + $0x48] sm:$0xff]
    %v2655 = vld [vmem:[#allocation6 + $0x50] sm:$0xff]
    %v2656 = vld [vmem:[#allocation6 + $0x58] sm:$0xff]
    %v2657 = vld [vmem:[#allocation6 + $0x60] sm:$0xff]
    %v2658 = vld [vmem:[#allocation6 + $0x68] sm:$0xff]
    %v2659 = vld [vmem:[#allocation6 + $0x70] sm:$0xff]
    %v2660 = vld [vmem:[#allocation6 + $0x78] sm:$0xff]
    %v2661 = vld [vmem:[#allocation6 + $0x80] sm:$0xff]
    %v2662 = vld [vmem:[#allocation6 + $0x88] sm:$0xff]
    %v2663 = vld [vmem:[#allocation6 + $0x90] sm:$0xff]
    %v2664 = vld [vmem:[#allocation6 + $0x98] sm:$0xff]
    %v2665 = vld [vmem:[#allocation6 + $0xa0] sm:$0xff]
    %v2666 = vld [vmem:[#allocation6 + $0xa8] sm:$0xff]
    %v2667 = vld [vmem:[#allocation6 + $0xb0] sm:$0xff]
    %v2668 = vld [vmem:[#allocation6 + $0xb8] sm:$0xff]
    %v2669 = vld [vmem:[#allocation6 + $0xc0] sm:$0xff]
    %v2670 = vld [vmem:[#allocation6 + $0xc8] sm:$0xff]
    %v2671 = vld [vmem:[#allocation6 + $0xd0] sm:$0xff]
    %v2672 = vld [vmem:[#allocation6 + $0xd8] sm:$0xff]
    %v2673 = vld [vmem:[#allocation6 + $0xe0] sm:$0xff]
    %v2674 = vld [vmem:[#allocation6 + $0xe8] sm:$0xff]
    %v2675 = vld [vmem:[#allocation6 + $0xf0] sm:$0xff]
    %v2676 = vld [vmem:[#allocation6 + $0xf8] sm:$0xff]
    %v2709 = vunpack.c.l.b16 %v2645
    %v2710 = vunpack.c.h.b16 %v2645
    %v2711 = vunpack.c.l.b16 %v2646
    %v2712 = vunpack.c.h.b16 %v2646
    %v2713 = vunpack.c.l.b16 %v2647
    %v2714 = vunpack.c.h.b16 %v2647
    %v2715 = vunpack.c.l.b16 %v2648
    %v2716 = vunpack.c.h.b16 %v2648
    %v2717 = vunpack.c.l.b16 %v2649
    %v2718 = vunpack.c.h.b16 %v2649
    %v2719 = vunpack.c.l.b16 %v2650
    %v2720 = vunpack.c.h.b16 %v2650
    %v2721 = vunpack.c.l.b16 %v2651
    %v2722 = vunpack.c.h.b16 %v2651
    %v2723 = vunpack.c.l.b16 %v2652
    %v2724 = vunpack.c.h.b16 %v2652
    %v2725 = vunpack.c.l.b16 %v2653
    %v2726 = vunpack.c.h.b16 %v2653
    %v2727 = vunpack.c.l.b16 %v2654
    %v2728 = vunpack.c.h.b16 %v2654
    %v2729 = vunpack.c.l.b16 %v2655
    %v2730 = vunpack.c.h.b16 %v2655
    %v2731 = vunpack.c.l.b16 %v2656
    %v2732 = vunpack.c.h.b16 %v2656
    %v2733 = vunpack.c.l.b16 %v2657
    %v2734 = vunpack.c.h.b16 %v2657
    %v2735 = vunpack.c.l.b16 %v2658
    %v2736 = vunpack.c.h.b16 %v2658
    %v2737 = vunpack.c.l.b16 %v2659
    %v2738 = vunpack.c.h.b16 %v2659
    %v2739 = vunpack.c.l.b16 %v2660
    %v2740 = vunpack.c.h.b16 %v2660
    %v2741 = vunpack.c.l.b16 %v2661
    %v2742 = vunpack.c.h.b16 %v2661
    %v2743 = vunpack.c.l.b16 %v2662
    %v2744 = vunpack.c.h.b16 %v2662
    %v2745 = vunpack.c.l.b16 %v2663
    %v2746 = vunpack.c.h.b16 %v2663
    %v2747 = vunpack.c.l.b16 %v2664
    %v2748 = vunpack.c.h.b16 %v2664
    %v2749 = vunpack.c.l.b16 %v2665
    %v2750 = vunpack.c.h.b16 %v2665
    %v2751 = vunpack.c.l.b16 %v2666
    %v2752 = vunpack.c.h.b16 %v2666
    %v2753 = vunpack.c.l.b16 %v2667
    %v2754 = vunpack.c.h.b16 %v2667
    %v2755 = vunpack.c.l.b16 %v2668
    %v2756 = vunpack.c.h.b16 %v2668
    %v2757 = vunpack.c.l.b16 %v2669
    %v2758 = vunpack.c.h.b16 %v2669
    %v2759 = vunpack.c.l.b16 %v2670
    %v2760 = vunpack.c.h.b16 %v2670
    %v2761 = vunpack.c.l.b16 %v2671
    %v2762 = vunpack.c.h.b16 %v2671
    %v2763 = vunpack.c.l.b16 %v2672
    %v2764 = vunpack.c.h.b16 %v2672
    %v2765 = vunpack.c.l.b16 %v2673
    %v2766 = vunpack.c.h.b16 %v2673
    %v2767 = vunpack.c.l.b16 %v2674
    %v2768 = vunpack.c.h.b16 %v2674
    %v2769 = vunpack.c.l.b16 %v2675
    %v2770 = vunpack.c.h.b16 %v2675
    %v2771 = vunpack.c.l.b16 %v2676
    %v2772 = vunpack.c.h.b16 %v2676
    %v2773 = vpack.c.b16 %v2713, %v2709
    %v2774 = vpack.c.b16 %v2714, %v2710
    %v2775 = vpack.c.b16 %v2715, %v2711
    %v2776 = vpack.c.b16 %v2716, %v2712
    %v2777 = vpack.c.b16 %v2721, %v2717
    %v2778 = vpack.c.b16 %v2722, %v2718
    %v2779 = vpack.c.b16 %v2723, %v2719
    %v2780 = vpack.c.b16 %v2724, %v2720
    %v2781 = vpack.c.b16 %v2729, %v2725
    %v2782 = vpack.c.b16 %v2730, %v2726
    %v2783 = vpack.c.b16 %v2731, %v2727
    %v2784 = vpack.c.b16 %v2732, %v2728
    %v2785 = vpack.c.b16 %v2737, %v2733
    %v2786 = vpack.c.b16 %v2738, %v2734
    %v2787 = vpack.c.b16 %v2739, %v2735
    %v2788 = vpack.c.b16 %v2740, %v2736
    %v2789 = vpack.c.b16 %v2745, %v2741
    %v2790 = vpack.c.b16 %v2746, %v2742
    %v2791 = vpack.c.b16 %v2747, %v2743
    %v2792 = vpack.c.b16 %v2748, %v2744
    %v2793 = vpack.c.b16 %v2753, %v2749
    %v2794 = vpack.c.b16 %v2754, %v2750
    %v2795 = vpack.c.b16 %v2755, %v2751
    %v2796 = vpack.c.b16 %v2756, %v2752
    %v2797 = vpack.c.b16 %v2761, %v2757
    %v2798 = vpack.c.b16 %v2762, %v2758
    %v2799 = vpack.c.b16 %v2763, %v2759
    %v2800 = vpack.c.b16 %v2764, %v2760
    %v2801 = vpack.c.b16 %v2769, %v2765
    %v2802 = vpack.c.b16 %v2770, %v2766
    %v2803 = vpack.c.b16 %v2771, %v2767
    %v2804 = vpack.c.b16 %v2772, %v2768
    %2837 = vmatprep.subr.bf16.mxu0 %v2774
    %2838 = vmatpush1.bf16.msra.mxu0 %v2773
    %2839 = vmatprep.subr.bf16.mxu0 %v2778
    %2840 = vmatpush1.bf16.msra.mxu0 %v2777
    %2841 = vmatprep.subr.bf16.mxu0 %v2782
    %2842 = vmatpush1.bf16.msra.mxu0 %v2781
    %2843 = vmatprep.subr.bf16.mxu0 %v2786
    %2844 = vmatpush1.bf16.msra.mxu0 %v2785
    %2845 = vmatprep.subr.bf16.mxu0 %v2790
    %2846 = vmatpush1.bf16.msra.mxu0 %v2789
    %2847 = vmatprep.subr.bf16.mxu0 %v2794
    %2848 = vmatpush1.bf16.msra.mxu0 %v2793
    %2849 = vmatprep.subr.bf16.mxu0 %v2798
    %2850 = vmatpush1.bf16.msra.mxu0 %v2797
    %2851 = vmatprep.subr.bf16.mxu0 %v2802
    %2852 = vmatpush1.bf16.msra.mxu0 %v2801
    %2853 = vmatprep.subr.bf16.mxu0 0
    %2854 = vmatpush1.bf16.msra.mxu0 0
    %2855 = vmatprep.subr.bf16.mxu0 0
    %2856 = vmatpush1.bf16.msra.mxu0 0
    %2857 = vmatprep.subr.bf16.mxu0 0
    %2858 = vmatpush1.bf16.msra.mxu0 0
    %2859 = vmatprep.subr.bf16.mxu0 0
    %2860 = vmatpush1.bf16.msra.mxu0 0
    %2861 = vmatprep.subr.bf16.mxu0 0
    %2862 = vmatpush1.bf16.msra.mxu0 0
    %2863 = vmatprep.subr.bf16.mxu0 0
    %2864 = vmatpush1.bf16.msra.mxu0 0
    %2865 = vmatprep.subr.bf16.mxu0 0
    %2866 = vmatpush1.bf16.msra.mxu0 0
    %2867 = vmatprep.subr.bf16.mxu0 0
    %2868 = vmatpush1.bf16.msra.mxu0 0
    %2869 = vmatprep.mubr.bf16.mxu0 0
    %2870 = vmatmul.mubr.bf16.gmra.mrb[0].mxu0 %v2644
    %v2871 = vpop.f32.mrb[0].mxu0
    %v2872 = vadd.f32 0.0, %v2871
    %v2873 = vpop.f32.mrb[0].mxu0
    %v2874 = vadd.f32 0.0, %v2873
    %v2875 = vpop.f32.mrb[0].mxu0
    %v2876 = vpop.f32.mrb[0].mxu0
    %2877 = vdwg.mxu0
    %2878 = vmatprep.subr.bf16.mxu0 %v2776
    %2879 = vmatpush1.bf16.msra.mxu0 %v2775
    %2880 = vmatprep.subr.bf16.mxu0 %v2780
    %2881 = vmatpush1.bf16.msra.mxu0 %v2779
    %2882 = vmatprep.subr.bf16.mxu0 %v2784
    %2883 = vmatpush1.bf16.msra.mxu0 %v2783
    %2884 = vmatprep.subr.bf16.mxu0 %v2788
    %2885 = vmatpush1.bf16.msra.mxu0 %v2787
    %2886 = vmatprep.subr.bf16.mxu0 %v2792
    %2887 = vmatpush1.bf16.msra.mxu0 %v2791
    %2888 = vmatprep.subr.bf16.mxu0 %v2796
    %2889 = vmatpush1.bf16.msra.mxu0 %v2795
    %2890 = vmatprep.subr.bf16.mxu0 %v2800
    %2891 = vmatpush1.bf16.msra.mxu0 %v2799
    %2892 = vmatprep.subr.bf16.mxu0 %v2804
    %2893 = vmatpush1.bf16.msra.mxu0 %v2803
    %2894 = vmatprep.subr.bf16.mxu0 0
    %2895 = vmatpush1.bf16.msra.mxu0 0
    %2896 = vmatprep.subr.bf16.mxu0 0
    %2897 = vmatpush1.bf16.msra.mxu0 0
    %2898 = vmatprep.subr.bf16.mxu0 0
    %2899 = vmatpush1.bf16.msra.mxu0 0
    %2900 = vmatprep.subr.bf16.mxu0 0
    %2901 = vmatpush1.bf16.msra.mxu0 0
    %2902 = vmatprep.subr.bf16.mxu0 0
    %2903 = vmatpush1.bf16.msra.mxu0 0
    %2904 = vmatprep.subr.bf16.mxu0 0
    %2905 = vmatpush1.bf16.msra.mxu0 0
    %2906 = vmatprep.subr.bf16.mxu0 0
    %2907 = vmatpush1.bf16.msra.mxu0 0
    %2908 = vmatprep.subr.bf16.mxu0 0
    %2909 = vmatpush1.bf16.msra.mxu0 0
    %2910 = vmatprep.mubr.bf16.mxu0 0
    %2911 = vmatmul.mubr.bf16.gmra.mrb[0].mxu0 %v2644
    %v2912 = vpop.f32.mrb[0].mxu0
    %v2913 = vadd.f32 0.0, %v2912
    %v2914 = vpop.f32.mrb[0].mxu0
    %v2915 = vadd.f32 0.0, %v2914
    %v2916 = vpop.f32.mrb[0].mxu0
    %v2917 = vpop.f32.mrb[0].mxu0
    %2918 = vdwg.mxu0
    %v2919 = vadd.f32 %v2640, %v2872
    %v2920 = vadd.f32 %v2641, %v2874
    %v2921 = vadd.f32 %v2642, %v2913
    %v2922 = vadd.f32 %v2643, %v2915
    %v2923 = vxor.u32 %v2919, 2147483648
    %v2924 = vmul.f32 %v2923, 1.442695
    %v2925 = vpow.pop %v2924
    %v2926 = vadd.f32 %v2925, 1.0
    %v2927 = vrcp.pop %v2926
    %v2928 = vmul.f32 1.0, %v2927
    %v2929 = vxor.u32 %v2920, 2147483648
    %v2930 = vmul.f32 %v2929, 1.442695
    %v2931 = vpow.pop %v2930
    %v2932 = vadd.f32 %v2931, 1.0
    %v2933 = vrcp.pop %v2932
    %v2934 = vmul.f32 1.0, %v2933
    %v2935 = vtanh.pop %v2921
    %v2936 = vxor.u32 %v2922, 2147483648
    %v2937 = vmul.f32 %v2936, 1.442695
    %v2938 = vpow.pop %v2937
    %v2939 = vadd.f32 %v2938, 1.0
    %v2940 = vrcp.pop %v2939
    %v2941 = vmul.f32 1.0, %v2940
    %v2942 = vmul.f32 %v2934, %v2639
    %v2943 = vmul.f32 %v2928, %v2935
    %v2944 = vadd.f32 %v2942, %v2943
    %v2945 = vtanh.pop %v2944
    %v2946 = vmul.f32 %v2941, %v2945
    %2947 = vst [vmem:[#allocation5] sm:$0xff] %v2944
    %2948 = vst [vmem:[#allocation4] sm:$0xff] %v2946
    %2949 = vst [vmem:[#allocation2 + $0x38] sm:$0xff] %v2946
    %v2950 = vld [vmem:[#allocation2] sm:$0xff]
    %v2951 = vld [vmem:[#allocation2 + $0x8] sm:$0xff]
    %v2952 = vld [vmem:[#allocation2 + $0x10] sm:$0xff]
    %v2953 = vld [vmem:[#allocation2 + $0x18] sm:$0xff]
    %v2954 = vld [vmem:[#allocation2 + $0x20] sm:$0xff]
    %v2955 = vld [vmem:[#allocation2 + $0x28] sm:$0xff]
    %v2956 = vld [vmem:[#allocation2 + $0x30] sm:$0xff]
    %v2957 = vld [vmem:[#allocation2 + $0x38] sm:$0xff]
    %v2958 = vpack.c.bf16 %v2951, %v2950
    %v2959 = vpack.c.bf16 %v2953, %v2952
    %v2960 = vpack.c.bf16 %v2955, %v2954
    %v2961 = vpack.c.bf16 %v2957, %v2956
    %s2962 = scalar_lea.vmem %s1, 256
    %v2963 = vld [vmem:[%s2962] sm:$0xff]
    %v2964 = vld [vmem:[%s2962 + $0x8] sm:$0xff]
    %v2965 = vld [vmem:[%s2962 + $0x10] sm:$0xff]
    %v2966 = vld [vmem:[%s2962 + $0x18] sm:$0xff]
    %v2967 = vld [vmem:[%s2962 + $0x20] sm:$0xff]
    %v2968 = vld [vmem:[%s2962 + $0x28] sm:$0xff]
    %v2969 = vld [vmem:[%s2962 + $0x30] sm:$0xff]
    %v2970 = vld [vmem:[%s2962 + $0x38] sm:$0xff]
    %v2971 = vld [vmem:[%s2962 + $0x40] sm:$0xff]
    %v2972 = vld [vmem:[%s2962 + $0x48] sm:$0xff]
    %v2973 = vld [vmem:[%s2962 + $0x50] sm:$0xff]
    %v2974 = vld [vmem:[%s2962 + $0x58] sm:$0xff]
    %v2975 = vld [vmem:[%s2962 + $0x60] sm:$0xff]
    %v2976 = vld [vmem:[%s2962 + $0x68] sm:$0xff]
    %v2977 = vld [vmem:[%s2962 + $0x70] sm:$0xff]
    %v2978 = vld [vmem:[%s2962 + $0x78] sm:$0xff]
    %v2979 = vld [vmem:[%s2962 + $0x80] sm:$0xff]
    %v2980 = vld [vmem:[%s2962 + $0x88] sm:$0xff]
    %v2981 = vld [vmem:[%s2962 + $0x90] sm:$0xff]
    %v2982 = vld [vmem:[%s2962 + $0x98] sm:$0xff]
    %v2983 = vld [vmem:[%s2962 + $0xa0] sm:$0xff]
    %v2984 = vld [vmem:[%s2962 + $0xa8] sm:$0xff]
    %v2985 = vld [vmem:[%s2962 + $0xb0] sm:$0xff]
    %v2986 = vld [vmem:[%s2962 + $0xb8] sm:$0xff]
    %v2987 = vld [vmem:[%s2962 + $0xc0] sm:$0xff]
    %v2988 = vld [vmem:[%s2962 + $0xc8] sm:$0xff]
    %v2989 = vld [vmem:[%s2962 + $0xd0] sm:$0xff]
    %v2990 = vld [vmem:[%s2962 + $0xd8] sm:$0xff]
    %v2991 = vld [vmem:[%s2962 + $0xe0] sm:$0xff]
    %v2992 = vld [vmem:[%s2962 + $0xe8] sm:$0xff]
    %v2993 = vld [vmem:[%s2962 + $0xf0] sm:$0xff]
    %v2994 = vld [vmem:[%s2962 + $0xf8] sm:$0xff]
    %s2995 = scalar_lea.vmem %s3, 4
    %v2996 = vld [vmem:[%s2995] sm:$0xf]
    %v2998 = vlaneseq
    %v2999 = vshrl.u32 %v2998, 7
    %v3000 = vsub.s32 0, %v2999
    %v3001 = vrot.slane %v2996, %v3000
    %v3002 = vlaneseq
    %v3003 = vshrl.u32 %v3002, 7
    %v3004 = vsub.s32 1, %v3003
    %v3005 = vrot.slane %v2996, %v3004
    %v3006 = vlaneseq
    %v3007 = vshrl.u32 %v3006, 7
    %v3008 = vsub.s32 2, %v3007
    %v3009 = vrot.slane %v2996, %v3008
    %v3010 = vlaneseq
    %v3011 = vshrl.u32 %v3010, 7
    %v3012 = vsub.s32 3, %v3011
    %v3013 = vrot.slane %v2996, %v3012
    %v3050 = vunpack.c.l.b16 %v2963
    %v3051 = vunpack.c.h.b16 %v2963
    %v3052 = vunpack.c.l.b16 %v2964
    %v3053 = vunpack.c.h.b16 %v2964
    %v3054 = vunpack.c.l.b16 %v2965
    %v3055 = vunpack.c.h.b16 %v2965
    %v3056 = vunpack.c.l.b16 %v2966
    %v3057 = vunpack.c.h.b16 %v2966
    %v3058 = vunpack.c.l.b16 %v2967
    %v3059 = vunpack.c.h.b16 %v2967
    %v3060 = vunpack.c.l.b16 %v2968
    %v3061 = vunpack.c.h.b16 %v2968
    %v3062 = vunpack.c.l.b16 %v2969
    %v3063 = vunpack.c.h.b16 %v2969
    %v3064 = vunpack.c.l.b16 %v2970
    %v3065 = vunpack.c.h.b16 %v2970
    %v3066 = vunpack.c.l.b16 %v2971
    %v3067 = vunpack.c.h.b16 %v2971
    %v3068 = vunpack.c.l.b16 %v2972
    %v3069 = vunpack.c.h.b16 %v2972
    %v3070 = vunpack.c.l.b16 %v2973
    %v3071 = vunpack.c.h.b16 %v2973
    %v3072 = vunpack.c.l.b16 %v2974
    %v3073 = vunpack.c.h.b16 %v2974
    %v3074 = vunpack.c.l.b16 %v2975
    %v3075 = vunpack.c.h.b16 %v2975
    %v3076 = vunpack.c.l.b16 %v2976
    %v3077 = vunpack.c.h.b16 %v2976
    %v3078 = vunpack.c.l.b16 %v2977
    %v3079 = vunpack.c.h.b16 %v2977
    %v3080 = vunpack.c.l.b16 %v2978
    %v3081 = vunpack.c.h.b16 %v2978
    %v3082 = vunpack.c.l.b16 %v2979
    %v3083 = vunpack.c.h.b16 %v2979
    %v3084 = vunpack.c.l.b16 %v2980
    %v3085 = vunpack.c.h.b16 %v2980
    %v3086 = vunpack.c.l.b16 %v2981
    %v3087 = vunpack.c.h.b16 %v2981
    %v3088 = vunpack.c.l.b16 %v2982
    %v3089 = vunpack.c.h.b16 %v2982
    %v3090 = vunpack.c.l.b16 %v2983
    %v3091 = vunpack.c.h.b16 %v2983
    %v3092 = vunpack.c.l.b16 %v2984
    %v3093 = vunpack.c.h.b16 %v2984
    %v3094 = vunpack.c.l.b16 %v2985
    %v3095 = vunpack.c.h.b16 %v2985
    %v3096 = vunpack.c.l.b16 %v2986
    %v3097 = vunpack.c.h.b16 %v2986
    %v3098 = vunpack.c.l.b16 %v2987
    %v3099 = vunpack.c.h.b16 %v2987
    %v3100 = vunpack.c.l.b16 %v2988
    %v3101 = vunpack.c.h.b16 %v2988
    %v3102 = vunpack.c.l.b16 %v2989
    %v3103 = vunpack.c.h.b16 %v2989
    %v3104 = vunpack.c.l.b16 %v2990
    %v3105 = vunpack.c.h.b16 %v2990
    %v3106 = vunpack.c.l.b16 %v2991
    %v3107 = vunpack.c.h.b16 %v2991
    %v3108 = vunpack.c.l.b16 %v2992
    %v3109 = vunpack.c.h.b16 %v2992
    %v3110 = vunpack.c.l.b16 %v2993
    %v3111 = vunpack.c.h.b16 %v2993
    %v3112 = vunpack.c.l.b16 %v2994
    %v3113 = vunpack.c.h.b16 %v2994
    %v3114 = vpack.c.b16 %v3054, %v3050
    %v3115 = vpack.c.b16 %v3055, %v3051
    %v3116 = vpack.c.b16 %v3056, %v3052
    %v3117 = vpack.c.b16 %v3057, %v3053
    %v3118 = vpack.c.b16 %v3062, %v3058
    %v3119 = vpack.c.b16 %v3063, %v3059
    %v3120 = vpack.c.b16 %v3064, %v3060
    %v3121 = vpack.c.b16 %v3065, %v3061
    %v3122 = vpack.c.b16 %v3070, %v3066
    %v3123 = vpack.c.b16 %v3071, %v3067
    %v3124 = vpack.c.b16 %v3072, %v3068
    %v3125 = vpack.c.b16 %v3073, %v3069
    %v3126 = vpack.c.b16 %v3078, %v3074
    %v3127 = vpack.c.b16 %v3079, %v3075
    %v3128 = vpack.c.b16 %v3080, %v3076
    %v3129 = vpack.c.b16 %v3081, %v3077
    %v3130 = vpack.c.b16 %v3086, %v3082
    %v3131 = vpack.c.b16 %v3087, %v3083
    %v3132 = vpack.c.b16 %v3088, %v3084
    %v3133 = vpack.c.b16 %v3089, %v3085
    %v3134 = vpack.c.b16 %v3094, %v3090
    %v3135 = vpack.c.b16 %v3095, %v3091
    %v3136 = vpack.c.b16 %v3096, %v3092
    %v3137 = vpack.c.b16 %v3097, %v3093
    %v3138 = vpack.c.b16 %v3102, %v3098
    %v3139 = vpack.c.b16 %v3103, %v3099
    %v3140 = vpack.c.b16 %v3104, %v3100
    %v3141 = vpack.c.b16 %v3105, %v3101
    %v3142 = vpack.c.b16 %v3110, %v3106
    %v3143 = vpack.c.b16 %v3111, %v3107
    %v3144 = vpack.c.b16 %v3112, %v3108
    %v3145 = vpack.c.b16 %v3113, %v3109
    %3178 = vmatprep.subr.bf16.mxu0 %v3115
    %3179 = vmatpush1.bf16.msra.mxu0 %v3114
    %3180 = vmatprep.subr.bf16.mxu0 %v3119
    %3181 = vmatpush1.bf16.msra.mxu0 %v3118
    %3182 = vmatprep.subr.bf16.mxu0 %v3123
    %3183 = vmatpush1.bf16.msra.mxu0 %v3122
    %3184 = vmatprep.subr.bf16.mxu0 %v3127
    %3185 = vmatpush1.bf16.msra.mxu0 %v3126
    %3186 = vmatprep.subr.bf16.mxu0 %v3131
    %3187 = vmatpush1.bf16.msra.mxu0 %v3130
    %3188 = vmatprep.subr.bf16.mxu0 %v3135
    %3189 = vmatpush1.bf16.msra.mxu0 %v3134
    %3190 = vmatprep.subr.bf16.mxu0 %v3139
    %3191 = vmatpush1.bf16.msra.mxu0 %v3138
    %3192 = vmatprep.subr.bf16.mxu0 %v3143
    %3193 = vmatpush1.bf16.msra.mxu0 %v3142
    %3194 = vmatprep.subr.bf16.mxu0 0
    %3195 = vmatpush1.bf16.msra.mxu0 0
    %3196 = vmatprep.subr.bf16.mxu0 0
    %3197 = vmatpush1.bf16.msra.mxu0 0
    %3198 = vmatprep.subr.bf16.mxu0 0
    %3199 = vmatpush1.bf16.msra.mxu0 0
    %3200 = vmatprep.subr.bf16.mxu0 0
    %3201 = vmatpush1.bf16.msra.mxu0 0
    %3202 = vmatprep.subr.bf16.mxu0 0
    %3203 = vmatpush1.bf16.msra.mxu0 0
    %3204 = vmatprep.subr.bf16.mxu0 0
    %3205 = vmatpush1.bf16.msra.mxu0 0
    %3206 = vmatprep.subr.bf16.mxu0 0
    %3207 = vmatpush1.bf16.msra.mxu0 0
    %3208 = vmatprep.subr.bf16.mxu0 0
    %3209 = vmatpush1.bf16.msra.mxu0 0
    %3210 = vmatprep.mubr.bf16.mxu0 0
    %3211 = vmatmul.mubr.bf16.gmra.mrb[0].mxu0 %v2958
    %v3212 = vpop.f32.mrb[0].mxu0
    %v3213 = vadd.f32 %v3001, %v3212
    %v3214 = vpop.f32.mrb[0].mxu0
    %v3215 = vadd.f32 %v3005, %v3214
    %v3216 = vpop.f32.mrb[0].mxu0
    %v3217 = vadd.f32 %v3001, %v3216
    %v3218 = vpop.f32.mrb[0].mxu0
    %v3219 = vadd.f32 %v3005, %v3218
    %3220 = vmatprep.mubr.bf16.mxu0 0
    %3221 = vmatmul.mubr.bf16.gmra.mrb[0].mxu0 %v2959
    %v3222 = vpop.f32.mrb[0].mxu0
    %v3223 = vadd.f32 %v3001, %v3222
    %v3224 = vpop.f32.mrb[0].mxu0
    %v3225 = vadd.f32 %v3005, %v3224
    %v3226 = vpop.f32.mrb[0].mxu0
    %v3227 = vadd.f32 %v3001, %v3226
    %v3228 = vpop.f32.mrb[0].mxu0
    %v3229 = vadd.f32 %v3005, %v3228
    %3230 = vmatprep.mubr.bf16.mxu0 0
    %3231 = vmatmul.mubr.bf16.gmra.mrb[0].mxu0 %v2960
    %v3232 = vpop.f32.mrb[0].mxu0
    %v3233 = vadd.f32 %v3001, %v3232
    %v3234 = vpop.f32.mrb[0].mxu0
    %v3235 = vadd.f32 %v3005, %v3234
    %v3236 = vpop.f32.mrb[0].mxu0
    %v3237 = vadd.f32 %v3001, %v3236
    %v3238 = vpop.f32.mrb[0].mxu0
    %v3239 = vadd.f32 %v3005, %v3238
    %3240 = vmatprep.mubr.bf16.mxu0 0
    %3241 = vmatmul.mubr.bf16.gmra.mrb[0].mxu0 %v2961
    %v3242 = vpop.f32.mrb[0].mxu0
    %v3243 = vadd.f32 %v3001, %v3242
    %v3244 = vpop.f32.mrb[0].mxu0
    %v3245 = vadd.f32 %v3005, %v3244
    %v3246 = vpop.f32.mrb[0].mxu0
    %v3247 = vadd.f32 %v3001, %v3246
    %v3248 = vpop.f32.mrb[0].mxu0
    %v3249 = vadd.f32 %v3005, %v3248
    %3250 = vdwg.mxu0
    %3251 = vmatprep.subr.bf16.mxu0 %v3117
    %3252 = vmatpush1.bf16.msra.mxu0 %v3116
    %3253 = vmatprep.subr.bf16.mxu0 %v3121
    %3254 = vmatpush1.bf16.msra.mxu0 %v3120
    %3255 = vmatprep.subr.bf16.mxu0 %v3125
    %3256 = vmatpush1.bf16.msra.mxu0 %v3124
    %3257 = vmatprep.subr.bf16.mxu0 %v3129
    %3258 = vmatpush1.bf16.msra.mxu0 %v3128
    %3259 = vmatprep.subr.bf16.mxu0 %v3133
    %3260 = vmatpush1.bf16.msra.mxu0 %v3132
    %3261 = vmatprep.subr.bf16.mxu0 %v3137
    %3262 = vmatpush1.bf16.msra.mxu0 %v3136
    %3263 = vmatprep.subr.bf16.mxu0 %v3141
    %3264 = vmatpush1.bf16.msra.mxu0 %v3140
    %3265 = vmatprep.subr.bf16.mxu0 %v3145
    %3266 = vmatpush1.bf16.msra.mxu0 %v3144
    %3267 = vmatprep.subr.bf16.mxu0 0
    %3268 = vmatpush1.bf16.msra.mxu0 0
    %3269 = vmatprep.subr.bf16.mxu0 0
    %3270 = vmatpush1.bf16.msra.mxu0 0
    %3271 = vmatprep.subr.bf16.mxu0 0
    %3272 = vmatpush1.bf16.msra.mxu0 0
    %3273 = vmatprep.subr.bf16.mxu0 0
    %3274 = vmatpush1.bf16.msra.mxu0 0
    %3275 = vmatprep.subr.bf16.mxu0 0
    %3276 = vmatpush1.bf16.msra.mxu0 0
    %3277 = vmatprep.subr.bf16.mxu0 0
    %3278 = vmatpush1.bf16.msra.mxu0 0
    %3279 = vmatprep.subr.bf16.mxu0 0
    %3280 = vmatpush1.bf16.msra.mxu0 0
    %3281 = vmatprep.subr.bf16.mxu0 0
    %3282 = vmatpush1.bf16.msra.mxu0 0
    %3283 = vmatprep.mubr.bf16.mxu0 0
    %3284 = vmatmul.mubr.bf16.gmra.mrb[0].mxu0 %v2958
    %v3285 = vpop.f32.mrb[0].mxu0
    %v3286 = vadd.f32 %v3009, %v3285
    %v3287 = vpop.f32.mrb[0].mxu0
    %v3288 = vadd.f32 %v3013, %v3287
    %v3289 = vpop.f32.mrb[0].mxu0
    %v3290 = vadd.f32 %v3009, %v3289
    %v3291 = vpop.f32.mrb[0].mxu0
    %v3292 = vadd.f32 %v3013, %v3291
    %3293 = vmatprep.mubr.bf16.mxu0 0
    %3294 = vmatmul.mubr.bf16.gmra.mrb[0].mxu0 %v2959
    %v3295 = vpop.f32.mrb[0].mxu0
    %v3296 = vadd.f32 %v3009, %v3295
    %v3297 = vpop.f32.mrb[0].mxu0
    %v3298 = vadd.f32 %v3013, %v3297
    %v3299 = vpop.f32.mrb[0].mxu0
    %v3300 = vadd.f32 %v3009, %v3299
    %v3301 = vpop.f32.mrb[0].mxu0
    %v3302 = vadd.f32 %v3013, %v3301
    %3303 = vmatprep.mubr.bf16.mxu0 0
    %3304 = vmatmul.mubr.bf16.gmra.mrb[0].mxu0 %v2960
    %v3305 = vpop.f32.mrb[0].mxu0
    %v3306 = vadd.f32 %v3009, %v3305
    %v3307 = vpop.f32.mrb[0].mxu0
    %v3308 = vadd.f32 %v3013, %v3307
    %v3309 = vpop.f32.mrb[0].mxu0
    %v3310 = vadd.f32 %v3009, %v3309
    %v3311 = vpop.f32.mrb[0].mxu0
    %v3312 = vadd.f32 %v3013, %v3311
    %3313 = vmatprep.mubr.bf16.mxu0 0
    %3314 = vmatmul.mubr.bf16.gmra.mrb[0].mxu0 %v2961
    %v3315 = vpop.f32.mrb[0].mxu0
    %v3316 = vadd.f32 %v3009, %v3315
    %v3317 = vpop.f32.mrb[0].mxu0
    %v3318 = vadd.f32 %v3013, %v3317
    %v3319 = vpop.f32.mrb[0].mxu0
    %v3320 = vadd.f32 %v3009, %v3319
    %v3321 = vpop.f32.mrb[0].mxu0
    %v3322 = vadd.f32 %v3013, %v3321
    %3323 = vdwg.mxu0
    %3324 = vst [vmem:[#allocation3] sm:$0xff] %v3213
    %3325 = vst [vmem:[#allocation3 + $0x8] sm:$0xff] %v3215
    %3326 = vst [vmem:[#allocation3 + $0x10] sm:$0xff] %v3286
    %3327 = vst [vmem:[#allocation3 + $0x18] sm:$0xff] %v3288
    %3328 = vst [vmem:[#allocation3 + $0x20] sm:$0xff] %v3217
    %3329 = vst [vmem:[#allocation3 + $0x28] sm:$0xff] %v3219
    %3330 = vst [vmem:[#allocation3 + $0x30] sm:$0xff] %v3290
    %3331 = vst [vmem:[#allocation3 + $0x38] sm:$0xff] %v3292
    %3332 = vst [vmem:[#allocation3 + $0x40] sm:$0xff] %v3223
    %3333 = vst [vmem:[#allocation3 + $0x48] sm:$0xff] %v3225
    %3334 = vst [vmem:[#allocation3 + $0x50] sm:$0xff] %v3296
    %3335 = vst [vmem:[#allocation3 + $0x58] sm:$0xff] %v3298
    %3336 = vst [vmem:[#allocation3 + $0x60] sm:$0xff] %v3227
    %3337 = vst [vmem:[#allocation3 + $0x68] sm:$0xff] %v3229
    %3338 = vst [vmem:[#allocation3 + $0x70] sm:$0xff] %v3300
    %3339 = vst [vmem:[#allocation3 + $0x78] sm:$0xff] %v3302
    %3340 = vst [vmem:[#allocation3 + $0x80] sm:$0xff] %v3233
    %3341 = vst [vmem:[#allocation3 + $0x88] sm:$0xff] %v3235
    %3342 = vst [vmem:[#allocation3 + $0x90] sm:$0xff] %v3306
    %3343 = vst [vmem:[#allocation3 + $0x98] sm:$0xff] %v3308
    %3344 = vst [vmem:[#allocation3 + $0xa0] sm:$0xff] %v3237
    %3345 = vst [vmem:[#allocation3 + $0xa8] sm:$0xff] %v3239
    %3346 = vst [vmem:[#allocation3 + $0xb0] sm:$0xff] %v3310
    %3347 = vst [vmem:[#allocation3 + $0xb8] sm:$0xff] %v3312
    %3348 = vst [vmem:[#allocation3 + $0xc0] sm:$0xff] %v3243
    %3349 = vst [vmem:[#allocation3 + $0xc8] sm:$0xff] %v3245
    %3350 = vst [vmem:[#allocation3 + $0xd0] sm:$0xff] %v3316
    %3351 = vst [vmem:[#allocation3 + $0xd8] sm:$0xff] %v3318
    %3352 = vst [vmem:[#allocation3 + $0xe0] sm:$0xff] %v3247
    %3353 = vst [vmem:[#allocation3 + $0xe8] sm:$0xff] %v3249
    %3354 = vst [vmem:[#allocation3 + $0xf0] sm:$0xff] %v3320
    %3355 = vst [vmem:[#allocation3 + $0xf8] sm:$0xff] %v3322
    %3356 = vst [vmem:[#allocation4] sm:$0xff] 0.0
    %3357 = vst [vmem:[#allocation5] sm:$0xff] 0.0
    %v3358 = vld [vmem:[#allocation4] sm:$0xff]
    %v3359 = vld [vmem:[#allocation5] sm:$0xff]
    %v3360 = vld [vmem:[#allocation3] sm:$0xff]
    %v3361 = vld [vmem:[#allocation3 + $0x8] sm:$0xff]
    %v3362 = vld [vmem:[#allocation3 + $0x10] sm:$0xff]
    %v3363 = vld [vmem:[#allocation3 + $0x18] sm:$0xff]
    %v3364 = vpack.c.bf16 %v3358, %v3358
    %s3365 = scalar_lea.vmem [#allocation6], 256
    %v3366 = vld [vmem:[%s3365] sm:$0xff]
    %v3367 = vld [vmem:[%s3365 + $0x8] sm:$0xff]
    %v3368 = vld [vmem:[%s3365 + $0x10] sm:$0xff]
    %v3369 = vld [vmem:[%s3365 + $0x18] sm:$0xff]
    %v3370 = vld [vmem:[%s3365 + $0x20] sm:$0xff]
    %v3371 = vld [vmem:[%s3365 + $0x28] sm:$0xff]
    %v3372 = vld [vmem:[%s3365 + $0x30] sm:$0xff]
    %v3373 = vld [vmem:[%s3365 + $0x38] sm:$0xff]
    %v3374 = vld [vmem:[%s3365 + $0x40] sm:$0xff]
    %v3375 = vld [vmem:[%s3365 + $0x48] sm:$0xff]
    %v3376 = vld [vmem:[%s3365 + $0x50] sm:$0xff]
    %v3377 = vld [vmem:[%s3365 + $0x58] sm:$0xff]
    %v3378 = vld [vmem:[%s3365 + $0x60] sm:$0xff]
    %v3379 = vld [vmem:[%s3365 + $0x68] sm:$0xff]
    %v3380 = vld [vmem:[%s3365 + $0x70] sm:$0xff]
    %v3381 = vld [vmem:[%s3365 + $0x78] sm:$0xff]
    %v3382 = vld [vmem:[%s3365 + $0x80] sm:$0xff]
    %v3383 = vld [vmem:[%s3365 + $0x88] sm:$0xff]
    %v3384 = vld [vmem:[%s3365 + $0x90] sm:$0xff]
    %v3385 = vld [vmem:[%s3365 + $0x98] sm:$0xff]
    %v3386 = vld [vmem:[%s3365 + $0xa0] sm:$0xff]
    %v3387 = vld [vmem:[%s3365 + $0xa8] sm:$0xff]
    %v3388 = vld [vmem:[%s3365 + $0xb0] sm:$0xff]
    %v3389 = vld [vmem:[%s3365 + $0xb8] sm:$0xff]
    %v3390 = vld [vmem:[%s3365 + $0xc0] sm:$0xff]
    %v3391 = vld [vmem:[%s3365 + $0xc8] sm:$0xff]
    %v3392 = vld [vmem:[%s3365 + $0xd0] sm:$0xff]
    %v3393 = vld [vmem:[%s3365 + $0xd8] sm:$0xff]
    %v3394 = vld [vmem:[%s3365 + $0xe0] sm:$0xff]
    %v3395 = vld [vmem:[%s3365 + $0xe8] sm:$0xff]
    %v3396 = vld [vmem:[%s3365 + $0xf0] sm:$0xff]
    %v3397 = vld [vmem:[%s3365 + $0xf8] sm:$0xff]
    %v3430 = vunpack.c.l.b16 %v3366
    %v3431 = vunpack.c.h.b16 %v3366
    %v3432 = vunpack.c.l.b16 %v3367
    %v3433 = vunpack.c.h.b16 %v3367
    %v3434 = vunpack.c.l.b16 %v3368
    %v3435 = vunpack.c.h.b16 %v3368
    %v3436 = vunpack.c.l.b16 %v3369
    %v3437 = vunpack.c.h.b16 %v3369
    %v3438 = vunpack.c.l.b16 %v3370
    %v3439 = vunpack.c.h.b16 %v3370
    %v3440 = vunpack.c.l.b16 %v3371
    %v3441 = vunpack.c.h.b16 %v3371
    %v3442 = vunpack.c.l.b16 %v3372
    %v3443 = vunpack.c.h.b16 %v3372
    %v3444 = vunpack.c.l.b16 %v3373
    %v3445 = vunpack.c.h.b16 %v3373
    %v3446 = vunpack.c.l.b16 %v3374
    %v3447 = vunpack.c.h.b16 %v3374
    %v3448 = vunpack.c.l.b16 %v3375
    %v3449 = vunpack.c.h.b16 %v3375
    %v3450 = vunpack.c.l.b16 %v3376
    %v3451 = vunpack.c.h.b16 %v3376
    %v3452 = vunpack.c.l.b16 %v3377
    %v3453 = vunpack.c.h.b16 %v3377
    %v3454 = vunpack.c.l.b16 %v3378
    %v3455 = vunpack.c.h.b16 %v3378
    %v3456 = vunpack.c.l.b16 %v3379
    %v3457 = vunpack.c.h.b16 %v3379
    %v3458 = vunpack.c.l.b16 %v3380
    %v3459 = vunpack.c.h.b16 %v3380
    %v3460 = vunpack.c.l.b16 %v3381
    %v3461 = vunpack.c.h.b16 %v3381
    %v3462 = vunpack.c.l.b16 %v3382
    %v3463 = vunpack.c.h.b16 %v3382
    %v3464 = vunpack.c.l.b16 %v3383
    %v3465 = vunpack.c.h.b16 %v3383
    %v3466 = vunpack.c.l.b16 %v3384
    %v3467 = vunpack.c.h.b16 %v3384
    %v3468 = vunpack.c.l.b16 %v3385
    %v3469 = vunpack.c.h.b16 %v3385
    %v3470 = vunpack.c.l.b16 %v3386
    %v3471 = vunpack.c.h.b16 %v3386
    %v3472 = vunpack.c.l.b16 %v3387
    %v3473 = vunpack.c.h.b16 %v3387
    %v3474 = vunpack.c.l.b16 %v3388
    %v3475 = vunpack.c.h.b16 %v3388
    %v3476 = vunpack.c.l.b16 %v3389
    %v3477 = vunpack.c.h.b16 %v3389
    %v3478 = vunpack.c.l.b16 %v3390
    %v3479 = vunpack.c.h.b16 %v3390
    %v3480 = vunpack.c.l.b16 %v3391
    %v3481 = vunpack.c.h.b16 %v3391
    %v3482 = vunpack.c.l.b16 %v3392
    %v3483 = vunpack.c.h.b16 %v3392
    %v3484 = vunpack.c.l.b16 %v3393
    %v3485 = vunpack.c.h.b16 %v3393
    %v3486 = vunpack.c.l.b16 %v3394
    %v3487 = vunpack.c.h.b16 %v3394
    %v3488 = vunpack.c.l.b16 %v3395
    %v3489 = vunpack.c.h.b16 %v3395
    %v3490 = vunpack.c.l.b16 %v3396
    %v3491 = vunpack.c.h.b16 %v3396
    %v3492 = vunpack.c.l.b16 %v3397
    %v3493 = vunpack.c.h.b16 %v3397
    %v3494 = vpack.c.b16 %v3434, %v3430
    %v3495 = vpack.c.b16 %v3435, %v3431
    %v3496 = vpack.c.b16 %v3436, %v3432
    %v3497 = vpack.c.b16 %v3437, %v3433
    %v3498 = vpack.c.b16 %v3442, %v3438
    %v3499 = vpack.c.b16 %v3443, %v3439
    %v3500 = vpack.c.b16 %v3444, %v3440
    %v3501 = vpack.c.b16 %v3445, %v3441
    %v3502 = vpack.c.b16 %v3450, %v3446
    %v3503 = vpack.c.b16 %v3451, %v3447
    %v3504 = vpack.c.b16 %v3452, %v3448
    %v3505 = vpack.c.b16 %v3453, %v3449
    %v3506 = vpack.c.b16 %v3458, %v3454
    %v3507 = vpack.c.b16 %v3459, %v3455
    %v3508 = vpack.c.b16 %v3460, %v3456
    %v3509 = vpack.c.b16 %v3461, %v3457
    %v3510 = vpack.c.b16 %v3466, %v3462
    %v3511 = vpack.c.b16 %v3467, %v3463
    %v3512 = vpack.c.b16 %v3468, %v3464
    %v3513 = vpack.c.b16 %v3469, %v3465
    %v3514 = vpack.c.b16 %v3474, %v3470
    %v3515 = vpack.c.b16 %v3475, %v3471
    %v3516 = vpack.c.b16 %v3476, %v3472
    %v3517 = vpack.c.b16 %v3477, %v3473
    %v3518 = vpack.c.b16 %v3482, %v3478
    %v3519 = vpack.c.b16 %v3483, %v3479
    %v3520 = vpack.c.b16 %v3484, %v3480
    %v3521 = vpack.c.b16 %v3485, %v3481
    %v3522 = vpack.c.b16 %v3490, %v3486
    %v3523 = vpack.c.b16 %v3491, %v3487
    %v3524 = vpack.c.b16 %v3492, %v3488
    %v3525 = vpack.c.b16 %v3493, %v3489
    %3558 = vmatprep.subr.bf16.mxu0 %v3495
    %3559 = vmatpush1.bf16.msra.mxu0 %v3494
    %3560 = vmatprep.subr.bf16.mxu0 %v3499
    %3561 = vmatpush1.bf16.msra.mxu0 %v3498
    %3562 = vmatprep.subr.bf16.mxu0 %v3503
    %3563 = vmatpush1.bf16.msra.mxu0 %v3502
    %3564 = vmatprep.subr.bf16.mxu0 %v3507
    %3565 = vmatpush1.bf16.msra.mxu0 %v3506
    %3566 = vmatprep.subr.bf16.mxu0 %v3511
    %3567 = vmatpush1.bf16.msra.mxu0 %v3510
    %3568 = vmatprep.subr.bf16.mxu0 %v3515
    %3569 = vmatpush1.bf16.msra.mxu0 %v3514
    %3570 = vmatprep.subr.bf16.mxu0 %v3519
    %3571 = vmatpush1.bf16.msra.mxu0 %v3518
    %3572 = vmatprep.subr.bf16.mxu0 %v3523
    %3573 = vmatpush1.bf16.msra.mxu0 %v3522
    %3574 = vmatprep.subr.bf16.mxu0 0
    %3575 = vmatpush1.bf16.msra.mxu0 0
    %3576 = vmatprep.subr.bf16.mxu0 0
    %3577 = vmatpush1.bf16.msra.mxu0 0
    %3578 = vmatprep.subr.bf16.mxu0 0
    %3579 = vmatpush1.bf16.msra.mxu0 0
    %3580 = vmatprep.subr.bf16.mxu0 0
    %3581 = vmatpush1.bf16.msra.mxu0 0
    %3582 = vmatprep.subr.bf16.mxu0 0
    %3583 = vmatpush1.bf16.msra.mxu0 0
    %3584 = vmatprep.subr.bf16.mxu0 0
    %3585 = vmatpush1.bf16.msra.mxu0 0
    %3586 = vmatprep.subr.bf16.mxu0 0
    %3587 = vmatpush1.bf16.msra.mxu0 0
    %3588 = vmatprep.subr.bf16.mxu0 0
    %3589 = vmatpush1.bf16.msra.mxu0 0
    %3590 = vmatprep.mubr.bf16.mxu0 0
    %3591 = vmatmul.mubr.bf16.gmra.mrb[0].mxu0 %v3364
    %v3592 = vpop.f32.mrb[0].mxu0
    %v3593 = vadd.f32 0.0, %v3592
    %v3594 = vpop.f32.mrb[0].mxu0
    %v3595 = vadd.f32 0.0, %v3594
    %v3596 = vpop.f32.mrb[0].mxu0
    %v3597 = vpop.f32.mrb[0].mxu0
    %3598 = vdwg.mxu0
    %3599 = vmatprep.subr.bf16.mxu0 %v3497
    %3600 = vmatpush1.bf16.msra.mxu0 %v3496
    %3601 = vmatprep.subr.bf16.mxu0 %v3501
    %3602 = vmatpush1.bf16.msra.mxu0 %v3500
    %3603 = vmatprep.subr.bf16.mxu0 %v3505
    %3604 = vmatpush1.bf16.msra.mxu0 %v3504
    %3605 = vmatprep.subr.bf16.mxu0 %v3509
    %3606 = vmatpush1.bf16.msra.mxu0 %v3508
    %3607 = vmatprep.subr.bf16.mxu0 %v3513
    %3608 = vmatpush1.bf16.msra.mxu0 %v3512
    %3609 = vmatprep.subr.bf16.mxu0 %v3517
    %3610 = vmatpush1.bf16.msra.mxu0 %v3516
    %3611 = vmatprep.subr.bf16.mxu0 %v3521
    %3612 = vmatpush1.bf16.msra.mxu0 %v3520
    %3613 = vmatprep.subr.bf16.mxu0 %v3525
    %3614 = vmatpush1.bf16.msra.mxu0 %v3524
    %3615 = vmatprep.subr.bf16.mxu0 0
    %3616 = vmatpush1.bf16.msra.mxu0 0
    %3617 = vmatprep.subr.bf16.mxu0 0
    %3618 = vmatpush1.bf16.msra.mxu0 0
    %3619 = vmatprep.subr.bf16.mxu0 0
    %3620 = vmatpush1.bf16.msra.mxu0 0
    %3621 = vmatprep.subr.bf16.mxu0 0
    %3622 = vmatpush1.bf16.msra.mxu0 0
    %3623 = vmatprep.subr.bf16.mxu0 0
    %3624 = vmatpush1.bf16.msra.mxu0 0
    %3625 = vmatprep.subr.bf16.mxu0 0
    %3626 = vmatpush1.bf16.msra.mxu0 0
    %3627 = vmatprep.subr.bf16.mxu0 0
    %3628 = vmatpush1.bf16.msra.mxu0 0
    %3629 = vmatprep.subr.bf16.mxu0 0
    %3630 = vmatpush1.bf16.msra.mxu0 0
    %3631 = vmatprep.mubr.bf16.mxu0 0
    %3632 = vmatmul.mubr.bf16.gmra.mrb[0].mxu0 %v3364
    %v3633 = vpop.f32.mrb[0].mxu0
    %v3634 = vadd.f32 0.0, %v3633
    %v3635 = vpop.f32.mrb[0].mxu0
    %v3636 = vadd.f32 0.0, %v3635
    %v3637 = vpop.f32.mrb[0].mxu0
    %v3638 = vpop.f32.mrb[0].mxu0
    %3639 = vdwg.mxu0
    %v3640 = vadd.f32 %v3360, %v3593
    %v3641 = vadd.f32 %v3361, %v3595
    %v3642 = vadd.f32 %v3362, %v3634
    %v3643 = vadd.f32 %v3363, %v3636
    %v3644 = vxor.u32 %v3640, 2147483648
    %v3645 = vmul.f32 %v3644, 1.442695
    %v3646 = vpow.pop %v3645
    %v3647 = vadd.f32 %v3646, 1.0
    %v3648 = vrcp.pop %v3647
    %v3649 = vmul.f32 1.0, %v3648
    %v3650 = vxor.u32 %v3641, 2147483648
    %v3651 = vmul.f32 %v3650, 1.442695
    %v3652 = vpow.pop %v3651
    %v3653 = vadd.f32 %v3652, 1.0
    %v3654 = vrcp.pop %v3653
    %v3655 = vmul.f32 1.0, %v3654
    %v3656 = vtanh.pop %v3642
    %v3657 = vxor.u32 %v3643, 2147483648
    %v3658 = vmul.f32 %v3657, 1.442695
    %v3659 = vpow.pop %v3658
    %v3660 = vadd.f32 %v3659, 1.0
    %v3661 = vrcp.pop %v3660
    %v3662 = vmul.f32 1.0, %v3661
    %v3663 = vmul.f32 %v3655, %v3359
    %v3664 = vmul.f32 %v3649, %v3656
    %v3665 = vadd.f32 %v3663, %v3664
    %v3666 = vtanh.pop %v3665
    %v3667 = vmul.f32 %v3662, %v3666
    %3668 = vst [vmem:[#allocation5] sm:$0xff] %v3665
    %3669 = vst [vmem:[#allocation4] sm:$0xff] %v3667
    %3670 = vst [vmem:[%s4] sm:$0xff] %v3667
    %v3671 = vld [vmem:[#allocation4] sm:$0xff]
    %v3672 = vld [vmem:[#allocation5] sm:$0xff]
    %v3673 = vld [vmem:[#allocation3 + $0x20] sm:$0xff]
    %v3674 = vld [vmem:[#allocation3 + $0x28] sm:$0xff]
    %v3675 = vld [vmem:[#allocation3 + $0x30] sm:$0xff]
    %v3676 = vld [vmem:[#allocation3 + $0x38] sm:$0xff]
    %v3677 = vpack.c.bf16 %v3671, %v3671
    %v3678 = vld [vmem:[%s3365] sm:$0xff]
    %v3679 = vld [vmem:[%s3365 + $0x8] sm:$0xff]
    %v3680 = vld [vmem:[%s3365 + $0x10] sm:$0xff]
    %v3681 = vld [vmem:[%s3365 + $0x18] sm:$0xff]
    %v3682 = vld [vmem:[%s3365 + $0x20] sm:$0xff]
    %v3683 = vld [vmem:[%s3365 + $0x28] sm:$0xff]
    %v3684 = vld [vmem:[%s3365 + $0x30] sm:$0xff]
    %v3685 = vld [vmem:[%s3365 + $0x38] sm:$0xff]
    %v3686 = vld [vmem:[%s3365 + $0x40] sm:$0xff]
    %v3687 = vld [vmem:[%s3365 + $0x48] sm:$0xff]
    %v3688 = vld [vmem:[%s3365 + $0x50] sm:$0xff]
    %v3689 = vld [vmem:[%s3365 + $0x58] sm:$0xff]
    %v3690 = vld [vmem:[%s3365 + $0x60] sm:$0xff]
    %v3691 = vld [vmem:[%s3365 + $0x68] sm:$0xff]
    %v3692 = vld [vmem:[%s3365 + $0x70] sm:$0xff]
    %v3693 = vld [vmem:[%s3365 + $0x78] sm:$0xff]
    %v3694 = vld [vmem:[%s3365 + $0x80] sm:$0xff]
    %v3695 = vld [vmem:[%s3365 + $0x88] sm:$0xff]
    %v3696 = vld [vmem:[%s3365 + $0x90] sm:$0xff]
    %v3697 = vld [vmem:[%s3365 + $0x98] sm:$0xff]
    %v3698 = vld [vmem:[%s3365 + $0xa0] sm:$0xff]
    %v3699 = vld [vmem:[%s3365 + $0xa8] sm:$0xff]
    %v3700 = vld [vmem:[%s3365 + $0xb0] sm:$0xff]
    %v3701 = vld [vmem:[%s3365 + $0xb8] sm:$0xff]
    %v3702 = vld [vmem:[%s3365 + $0xc0] sm:$0xff]
    %v3703 = vld [vmem:[%s3365 + $0xc8] sm:$0xff]
    %v3704 = vld [vmem:[%s3365 + $0xd0] sm:$0xff]
    %v3705 = vld [vmem:[%s3365 + $0xd8] sm:$0xff]
    %v3706 = vld [vmem:[%s3365 + $0xe0] sm:$0xff]
    %v3707 = vld [vmem:[%s3365 + $0xe8] sm:$0xff]
    %v3708 = vld [vmem:[%s3365 + $0xf0] sm:$0xff]
    %v3709 = vld [vmem:[%s3365 + $0xf8] sm:$0xff]
    %v3742 = vunpack.c.l.b16 %v3678
    %v3743 = vunpack.c.h.b16 %v3678
    %v3744 = vunpack.c.l.b16 %v3679
    %v3745 = vunpack.c.h.b16 %v3679
    %v3746 = vunpack.c.l.b16 %v3680
    %v3747 = vunpack.c.h.b16 %v3680
    %v3748 = vunpack.c.l.b16 %v3681
    %v3749 = vunpack.c.h.b16 %v3681
    %v3750 = vunpack.c.l.b16 %v3682
    %v3751 = vunpack.c.h.b16 %v3682
    %v3752 = vunpack.c.l.b16 %v3683
    %v3753 = vunpack.c.h.b16 %v3683
    %v3754 = vunpack.c.l.b16 %v3684
    %v3755 = vunpack.c.h.b16 %v3684
    %v3756 = vunpack.c.l.b16 %v3685
    %v3757 = vunpack.c.h.b16 %v3685
    %v3758 = vunpack.c.l.b16 %v3686
    %v3759 = vunpack.c.h.b16 %v3686
    %v3760 = vunpack.c.l.b16 %v3687
    %v3761 = vunpack.c.h.b16 %v3687
    %v3762 = vunpack.c.l.b16 %v3688
    %v3763 = vunpack.c.h.b16 %v3688
    %v3764 = vunpack.c.l.b16 %v3689
    %v3765 = vunpack.c.h.b16 %v3689
    %v3766 = vunpack.c.l.b16 %v3690
    %v3767 = vunpack.c.h.b16 %v3690
    %v3768 = vunpack.c.l.b16 %v3691
    %v3769 = vunpack.c.h.b16 %v3691
    %v3770 = vunpack.c.l.b16 %v3692
    %v3771 = vunpack.c.h.b16 %v3692
    %v3772 = vunpack.c.l.b16 %v3693
    %v3773 = vunpack.c.h.b16 %v3693
    %v3774 = vunpack.c.l.b16 %v3694
    %v3775 = vunpack.c.h.b16 %v3694
    %v3776 = vunpack.c.l.b16 %v3695
    %v3777 = vunpack.c.h.b16 %v3695
    %v3778 = vunpack.c.l.b16 %v3696
    %v3779 = vunpack.c.h.b16 %v3696
    %v3780 = vunpack.c.l.b16 %v3697
    %v3781 = vunpack.c.h.b16 %v3697
    %v3782 = vunpack.c.l.b16 %v3698
    %v3783 = vunpack.c.h.b16 %v3698
    %v3784 = vunpack.c.l.b16 %v3699
    %v3785 = vunpack.c.h.b16 %v3699
    %v3786 = vunpack.c.l.b16 %v3700
    %v3787 = vunpack.c.h.b16 %v3700
    %v3788 = vunpack.c.l.b16 %v3701
    %v3789 = vunpack.c.h.b16 %v3701
    %v3790 = vunpack.c.l.b16 %v3702
    %v3791 = vunpack.c.h.b16 %v3702
    %v3792 = vunpack.c.l.b16 %v3703
    %v3793 = vunpack.c.h.b16 %v3703
    %v3794 = vunpack.c.l.b16 %v3704
    %v3795 = vunpack.c.h.b16 %v3704
    %v3796 = vunpack.c.l.b16 %v3705
    %v3797 = vunpack.c.h.b16 %v3705
    %v3798 = vunpack.c.l.b16 %v3706
    %v3799 = vunpack.c.h.b16 %v3706
    %v3800 = vunpack.c.l.b16 %v3707
    %v3801 = vunpack.c.h.b16 %v3707
    %v3802 = vunpack.c.l.b16 %v3708
    %v3803 = vunpack.c.h.b16 %v3708
    %v3804 = vunpack.c.l.b16 %v3709
    %v3805 = vunpack.c.h.b16 %v3709
    %v3806 = vpack.c.b16 %v3746, %v3742
    %v3807 = vpack.c.b16 %v3747, %v3743
    %v3808 = vpack.c.b16 %v3748, %v3744
    %v3809 = vpack.c.b16 %v3749, %v3745
    %v3810 = vpack.c.b16 %v3754, %v3750
    %v3811 = vpack.c.b16 %v3755, %v3751
    %v3812 = vpack.c.b16 %v3756, %v3752
    %v3813 = vpack.c.b16 %v3757, %v3753
    %v3814 = vpack.c.b16 %v3762, %v3758
    %v3815 = vpack.c.b16 %v3763, %v3759
    %v3816 = vpack.c.b16 %v3764, %v3760
    %v3817 = vpack.c.b16 %v3765, %v3761
    %v3818 = vpack.c.b16 %v3770, %v3766
    %v3819 = vpack.c.b16 %v3771, %v3767
    %v3820 = vpack.c.b16 %v3772, %v3768
    %v3821 = vpack.c.b16 %v3773, %v3769
    %v3822 = vpack.c.b16 %v3778, %v3774
    %v3823 = vpack.c.b16 %v3779, %v3775
    %v3824 = vpack.c.b16 %v3780, %v3776
    %v3825 = vpack.c.b16 %v3781, %v3777
    %v3826 = vpack.c.b16 %v3786, %v3782
    %v3827 = vpack.c.b16 %v3787, %v3783
    %v3828 = vpack.c.b16 %v3788, %v3784
    %v3829 = vpack.c.b16 %v3789, %v3785
    %v3830 = vpack.c.b16 %v3794, %v3790
    %v3831 = vpack.c.b16 %v3795, %v3791
    %v3832 = vpack.c.b16 %v3796, %v3792
    %v3833 = vpack.c.b16 %v3797, %v3793
    %v3834 = vpack.c.b16 %v3802, %v3798
    %v3835 = vpack.c.b16 %v3803, %v3799
    %v3836 = vpack.c.b16 %v3804, %v3800
    %v3837 = vpack.c.b16 %v3805, %v3801
    %3870 = vmatprep.subr.bf16.mxu0 %v3807
    %3871 = vmatpush1.bf16.msra.mxu0 %v3806
    %3872 = vmatprep.subr.bf16.mxu0 %v3811
    %3873 = vmatpush1.bf16.msra.mxu0 %v3810
    %3874 = vmatprep.subr.bf16.mxu0 %v3815
    %3875 = vmatpush1.bf16.msra.mxu0 %v3814
    %3876 = vmatprep.subr.bf16.mxu0 %v3819
    %3877 = vmatpush1.bf16.msra.mxu0 %v3818
    %3878 = vmatprep.subr.bf16.mxu0 %v3823
    %3879 = vmatpush1.bf16.msra.mxu0 %v3822
    %3880 = vmatprep.subr.bf16.mxu0 %v3827
    %3881 = vmatpush1.bf16.msra.mxu0 %v3826
    %3882 = vmatprep.subr.bf16.mxu0 %v3831
    %3883 = vmatpush1.bf16.msra.mxu0 %v3830
    %3884 = vmatprep.subr.bf16.mxu0 %v3835
    %3885 = vmatpush1.bf16.msra.mxu0 %v3834
    %3886 = vmatprep.subr.bf16.mxu0 0
    %3887 = vmatpush1.bf16.msra.mxu0 0
    %3888 = vmatprep.subr.bf16.mxu0 0
    %3889 = vmatpush1.bf16.msra.mxu0 0
    %3890 = vmatprep.subr.bf16.mxu0 0
    %3891 = vmatpush1.bf16.msra.mxu0 0
    %3892 = vmatprep.subr.bf16.mxu0 0
    %3893 = vmatpush1.bf16.msra.mxu0 0
    %3894 = vmatprep.subr.bf16.mxu0 0
    %3895 = vmatpush1.bf16.msra.mxu0 0
    %3896 = vmatprep.subr.bf16.mxu0 0
    %3897 = vmatpush1.bf16.msra.mxu0 0
    %3898 = vmatprep.subr.bf16.mxu0 0
    %3899 = vmatpush1.bf16.msra.mxu0 0
    %3900 = vmatprep.subr.bf16.mxu0 0
    %3901 = vmatpush1.bf16.msra.mxu0 0
    %3902 = vmatprep.mubr.bf16.mxu0 0
    %3903 = vmatmul.mubr.bf16.gmra.mrb[0].mxu0 %v3677
    %v3904 = vpop.f32.mrb[0].mxu0
    %v3905 = vadd.f32 0.0, %v3904
    %v3906 = vpop.f32.mrb[0].mxu0
    %v3907 = vadd.f32 0.0, %v3906
    %v3908 = vpop.f32.mrb[0].mxu0
    %v3909 = vpop.f32.mrb[0].mxu0
    %3910 = vdwg.mxu0
    %3911 = vmatprep.subr.bf16.mxu0 %v3809
    %3912 = vmatpush1.bf16.msra.mxu0 %v3808
    %3913 = vmatprep.subr.bf16.mxu0 %v3813
    %3914 = vmatpush1.bf16.msra.mxu0 %v3812
    %3915 = vmatprep.subr.bf16.mxu0 %v3817
    %3916 = vmatpush1.bf16.msra.mxu0 %v3816
    %3917 = vmatprep.subr.bf16.mxu0 %v3821
    %3918 = vmatpush1.bf16.msra.mxu0 %v3820
    %3919 = vmatprep.subr.bf16.mxu0 %v3825
    %3920 = vmatpush1.bf16.msra.mxu0 %v3824
    %3921 = vmatprep.subr.bf16.mxu0 %v3829
    %3922 = vmatpush1.bf16.msra.mxu0 %v3828
    %3923 = vmatprep.subr.bf16.mxu0 %v3833
    %3924 = vmatpush1.bf16.msra.mxu0 %v3832
    %3925 = vmatprep.subr.bf16.mxu0 %v3837
    %3926 = vmatpush1.bf16.msra.mxu0 %v3836
    %3927 = vmatprep.subr.bf16.mxu0 0
    %3928 = vmatpush1.bf16.msra.mxu0 0
    %3929 = vmatprep.subr.bf16.mxu0 0
    %3930 = vmatpush1.bf16.msra.mxu0 0
    %3931 = vmatprep.subr.bf16.mxu0 0
    %3932 = vmatpush1.bf16.msra.mxu0 0
    %3933 = vmatprep.subr.bf16.mxu0 0
    %3934 = vmatpush1.bf16.msra.mxu0 0
    %3935 = vmatprep.subr.bf16.mxu0 0
    %3936 = vmatpush1.bf16.msra.mxu0 0
    %3937 = vmatprep.subr.bf16.mxu0 0
    %3938 = vmatpush1.bf16.msra.mxu0 0
    %3939 = vmatprep.subr.bf16.mxu0 0
    %3940 = vmatpush1.bf16.msra.mxu0 0
    %3941 = vmatprep.subr.bf16.mxu0 0
    %3942 = vmatpush1.bf16.msra.mxu0 0
    %3943 = vmatprep.mubr.bf16.mxu0 0
    %3944 = vmatmul.mubr.bf16.gmra.mrb[0].mxu0 %v3677
    %v3945 = vpop.f32.mrb[0].mxu0
    %v3946 = vadd.f32 0.0, %v3945
    %v3947 = vpop.f32.mrb[0].mxu0
    %v3948 = vadd.f32 0.0, %v3947
    %v3949 = vpop.f32.mrb[0].mxu0
    %v3950 = vpop.f32.mrb[0].mxu0
    %3951 = vdwg.mxu0
    %v3952 = vadd.f32 %v3673, %v3905
    %v3953 = vadd.f32 %v3674, %v3907
    %v3954 = vadd.f32 %v3675, %v3946
    %v3955 = vadd.f32 %v3676, %v3948
    %v3956 = vxor.u32 %v3952, 2147483648
    %v3957 = vmul.f32 %v3956, 1.442695
    %v3958 = vpow.pop %v3957
    %v3959 = vadd.f32 %v3958, 1.0
    %v3960 = vrcp.pop %v3959
    %v3961 = vmul.f32 1.0, %v3960
    %v3962 = vxor.u32 %v3953, 2147483648
    %v3963 = vmul.f32 %v3962, 1.442695
    %v3964 = vpow.pop %v3963
    %v3965 = vadd.f32 %v3964, 1.0
    %v3966 = vrcp.pop %v3965
    %v3967 = vmul.f32 1.0, %v3966
    %v3968 = vtanh.pop %v3954
    %v3969 = vxor.u32 %v3955, 2147483648
    %v3970 = vmul.f32 %v3969, 1.442695
    %v3971 = vpow.pop %v3970
    %v3972 = vadd.f32 %v3971, 1.0
    %v3973 = vrcp.pop %v3972
    %v3974 = vmul.f32 1.0, %v3973
    %v3975 = vmul.f32 %v3967, %v3672
    %v3976 = vmul.f32 %v3961, %v3968
    %v3977 = vadd.f32 %v3975, %v3976
    %v3978 = vtanh.pop %v3977
    %v3979 = vmul.f32 %v3974, %v3978
    %3980 = vst [vmem:[#allocation5] sm:$0xff] %v3977
    %3981 = vst [vmem:[#allocation4] sm:$0xff] %v3979
    %3982 = vst [vmem:[%s4 + $0x8] sm:$0xff] %v3979
    %v3983 = vld [vmem:[#allocation4] sm:$0xff]
    %v3984 = vld [vmem:[#allocation5] sm:$0xff]
    %v3985 = vld [vmem:[#allocation3 + $0x40] sm:$0xff]
    %v3986 = vld [vmem:[#allocation3 + $0x48] sm:$0xff]
    %v3987 = vld [vmem:[#allocation3 + $0x50] sm:$0xff]
    %v3988 = vld [vmem:[#allocation3 + $0x58] sm:$0xff]
    %v3989 = vpack.c.bf16 %v3983, %v3983
    %v3990 = vld [vmem:[%s3365] sm:$0xff]
    %v3991 = vld [vmem:[%s3365 + $0x8] sm:$0xff]
    %v3992 = vld [vmem:[%s3365 + $0x10] sm:$0xff]
    %v3993 = vld [vmem:[%s3365 + $0x18] sm:$0xff]
    %v3994 = vld [vmem:[%s3365 + $0x20] sm:$0xff]
    %v3995 = vld [vmem:[%s3365 + $0x28] sm:$0xff]
    %v3996 = vld [vmem:[%s3365 + $0x30] sm:$0xff]
    %v3997 = vld [vmem:[%s3365 + $0x38] sm:$0xff]
    %v3998 = vld [vmem:[%s3365 + $0x40] sm:$0xff]
    %v3999 = vld [vmem:[%s3365 + $0x48] sm:$0xff]
    %v4000 = vld [vmem:[%s3365 + $0x50] sm:$0xff]
    %v4001 = vld [vmem:[%s3365 + $0x58] sm:$0xff]
    %v4002 = vld [vmem:[%s3365 + $0x60] sm:$0xff]
    %v4003 = vld [vmem:[%s3365 + $0x68] sm:$0xff]
    %v4004 = vld [vmem:[%s3365 + $0x70] sm:$0xff]
    %v4005 = vld [vmem:[%s3365 + $0x78] sm:$0xff]
    %v4006 = vld [vmem:[%s3365 + $0x80] sm:$0xff]
    %v4007 = vld [vmem:[%s3365 + $0x88] sm:$0xff]
    %v4008 = vld [vmem:[%s3365 + $0x90] sm:$0xff]
    %v4009 = vld [vmem:[%s3365 + $0x98] sm:$0xff]
    %v4010 = vld [vmem:[%s3365 + $0xa0] sm:$0xff]
    %v4011 = vld [vmem:[%s3365 + $0xa8] sm:$0xff]
    %v4012 = vld [vmem:[%s3365 + $0xb0] sm:$0xff]
    %v4013 = vld [vmem:[%s3365 + $0xb8] sm:$0xff]
    %v4014 = vld [vmem:[%s3365 + $0xc0] sm:$0xff]
    %v4015 = vld [vmem:[%s3365 + $0xc8] sm:$0xff]
    %v4016 = vld [vmem:[%s3365 + $0xd0] sm:$0xff]
    %v4017 = vld [vmem:[%s3365 + $0xd8] sm:$0xff]
    %v4018 = vld [vmem:[%s3365 + $0xe0] sm:$0xff]
    %v4019 = vld [vmem:[%s3365 + $0xe8] sm:$0xff]
    %v4020 = vld [vmem:[%s3365 + $0xf0] sm:$0xff]
    %v4021 = vld [vmem:[%s3365 + $0xf8] sm:$0xff]
    %v4054 = vunpack.c.l.b16 %v3990
    %v4055 = vunpack.c.h.b16 %v3990
    %v4056 = vunpack.c.l.b16 %v3991
    %v4057 = vunpack.c.h.b16 %v3991
    %v4058 = vunpack.c.l.b16 %v3992
    %v4059 = vunpack.c.h.b16 %v3992
    %v4060 = vunpack.c.l.b16 %v3993
    %v4061 = vunpack.c.h.b16 %v3993
    %v4062 = vunpack.c.l.b16 %v3994
    %v4063 = vunpack.c.h.b16 %v3994
    %v4064 = vunpack.c.l.b16 %v3995
    %v4065 = vunpack.c.h.b16 %v3995
    %v4066 = vunpack.c.l.b16 %v3996
    %v4067 = vunpack.c.h.b16 %v3996
    %v4068 = vunpack.c.l.b16 %v3997
    %v4069 = vunpack.c.h.b16 %v3997
    %v4070 = vunpack.c.l.b16 %v3998
    %v4071 = vunpack.c.h.b16 %v3998
    %v4072 = vunpack.c.l.b16 %v3999
    %v4073 = vunpack.c.h.b16 %v3999
    %v4074 = vunpack.c.l.b16 %v4000
    %v4075 = vunpack.c.h.b16 %v4000
    %v4076 = vunpack.c.l.b16 %v4001
    %v4077 = vunpack.c.h.b16 %v4001
    %v4078 = vunpack.c.l.b16 %v4002
    %v4079 = vunpack.c.h.b16 %v4002
    %v4080 = vunpack.c.l.b16 %v4003
    %v4081 = vunpack.c.h.b16 %v4003
    %v4082 = vunpack.c.l.b16 %v4004
    %v4083 = vunpack.c.h.b16 %v4004
    %v4084 = vunpack.c.l.b16 %v4005
    %v4085 = vunpack.c.h.b16 %v4005
    %v4086 = vunpack.c.l.b16 %v4006
    %v4087 = vunpack.c.h.b16 %v4006
    %v4088 = vunpack.c.l.b16 %v4007
    %v4089 = vunpack.c.h.b16 %v4007
    %v4090 = vunpack.c.l.b16 %v4008
    %v4091 = vunpack.c.h.b16 %v4008
    %v4092 = vunpack.c.l.b16 %v4009
    %v4093 = vunpack.c.h.b16 %v4009
    %v4094 = vunpack.c.l.b16 %v4010
    %v4095 = vunpack.c.h.b16 %v4010
    %v4096 = vunpack.c.l.b16 %v4011
    %v4097 = vunpack.c.h.b16 %v4011
    %v4098 = vunpack.c.l.b16 %v4012
    %v4099 = vunpack.c.h.b16 %v4012
    %v4100 = vunpack.c.l.b16 %v4013
    %v4101 = vunpack.c.h.b16 %v4013
    %v4102 = vunpack.c.l.b16 %v4014
    %v4103 = vunpack.c.h.b16 %v4014
    %v4104 = vunpack.c.l.b16 %v4015
    %v4105 = vunpack.c.h.b16 %v4015
    %v4106 = vunpack.c.l.b16 %v4016
    %v4107 = vunpack.c.h.b16 %v4016
    %v4108 = vunpack.c.l.b16 %v4017
    %v4109 = vunpack.c.h.b16 %v4017
    %v4110 = vunpack.c.l.b16 %v4018
    %v4111 = vunpack.c.h.b16 %v4018
    %v4112 = vunpack.c.l.b16 %v4019
    %v4113 = vunpack.c.h.b16 %v4019
    %v4114 = vunpack.c.l.b16 %v4020
    %v4115 = vunpack.c.h.b16 %v4020
    %v4116 = vunpack.c.l.b16 %v4021
    %v4117 = vunpack.c.h.b16 %v4021
    %v4118 = vpack.c.b16 %v4058, %v4054
    %v4119 = vpack.c.b16 %v4059, %v4055
    %v4120 = vpack.c.b16 %v4060, %v4056
    %v4121 = vpack.c.b16 %v4061, %v4057
    %v4122 = vpack.c.b16 %v4066, %v4062
    %v4123 = vpack.c.b16 %v4067, %v4063
    %v4124 = vpack.c.b16 %v4068, %v4064
    %v4125 = vpack.c.b16 %v4069, %v4065
    %v4126 = vpack.c.b16 %v4074, %v4070
    %v4127 = vpack.c.b16 %v4075, %v4071
    %v4128 = vpack.c.b16 %v4076, %v4072
    %v4129 = vpack.c.b16 %v4077, %v4073
    %v4130 = vpack.c.b16 %v4082, %v4078
    %v4131 = vpack.c.b16 %v4083, %v4079
    %v4132 = vpack.c.b16 %v4084, %v4080
    %v4133 = vpack.c.b16 %v4085, %v4081
    %v4134 = vpack.c.b16 %v4090, %v4086
    %v4135 = vpack.c.b16 %v4091, %v4087
    %v4136 = vpack.c.b16 %v4092, %v4088
    %v4137 = vpack.c.b16 %v4093, %v4089
    %v4138 = vpack.c.b16 %v4098, %v4094
    %v4139 = vpack.c.b16 %v4099, %v4095
    %v4140 = vpack.c.b16 %v4100, %v4096
    %v4141 = vpack.c.b16 %v4101, %v4097
    %v4142 = vpack.c.b16 %v4106, %v4102
    %v4143 = vpack.c.b16 %v4107, %v4103
    %v4144 = vpack.c.b16 %v4108, %v4104
    %v4145 = vpack.c.b16 %v4109, %v4105
    %v4146 = vpack.c.b16 %v4114, %v4110
    %v4147 = vpack.c.b16 %v4115, %v4111
    %v4148 = vpack.c.b16 %v4116, %v4112
    %v4149 = vpack.c.b16 %v4117, %v4113
    %4182 = vmatprep.subr.bf16.mxu0 %v4119
    %4183 = vmatpush1.bf16.msra.mxu0 %v4118
    %4184 = vmatprep.subr.bf16.mxu0 %v4123
    %4185 = vmatpush1.bf16.msra.mxu0 %v4122
    %4186 = vmatprep.subr.bf16.mxu0 %v4127
    %4187 = vmatpush1.bf16.msra.mxu0 %v4126
    %4188 = vmatprep.subr.bf16.mxu0 %v4131
    %4189 = vmatpush1.bf16.msra.mxu0 %v4130
    %4190 = vmatprep.subr.bf16.mxu0 %v4135
    %4191 = vmatpush1.bf16.msra.mxu0 %v4134
    %4192 = vmatprep.subr.bf16.mxu0 %v4139
    %4193 = vmatpush1.bf16.msra.mxu0 %v4138
    %4194 = vmatprep.subr.bf16.mxu0 %v4143
    %4195 = vmatpush1.bf16.msra.mxu0 %v4142
    %4196 = vmatprep.subr.bf16.mxu0 %v4147
    %4197 = vmatpush1.bf16.msra.mxu0 %v4146
    %4198 = vmatprep.subr.bf16.mxu0 0
    %4199 = vmatpush1.bf16.msra.mxu0 0
    %4200 = vmatprep.subr.bf16.mxu0 0
    %4201 = vmatpush1.bf16.msra.mxu0 0
    %4202 = vmatprep.subr.bf16.mxu0 0
    %4203 = vmatpush1.bf16.msra.mxu0 0
    %4204 = vmatprep.subr.bf16.mxu0 0
    %4205 = vmatpush1.bf16.msra.mxu0 0
    %4206 = vmatprep.subr.bf16.mxu0 0
    %4207 = vmatpush1.bf16.msra.mxu0 0
    %4208 = vmatprep.subr.bf16.mxu0 0
    %4209 = vmatpush1.bf16.msra.mxu0 0
    %4210 = vmatprep.subr.bf16.mxu0 0
    %4211 = vmatpush1.bf16.msra.mxu0 0
    %4212 = vmatprep.subr.bf16.mxu0 0
    %4213 = vmatpush1.bf16.msra.mxu0 0
    %4214 = vmatprep.mubr.bf16.mxu0 0
    %4215 = vmatmul.mubr.bf16.gmra.mrb[0].mxu0 %v3989
    %v4216 = vpop.f32.mrb[0].mxu0
    %v4217 = vadd.f32 0.0, %v4216
    %v4218 = vpop.f32.mrb[0].mxu0
    %v4219 = vadd.f32 0.0, %v4218
    %v4220 = vpop.f32.mrb[0].mxu0
    %v4221 = vpop.f32.mrb[0].mxu0
    %4222 = vdwg.mxu0
    %4223 = vmatprep.subr.bf16.mxu0 %v4121
    %4224 = vmatpush1.bf16.msra.mxu0 %v4120
    %4225 = vmatprep.subr.bf16.mxu0 %v4125
    %4226 = vmatpush1.bf16.msra.mxu0 %v4124
    %4227 = vmatprep.subr.bf16.mxu0 %v4129
    %4228 = vmatpush1.bf16.msra.mxu0 %v4128
    %4229 = vmatprep.subr.bf16.mxu0 %v4133
    %4230 = vmatpush1.bf16.msra.mxu0 %v4132
    %4231 = vmatprep.subr.bf16.mxu0 %v4137
    %4232 = vmatpush1.bf16.msra.mxu0 %v4136
    %4233 = vmatprep.subr.bf16.mxu0 %v4141
    %4234 = vmatpush1.bf16.msra.mxu0 %v4140
    %4235 = vmatprep.subr.bf16.mxu0 %v4145
    %4236 = vmatpush1.bf16.msra.mxu0 %v4144
    %4237 = vmatprep.subr.bf16.mxu0 %v4149
    %4238 = vmatpush1.bf16.msra.mxu0 %v4148
    %4239 = vmatprep.subr.bf16.mxu0 0
    %4240 = vmatpush1.bf16.msra.mxu0 0
    %4241 = vmatprep.subr.bf16.mxu0 0
    %4242 = vmatpush1.bf16.msra.mxu0 0
    %4243 = vmatprep.subr.bf16.mxu0 0
    %4244 = vmatpush1.bf16.msra.mxu0 0
    %4245 = vmatprep.subr.bf16.mxu0 0
    %4246 = vmatpush1.bf16.msra.mxu0 0
    %4247 = vmatprep.subr.bf16.mxu0 0
    %4248 = vmatpush1.bf16.msra.mxu0 0
    %4249 = vmatprep.subr.bf16.mxu0 0
    %4250 = vmatpush1.bf16.msra.mxu0 0
    %4251 = vmatprep.subr.bf16.mxu0 0
    %4252 = vmatpush1.bf16.msra.mxu0 0
    %4253 = vmatprep.subr.bf16.mxu0 0
    %4254 = vmatpush1.bf16.msra.mxu0 0
    %4255 = vmatprep.mubr.bf16.mxu0 0
    %4256 = vmatmul.mubr.bf16.gmra.mrb[0].mxu0 %v3989
    %v4257 = vpop.f32.mrb[0].mxu0
    %v4258 = vadd.f32 0.0, %v4257
    %v4259 = vpop.f32.mrb[0].mxu0
    %v4260 = vadd.f32 0.0, %v4259
    %v4261 = vpop.f32.mrb[0].mxu0
    %v4262 = vpop.f32.mrb[0].mxu0
    %4263 = vdwg.mxu0
    %v4264 = vadd.f32 %v3985, %v4217
    %v4265 = vadd.f32 %v3986, %v4219
    %v4266 = vadd.f32 %v3987, %v4258
    %v4267 = vadd.f32 %v3988, %v4260
    %v4268 = vxor.u32 %v4264, 2147483648
    %v4269 = vmul.f32 %v4268, 1.442695
    %v4270 = vpow.pop %v4269
    %v4271 = vadd.f32 %v4270, 1.0
    %v4272 = vrcp.pop %v4271
    %v4273 = vmul.f32 1.0, %v4272
    %v4274 = vxor.u32 %v4265, 2147483648
    %v4275 = vmul.f32 %v4274, 1.442695
    %v4276 = vpow.pop %v4275
    %v4277 = vadd.f32 %v4276, 1.0
    %v4278 = vrcp.pop %v4277
    %v4279 = vmul.f32 1.0, %v4278
    %v4280 = vtanh.pop %v4266
    %v4281 = vxor.u32 %v4267, 2147483648
    %v4282 = vmul.f32 %v4281, 1.442695
    %v4283 = vpow.pop %v4282
    %v4284 = vadd.f32 %v4283, 1.0
    %v4285 = vrcp.pop %v4284
    %v4286 = vmul.f32 1.0, %v4285
    %v4287 = vmul.f32 %v4279, %v3984
    %v4288 = vmul.f32 %v4273, %v4280
    %v4289 = vadd.f32 %v4287, %v4288
    %v4290 = vtanh.pop %v4289
    %v4291 = vmul.f32 %v4286, %v4290
    %4292 = vst [vmem:[#allocation5] sm:$0xff] %v4289
    %4293 = vst [vmem:[#allocation4] sm:$0xff] %v4291
    %4294 = vst [vmem:[%s4 + $0x10] sm:$0xff] %v4291
    %v4295 = vld [vmem:[#allocation4] sm:$0xff]
    %v4296 = vld [vmem:[#allocation5] sm:$0xff]
    %v4297 = vld [vmem:[#allocation3 + $0x60] sm:$0xff]
    %v4298 = vld [vmem:[#allocation3 + $0x68] sm:$0xff]
    %v4299 = vld [vmem:[#allocation3 + $0x70] sm:$0xff]
    %v4300 = vld [vmem:[#allocation3 + $0x78] sm:$0xff]
    %v4301 = vpack.c.bf16 %v4295, %v4295
    %v4302 = vld [vmem:[%s3365] sm:$0xff]
    %v4303 = vld [vmem:[%s3365 + $0x8] sm:$0xff]
    %v4304 = vld [vmem:[%s3365 + $0x10] sm:$0xff]
    %v4305 = vld [vmem:[%s3365 + $0x18] sm:$0xff]
    %v4306 = vld [vmem:[%s3365 + $0x20] sm:$0xff]
    %v4307 = vld [vmem:[%s3365 + $0x28] sm:$0xff]
    %v4308 = vld [vmem:[%s3365 + $0x30] sm:$0xff]
    %v4309 = vld [vmem:[%s3365 + $0x38] sm:$0xff]
    %v4310 = vld [vmem:[%s3365 + $0x40] sm:$0xff]
    %v4311 = vld [vmem:[%s3365 + $0x48] sm:$0xff]
    %v4312 = vld [vmem:[%s3365 + $0x50] sm:$0xff]
    %v4313 = vld [vmem:[%s3365 + $0x58] sm:$0xff]
    %v4314 = vld [vmem:[%s3365 + $0x60] sm:$0xff]
    %v4315 = vld [vmem:[%s3365 + $0x68] sm:$0xff]
    %v4316 = vld [vmem:[%s3365 + $0x70] sm:$0xff]
    %v4317 = vld [vmem:[%s3365 + $0x78] sm:$0xff]
    %v4318 = vld [vmem:[%s3365 + $0x80] sm:$0xff]
    %v4319 = vld [vmem:[%s3365 + $0x88] sm:$0xff]
    %v4320 = vld [vmem:[%s3365 + $0x90] sm:$0xff]
    %v4321 = vld [vmem:[%s3365 + $0x98] sm:$0xff]
    %v4322 = vld [vmem:[%s3365 + $0xa0] sm:$0xff]
    %v4323 = vld [vmem:[%s3365 + $0xa8] sm:$0xff]
    %v4324 = vld [vmem:[%s3365 + $0xb0] sm:$0xff]
    %v4325 = vld [vmem:[%s3365 + $0xb8] sm:$0xff]
    %v4326 = vld [vmem:[%s3365 + $0xc0] sm:$0xff]
    %v4327 = vld [vmem:[%s3365 + $0xc8] sm:$0xff]
    %v4328 = vld [vmem:[%s3365 + $0xd0] sm:$0xff]
    %v4329 = vld [vmem:[%s3365 + $0xd8] sm:$0xff]
    %v4330 = vld [vmem:[%s3365 + $0xe0] sm:$0xff]
    %v4331 = vld [vmem:[%s3365 + $0xe8] sm:$0xff]
    %v4332 = vld [vmem:[%s3365 + $0xf0] sm:$0xff]
    %v4333 = vld [vmem:[%s3365 + $0xf8] sm:$0xff]
    %v4366 = vunpack.c.l.b16 %v4302
    %v4367 = vunpack.c.h.b16 %v4302
    %v4368 = vunpack.c.l.b16 %v4303
    %v4369 = vunpack.c.h.b16 %v4303
    %v4370 = vunpack.c.l.b16 %v4304
    %v4371 = vunpack.c.h.b16 %v4304
    %v4372 = vunpack.c.l.b16 %v4305
    %v4373 = vunpack.c.h.b16 %v4305
    %v4374 = vunpack.c.l.b16 %v4306
    %v4375 = vunpack.c.h.b16 %v4306
    %v4376 = vunpack.c.l.b16 %v4307
    %v4377 = vunpack.c.h.b16 %v4307
    %v4378 = vunpack.c.l.b16 %v4308
    %v4379 = vunpack.c.h.b16 %v4308
    %v4380 = vunpack.c.l.b16 %v4309
    %v4381 = vunpack.c.h.b16 %v4309
    %v4382 = vunpack.c.l.b16 %v4310
    %v4383 = vunpack.c.h.b16 %v4310
    %v4384 = vunpack.c.l.b16 %v4311
    %v4385 = vunpack.c.h.b16 %v4311
    %v4386 = vunpack.c.l.b16 %v4312
    %v4387 = vunpack.c.h.b16 %v4312
    %v4388 = vunpack.c.l.b16 %v4313
    %v4389 = vunpack.c.h.b16 %v4313
    %v4390 = vunpack.c.l.b16 %v4314
    %v4391 = vunpack.c.h.b16 %v4314
    %v4392 = vunpack.c.l.b16 %v4315
    %v4393 = vunpack.c.h.b16 %v4315
    %v4394 = vunpack.c.l.b16 %v4316
    %v4395 = vunpack.c.h.b16 %v4316
    %v4396 = vunpack.c.l.b16 %v4317
    %v4397 = vunpack.c.h.b16 %v4317
    %v4398 = vunpack.c.l.b16 %v4318
    %v4399 = vunpack.c.h.b16 %v4318
    %v4400 = vunpack.c.l.b16 %v4319
    %v4401 = vunpack.c.h.b16 %v4319
    %v4402 = vunpack.c.l.b16 %v4320
    %v4403 = vunpack.c.h.b16 %v4320
    %v4404 = vunpack.c.l.b16 %v4321
    %v4405 = vunpack.c.h.b16 %v4321
    %v4406 = vunpack.c.l.b16 %v4322
    %v4407 = vunpack.c.h.b16 %v4322
    %v4408 = vunpack.c.l.b16 %v4323
    %v4409 = vunpack.c.h.b16 %v4323
    %v4410 = vunpack.c.l.b16 %v4324
    %v4411 = vunpack.c.h.b16 %v4324
    %v4412 = vunpack.c.l.b16 %v4325
    %v4413 = vunpack.c.h.b16 %v4325
    %v4414 = vunpack.c.l.b16 %v4326
    %v4415 = vunpack.c.h.b16 %v4326
    %v4416 = vunpack.c.l.b16 %v4327
    %v4417 = vunpack.c.h.b16 %v4327
    %v4418 = vunpack.c.l.b16 %v4328
    %v4419 = vunpack.c.h.b16 %v4328
    %v4420 = vunpack.c.l.b16 %v4329
    %v4421 = vunpack.c.h.b16 %v4329
    %v4422 = vunpack.c.l.b16 %v4330
    %v4423 = vunpack.c.h.b16 %v4330
    %v4424 = vunpack.c.l.b16 %v4331
    %v4425 = vunpack.c.h.b16 %v4331
    %v4426 = vunpack.c.l.b16 %v4332
    %v4427 = vunpack.c.h.b16 %v4332
    %v4428 = vunpack.c.l.b16 %v4333
    %v4429 = vunpack.c.h.b16 %v4333
    %v4430 = vpack.c.b16 %v4370, %v4366
    %v4431 = vpack.c.b16 %v4371, %v4367
    %v4432 = vpack.c.b16 %v4372, %v4368
    %v4433 = vpack.c.b16 %v4373, %v4369
    %v4434 = vpack.c.b16 %v4378, %v4374
    %v4435 = vpack.c.b16 %v4379, %v4375
    %v4436 = vpack.c.b16 %v4380, %v4376
    %v4437 = vpack.c.b16 %v4381, %v4377
    %v4438 = vpack.c.b16 %v4386, %v4382
    %v4439 = vpack.c.b16 %v4387, %v4383
    %v4440 = vpack.c.b16 %v4388, %v4384
    %v4441 = vpack.c.b16 %v4389, %v4385
    %v4442 = vpack.c.b16 %v4394, %v4390
    %v4443 = vpack.c.b16 %v4395, %v4391
    %v4444 = vpack.c.b16 %v4396, %v4392
    %v4445 = vpack.c.b16 %v4397, %v4393
    %v4446 = vpack.c.b16 %v4402, %v4398
    %v4447 = vpack.c.b16 %v4403, %v4399
    %v4448 = vpack.c.b16 %v4404, %v4400
    %v4449 = vpack.c.b16 %v4405, %v4401
    %v4450 = vpack.c.b16 %v4410, %v4406
    %v4451 = vpack.c.b16 %v4411, %v4407
    %v4452 = vpack.c.b16 %v4412, %v4408
    %v4453 = vpack.c.b16 %v4413, %v4409
    %v4454 = vpack.c.b16 %v4418, %v4414
    %v4455 = vpack.c.b16 %v4419, %v4415
    %v4456 = vpack.c.b16 %v4420, %v4416
    %v4457 = vpack.c.b16 %v4421, %v4417
    %v4458 = vpack.c.b16 %v4426, %v4422
    %v4459 = vpack.c.b16 %v4427, %v4423
    %v4460 = vpack.c.b16 %v4428, %v4424
    %v4461 = vpack.c.b16 %v4429, %v4425
    %4494 = vmatprep.subr.bf16.mxu0 %v4431
    %4495 = vmatpush1.bf16.msra.mxu0 %v4430
    %4496 = vmatprep.subr.bf16.mxu0 %v4435
    %4497 = vmatpush1.bf16.msra.mxu0 %v4434
    %4498 = vmatprep.subr.bf16.mxu0 %v4439
    %4499 = vmatpush1.bf16.msra.mxu0 %v4438
    %4500 = vmatprep.subr.bf16.mxu0 %v4443
    %4501 = vmatpush1.bf16.msra.mxu0 %v4442
    %4502 = vmatprep.subr.bf16.mxu0 %v4447
    %4503 = vmatpush1.bf16.msra.mxu0 %v4446
    %4504 = vmatprep.subr.bf16.mxu0 %v4451
    %4505 = vmatpush1.bf16.msra.mxu0 %v4450
    %4506 = vmatprep.subr.bf16.mxu0 %v4455
    %4507 = vmatpush1.bf16.msra.mxu0 %v4454
    %4508 = vmatprep.subr.bf16.mxu0 %v4459
    %4509 = vmatpush1.bf16.msra.mxu0 %v4458
    %4510 = vmatprep.subr.bf16.mxu0 0
    %4511 = vmatpush1.bf16.msra.mxu0 0
    %4512 = vmatprep.subr.bf16.mxu0 0
    %4513 = vmatpush1.bf16.msra.mxu0 0
    %4514 = vmatprep.subr.bf16.mxu0 0
    %4515 = vmatpush1.bf16.msra.mxu0 0
    %4516 = vmatprep.subr.bf16.mxu0 0
    %4517 = vmatpush1.bf16.msra.mxu0 0
    %4518 = vmatprep.subr.bf16.mxu0 0
    %4519 = vmatpush1.bf16.msra.mxu0 0
    %4520 = vmatprep.subr.bf16.mxu0 0
    %4521 = vmatpush1.bf16.msra.mxu0 0
    %4522 = vmatprep.subr.bf16.mxu0 0
    %4523 = vmatpush1.bf16.msra.mxu0 0
    %4524 = vmatprep.subr.bf16.mxu0 0
    %4525 = vmatpush1.bf16.msra.mxu0 0
    %4526 = vmatprep.mubr.bf16.mxu0 0
    %4527 = vmatmul.mubr.bf16.gmra.mrb[0].mxu0 %v4301
    %v4528 = vpop.f32.mrb[0].mxu0
    %v4529 = vadd.f32 0.0, %v4528
    %v4530 = vpop.f32.mrb[0].mxu0
    %v4531 = vadd.f32 0.0, %v4530
    %v4532 = vpop.f32.mrb[0].mxu0
    %v4533 = vpop.f32.mrb[0].mxu0
    %4534 = vdwg.mxu0
    %4535 = vmatprep.subr.bf16.mxu0 %v4433
    %4536 = vmatpush1.bf16.msra.mxu0 %v4432
    %4537 = vmatprep.subr.bf16.mxu0 %v4437
    %4538 = vmatpush1.bf16.msra.mxu0 %v4436
    %4539 = vmatprep.subr.bf16.mxu0 %v4441
    %4540 = vmatpush1.bf16.msra.mxu0 %v4440
    %4541 = vmatprep.subr.bf16.mxu0 %v4445
    %4542 = vmatpush1.bf16.msra.mxu0 %v4444
    %4543 = vmatprep.subr.bf16.mxu0 %v4449
    %4544 = vmatpush1.bf16.msra.mxu0 %v4448
    %4545 = vmatprep.subr.bf16.mxu0 %v4453
    %4546 = vmatpush1.bf16.msra.mxu0 %v4452
    %4547 = vmatprep.subr.bf16.mxu0 %v4457
    %4548 = vmatpush1.bf16.msra.mxu0 %v4456
    %4549 = vmatprep.subr.bf16.mxu0 %v4461
    %4550 = vmatpush1.bf16.msra.mxu0 %v4460
    %4551 = vmatprep.subr.bf16.mxu0 0
    %4552 = vmatpush1.bf16.msra.mxu0 0
    %4553 = vmatprep.subr.bf16.mxu0 0
    %4554 = vmatpush1.bf16.msra.mxu0 0
    %4555 = vmatprep.subr.bf16.mxu0 0
    %4556 = vmatpush1.bf16.msra.mxu0 0
    %4557 = vmatprep.subr.bf16.mxu0 0
    %4558 = vmatpush1.bf16.msra.mxu0 0
    %4559 = vmatprep.subr.bf16.mxu0 0
    %4560 = vmatpush1.bf16.msra.mxu0 0
    %4561 = vmatprep.subr.bf16.mxu0 0
    %4562 = vmatpush1.bf16.msra.mxu0 0
    %4563 = vmatprep.subr.bf16.mxu0 0
    %4564 = vmatpush1.bf16.msra.mxu0 0
    %4565 = vmatprep.subr.bf16.mxu0 0
    %4566 = vmatpush1.bf16.msra.mxu0 0
    %4567 = vmatprep.mubr.bf16.mxu0 0
    %4568 = vmatmul.mubr.bf16.gmra.mrb[0].mxu0 %v4301
    %v4569 = vpop.f32.mrb[0].mxu0
    %v4570 = vadd.f32 0.0, %v4569
    %v4571 = vpop.f32.mrb[0].mxu0
    %v4572 = vadd.f32 0.0, %v4571
    %v4573 = vpop.f32.mrb[0].mxu0
    %v4574 = vpop.f32.mrb[0].mxu0
    %4575 = vdwg.mxu0
    %v4576 = vadd.f32 %v4297, %v4529
    %v4577 = vadd.f32 %v4298, %v4531
    %v4578 = vadd.f32 %v4299, %v4570
    %v4579 = vadd.f32 %v4300, %v4572
    %v4580 = vxor.u32 %v4576, 2147483648
    %v4581 = vmul.f32 %v4580, 1.442695
    %v4582 = vpow.pop %v4581
    %v4583 = vadd.f32 %v4582, 1.0
    %v4584 = vrcp.pop %v4583
    %v4585 = vmul.f32 1.0, %v4584
    %v4586 = vxor.u32 %v4577, 2147483648
    %v4587 = vmul.f32 %v4586, 1.442695
    %v4588 = vpow.pop %v4587
    %v4589 = vadd.f32 %v4588, 1.0
    %v4590 = vrcp.pop %v4589
    %v4591 = vmul.f32 1.0, %v4590
    %v4592 = vtanh.pop %v4578
    %v4593 = vxor.u32 %v4579, 2147483648
    %v4594 = vmul.f32 %v4593, 1.442695
    %v4595 = vpow.pop %v4594
    %v4596 = vadd.f32 %v4595, 1.0
    %v4597 = vrcp.pop %v4596
    %v4598 = vmul.f32 1.0, %v4597
    %v4599 = vmul.f32 %v4591, %v4296
    %v4600 = vmul.f32 %v4585, %v4592
    %v4601 = vadd.f32 %v4599, %v4600
    %v4602 = vtanh.pop %v4601
    %v4603 = vmul.f32 %v4598, %v4602
    %4604 = vst [vmem:[#allocation5] sm:$0xff] %v4601
    %4605 = vst [vmem:[#allocation4] sm:$0xff] %v4603
    %4606 = vst [vmem:[%s4 + $0x18] sm:$0xff] %v4603
    %v4607 = vld [vmem:[#allocation4] sm:$0xff]
    %v4608 = vld [vmem:[#allocation5] sm:$0xff]
    %v4609 = vld [vmem:[#allocation3 + $0x80] sm:$0xff]
    %v4610 = vld [vmem:[#allocation3 + $0x88] sm:$0xff]
    %v4611 = vld [vmem:[#allocation3 + $0x90] sm:$0xff]
    %v4612 = vld [vmem:[#allocation3 + $0x98] sm:$0xff]
    %v4613 = vpack.c.bf16 %v4607, %v4607
    %v4614 = vld [vmem:[%s3365] sm:$0xff]
    %v4615 = vld [vmem:[%s3365 + $0x8] sm:$0xff]
    %v4616 = vld [vmem:[%s3365 + $0x10] sm:$0xff]
    %v4617 = vld [vmem:[%s3365 + $0x18] sm:$0xff]
    %v4618 = vld [vmem:[%s3365 + $0x20] sm:$0xff]
    %v4619 = vld [vmem:[%s3365 + $0x28] sm:$0xff]
    %v4620 = vld [vmem:[%s3365 + $0x30] sm:$0xff]
    %v4621 = vld [vmem:[%s3365 + $0x38] sm:$0xff]
    %v4622 = vld [vmem:[%s3365 + $0x40] sm:$0xff]
    %v4623 = vld [vmem:[%s3365 + $0x48] sm:$0xff]
    %v4624 = vld [vmem:[%s3365 + $0x50] sm:$0xff]
    %v4625 = vld [vmem:[%s3365 + $0x58] sm:$0xff]
    %v4626 = vld [vmem:[%s3365 + $0x60] sm:$0xff]
    %v4627 = vld [vmem:[%s3365 + $0x68] sm:$0xff]
    %v4628 = vld [vmem:[%s3365 + $0x70] sm:$0xff]
    %v4629 = vld [vmem:[%s3365 + $0x78] sm:$0xff]
    %v4630 = vld [vmem:[%s3365 + $0x80] sm:$0xff]
    %v4631 = vld [vmem:[%s3365 + $0x88] sm:$0xff]
    %v4632 = vld [vmem:[%s3365 + $0x90] sm:$0xff]
    %v4633 = vld [vmem:[%s3365 + $0x98] sm:$0xff]
    %v4634 = vld [vmem:[%s3365 + $0xa0] sm:$0xff]
    %v4635 = vld [vmem:[%s3365 + $0xa8] sm:$0xff]
    %v4636 = vld [vmem:[%s3365 + $0xb0] sm:$0xff]
    %v4637 = vld [vmem:[%s3365 + $0xb8] sm:$0xff]
    %v4638 = vld [vmem:[%s3365 + $0xc0] sm:$0xff]
    %v4639 = vld [vmem:[%s3365 + $0xc8] sm:$0xff]
    %v4640 = vld [vmem:[%s3365 + $0xd0] sm:$0xff]
    %v4641 = vld [vmem:[%s3365 + $0xd8] sm:$0xff]
    %v4642 = vld [vmem:[%s3365 + $0xe0] sm:$0xff]
    %v4643 = vld [vmem:[%s3365 + $0xe8] sm:$0xff]
    %v4644 = vld [vmem:[%s3365 + $0xf0] sm:$0xff]
    %v4645 = vld [vmem:[%s3365 + $0xf8] sm:$0xff]
    %v4678 = vunpack.c.l.b16 %v4614
    %v4679 = vunpack.c.h.b16 %v4614
    %v4680 = vunpack.c.l.b16 %v4615
    %v4681 = vunpack.c.h.b16 %v4615
    %v4682 = vunpack.c.l.b16 %v4616
    %v4683 = vunpack.c.h.b16 %v4616
    %v4684 = vunpack.c.l.b16 %v4617
    %v4685 = vunpack.c.h.b16 %v4617
    %v4686 = vunpack.c.l.b16 %v4618
    %v4687 = vunpack.c.h.b16 %v4618
    %v4688 = vunpack.c.l.b16 %v4619
    %v4689 = vunpack.c.h.b16 %v4619
    %v4690 = vunpack.c.l.b16 %v4620
    %v4691 = vunpack.c.h.b16 %v4620
    %v4692 = vunpack.c.l.b16 %v4621
    %v4693 = vunpack.c.h.b16 %v4621
    %v4694 = vunpack.c.l.b16 %v4622
    %v4695 = vunpack.c.h.b16 %v4622
    %v4696 = vunpack.c.l.b16 %v4623
    %v4697 = vunpack.c.h.b16 %v4623
    %v4698 = vunpack.c.l.b16 %v4624
    %v4699 = vunpack.c.h.b16 %v4624
    %v4700 = vunpack.c.l.b16 %v4625
    %v4701 = vunpack.c.h.b16 %v4625
    %v4702 = vunpack.c.l.b16 %v4626
    %v4703 = vunpack.c.h.b16 %v4626
    %v4704 = vunpack.c.l.b16 %v4627
    %v4705 = vunpack.c.h.b16 %v4627
    %v4706 = vunpack.c.l.b16 %v4628
    %v4707 = vunpack.c.h.b16 %v4628
    %v4708 = vunpack.c.l.b16 %v4629
    %v4709 = vunpack.c.h.b16 %v4629
    %v4710 = vunpack.c.l.b16 %v4630
    %v4711 = vunpack.c.h.b16 %v4630
    %v4712 = vunpack.c.l.b16 %v4631
    %v4713 = vunpack.c.h.b16 %v4631
    %v4714 = vunpack.c.l.b16 %v4632
    %v4715 = vunpack.c.h.b16 %v4632
    %v4716 = vunpack.c.l.b16 %v4633
    %v4717 = vunpack.c.h.b16 %v4633
    %v4718 = vunpack.c.l.b16 %v4634
    %v4719 = vunpack.c.h.b16 %v4634
    %v4720 = vunpack.c.l.b16 %v4635
    %v4721 = vunpack.c.h.b16 %v4635
    %v4722 = vunpack.c.l.b16 %v4636
    %v4723 = vunpack.c.h.b16 %v4636
    %v4724 = vunpack.c.l.b16 %v4637
    %v4725 = vunpack.c.h.b16 %v4637
    %v4726 = vunpack.c.l.b16 %v4638
    %v4727 = vunpack.c.h.b16 %v4638
    %v4728 = vunpack.c.l.b16 %v4639
    %v4729 = vunpack.c.h.b16 %v4639
    %v4730 = vunpack.c.l.b16 %v4640
    %v4731 = vunpack.c.h.b16 %v4640
    %v4732 = vunpack.c.l.b16 %v4641
    %v4733 = vunpack.c.h.b16 %v4641
    %v4734 = vunpack.c.l.b16 %v4642
    %v4735 = vunpack.c.h.b16 %v4642
    %v4736 = vunpack.c.l.b16 %v4643
    %v4737 = vunpack.c.h.b16 %v4643
    %v4738 = vunpack.c.l.b16 %v4644
    %v4739 = vunpack.c.h.b16 %v4644
    %v4740 = vunpack.c.l.b16 %v4645
    %v4741 = vunpack.c.h.b16 %v4645
    %v4742 = vpack.c.b16 %v4682, %v4678
    %v4743 = vpack.c.b16 %v4683, %v4679
    %v4744 = vpack.c.b16 %v4684, %v4680
    %v4745 = vpack.c.b16 %v4685, %v4681
    %v4746 = vpack.c.b16 %v4690, %v4686
    %v4747 = vpack.c.b16 %v4691, %v4687
    %v4748 = vpack.c.b16 %v4692, %v4688
    %v4749 = vpack.c.b16 %v4693, %v4689
    %v4750 = vpack.c.b16 %v4698, %v4694
    %v4751 = vpack.c.b16 %v4699, %v4695
    %v4752 = vpack.c.b16 %v4700, %v4696
    %v4753 = vpack.c.b16 %v4701, %v4697
    %v4754 = vpack.c.b16 %v4706, %v4702
    %v4755 = vpack.c.b16 %v4707, %v4703
    %v4756 = vpack.c.b16 %v4708, %v4704
    %v4757 = vpack.c.b16 %v4709, %v4705
    %v4758 = vpack.c.b16 %v4714, %v4710
    %v4759 = vpack.c.b16 %v4715, %v4711
    %v4760 = vpack.c.b16 %v4716, %v4712
    %v4761 = vpack.c.b16 %v4717, %v4713
    %v4762 = vpack.c.b16 %v4722, %v4718
    %v4763 = vpack.c.b16 %v4723, %v4719
    %v4764 = vpack.c.b16 %v4724, %v4720
    %v4765 = vpack.c.b16 %v4725, %v4721
    %v4766 = vpack.c.b16 %v4730, %v4726
    %v4767 = vpack.c.b16 %v4731, %v4727
    %v4768 = vpack.c.b16 %v4732, %v4728
    %v4769 = vpack.c.b16 %v4733, %v4729
    %v4770 = vpack.c.b16 %v4738, %v4734
    %v4771 = vpack.c.b16 %v4739, %v4735
    %v4772 = vpack.c.b16 %v4740, %v4736
    %v4773 = vpack.c.b16 %v4741, %v4737
    %4806 = vmatprep.subr.bf16.mxu0 %v4743
    %4807 = vmatpush1.bf16.msra.mxu0 %v4742
    %4808 = vmatprep.subr.bf16.mxu0 %v4747
    %4809 = vmatpush1.bf16.msra.mxu0 %v4746
    %4810 = vmatprep.subr.bf16.mxu0 %v4751
    %4811 = vmatpush1.bf16.msra.mxu0 %v4750
    %4812 = vmatprep.subr.bf16.mxu0 %v4755
    %4813 = vmatpush1.bf16.msra.mxu0 %v4754
    %4814 = vmatprep.subr.bf16.mxu0 %v4759
    %4815 = vmatpush1.bf16.msra.mxu0 %v4758
    %4816 = vmatprep.subr.bf16.mxu0 %v4763
    %4817 = vmatpush1.bf16.msra.mxu0 %v4762
    %4818 = vmatprep.subr.bf16.mxu0 %v4767
    %4819 = vmatpush1.bf16.msra.mxu0 %v4766
    %4820 = vmatprep.subr.bf16.mxu0 %v4771
    %4821 = vmatpush1.bf16.msra.mxu0 %v4770
    %4822 = vmatprep.subr.bf16.mxu0 0
    %4823 = vmatpush1.bf16.msra.mxu0 0
    %4824 = vmatprep.subr.bf16.mxu0 0
    %4825 = vmatpush1.bf16.msra.mxu0 0
    %4826 = vmatprep.subr.bf16.mxu0 0
    %4827 = vmatpush1.bf16.msra.mxu0 0
    %4828 = vmatprep.subr.bf16.mxu0 0
    %4829 = vmatpush1.bf16.msra.mxu0 0
    %4830 = vmatprep.subr.bf16.mxu0 0
    %4831 = vmatpush1.bf16.msra.mxu0 0
    %4832 = vmatprep.subr.bf16.mxu0 0
    %4833 = vmatpush1.bf16.msra.mxu0 0
    %4834 = vmatprep.subr.bf16.mxu0 0
    %4835 = vmatpush1.bf16.msra.mxu0 0
    %4836 = vmatprep.subr.bf16.mxu0 0
    %4837 = vmatpush1.bf16.msra.mxu0 0
    %4838 = vmatprep.mubr.bf16.mxu0 0
    %4839 = vmatmul.mubr.bf16.gmra.mrb[0].mxu0 %v4613
    %v4840 = vpop.f32.mrb[0].mxu0
    %v4841 = vadd.f32 0.0, %v4840
    %v4842 = vpop.f32.mrb[0].mxu0
    %v4843 = vadd.f32 0.0, %v4842
    %v4844 = vpop.f32.mrb[0].mxu0
    %v4845 = vpop.f32.mrb[0].mxu0
    %4846 = vdwg.mxu0
    %4847 = vmatprep.subr.bf16.mxu0 %v4745
    %4848 = vmatpush1.bf16.msra.mxu0 %v4744
    %4849 = vmatprep.subr.bf16.mxu0 %v4749
    %4850 = vmatpush1.bf16.msra.mxu0 %v4748
    %4851 = vmatprep.subr.bf16.mxu0 %v4753
    %4852 = vmatpush1.bf16.msra.mxu0 %v4752
    %4853 = vmatprep.subr.bf16.mxu0 %v4757
    %4854 = vmatpush1.bf16.msra.mxu0 %v4756
    %4855 = vmatprep.subr.bf16.mxu0 %v4761
    %4856 = vmatpush1.bf16.msra.mxu0 %v4760
    %4857 = vmatprep.subr.bf16.mxu0 %v4765
    %4858 = vmatpush1.bf16.msra.mxu0 %v4764
    %4859 = vmatprep.subr.bf16.mxu0 %v4769
    %4860 = vmatpush1.bf16.msra.mxu0 %v4768
    %4861 = vmatprep.subr.bf16.mxu0 %v4773
    %4862 = vmatpush1.bf16.msra.mxu0 %v4772
    %4863 = vmatprep.subr.bf16.mxu0 0
    %4864 = vmatpush1.bf16.msra.mxu0 0
    %4865 = vmatprep.subr.bf16.mxu0 0
    %4866 = vmatpush1.bf16.msra.mxu0 0
    %4867 = vmatprep.subr.bf16.mxu0 0
    %4868 = vmatpush1.bf16.msra.mxu0 0
    %4869 = vmatprep.subr.bf16.mxu0 0
    %4870 = vmatpush1.bf16.msra.mxu0 0
    %4871 = vmatprep.subr.bf16.mxu0 0
    %4872 = vmatpush1.bf16.msra.mxu0 0
    %4873 = vmatprep.subr.bf16.mxu0 0
    %4874 = vmatpush1.bf16.msra.mxu0 0
    %4875 = vmatprep.subr.bf16.mxu0 0
    %4876 = vmatpush1.bf16.msra.mxu0 0
    %4877 = vmatprep.subr.bf16.mxu0 0
    %4878 = vmatpush1.bf16.msra.mxu0 0
    %4879 = vmatprep.mubr.bf16.mxu0 0
    %4880 = vmatmul.mubr.bf16.gmra.mrb[0].mxu0 %v4613
    %v4881 = vpop.f32.mrb[0].mxu0
    %v4882 = vadd.f32 0.0, %v4881
    %v4883 = vpop.f32.mrb[0].mxu0
    %v4884 = vadd.f32 0.0, %v4883
    %v4885 = vpop.f32.mrb[0].mxu0
    %v4886 = vpop.f32.mrb[0].mxu0
    %4887 = vdwg.mxu0
    %v4888 = vadd.f32 %v4609, %v4841
    %v4889 = vadd.f32 %v4610, %v4843
    %v4890 = vadd.f32 %v4611, %v4882
    %v4891 = vadd.f32 %v4612, %v4884
    %v4892 = vxor.u32 %v4888, 2147483648
    %v4893 = vmul.f32 %v4892, 1.442695
    %v4894 = vpow.pop %v4893
    %v4895 = vadd.f32 %v4894, 1.0
    %v4896 = vrcp.pop %v4895
    %v4897 = vmul.f32 1.0, %v4896
    %v4898 = vxor.u32 %v4889, 2147483648
    %v4899 = vmul.f32 %v4898, 1.442695
    %v4900 = vpow.pop %v4899
    %v4901 = vadd.f32 %v4900, 1.0
    %v4902 = vrcp.pop %v4901
    %v4903 = vmul.f32 1.0, %v4902
    %v4904 = vtanh.pop %v4890
    %v4905 = vxor.u32 %v4891, 2147483648
    %v4906 = vmul.f32 %v4905, 1.442695
    %v4907 = vpow.pop %v4906
    %v4908 = vadd.f32 %v4907, 1.0
    %v4909 = vrcp.pop %v4908
    %v4910 = vmul.f32 1.0, %v4909
    %v4911 = vmul.f32 %v4903, %v4608
    %v4912 = vmul.f32 %v4897, %v4904
    %v4913 = vadd.f32 %v4911, %v4912
    %v4914 = vtanh.pop %v4913
    %v4915 = vmul.f32 %v4910, %v4914
    %4916 = vst [vmem:[#allocation5] sm:$0xff] %v4913
    %4917 = vst [vmem:[#allocation4] sm:$0xff] %v4915
    %4918 = vst [vmem:[%s4 + $0x20] sm:$0xff] %v4915
    %v4919 = vld [vmem:[#allocation4] sm:$0xff]
    %v4920 = vld [vmem:[#allocation5] sm:$0xff]
    %v4921 = vld [vmem:[#allocation3 + $0xa0] sm:$0xff]
    %v4922 = vld [vmem:[#allocation3 + $0xa8] sm:$0xff]
    %v4923 = vld [vmem:[#allocation3 + $0xb0] sm:$0xff]
    %v4924 = vld [vmem:[#allocation3 + $0xb8] sm:$0xff]
    %v4925 = vpack.c.bf16 %v4919, %v4919
    %v4926 = vld [vmem:[%s3365] sm:$0xff]
    %v4927 = vld [vmem:[%s3365 + $0x8] sm:$0xff]
    %v4928 = vld [vmem:[%s3365 + $0x10] sm:$0xff]
    %v4929 = vld [vmem:[%s3365 + $0x18] sm:$0xff]
    %v4930 = vld [vmem:[%s3365 + $0x20] sm:$0xff]
    %v4931 = vld [vmem:[%s3365 + $0x28] sm:$0xff]
    %v4932 = vld [vmem:[%s3365 + $0x30] sm:$0xff]
    %v4933 = vld [vmem:[%s3365 + $0x38] sm:$0xff]
    %v4934 = vld [vmem:[%s3365 + $0x40] sm:$0xff]
    %v4935 = vld [vmem:[%s3365 + $0x48] sm:$0xff]
    %v4936 = vld [vmem:[%s3365 + $0x50] sm:$0xff]
    %v4937 = vld [vmem:[%s3365 + $0x58] sm:$0xff]
    %v4938 = vld [vmem:[%s3365 + $0x60] sm:$0xff]
    %v4939 = vld [vmem:[%s3365 + $0x68] sm:$0xff]
    %v4940 = vld [vmem:[%s3365 + $0x70] sm:$0xff]
    %v4941 = vld [vmem:[%s3365 + $0x78] sm:$0xff]
    %v4942 = vld [vmem:[%s3365 + $0x80] sm:$0xff]
    %v4943 = vld [vmem:[%s3365 + $0x88] sm:$0xff]
    %v4944 = vld [vmem:[%s3365 + $0x90] sm:$0xff]
    %v4945 = vld [vmem:[%s3365 + $0x98] sm:$0xff]
    %v4946 = vld [vmem:[%s3365 + $0xa0] sm:$0xff]
    %v4947 = vld [vmem:[%s3365 + $0xa8] sm:$0xff]
    %v4948 = vld [vmem:[%s3365 + $0xb0] sm:$0xff]
    %v4949 = vld [vmem:[%s3365 + $0xb8] sm:$0xff]
    %v4950 = vld [vmem:[%s3365 + $0xc0] sm:$0xff]
    %v4951 = vld [vmem:[%s3365 + $0xc8] sm:$0xff]
    %v4952 = vld [vmem:[%s3365 + $0xd0] sm:$0xff]
    %v4953 = vld [vmem:[%s3365 + $0xd8] sm:$0xff]
    %v4954 = vld [vmem:[%s3365 + $0xe0] sm:$0xff]
    %v4955 = vld [vmem:[%s3365 + $0xe8] sm:$0xff]
    %v4956 = vld [vmem:[%s3365 + $0xf0] sm:$0xff]
    %v4957 = vld [vmem:[%s3365 + $0xf8] sm:$0xff]
    %v4990 = vunpack.c.l.b16 %v4926
    %v4991 = vunpack.c.h.b16 %v4926
    %v4992 = vunpack.c.l.b16 %v4927
    %v4993 = vunpack.c.h.b16 %v4927
    %v4994 = vunpack.c.l.b16 %v4928
    %v4995 = vunpack.c.h.b16 %v4928
    %v4996 = vunpack.c.l.b16 %v4929
    %v4997 = vunpack.c.h.b16 %v4929
    %v4998 = vunpack.c.l.b16 %v4930
    %v4999 = vunpack.c.h.b16 %v4930
    %v5000 = vunpack.c.l.b16 %v4931
    %v5001 = vunpack.c.h.b16 %v4931
    %v5002 = vunpack.c.l.b16 %v4932
    %v5003 = vunpack.c.h.b16 %v4932
    %v5004 = vunpack.c.l.b16 %v4933
    %v5005 = vunpack.c.h.b16 %v4933
    %v5006 = vunpack.c.l.b16 %v4934
    %v5007 = vunpack.c.h.b16 %v4934
    %v5008 = vunpack.c.l.b16 %v4935
    %v5009 = vunpack.c.h.b16 %v4935
    %v5010 = vunpack.c.l.b16 %v4936
    %v5011 = vunpack.c.h.b16 %v4936
    %v5012 = vunpack.c.l.b16 %v4937
    %v5013 = vunpack.c.h.b16 %v4937
    %v5014 = vunpack.c.l.b16 %v4938
    %v5015 = vunpack.c.h.b16 %v4938
    %v5016 = vunpack.c.l.b16 %v4939
    %v5017 = vunpack.c.h.b16 %v4939
    %v5018 = vunpack.c.l.b16 %v4940
    %v5019 = vunpack.c.h.b16 %v4940
    %v5020 = vunpack.c.l.b16 %v4941
    %v5021 = vunpack.c.h.b16 %v4941
    %v5022 = vunpack.c.l.b16 %v4942
    %v5023 = vunpack.c.h.b16 %v4942
    %v5024 = vunpack.c.l.b16 %v4943
    %v5025 = vunpack.c.h.b16 %v4943
    %v5026 = vunpack.c.l.b16 %v4944
    %v5027 = vunpack.c.h.b16 %v4944
    %v5028 = vunpack.c.l.b16 %v4945
    %v5029 = vunpack.c.h.b16 %v4945
    %v5030 = vunpack.c.l.b16 %v4946
    %v5031 = vunpack.c.h.b16 %v4946
    %v5032 = vunpack.c.l.b16 %v4947
    %v5033 = vunpack.c.h.b16 %v4947
    %v5034 = vunpack.c.l.b16 %v4948
    %v5035 = vunpack.c.h.b16 %v4948
    %v5036 = vunpack.c.l.b16 %v4949
    %v5037 = vunpack.c.h.b16 %v4949
    %v5038 = vunpack.c.l.b16 %v4950
    %v5039 = vunpack.c.h.b16 %v4950
    %v5040 = vunpack.c.l.b16 %v4951
    %v5041 = vunpack.c.h.b16 %v4951
    %v5042 = vunpack.c.l.b16 %v4952
    %v5043 = vunpack.c.h.b16 %v4952
    %v5044 = vunpack.c.l.b16 %v4953
    %v5045 = vunpack.c.h.b16 %v4953
    %v5046 = vunpack.c.l.b16 %v4954
    %v5047 = vunpack.c.h.b16 %v4954
    %v5048 = vunpack.c.l.b16 %v4955
    %v5049 = vunpack.c.h.b16 %v4955
    %v5050 = vunpack.c.l.b16 %v4956
    %v5051 = vunpack.c.h.b16 %v4956
    %v5052 = vunpack.c.l.b16 %v4957
    %v5053 = vunpack.c.h.b16 %v4957
    %v5054 = vpack.c.b16 %v4994, %v4990
    %v5055 = vpack.c.b16 %v4995, %v4991
    %v5056 = vpack.c.b16 %v4996, %v4992
    %v5057 = vpack.c.b16 %v4997, %v4993
    %v5058 = vpack.c.b16 %v5002, %v4998
    %v5059 = vpack.c.b16 %v5003, %v4999
    %v5060 = vpack.c.b16 %v5004, %v5000
    %v5061 = vpack.c.b16 %v5005, %v5001
    %v5062 = vpack.c.b16 %v5010, %v5006
    %v5063 = vpack.c.b16 %v5011, %v5007
    %v5064 = vpack.c.b16 %v5012, %v5008
    %v5065 = vpack.c.b16 %v5013, %v5009
    %v5066 = vpack.c.b16 %v5018, %v5014
    %v5067 = vpack.c.b16 %v5019, %v5015
    %v5068 = vpack.c.b16 %v5020, %v5016
    %v5069 = vpack.c.b16 %v5021, %v5017
    %v5070 = vpack.c.b16 %v5026, %v5022
    %v5071 = vpack.c.b16 %v5027, %v5023
    %v5072 = vpack.c.b16 %v5028, %v5024
    %v5073 = vpack.c.b16 %v5029, %v5025
    %v5074 = vpack.c.b16 %v5034, %v5030
    %v5075 = vpack.c.b16 %v5035, %v5031
    %v5076 = vpack.c.b16 %v5036, %v5032
    %v5077 = vpack.c.b16 %v5037, %v5033
    %v5078 = vpack.c.b16 %v5042, %v5038
    %v5079 = vpack.c.b16 %v5043, %v5039
    %v5080 = vpack.c.b16 %v5044, %v5040
    %v5081 = vpack.c.b16 %v5045, %v5041
    %v5082 = vpack.c.b16 %v5050, %v5046
    %v5083 = vpack.c.b16 %v5051, %v5047
    %v5084 = vpack.c.b16 %v5052, %v5048
    %v5085 = vpack.c.b16 %v5053, %v5049
    %5118 = vmatprep.subr.bf16.mxu0 %v5055
    %5119 = vmatpush1.bf16.msra.mxu0 %v5054
    %5120 = vmatprep.subr.bf16.mxu0 %v5059
    %5121 = vmatpush1.bf16.msra.mxu0 %v5058
    %5122 = vmatprep.subr.bf16.mxu0 %v5063
    %5123 = vmatpush1.bf16.msra.mxu0 %v5062
    %5124 = vmatprep.subr.bf16.mxu0 %v5067
    %5125 = vmatpush1.bf16.msra.mxu0 %v5066
    %5126 = vmatprep.subr.bf16.mxu0 %v5071
    %5127 = vmatpush1.bf16.msra.mxu0 %v5070
    %5128 = vmatprep.subr.bf16.mxu0 %v5075
    %5129 = vmatpush1.bf16.msra.mxu0 %v5074
    %5130 = vmatprep.subr.bf16.mxu0 %v5079
    %5131 = vmatpush1.bf16.msra.mxu0 %v5078
    %5132 = vmatprep.subr.bf16.mxu0 %v5083
    %5133 = vmatpush1.bf16.msra.mxu0 %v5082
    %5134 = vmatprep.subr.bf16.mxu0 0
    %5135 = vmatpush1.bf16.msra.mxu0 0
    %5136 = vmatprep.subr.bf16.mxu0 0
    %5137 = vmatpush1.bf16.msra.mxu0 0
    %5138 = vmatprep.subr.bf16.mxu0 0
    %5139 = vmatpush1.bf16.msra.mxu0 0
    %5140 = vmatprep.subr.bf16.mxu0 0
    %5141 = vmatpush1.bf16.msra.mxu0 0
    %5142 = vmatprep.subr.bf16.mxu0 0
    %5143 = vmatpush1.bf16.msra.mxu0 0
    %5144 = vmatprep.subr.bf16.mxu0 0
    %5145 = vmatpush1.bf16.msra.mxu0 0
    %5146 = vmatprep.subr.bf16.mxu0 0
    %5147 = vmatpush1.bf16.msra.mxu0 0
    %5148 = vmatprep.subr.bf16.mxu0 0
    %5149 = vmatpush1.bf16.msra.mxu0 0
    %5150 = vmatprep.mubr.bf16.mxu0 0
    %5151 = vmatmul.mubr.bf16.gmra.mrb[0].mxu0 %v4925
    %v5152 = vpop.f32.mrb[0].mxu0
    %v5153 = vadd.f32 0.0, %v5152
    %v5154 = vpop.f32.mrb[0].mxu0
    %v5155 = vadd.f32 0.0, %v5154
    %v5156 = vpop.f32.mrb[0].mxu0
    %v5157 = vpop.f32.mrb[0].mxu0
    %5158 = vdwg.mxu0
    %5159 = vmatprep.subr.bf16.mxu0 %v5057
    %5160 = vmatpush1.bf16.msra.mxu0 %v5056
    %5161 = vmatprep.subr.bf16.mxu0 %v5061
    %5162 = vmatpush1.bf16.msra.mxu0 %v5060
    %5163 = vmatprep.subr.bf16.mxu0 %v5065
    %5164 = vmatpush1.bf16.msra.mxu0 %v5064
    %5165 = vmatprep.subr.bf16.mxu0 %v5069
    %5166 = vmatpush1.bf16.msra.mxu0 %v5068
    %5167 = vmatprep.subr.bf16.mxu0 %v5073
    %5168 = vmatpush1.bf16.msra.mxu0 %v5072
    %5169 = vmatprep.subr.bf16.mxu0 %v5077
    %5170 = vmatpush1.bf16.msra.mxu0 %v5076
    %5171 = vmatprep.subr.bf16.mxu0 %v5081
    %5172 = vmatpush1.bf16.msra.mxu0 %v5080
    %5173 = vmatprep.subr.bf16.mxu0 %v5085
    %5174 = vmatpush1.bf16.msra.mxu0 %v5084
    %5175 = vmatprep.subr.bf16.mxu0 0
    %5176 = vmatpush1.bf16.msra.mxu0 0
    %5177 = vmatprep.subr.bf16.mxu0 0
    %5178 = vmatpush1.bf16.msra.mxu0 0
    %5179 = vmatprep.subr.bf16.mxu0 0
    %5180 = vmatpush1.bf16.msra.mxu0 0
    %5181 = vmatprep.subr.bf16.mxu0 0
    %5182 = vmatpush1.bf16.msra.mxu0 0
    %5183 = vmatprep.subr.bf16.mxu0 0
    %5184 = vmatpush1.bf16.msra.mxu0 0
    %5185 = vmatprep.subr.bf16.mxu0 0
    %5186 = vmatpush1.bf16.msra.mxu0 0
    %5187 = vmatprep.subr.bf16.mxu0 0
    %5188 = vmatpush1.bf16.msra.mxu0 0
    %5189 = vmatprep.subr.bf16.mxu0 0
    %5190 = vmatpush1.bf16.msra.mxu0 0
    %5191 = vmatprep.mubr.bf16.mxu0 0
    %5192 = vmatmul.mubr.bf16.gmra.mrb[0].mxu0 %v4925
    %v5193 = vpop.f32.mrb[0].mxu0
    %v5194 = vadd.f32 0.0, %v5193
    %v5195 = vpop.f32.mrb[0].mxu0
    %v5196 = vadd.f32 0.0, %v5195
    %v5197 = vpop.f32.mrb[0].mxu0
    %v5198 = vpop.f32.mrb[0].mxu0
    %5199 = vdwg.mxu0
    %v5200 = vadd.f32 %v4921, %v5153
    %v5201 = vadd.f32 %v4922, %v5155
    %v5202 = vadd.f32 %v4923, %v5194
    %v5203 = vadd.f32 %v4924, %v5196
    %v5204 = vxor.u32 %v5200, 2147483648
    %v5205 = vmul.f32 %v5204, 1.442695
    %v5206 = vpow.pop %v5205
    %v5207 = vadd.f32 %v5206, 1.0
    %v5208 = vrcp.pop %v5207
    %v5209 = vmul.f32 1.0, %v5208
    %v5210 = vxor.u32 %v5201, 2147483648
    %v5211 = vmul.f32 %v5210, 1.442695
    %v5212 = vpow.pop %v5211
    %v5213 = vadd.f32 %v5212, 1.0
    %v5214 = vrcp.pop %v5213
    %v5215 = vmul.f32 1.0, %v5214
    %v5216 = vtanh.pop %v5202
    %v5217 = vxor.u32 %v5203, 2147483648
    %v5218 = vmul.f32 %v5217, 1.442695
    %v5219 = vpow.pop %v5218
    %v5220 = vadd.f32 %v5219, 1.0
    %v5221 = vrcp.pop %v5220
    %v5222 = vmul.f32 1.0, %v5221
    %v5223 = vmul.f32 %v5215, %v4920
    %v5224 = vmul.f32 %v5209, %v5216
    %v5225 = vadd.f32 %v5223, %v5224
    %v5226 = vtanh.pop %v5225
    %v5227 = vmul.f32 %v5222, %v5226
    %5228 = vst [vmem:[#allocation5] sm:$0xff] %v5225
    %5229 = vst [vmem:[#allocation4] sm:$0xff] %v5227
    %5230 = vst [vmem:[%s4 + $0x28] sm:$0xff] %v5227
    %v5231 = vld [vmem:[#allocation4] sm:$0xff]
    %v5232 = vld [vmem:[#allocation5] sm:$0xff]
    %v5233 = vld [vmem:[#allocation3 + $0xc0] sm:$0xff]
    %v5234 = vld [vmem:[#allocation3 + $0xc8] sm:$0xff]
    %v5235 = vld [vmem:[#allocation3 + $0xd0] sm:$0xff]
    %v5236 = vld [vmem:[#allocation3 + $0xd8] sm:$0xff]
    %v5237 = vpack.c.bf16 %v5231, %v5231
    %v5238 = vld [vmem:[%s3365] sm:$0xff]
    %v5239 = vld [vmem:[%s3365 + $0x8] sm:$0xff]
    %v5240 = vld [vmem:[%s3365 + $0x10] sm:$0xff]
    %v5241 = vld [vmem:[%s3365 + $0x18] sm:$0xff]
    %v5242 = vld [vmem:[%s3365 + $0x20] sm:$0xff]
    %v5243 = vld [vmem:[%s3365 + $0x28] sm:$0xff]
    %v5244 = vld [vmem:[%s3365 + $0x30] sm:$0xff]
    %v5245 = vld [vmem:[%s3365 + $0x38] sm:$0xff]
    %v5246 = vld [vmem:[%s3365 + $0x40] sm:$0xff]
    %v5247 = vld [vmem:[%s3365 + $0x48] sm:$0xff]
    %v5248 = vld [vmem:[%s3365 + $0x50] sm:$0xff]
    %v5249 = vld [vmem:[%s3365 + $0x58] sm:$0xff]
    %v5250 = vld [vmem:[%s3365 + $0x60] sm:$0xff]
    %v5251 = vld [vmem:[%s3365 + $0x68] sm:$0xff]
    %v5252 = vld [vmem:[%s3365 + $0x70] sm:$0xff]
    %v5253 = vld [vmem:[%s3365 + $0x78] sm:$0xff]
    %v5254 = vld [vmem:[%s3365 + $0x80] sm:$0xff]
    %v5255 = vld [vmem:[%s3365 + $0x88] sm:$0xff]
    %v5256 = vld [vmem:[%s3365 + $0x90] sm:$0xff]
    %v5257 = vld [vmem:[%s3365 + $0x98] sm:$0xff]
    %v5258 = vld [vmem:[%s3365 + $0xa0] sm:$0xff]
    %v5259 = vld [vmem:[%s3365 + $0xa8] sm:$0xff]
    %v5260 = vld [vmem:[%s3365 + $0xb0] sm:$0xff]
    %v5261 = vld [vmem:[%s3365 + $0xb8] sm:$0xff]
    %v5262 = vld [vmem:[%s3365 + $0xc0] sm:$0xff]
    %v5263 = vld [vmem:[%s3365 + $0xc8] sm:$0xff]
    %v5264 = vld [vmem:[%s3365 + $0xd0] sm:$0xff]
    %v5265 = vld [vmem:[%s3365 + $0xd8] sm:$0xff]
    %v5266 = vld [vmem:[%s3365 + $0xe0] sm:$0xff]
    %v5267 = vld [vmem:[%s3365 + $0xe8] sm:$0xff]
    %v5268 = vld [vmem:[%s3365 + $0xf0] sm:$0xff]
    %v5269 = vld [vmem:[%s3365 + $0xf8] sm:$0xff]
    %v5302 = vunpack.c.l.b16 %v5238
    %v5303 = vunpack.c.h.b16 %v5238
    %v5304 = vunpack.c.l.b16 %v5239
    %v5305 = vunpack.c.h.b16 %v5239
    %v5306 = vunpack.c.l.b16 %v5240
    %v5307 = vunpack.c.h.b16 %v5240
    %v5308 = vunpack.c.l.b16 %v5241
    %v5309 = vunpack.c.h.b16 %v5241
    %v5310 = vunpack.c.l.b16 %v5242
    %v5311 = vunpack.c.h.b16 %v5242
    %v5312 = vunpack.c.l.b16 %v5243
    %v5313 = vunpack.c.h.b16 %v5243
    %v5314 = vunpack.c.l.b16 %v5244
    %v5315 = vunpack.c.h.b16 %v5244
    %v5316 = vunpack.c.l.b16 %v5245
    %v5317 = vunpack.c.h.b16 %v5245
    %v5318 = vunpack.c.l.b16 %v5246
    %v5319 = vunpack.c.h.b16 %v5246
    %v5320 = vunpack.c.l.b16 %v5247
    %v5321 = vunpack.c.h.b16 %v5247
    %v5322 = vunpack.c.l.b16 %v5248
    %v5323 = vunpack.c.h.b16 %v5248
    %v5324 = vunpack.c.l.b16 %v5249
    %v5325 = vunpack.c.h.b16 %v5249
    %v5326 = vunpack.c.l.b16 %v5250
    %v5327 = vunpack.c.h.b16 %v5250
    %v5328 = vunpack.c.l.b16 %v5251
    %v5329 = vunpack.c.h.b16 %v5251
    %v5330 = vunpack.c.l.b16 %v5252
    %v5331 = vunpack.c.h.b16 %v5252
    %v5332 = vunpack.c.l.b16 %v5253
    %v5333 = vunpack.c.h.b16 %v5253
    %v5334 = vunpack.c.l.b16 %v5254
    %v5335 = vunpack.c.h.b16 %v5254
    %v5336 = vunpack.c.l.b16 %v5255
    %v5337 = vunpack.c.h.b16 %v5255
    %v5338 = vunpack.c.l.b16 %v5256
    %v5339 = vunpack.c.h.b16 %v5256
    %v5340 = vunpack.c.l.b16 %v5257
    %v5341 = vunpack.c.h.b16 %v5257
    %v5342 = vunpack.c.l.b16 %v5258
    %v5343 = vunpack.c.h.b16 %v5258
    %v5344 = vunpack.c.l.b16 %v5259
    %v5345 = vunpack.c.h.b16 %v5259
    %v5346 = vunpack.c.l.b16 %v5260
    %v5347 = vunpack.c.h.b16 %v5260
    %v5348 = vunpack.c.l.b16 %v5261
    %v5349 = vunpack.c.h.b16 %v5261
    %v5350 = vunpack.c.l.b16 %v5262
    %v5351 = vunpack.c.h.b16 %v5262
    %v5352 = vunpack.c.l.b16 %v5263
    %v5353 = vunpack.c.h.b16 %v5263
    %v5354 = vunpack.c.l.b16 %v5264
    %v5355 = vunpack.c.h.b16 %v5264
    %v5356 = vunpack.c.l.b16 %v5265
    %v5357 = vunpack.c.h.b16 %v5265
    %v5358 = vunpack.c.l.b16 %v5266
    %v5359 = vunpack.c.h.b16 %v5266
    %v5360 = vunpack.c.l.b16 %v5267
    %v5361 = vunpack.c.h.b16 %v5267
    %v5362 = vunpack.c.l.b16 %v5268
    %v5363 = vunpack.c.h.b16 %v5268
    %v5364 = vunpack.c.l.b16 %v5269
    %v5365 = vunpack.c.h.b16 %v5269
    %v5366 = vpack.c.b16 %v5306, %v5302
    %v5367 = vpack.c.b16 %v5307, %v5303
    %v5368 = vpack.c.b16 %v5308, %v5304
    %v5369 = vpack.c.b16 %v5309, %v5305
    %v5370 = vpack.c.b16 %v5314, %v5310
    %v5371 = vpack.c.b16 %v5315, %v5311
    %v5372 = vpack.c.b16 %v5316, %v5312
    %v5373 = vpack.c.b16 %v5317, %v5313
    %v5374 = vpack.c.b16 %v5322, %v5318
    %v5375 = vpack.c.b16 %v5323, %v5319
    %v5376 = vpack.c.b16 %v5324, %v5320
    %v5377 = vpack.c.b16 %v5325, %v5321
    %v5378 = vpack.c.b16 %v5330, %v5326
    %v5379 = vpack.c.b16 %v5331, %v5327
    %v5380 = vpack.c.b16 %v5332, %v5328
    %v5381 = vpack.c.b16 %v5333, %v5329
    %v5382 = vpack.c.b16 %v5338, %v5334
    %v5383 = vpack.c.b16 %v5339, %v5335
    %v5384 = vpack.c.b16 %v5340, %v5336
    %v5385 = vpack.c.b16 %v5341, %v5337
    %v5386 = vpack.c.b16 %v5346, %v5342
    %v5387 = vpack.c.b16 %v5347, %v5343
    %v5388 = vpack.c.b16 %v5348, %v5344
    %v5389 = vpack.c.b16 %v5349, %v5345
    %v5390 = vpack.c.b16 %v5354, %v5350
    %v5391 = vpack.c.b16 %v5355, %v5351
    %v5392 = vpack.c.b16 %v5356, %v5352
    %v5393 = vpack.c.b16 %v5357, %v5353
    %v5394 = vpack.c.b16 %v5362, %v5358
    %v5395 = vpack.c.b16 %v5363, %v5359
    %v5396 = vpack.c.b16 %v5364, %v5360
    %v5397 = vpack.c.b16 %v5365, %v5361
    %5430 = vmatprep.subr.bf16.mxu0 %v5367
    %5431 = vmatpush1.bf16.msra.mxu0 %v5366
    %5432 = vmatprep.subr.bf16.mxu0 %v5371
    %5433 = vmatpush1.bf16.msra.mxu0 %v5370
    %5434 = vmatprep.subr.bf16.mxu0 %v5375
    %5435 = vmatpush1.bf16.msra.mxu0 %v5374
    %5436 = vmatprep.subr.bf16.mxu0 %v5379
    %5437 = vmatpush1.bf16.msra.mxu0 %v5378
    %5438 = vmatprep.subr.bf16.mxu0 %v5383
    %5439 = vmatpush1.bf16.msra.mxu0 %v5382
    %5440 = vmatprep.subr.bf16.mxu0 %v5387
    %5441 = vmatpush1.bf16.msra.mxu0 %v5386
    %5442 = vmatprep.subr.bf16.mxu0 %v5391
    %5443 = vmatpush1.bf16.msra.mxu0 %v5390
    %5444 = vmatprep.subr.bf16.mxu0 %v5395
    %5445 = vmatpush1.bf16.msra.mxu0 %v5394
    %5446 = vmatprep.subr.bf16.mxu0 0
    %5447 = vmatpush1.bf16.msra.mxu0 0
    %5448 = vmatprep.subr.bf16.mxu0 0
    %5449 = vmatpush1.bf16.msra.mxu0 0
    %5450 = vmatprep.subr.bf16.mxu0 0
    %5451 = vmatpush1.bf16.msra.mxu0 0
    %5452 = vmatprep.subr.bf16.mxu0 0
    %5453 = vmatpush1.bf16.msra.mxu0 0
    %5454 = vmatprep.subr.bf16.mxu0 0
    %5455 = vmatpush1.bf16.msra.mxu0 0
    %5456 = vmatprep.subr.bf16.mxu0 0
    %5457 = vmatpush1.bf16.msra.mxu0 0
    %5458 = vmatprep.subr.bf16.mxu0 0
    %5459 = vmatpush1.bf16.msra.mxu0 0
    %5460 = vmatprep.subr.bf16.mxu0 0
    %5461 = vmatpush1.bf16.msra.mxu0 0
    %5462 = vmatprep.mubr.bf16.mxu0 0
    %5463 = vmatmul.mubr.bf16.gmra.mrb[0].mxu0 %v5237
    %v5464 = vpop.f32.mrb[0].mxu0
    %v5465 = vadd.f32 0.0, %v5464
    %v5466 = vpop.f32.mrb[0].mxu0
    %v5467 = vadd.f32 0.0, %v5466
    %v5468 = vpop.f32.mrb[0].mxu0
    %v5469 = vpop.f32.mrb[0].mxu0
    %5470 = vdwg.mxu0
    %5471 = vmatprep.subr.bf16.mxu0 %v5369
    %5472 = vmatpush1.bf16.msra.mxu0 %v5368
    %5473 = vmatprep.subr.bf16.mxu0 %v5373
    %5474 = vmatpush1.bf16.msra.mxu0 %v5372
    %5475 = vmatprep.subr.bf16.mxu0 %v5377
    %5476 = vmatpush1.bf16.msra.mxu0 %v5376
    %5477 = vmatprep.subr.bf16.mxu0 %v5381
    %5478 = vmatpush1.bf16.msra.mxu0 %v5380
    %5479 = vmatprep.subr.bf16.mxu0 %v5385
    %5480 = vmatpush1.bf16.msra.mxu0 %v5384
    %5481 = vmatprep.subr.bf16.mxu0 %v5389
    %5482 = vmatpush1.bf16.msra.mxu0 %v5388
    %5483 = vmatprep.subr.bf16.mxu0 %v5393
    %5484 = vmatpush1.bf16.msra.mxu0 %v5392
    %5485 = vmatprep.subr.bf16.mxu0 %v5397
    %5486 = vmatpush1.bf16.msra.mxu0 %v5396
    %5487 = vmatprep.subr.bf16.mxu0 0
    %5488 = vmatpush1.bf16.msra.mxu0 0
    %5489 = vmatprep.subr.bf16.mxu0 0
    %5490 = vmatpush1.bf16.msra.mxu0 0
    %5491 = vmatprep.subr.bf16.mxu0 0
    %5492 = vmatpush1.bf16.msra.mxu0 0
    %5493 = vmatprep.subr.bf16.mxu0 0
    %5494 = vmatpush1.bf16.msra.mxu0 0
    %5495 = vmatprep.subr.bf16.mxu0 0
    %5496 = vmatpush1.bf16.msra.mxu0 0
    %5497 = vmatprep.subr.bf16.mxu0 0
    %5498 = vmatpush1.bf16.msra.mxu0 0
    %5499 = vmatprep.subr.bf16.mxu0 0
    %5500 = vmatpush1.bf16.msra.mxu0 0
    %5501 = vmatprep.subr.bf16.mxu0 0
    %5502 = vmatpush1.bf16.msra.mxu0 0
    %5503 = vmatprep.mubr.bf16.mxu0 0
    %5504 = vmatmul.mubr.bf16.gmra.mrb[0].mxu0 %v5237
    %v5505 = vpop.f32.mrb[0].mxu0
    %v5506 = vadd.f32 0.0, %v5505
    %v5507 = vpop.f32.mrb[0].mxu0
    %v5508 = vadd.f32 0.0, %v5507
    %v5509 = vpop.f32.mrb[0].mxu0
    %v5510 = vpop.f32.mrb[0].mxu0
    %5511 = vdwg.mxu0
    %v5512 = vadd.f32 %v5233, %v5465
    %v5513 = vadd.f32 %v5234, %v5467
    %v5514 = vadd.f32 %v5235, %v5506
    %v5515 = vadd.f32 %v5236, %v5508
    %v5516 = vxor.u32 %v5512, 2147483648
    %v5517 = vmul.f32 %v5516, 1.442695
    %v5518 = vpow.pop %v5517
    %v5519 = vadd.f32 %v5518, 1.0
    %v5520 = vrcp.pop %v5519
    %v5521 = vmul.f32 1.0, %v5520
    %v5522 = vxor.u32 %v5513, 2147483648
    %v5523 = vmul.f32 %v5522, 1.442695
    %v5524 = vpow.pop %v5523
    %v5525 = vadd.f32 %v5524, 1.0
    %v5526 = vrcp.pop %v5525
    %v5527 = vmul.f32 1.0, %v5526
    %v5528 = vtanh.pop %v5514
    %v5529 = vxor.u32 %v5515, 2147483648
    %v5530 = vmul.f32 %v5529, 1.442695
    %v5531 = vpow.pop %v5530
    %v5532 = vadd.f32 %v5531, 1.0
    %v5533 = vrcp.pop %v5532
    %v5534 = vmul.f32 1.0, %v5533
    %v5535 = vmul.f32 %v5527, %v5232
    %v5536 = vmul.f32 %v5521, %v5528
    %v5537 = vadd.f32 %v5535, %v5536
    %v5538 = vtanh.pop %v5537
    %v5539 = vmul.f32 %v5534, %v5538
    %5540 = vst [vmem:[#allocation5] sm:$0xff] %v5537
    %5541 = vst [vmem:[#allocation4] sm:$0xff] %v5539
    %5542 = vst [vmem:[%s4 + $0x30] sm:$0xff] %v5539
    %v5543 = vld [vmem:[#allocation4] sm:$0xff]
    %v5544 = vld [vmem:[#allocation5] sm:$0xff]
    %v5545 = vld [vmem:[#allocation3 + $0xe0] sm:$0xff]
    %v5546 = vld [vmem:[#allocation3 + $0xe8] sm:$0xff]
    %v5547 = vld [vmem:[#allocation3 + $0xf0] sm:$0xff]
    %v5548 = vld [vmem:[#allocation3 + $0xf8] sm:$0xff]
    %v5549 = vpack.c.bf16 %v5543, %v5543
    %v5550 = vld [vmem:[%s3365] sm:$0xff]
    %v5551 = vld [vmem:[%s3365 + $0x8] sm:$0xff]
    %v5552 = vld [vmem:[%s3365 + $0x10] sm:$0xff]
    %v5553 = vld [vmem:[%s3365 + $0x18] sm:$0xff]
    %v5554 = vld [vmem:[%s3365 + $0x20] sm:$0xff]
    %v5555 = vld [vmem:[%s3365 + $0x28] sm:$0xff]
    %v5556 = vld [vmem:[%s3365 + $0x30] sm:$0xff]
    %v5557 = vld [vmem:[%s3365 + $0x38] sm:$0xff]
    %v5558 = vld [vmem:[%s3365 + $0x40] sm:$0xff]
    %v5559 = vld [vmem:[%s3365 + $0x48] sm:$0xff]
    %v5560 = vld [vmem:[%s3365 + $0x50] sm:$0xff]
    %v5561 = vld [vmem:[%s3365 + $0x58] sm:$0xff]
    %v5562 = vld [vmem:[%s3365 + $0x60] sm:$0xff]
    %v5563 = vld [vmem:[%s3365 + $0x68] sm:$0xff]
    %v5564 = vld [vmem:[%s3365 + $0x70] sm:$0xff]
    %v5565 = vld [vmem:[%s3365 + $0x78] sm:$0xff]
    %v5566 = vld [vmem:[%s3365 + $0x80] sm:$0xff]
    %v5567 = vld [vmem:[%s3365 + $0x88] sm:$0xff]
    %v5568 = vld [vmem:[%s3365 + $0x90] sm:$0xff]
    %v5569 = vld [vmem:[%s3365 + $0x98] sm:$0xff]
    %v5570 = vld [vmem:[%s3365 + $0xa0] sm:$0xff]
    %v5571 = vld [vmem:[%s3365 + $0xa8] sm:$0xff]
    %v5572 = vld [vmem:[%s3365 + $0xb0] sm:$0xff]
    %v5573 = vld [vmem:[%s3365 + $0xb8] sm:$0xff]
    %v5574 = vld [vmem:[%s3365 + $0xc0] sm:$0xff]
    %v5575 = vld [vmem:[%s3365 + $0xc8] sm:$0xff]
    %v5576 = vld [vmem:[%s3365 + $0xd0] sm:$0xff]
    %v5577 = vld [vmem:[%s3365 + $0xd8] sm:$0xff]
    %v5578 = vld [vmem:[%s3365 + $0xe0] sm:$0xff]
    %v5579 = vld [vmem:[%s3365 + $0xe8] sm:$0xff]
    %v5580 = vld [vmem:[%s3365 + $0xf0] sm:$0xff]
    %v5581 = vld [vmem:[%s3365 + $0xf8] sm:$0xff]
    %v5614 = vunpack.c.l.b16 %v5550
    %v5615 = vunpack.c.h.b16 %v5550
    %v5616 = vunpack.c.l.b16 %v5551
    %v5617 = vunpack.c.h.b16 %v5551
    %v5618 = vunpack.c.l.b16 %v5552
    %v5619 = vunpack.c.h.b16 %v5552
    %v5620 = vunpack.c.l.b16 %v5553
    %v5621 = vunpack.c.h.b16 %v5553
    %v5622 = vunpack.c.l.b16 %v5554
    %v5623 = vunpack.c.h.b16 %v5554
    %v5624 = vunpack.c.l.b16 %v5555
    %v5625 = vunpack.c.h.b16 %v5555
    %v5626 = vunpack.c.l.b16 %v5556
    %v5627 = vunpack.c.h.b16 %v5556
    %v5628 = vunpack.c.l.b16 %v5557
    %v5629 = vunpack.c.h.b16 %v5557
    %v5630 = vunpack.c.l.b16 %v5558
    %v5631 = vunpack.c.h.b16 %v5558
    %v5632 = vunpack.c.l.b16 %v5559
    %v5633 = vunpack.c.h.b16 %v5559
    %v5634 = vunpack.c.l.b16 %v5560
    %v5635 = vunpack.c.h.b16 %v5560
    %v5636 = vunpack.c.l.b16 %v5561
    %v5637 = vunpack.c.h.b16 %v5561
    %v5638 = vunpack.c.l.b16 %v5562
    %v5639 = vunpack.c.h.b16 %v5562
    %v5640 = vunpack.c.l.b16 %v5563
    %v5641 = vunpack.c.h.b16 %v5563
    %v5642 = vunpack.c.l.b16 %v5564
    %v5643 = vunpack.c.h.b16 %v5564
    %v5644 = vunpack.c.l.b16 %v5565
    %v5645 = vunpack.c.h.b16 %v5565
    %v5646 = vunpack.c.l.b16 %v5566
    %v5647 = vunpack.c.h.b16 %v5566
    %v5648 = vunpack.c.l.b16 %v5567
    %v5649 = vunpack.c.h.b16 %v5567
    %v5650 = vunpack.c.l.b16 %v5568
    %v5651 = vunpack.c.h.b16 %v5568
    %v5652 = vunpack.c.l.b16 %v5569
    %v5653 = vunpack.c.h.b16 %v5569
    %v5654 = vunpack.c.l.b16 %v5570
    %v5655 = vunpack.c.h.b16 %v5570
    %v5656 = vunpack.c.l.b16 %v5571
    %v5657 = vunpack.c.h.b16 %v5571
    %v5658 = vunpack.c.l.b16 %v5572
    %v5659 = vunpack.c.h.b16 %v5572
    %v5660 = vunpack.c.l.b16 %v5573
    %v5661 = vunpack.c.h.b16 %v5573
    %v5662 = vunpack.c.l.b16 %v5574
    %v5663 = vunpack.c.h.b16 %v5574
    %v5664 = vunpack.c.l.b16 %v5575
    %v5665 = vunpack.c.h.b16 %v5575
    %v5666 = vunpack.c.l.b16 %v5576
    %v5667 = vunpack.c.h.b16 %v5576
    %v5668 = vunpack.c.l.b16 %v5577
    %v5669 = vunpack.c.h.b16 %v5577
    %v5670 = vunpack.c.l.b16 %v5578
    %v5671 = vunpack.c.h.b16 %v5578
    %v5672 = vunpack.c.l.b16 %v5579
    %v5673 = vunpack.c.h.b16 %v5579
    %v5674 = vunpack.c.l.b16 %v5580
    %v5675 = vunpack.c.h.b16 %v5580
    %v5676 = vunpack.c.l.b16 %v5581
    %v5677 = vunpack.c.h.b16 %v5581
    %v5678 = vpack.c.b16 %v5618, %v5614
    %v5679 = vpack.c.b16 %v5619, %v5615
    %v5680 = vpack.c.b16 %v5620, %v5616
    %v5681 = vpack.c.b16 %v5621, %v5617
    %v5682 = vpack.c.b16 %v5626, %v5622
    %v5683 = vpack.c.b16 %v5627, %v5623
    %v5684 = vpack.c.b16 %v5628, %v5624
    %v5685 = vpack.c.b16 %v5629, %v5625
    %v5686 = vpack.c.b16 %v5634, %v5630
    %v5687 = vpack.c.b16 %v5635, %v5631
    %v5688 = vpack.c.b16 %v5636, %v5632
    %v5689 = vpack.c.b16 %v5637, %v5633
    %v5690 = vpack.c.b16 %v5642, %v5638
    %v5691 = vpack.c.b16 %v5643, %v5639
    %v5692 = vpack.c.b16 %v5644, %v5640
    %v5693 = vpack.c.b16 %v5645, %v5641
    %v5694 = vpack.c.b16 %v5650, %v5646
    %v5695 = vpack.c.b16 %v5651, %v5647
    %v5696 = vpack.c.b16 %v5652, %v5648
    %v5697 = vpack.c.b16 %v5653, %v5649
    %v5698 = vpack.c.b16 %v5658, %v5654
    %v5699 = vpack.c.b16 %v5659, %v5655
    %v5700 = vpack.c.b16 %v5660, %v5656
    %v5701 = vpack.c.b16 %v5661, %v5657
    %v5702 = vpack.c.b16 %v5666, %v5662
    %v5703 = vpack.c.b16 %v5667, %v5663
    %v5704 = vpack.c.b16 %v5668, %v5664
    %v5705 = vpack.c.b16 %v5669, %v5665
    %v5706 = vpack.c.b16 %v5674, %v5670
    %v5707 = vpack.c.b16 %v5675, %v5671
    %v5708 = vpack.c.b16 %v5676, %v5672
    %v5709 = vpack.c.b16 %v5677, %v5673
    %5742 = vmatprep.subr.bf16.mxu0 %v5679
    %5743 = vmatpush1.bf16.msra.mxu0 %v5678
    %5744 = vmatprep.subr.bf16.mxu0 %v5683
    %5745 = vmatpush1.bf16.msra.mxu0 %v5682
    %5746 = vmatprep.subr.bf16.mxu0 %v5687
    %5747 = vmatpush1.bf16.msra.mxu0 %v5686
    %5748 = vmatprep.subr.bf16.mxu0 %v5691
    %5749 = vmatpush1.bf16.msra.mxu0 %v5690
    %5750 = vmatprep.subr.bf16.mxu0 %v5695
    %5751 = vmatpush1.bf16.msra.mxu0 %v5694
    %5752 = vmatprep.subr.bf16.mxu0 %v5699
    %5753 = vmatpush1.bf16.msra.mxu0 %v5698
    %5754 = vmatprep.subr.bf16.mxu0 %v5703
    %5755 = vmatpush1.bf16.msra.mxu0 %v5702
    %5756 = vmatprep.subr.bf16.mxu0 %v5707
    %5757 = vmatpush1.bf16.msra.mxu0 %v5706
    %5758 = vmatprep.subr.bf16.mxu0 0
    %5759 = vmatpush1.bf16.msra.mxu0 0
    %5760 = vmatprep.subr.bf16.mxu0 0
    %5761 = vmatpush1.bf16.msra.mxu0 0
    %5762 = vmatprep.subr.bf16.mxu0 0
    %5763 = vmatpush1.bf16.msra.mxu0 0
    %5764 = vmatprep.subr.bf16.mxu0 0
    %5765 = vmatpush1.bf16.msra.mxu0 0
    %5766 = vmatprep.subr.bf16.mxu0 0
    %5767 = vmatpush1.bf16.msra.mxu0 0
    %5768 = vmatprep.subr.bf16.mxu0 0
    %5769 = vmatpush1.bf16.msra.mxu0 0
    %5770 = vmatprep.subr.bf16.mxu0 0
    %5771 = vmatpush1.bf16.msra.mxu0 0
    %5772 = vmatprep.subr.bf16.mxu0 0
    %5773 = vmatpush1.bf16.msra.mxu0 0
    %5774 = vmatprep.mubr.bf16.mxu0 0
    %5775 = vmatmul.mubr.bf16.gmra.mrb[0].mxu0 %v5549
    %v5776 = vpop.f32.mrb[0].mxu0
    %v5777 = vadd.f32 0.0, %v5776
    %v5778 = vpop.f32.mrb[0].mxu0
    %v5779 = vadd.f32 0.0, %v5778
    %v5780 = vpop.f32.mrb[0].mxu0
    %v5781 = vpop.f32.mrb[0].mxu0
    %5782 = vdwg.mxu0
    %5783 = vmatprep.subr.bf16.mxu0 %v5681
    %5784 = vmatpush1.bf16.msra.mxu0 %v5680
    %5785 = vmatprep.subr.bf16.mxu0 %v5685
    %5786 = vmatpush1.bf16.msra.mxu0 %v5684
    %5787 = vmatprep.subr.bf16.mxu0 %v5689
    %5788 = vmatpush1.bf16.msra.mxu0 %v5688
    %5789 = vmatprep.subr.bf16.mxu0 %v5693
    %5790 = vmatpush1.bf16.msra.mxu0 %v5692
    %5791 = vmatprep.subr.bf16.mxu0 %v5697
    %5792 = vmatpush1.bf16.msra.mxu0 %v5696
    %5793 = vmatprep.subr.bf16.mxu0 %v5701
    %5794 = vmatpush1.bf16.msra.mxu0 %v5700
    %5795 = vmatprep.subr.bf16.mxu0 %v5705
    %5796 = vmatpush1.bf16.msra.mxu0 %v5704
    %5797 = vmatprep.subr.bf16.mxu0 %v5709
    %5798 = vmatpush1.bf16.msra.mxu0 %v5708
    %5799 = vmatprep.subr.bf16.mxu0 0
    %5800 = vmatpush1.bf16.msra.mxu0 0
    %5801 = vmatprep.subr.bf16.mxu0 0
    %5802 = vmatpush1.bf16.msra.mxu0 0
    %5803 = vmatprep.subr.bf16.mxu0 0
    %5804 = vmatpush1.bf16.msra.mxu0 0
    %5805 = vmatprep.subr.bf16.mxu0 0
    %5806 = vmatpush1.bf16.msra.mxu0 0
    %5807 = vmatprep.subr.bf16.mxu0 0
    %5808 = vmatpush1.bf16.msra.mxu0 0
    %5809 = vmatprep.subr.bf16.mxu0 0
    %5810 = vmatpush1.bf16.msra.mxu0 0
    %5811 = vmatprep.subr.bf16.mxu0 0
    %5812 = vmatpush1.bf16.msra.mxu0 0
    %5813 = vmatprep.subr.bf16.mxu0 0
    %5814 = vmatpush1.bf16.msra.mxu0 0
    %5815 = vmatprep.mubr.bf16.mxu0 0
    %5816 = vmatmul.mubr.bf16.gmra.mrb[0].mxu0 %v5549
    %v5817 = vpop.f32.mrb[0].mxu0
    %v5818 = vadd.f32 0.0, %v5817
    %v5819 = vpop.f32.mrb[0].mxu0
    %v5820 = vadd.f32 0.0, %v5819
    %v5821 = vpop.f32.mrb[0].mxu0
    %v5822 = vpop.f32.mrb[0].mxu0
    %5823 = vdwg.mxu0
    %v5824 = vadd.f32 %v5545, %v5777
    %v5825 = vadd.f32 %v5546, %v5779
    %v5826 = vadd.f32 %v5547, %v5818
    %v5827 = vadd.f32 %v5548, %v5820
    %v5828 = vxor.u32 %v5824, 2147483648
    %v5829 = vmul.f32 %v5828, 1.442695
    %v5830 = vpow.pop %v5829
    %v5831 = vadd.f32 %v5830, 1.0
    %v5832 = vrcp.pop %v5831
    %v5833 = vmul.f32 1.0, %v5832
    %v5834 = vxor.u32 %v5825, 2147483648
    %v5835 = vmul.f32 %v5834, 1.442695
    %v5836 = vpow.pop %v5835
    %v5837 = vadd.f32 %v5836, 1.0
    %v5838 = vrcp.pop %v5837
    %v5839 = vmul.f32 1.0, %v5838
    %v5840 = vtanh.pop %v5826
    %v5841 = vxor.u32 %v5827, 2147483648
    %v5842 = vmul.f32 %v5841, 1.442695
    %v5843 = vpow.pop %v5842
    %v5844 = vadd.f32 %v5843, 1.0
    %v5845 = vrcp.pop %v5844
    %v5846 = vmul.f32 1.0, %v5845
    %v5847 = vmul.f32 %v5839, %v5544
    %v5848 = vmul.f32 %v5833, %v5840
    %v5849 = vadd.f32 %v5847, %v5848
    %v5850 = vtanh.pop %v5849
    %v5851 = vmul.f32 %v5846, %v5850
    %5852 = vst [vmem:[#allocation5] sm:$0xff] %v5849
    %5853 = vst [vmem:[#allocation4] sm:$0xff] %v5851
    %5854 = vst [vmem:[%s4 + $0x38] sm:$0xff] %v5851
    // Predicated region
    $region22: #{seq2seq_forward.2} parent=1 // pred_check
      _
    $region23: #{seq2seq_forward.2} parent=1 // pred_check_branch
      %5856 = sbr.rel (0) target = $region25
    $region24: #{seq2seq_forward.2} parent=1 // pred_region
      _
    $region25: #{seq2seq_forward.2} parent=1 // pred_fallthru
      _
    // Predicated region
    $region26: #{seq2seq_forward.2} parent=1 // pred_check
      _
    $region27: #{seq2seq_forward.2} parent=1 // pred_check_branch
      %5858 = sbr.rel (0) target = $region29
    $region28: #{seq2seq_forward.2} parent=1 // pred_region
      _
    $region29: #{seq2seq_forward.2} parent=1 // pred_fallthru
      _
    %5859 = vsyncpa [#allocation7], 1

</llo_original>
